<compile_context>
chip_gen: v7x
topology: tpu7x:2x2x1
jax: 0.10.0
libtpu: 0.0.40
codegen_flags: <defaults>
</compile_context>

<pallas_src>
import jax
import jax.numpy as jnp
from jax.experimental import pallas as pl
from jax.experimental.pallas import tpu as pltpu

# ---------------------------------------------------------------------------
# Model dimensions (scaled; all channel widths kept 128-lane dense).
# ---------------------------------------------------------------------------
STEM_C = 128          # wrn101_2 stem is 64; padded up to a full 128-lane tile
MID_C = 128           # bottleneck 3x3 width (wide: width_per_group = 128)
OUT_C = 256           # bottleneck output width (layer1 of wrn101_2)
NUM_CLASSES = 88
NCLS_PAD = 128        # logits padded to a full lane tile inside the kernel
K_STEM = 7 * 7 * 3    # im2col contraction for the 7x7x3 stem conv
K_STEM_PAD = 160      # padded to a bf16-sublane-friendly multiple of 16

H0, W0 = 32, 32       # input spatial
H1, W1 = 16, 16       # after 7x7 / stride-2 stem
H2, W2 = 8, 8         # after 3x3 / stride-2 max-pool

_COMPILER_PARAMS = pltpu.CompilerParams(
    dimension_semantics=("parallel",),          # megacore-shard the batch axis
)


def _pick_batch_tile(n):
    # Images per grid step.  For tiny demo batches one step covers everything;
    # for larger batches 8 images / step keeps stores sublane-dense (8,128).
    if n <= 8:
        return n
    assert n % 8 == 0, "batch must be <=8 or a multiple of 8"
    return 8


# ---------------------------------------------------------------------------
# Kernel 1: stem 7x7/2 conv (+folded BN bias, ReLU) as an im2col matmul, with
# the 3x3/2 max-pool fused into the epilogue.  B_TILE images per grid step
# (M = B_TILE*256 matmul rows); bf16 MXU operands, f32 epilogue, bf16 store.
# ---------------------------------------------------------------------------
def _maxpool_3x3_s2_p1(x):
    """3x3 / stride-2 / pad-1 max-pool on (B, 16, 16, C).

    Inputs are post-ReLU (>= 0), so zero padding is equivalent to -inf padding.
    Implemented with reshape/concat/max only (no strided slicing) so it lowers
    cleanly in Mosaic.
    """
    b, h, w, c = x.shape
    # pool along H: out_h[i] = max(x[2i-1], x[2i], x[2i+1])
    xr = x.reshape(b, h // 2, 2, w, c)
    ev_h, od_h = xr[:, :, 0], xr[:, :, 1]                           # (B, 8, 16, C)
    prev_h = jnp.concatenate(
        [jnp.zeros((b, 1, w, c), x.dtype), od_h[:, :h // 2 - 1]], axis=1)
    hm = jnp.maximum(jnp.maximum(ev_h, od_h), prev_h)               # (B, 8, 16, C)
    # pool along W
    wr = hm.reshape(b, h // 2, w // 2, 2, c)
    ev_w, od_w = wr[:, :, :, 0], wr[:, :, :, 1]                     # (B, 8, 8, C)
    prev_w = jnp.concatenate(
        [jnp.zeros((b, h // 2, 1, c), x.dtype), od_w[:, :, :w // 2 - 1]], axis=2)
    return jnp.maximum(jnp.maximum(ev_w, od_w), prev_w)             # (B, 8, 8, C)


def _stem_kernel(p_ref, w_ref, b_ref, o_ref):
    b_tile = o_ref.shape[0]
    z = jnp.dot(p_ref[...], w_ref[...], preferred_element_type=jnp.float32)
    z = jnp.maximum(z + b_ref[...], 0.0)                            # folded BN + ReLU
    z = z.reshape(b_tile, H1, W1, STEM_C)
    pooled = _maxpool_3x3_s2_p1(z)                                  # (B, 8, 8, C)
    o_ref[...] = pooled.astype(o_ref.dtype)


def stem_conv_pool(patches, w, b, b_tile):
    n = patches.shape[0] // (H1 * W1)
    tm = b_tile * H1 * W1
    return pl.pallas_call(
        _stem_kernel,
        grid=(n // b_tile,),
        in_specs=[
            pl.BlockSpec((tm, K_STEM_PAD), lambda i: (i, 0)),
            pl.BlockSpec((K_STEM_PAD, STEM_C), lambda i: (0, 0)),
            pl.BlockSpec((1, STEM_C), lambda i: (0, 0)),
        ],
        out_specs=pl.BlockSpec((b_tile, H2, W2, STEM_C), lambda i: (i, 0, 0, 0)),
        out_shape=jax.ShapeDtypeStruct((n, H2, W2, STEM_C), jnp.bfloat16),
        compiler_params=_COMPILER_PARAMS,
    )(patches, w, b)


# ---------------------------------------------------------------------------
# Kernel 2: fused trunk.  One pallas_call, grid over batch tiles of B_TILE
# images (M = B_TILE*64 rows per matmul):
#   block1: [1x1 conv || 1x1 downsample] (one matmul, shared LHS) + ReLU
#           -> 3x3 conv as ONE K=1152 im2col matmul + ReLU
#           -> 1x1 conv -> + downsample shortcut -> ReLU
#   block2: 1x1 -> 3x3 (K=1152 matmul) -> 1x1 -> + identity -> ReLU
#   head  : global-average-pool + 88-way fc (logits padded to 128 lanes),
#           stored as one lane/sublane-dense (B_TILE, 128) block.
# All intermediates stay in VMEM; matmuls take bf16 operands, accumulate in f32.
# ---------------------------------------------------------------------------
def _im2col_3x3(h, b_tile, c):
    """(B*64, C) f32 -> (B*64, 9*C) bf16 taps of a 3x3 SAME conv over 8x8 maps."""
    hb = h.astype(jnp.bfloat16).reshape(b_tile, H2, W2, c)
    z_row = jnp.zeros((b_tile, 1, W2, c), jnp.bfloat16)
    hp = jnp.concatenate([z_row, hb, z_row], axis=1)                 # (B, 10, 8, C)
    z_col = jnp.zeros((b_tile, H2 + 2, 1, c), jnp.bfloat16)
    hp = jnp.concatenate([z_col, hp, z_col], axis=2)                 # (B, 10, 10, C)
    taps = [hp[:, kh:kh + H2, kw:kw + W2, :].reshape(b_tile * H2 * W2, c)
            for kh in range(3) for kw in range(3)]
    return jnp.concatenate(taps, axis=-1)                            # (B*64, 9C)


def _trunk_kernel(x_ref,
                  w1a_ref, b1a_ref, bsa_ref, w2a_ref, b2a_ref, w3a_ref, b3a_ref,
                  w1b_ref, b1b_ref, w2b_ref, b2b_ref, w3b_ref, b3b_ref,
                  wfc_ref, bfc_ref, o_ref):
    b_tile = x_ref.shape[0]
    m = b_tile * H2 * W2
    xb = x_ref[...].reshape(m, STEM_C)                               # bf16

    # ---- block 1: fused conv1 1x1 + downsample shortcut (shared LHS) --------
    t = jnp.dot(xb, w1a_ref[...], preferred_element_type=jnp.float32)  # (M, 384)
    h1 = jnp.maximum(t[:, :MID_C] + b1a_ref[...], 0.0)                  # (M, 128)
    sc = t[:, MID_C:] + bsa_ref[...]                                    # (M, 256)

    cols = _im2col_3x3(h1, b_tile, MID_C)                               # (M, 1152)
    h2 = jnp.maximum(
        jnp.dot(cols, w2a_ref[...], preferred_element_type=jnp.float32)
        + b2a_ref[...], 0.0).astype(jnp.bfloat16)
    h3 = jnp.dot(h2, w3a_ref[...], preferred_element_type=jnp.float32) + b3a_ref[...]
    y1 = jnp.maximum(h3 + sc, 0.0)                                       # (M, 256) f32

    # ---- block 2: identity shortcut -----------------------------------------
    y1b = y1.astype(jnp.bfloat16)
    g1 = jnp.maximum(
        jnp.dot(y1b, w1b_ref[...], preferred_element_type=jnp.float32)
        + b1b_ref[...], 0.0)
    cols = _im2col_3x3(g1, b_tile, MID_C)
    g2 = jnp.maximum(
        jnp.dot(cols, w2b_ref[...], preferred_element_type=jnp.float32)
        + b2b_ref[...], 0.0).astype(jnp.bfloat16)
    g3 = jnp.dot(g2, w3b_ref[...], preferred_element_type=jnp.float32) + b3b_ref[...]
    y2 = jnp.maximum(g3 + y1, 0.0)                                       # (M, 256) f32

    # ---- fused global-average-pool + classifier (lane/sublane-dense logits) --
    pooled = jnp.mean(y2.reshape(b_tile, H2 * W2, OUT_C), axis=1)        # (B, 256)
    logits = jnp.dot(pooled.astype(jnp.bfloat16), wfc_ref[...],
                     preferred_element_type=jnp.float32) + bfc_ref[...]
    o_ref[...] = logits                                                  # (B, 128)


def trunk(x, params, b_tile):
    n = x.shape[0]
    p1, p2, ph = params["block1"], params["block2"], params["head"]

    def _rep(a):                                      # weight resident across the grid
        nd = a.ndim
        return pl.BlockSpec(a.shape, lambda i, _nd=nd: (0,) * _nd)

    weights = [p1["w1s"], p1["b1"], p1["bs"], p1["w2"], p1["b2"], p1["w3"], p1["b3"],
               p2["w1"], p2["b1"], p2["w2"], p2["b2"], p2["w3"], p2["b3"],
               ph["wfc"], ph["bfc"]]
    in_specs = ([pl.BlockSpec((b_tile, H2, W2, STEM_C), lambda i: (i, 0, 0, 0))]
                + [_rep(a) for a in weights])

    return pl.pallas_call(
        _trunk_kernel,
        grid=(n // b_tile,),
        in_specs=in_specs,
        out_specs=pl.BlockSpec((b_tile, NCLS_PAD), lambda i: (i, 0)),
        out_shape=jax.ShapeDtypeStruct((n, NCLS_PAD), jnp.float32),
        compiler_params=_COMPILER_PARAMS,
    )(x, *weights)


# ---------------------------------------------------------------------------
# Parameters (deterministic, synthetic; BN folded into conv biases; conv1 and
# the downsample 1x1 are pre-concatenated so the kernel issues one matmul).
# ---------------------------------------------------------------------------
def _rand(key, shape, scale=0.05, dtype=jnp.float32):
    return (scale * jax.random.normal(key, shape, jnp.float32)).astype(dtype)


def init_params(key):
    ks = jax.random.split(key, 18)
    bf = jnp.bfloat16
    return dict(
        stem=dict(w=_rand(ks[0], (K_STEM_PAD, STEM_C), dtype=bf),
                  b=_rand(ks[1], (1, STEM_C))),
        block1=dict(
            # w1 (cin -> MID_C) and ws (cin -> OUT_C) fused along the N dim.
            w1s=_rand(ks[2], (STEM_C, MID_C + OUT_C), dtype=bf),
            b1=_rand(ks[3], (1, MID_C)),
            bs=_rand(ks[4], (1, OUT_C)),
            w2=_rand(ks[5], (9 * MID_C, MID_C), dtype=bf),   # im2col 3x3 weight
            b2=_rand(ks[6], (1, MID_C)),
            w3=_rand(ks[7], (MID_C, OUT_C), dtype=bf),
            b3=_rand(ks[8], (1, OUT_C))),
        block2=dict(
            w1=_rand(ks[9], (OUT_C, MID_C), dtype=bf),
            b1=_rand(ks[10], (1, MID_C)),
            w2=_rand(ks[11], (9 * MID_C, MID_C), dtype=bf),
            b2=_rand(ks[12], (1, MID_C)),
            w3=_rand(ks[13], (MID_C, OUT_C), dtype=bf),
            b3=_rand(ks[14], (1, OUT_C))),
        head=dict(
            wfc=_rand(ks[15], (OUT_C, NCLS_PAD), dtype=bf),
            bfc=_rand(ks[16], (1, NCLS_PAD))),
    )


# ---------------------------------------------------------------------------
# Forward pass
# ---------------------------------------------------------------------------
def network_wrn101_forward(params, x_nchw):
    n = x_nchw.shape[0]
    b_tile = _pick_batch_tile(n)
    x = jnp.transpose(x_nchw, (0, 2, 3, 1)).astype(jnp.float32)      # NHWC (N,32,32,3)

    # --- stem 7x7/2 conv: im2col in the wrapper (3-channel input, tiny, once),
    #     K padded 147 -> 160, bf16 feed.  The 3x3/2 max-pool is fused into the
    #     stem kernel's epilogue, so only the pooled (N,8,8,128) map hits HBM.
    # TODO(synk): at real 224x224 sizes gather the 49 taps in-kernel (manual
    #             halo DMA, P4) instead of materializing the patch tensor.
    xp = jnp.pad(x, ((0, 0), (3, 3), (3, 3), (0, 0)))
    cols = [xp[:, kh:kh + 2 * (H1 - 1) + 1:2, kw:kw + 2 * (W1 - 1) + 1:2, :]
            for kh in range(7) for kw in range(7)]
    patches = jnp.concatenate(cols, axis=-1)                          # (N, 16, 16, 147)
    patches = jnp.pad(patches, ((0, 0), (0, 0), (0, 0), (0, K_STEM_PAD - K_STEM)))
    patches = patches.reshape(n * H1 * W1, K_STEM_PAD).astype(jnp.bfloat16)
    pooled = stem_conv_pool(patches, params["stem"]["w"], params["stem"]["b"],
                            b_tile)                                   # (N, 8, 8, 128) bf16

    # --- fused trunk: bottleneck1 (downsample) + bottleneck2 (identity)
    #     + global-average-pool + 88-way classifier, one pallas_call.
    logits = trunk(pooled, params, b_tile)                            # (N, 128) f32
    return logits[:, :NUM_CLASSES]


if __name__ == "__main__":
    key = jax.random.PRNGKey(0)
    x = jax.random.normal(key, (2, 3, H0, W0), jnp.float32)           # NCHW like PyTorch
    params = init_params(jax.random.PRNGKey(1))
    out = jax.jit(network_wrn101_forward)(params, x)
    jax.block_until_ready(out)
    assert out.shape == (2, NUM_CLASSES) and out.dtype == jnp.float32
    assert bool(jnp.all(jnp.isfinite(out)))
    print("KERNEL_OK")
</pallas_src>

<mosaic_0001>
module attributes {stable_mosaic.version = 11 : i64} {
  func.func @_stem_kernel(%arg0: i32, %arg1: memref<512x160xbf16, #tpu.memory_space<vmem>>, %arg2: memref<160x128xbf16, #tpu.memory_space<vmem>>, %arg3: memref<1x128xf32, #tpu.memory_space<vmem>>, %arg4: memref<2x8x8x128xbf16, #tpu.memory_space<vmem>>) attributes {dimension_semantics = [#tpu.dimension_semantics<parallel>], iteration_bounds = array<i64: 1>, scalar_prefetch = 0 : i64, scratch_operands = 0 : i64, tpu.core_type = #tpu.core_type<tc>, window_params = [{transform_indices = @transform_0, window_bounds = array<i64: 512, 160>}, {pipeline_mode = #tpu.pipeline_mode<synchronous>, transform_indices = @transform_1, window_bounds = array<i64: 160, 128>}, {pipeline_mode = #tpu.pipeline_mode<synchronous>, transform_indices = @transform_2, window_bounds = array<i64: 1, 128>}, {transform_indices = @transform_3, window_bounds = array<i64: 2, 8, 8, 128>}]} {
    %c0 = arith.constant 0 : index
    %c0_0 = arith.constant 0 : index
    %0 = vector.load %arg1[%c0, %c0_0] : memref<512x160xbf16, #tpu.memory_space<vmem>>, vector<512x160xbf16>
    %c0_1 = arith.constant 0 : index
    %c0_2 = arith.constant 0 : index
    %1 = vector.load %arg2[%c0_1, %c0_2] : memref<160x128xbf16, #tpu.memory_space<vmem>>, vector<160x128xbf16>
    %cst = arith.constant dense<0.000000e+00> : vector<512x128xf32>
    %2 = tpu.matmul %0, %1, %cst {dimension_numbers = #tpu.dot_dimension_numbers<[1], [0], [0], [1], [0, 0, 1, 1], [], []>} : vector<512x160xbf16>, vector<160x128xbf16>, vector<512x128xf32> -> vector<512x128xf32>
    %c0_3 = arith.constant 0 : index
    %c0_4 = arith.constant 0 : index
    %3 = vector.load %arg3[%c0_3, %c0_4] : memref<1x128xf32, #tpu.memory_space<vmem>>, vector<1x128xf32>
    %4 = vector.broadcast %3 : vector<1x128xf32> to vector<512x128xf32>
    %5 = arith.addf %2, %4 : vector<512x128xf32>
    %cst_5 = arith.constant 0.000000e+00 : f32
    %6 = vector.broadcast %cst_5 : f32 to vector<512x128xf32>
    %7 = arith.maximumf %5, %6 : vector<512x128xf32>
    %8 = vector.shape_cast %7 : vector<512x128xf32> to vector<2x16x16x128xf32>
    %9 = vector.shape_cast %8 : vector<2x16x16x128xf32> to vector<2x8x2x16x128xf32>
    %10 = vector.extract_strided_slice %9 {offsets = [0, 0, 0, 0, 0], sizes = [2, 8, 1, 16, 128], strides = [1, 1, 1, 1, 1]} : vector<2x8x2x16x128xf32> to vector<2x8x1x16x128xf32>
    %11 = vector.shape_cast %10 : vector<2x8x1x16x128xf32> to vector<2x8x16x128xf32>
    %12 = vector.extract_strided_slice %9 {offsets = [0, 0, 1, 0, 0], sizes = [2, 8, 1, 16, 128], strides = [1, 1, 1, 1, 1]} : vector<2x8x2x16x128xf32> to vector<2x8x1x16x128xf32>
    %13 = vector.shape_cast %12 : vector<2x8x1x16x128xf32> to vector<2x8x16x128xf32>
    %cst_6 = arith.constant 0.000000e+00 : f32
    %14 = vector.broadcast %cst_6 : f32 to vector<2x1x16x128xf32>
    %15 = vector.extract_strided_slice %13 {offsets = [0, 0, 0, 0], sizes = [2, 7, 16, 128], strides = [1, 1, 1, 1]} : vector<2x8x16x128xf32> to vector<2x7x16x128xf32>
    %16 = tpu.concatenate %14, %15 in 1 : vector<2x1x16x128xf32>, vector<2x7x16x128xf32> -> vector<2x8x16x128xf32>
    %17 = arith.maximumf %11, %13 : vector<2x8x16x128xf32>
    %18 = arith.maximumf %17, %16 : vector<2x8x16x128xf32>
    %19 = vector.shape_cast %18 : vector<2x8x16x128xf32> to vector<2x8x8x2x128xf32>
    %20 = vector.extract_strided_slice %19 {offsets = [0, 0, 0, 0, 0], sizes = [2, 8, 8, 1, 128], strides = [1, 1, 1, 1, 1]} : vector<2x8x8x2x128xf32> to vector<2x8x8x1x128xf32>
    %21 = vector.shape_cast %20 : vector<2x8x8x1x128xf32> to vector<2x8x8x128xf32>
    %22 = vector.extract_strided_slice %19 {offsets = [0, 0, 0, 1, 0], sizes = [2, 8, 8, 1, 128], strides = [1, 1, 1, 1, 1]} : vector<2x8x8x2x128xf32> to vector<2x8x8x1x128xf32>
    %23 = vector.shape_cast %22 : vector<2x8x8x1x128xf32> to vector<2x8x8x128xf32>
    %cst_7 = arith.constant 0.000000e+00 : f32
    %24 = vector.broadcast %cst_7 : f32 to vector<2x8x1x128xf32>
    %25 = vector.extract_strided_slice %23 {offsets = [0, 0, 0, 0], sizes = [2, 8, 7, 128], strides = [1, 1, 1, 1]} : vector<2x8x8x128xf32> to vector<2x8x7x128xf32>
    %26 = tpu.concatenate %24, %25 in 2 : vector<2x8x1x128xf32>, vector<2x8x7x128xf32> -> vector<2x8x8x128xf32>
    %27 = arith.maximumf %21, %23 : vector<2x8x8x128xf32>
    %28 = arith.maximumf %27, %26 : vector<2x8x8x128xf32>
    %29 = arith.truncf %28 : vector<2x8x8x128xf32> to vector<2x8x8x128xbf16>
    %c0_8 = arith.constant 0 : index
    %c0_9 = arith.constant 0 : index
    %c0_10 = arith.constant 0 : index
    %c0_11 = arith.constant 0 : index
    %30 = vector.load %arg4[%c0_8, %c0_9, %c0_10, %c0_11] : memref<2x8x8x128xbf16, #tpu.memory_space<vmem>>, vector<2x8x8x128xbf16>
    tpu.vector_store %arg4[%c0_8, %c0_9, %c0_10, %c0_11], %29 {strides = array<i32>} : memref<2x8x8x128xbf16, #tpu.memory_space<vmem>>, vector<2x8x8x128xbf16>,
    return
  }
  func.func @transform_0(%arg0: i32) -> (i32, i32) {
    %c0_i32 = arith.constant 0 : i32
    %c0_i32_0 = arith.constant 0 : i32
    return %arg0, %c0_i32 : i32, i32
  }
  func.func @transform_1(%arg0: i32) -> (i32, i32) {
    %c0_i32 = arith.constant 0 : i32
    %c0_i32_0 = arith.constant 0 : i32
    %c0_i32_1 = arith.constant 0 : i32
    return %c0_i32, %c0_i32_0 : i32, i32
  }
  func.func @transform_2(%arg0: i32) -> (i32, i32) {
    %c0_i32 = arith.constant 0 : i32
    %c0_i32_0 = arith.constant 0 : i32
    %c0_i32_1 = arith.constant 0 : i32
    return %c0_i32, %c0_i32_0 : i32, i32
  }
  func.func @transform_3(%arg0: i32) -> (i32, i32, i32, i32) {
    %c0_i32 = arith.constant 0 : i32
    %c0_i32_0 = arith.constant 0 : i32
    %c0_i32_1 = arith.constant 0 : i32
    %c0_i32_2 = arith.constant 0 : i32
    return %arg0, %c0_i32, %c0_i32_0, %c0_i32_1 : i32, i32, i32, i32
  }
}

module attributes {stable_mosaic.version = 11 : i64} {
  func.func @_trunk_kernel(%arg0: i32, %arg1: memref<2x8x8x128xbf16, #tpu.memory_space<vmem>>, %arg2: memref<128x384xbf16, #tpu.memory_space<vmem>>, %arg3: memref<1x128xf32, #tpu.memory_space<vmem>>, %arg4: memref<1x256xf32, #tpu.memory_space<vmem>>, %arg5: memref<1152x128xbf16, #tpu.memory_space<vmem>>, %arg6: memref<1x128xf32, #tpu.memory_space<vmem>>, %arg7: memref<128x256xbf16, #tpu.memory_space<vmem>>, %arg8: memref<1x256xf32, #tpu.memory_space<vmem>>, %arg9: memref<256x128xbf16, #tpu.memory_space<vmem>>, %arg10: memref<1x128xf32, #tpu.memory_space<vmem>>, %arg11: memref<1152x128xbf16, #tpu.memory_space<vmem>>, %arg12: memref<1x128xf32, #tpu.memory_space<vmem>>, %arg13: memref<128x256xbf16, #tpu.memory_space<vmem>>, %arg14: memref<1x256xf32, #tpu.memory_space<vmem>>, %arg15: memref<256x128xbf16, #tpu.memory_space<vmem>>, %arg16: memref<1x128xf32, #tpu.memory_space<vmem>>, %arg17: memref<2x128xf32, #tpu.memory_space<vmem>>) attributes {dimension_semantics = [#tpu.dimension_semantics<parallel>], iteration_bounds = array<i64: 1>, scalar_prefetch = 0 : i64, scratch_operands = 0 : i64, tpu.core_type = #tpu.core_type<tc>, window_params = [{transform_indices = @transform_0, window_bounds = array<i64: 2, 8, 8, 128>}, {pipeline_mode = #tpu.pipeline_mode<synchronous>, transform_indices = @transform_1, window_bounds = array<i64: 128, 384>}, {pipeline_mode = #tpu.pipeline_mode<synchronous>, transform_indices = @transform_2, window_bounds = array<i64: 1, 128>}, {pipeline_mode = #tpu.pipeline_mode<synchronous>, transform_indices = @transform_3, window_bounds = array<i64: 1, 256>}, {pipeline_mode = #tpu.pipeline_mode<synchronous>, transform_indices = @transform_4, window_bounds = array<i64: 1152, 128>}, {pipeline_mode = #tpu.pipeline_mode<synchronous>, transform_indices = @transform_5, window_bounds = array<i64: 1, 128>}, {pipeline_mode = #tpu.pipeline_mode<synchronous>, transform_indices = @transform_6, window_bounds = array<i64: 128, 256>}, {pipeline_mode = #tpu.pipeline_mode<synchronous>, transform_indices = @transform_7, window_bounds = array<i64: 1, 256>}, {pipeline_mode = #tpu.pipeline_mode<synchronous>, transform_indices = @transform_8, window_bounds = array<i64: 256, 128>}, {pipeline_mode = #tpu.pipeline_mode<synchronous>, transform_indices = @transform_9, window_bounds = array<i64: 1, 128>}, {pipeline_mode = #tpu.pipeline_mode<synchronous>, transform_indices = @transform_10, window_bounds = array<i64: 1152, 128>}, {pipeline_mode = #tpu.pipeline_mode<synchronous>, transform_indices = @transform_11, window_bounds = array<i64: 1, 128>}, {pipeline_mode = #tpu.pipeline_mode<synchronous>, transform_indices = @transform_12, window_bounds = array<i64: 128, 256>}, {pipeline_mode = #tpu.pipeline_mode<synchronous>, transform_indices = @transform_13, window_bounds = array<i64: 1, 256>}, {pipeline_mode = #tpu.pipeline_mode<synchronous>, transform_indices = @transform_14, window_bounds = array<i64: 256, 128>}, {pipeline_mode = #tpu.pipeline_mode<synchronous>, transform_indices = @transform_15, window_bounds = array<i64: 1, 128>}, {transform_indices = @transform_16, window_bounds = array<i64: 2, 128>}]} {
    %c0 = arith.constant 0 : index
    %c0_0 = arith.constant 0 : index
    %c0_1 = arith.constant 0 : index
    %c0_2 = arith.constant 0 : index
    %0 = vector.load %arg1[%c0, %c0_0, %c0_1, %c0_2] : memref<2x8x8x128xbf16, #tpu.memory_space<vmem>>, vector<2x8x8x128xbf16>
    %1 = vector.shape_cast %0 : vector<2x8x8x128xbf16> to vector<128x128xbf16>
    %c0_3 = arith.constant 0 : index
    %c0_4 = arith.constant 0 : index
    %2 = vector.load %arg2[%c0_3, %c0_4] : memref<128x384xbf16, #tpu.memory_space<vmem>>, vector<128x384xbf16>
    %cst = arith.constant dense<0.000000e+00> : vector<128x384xf32>
    %3 = tpu.matmul %1, %2, %cst {dimension_numbers = #tpu.dot_dimension_numbers<[1], [0], [0], [1], [0, 0, 1, 1], [], []>} : vector<128x128xbf16>, vector<128x384xbf16>, vector<128x384xf32> -> vector<128x384xf32>
    %4 = vector.extract_strided_slice %3 {offsets = [0, 0], sizes = [128, 128], strides = [1, 1]} : vector<128x384xf32> to vector<128x128xf32>
    %c0_5 = arith.constant 0 : index
    %c0_6 = arith.constant 0 : index
    %5 = vector.load %arg3[%c0_5, %c0_6] : memref<1x128xf32, #tpu.memory_space<vmem>>, vector<1x128xf32>
    %6 = vector.broadcast %5 : vector<1x128xf32> to vector<128x128xf32>
    %7 = arith.addf %4, %6 : vector<128x128xf32>
    %cst_7 = arith.constant 0.000000e+00 : f32
    %8 = vector.broadcast %cst_7 : f32 to vector<128x128xf32>
    %9 = arith.maximumf %7, %8 : vector<128x128xf32>
    %10 = vector.extract_strided_slice %3 {offsets = [0, 128], sizes = [128, 256], strides = [1, 1]} : vector<128x384xf32> to vector<128x256xf32>
    %c0_8 = arith.constant 0 : index
    %c0_9 = arith.constant 0 : index
    %11 = vector.load %arg4[%c0_8, %c0_9] : memref<1x256xf32, #tpu.memory_space<vmem>>, vector<1x256xf32>
    %12 = vector.broadcast %11 : vector<1x256xf32> to vector<128x256xf32>
    %13 = arith.addf %10, %12 : vector<128x256xf32>
    %14 = arith.truncf %9 : vector<128x128xf32> to vector<128x128xbf16>
    %15 = vector.shape_cast %14 : vector<128x128xbf16> to vector<2x8x8x128xbf16>
    %cst_10 = arith.constant 0.000000e+00 : bf16
    %16 = vector.broadcast %cst_10 : bf16 to vector<2x1x8x128xbf16>
    %17 = tpu.concatenate %16, %15, %16 in 1 : vector<2x1x8x128xbf16>, vector<2x8x8x128xbf16>, vector<2x1x8x128xbf16> -> vector<2x10x8x128xbf16>
    %cst_11 = arith.constant 0.000000e+00 : bf16
    %18 = vector.broadcast %cst_11 : bf16 to vector<2x10x1x128xbf16>
    %19 = tpu.concatenate %18, %17, %18 in 2 : vector<2x10x1x128xbf16>, vector<2x10x8x128xbf16>, vector<2x10x1x128xbf16> -> vector<2x10x10x128xbf16>
    %20 = vector.extract_strided_slice %19 {offsets = [0, 0, 0, 0], sizes = [2, 8, 8, 128], strides = [1, 1, 1, 1]} : vector<2x10x10x128xbf16> to vector<2x8x8x128xbf16>
    %21 = vector.shape_cast %20 : vector<2x8x8x128xbf16> to vector<128x128xbf16>
    %22 = vector.extract_strided_slice %19 {offsets = [0, 0, 1, 0], sizes = [2, 8, 8, 128], strides = [1, 1, 1, 1]} : vector<2x10x10x128xbf16> to vector<2x8x8x128xbf16>
    %23 = vector.shape_cast %22 : vector<2x8x8x128xbf16> to vector<128x128xbf16>
    %24 = vector.extract_strided_slice %19 {offsets = [0, 0, 2, 0], sizes = [2, 8, 8, 128], strides = [1, 1, 1, 1]} : vector<2x10x10x128xbf16> to vector<2x8x8x128xbf16>
    %25 = vector.shape_cast %24 : vector<2x8x8x128xbf16> to vector<128x128xbf16>
    %26 = vector.extract_strided_slice %19 {offsets = [0, 1, 0, 0], sizes = [2, 8, 8, 128], strides = [1, 1, 1, 1]} : vector<2x10x10x128xbf16> to vector<2x8x8x128xbf16>
    %27 = vector.shape_cast %26 : vector<2x8x8x128xbf16> to vector<128x128xbf16>
    %28 = vector.extract_strided_slice %19 {offsets = [0, 1, 1, 0], sizes = [2, 8, 8, 128], strides = [1, 1, 1, 1]} : vector<2x10x10x128xbf16> to vector<2x8x8x128xbf16>
    %29 = vector.shape_cast %28 : vector<2x8x8x128xbf16> to vector<128x128xbf16>
    %30 = vector.extract_strided_slice %19 {offsets = [0, 1, 2, 0], sizes = [2, 8, 8, 128], strides = [1, 1, 1, 1]} : vector<2x10x10x128xbf16> to vector<2x8x8x128xbf16>
    %31 = vector.shape_cast %30 : vector<2x8x8x128xbf16> to vector<128x128xbf16>
    %32 = vector.extract_strided_slice %19 {offsets = [0, 2, 0, 0], sizes = [2, 8, 8, 128], strides = [1, 1, 1, 1]} : vector<2x10x10x128xbf16> to vector<2x8x8x128xbf16>
    %33 = vector.shape_cast %32 : vector<2x8x8x128xbf16> to vector<128x128xbf16>
    %34 = vector.extract_strided_slice %19 {offsets = [0, 2, 1, 0], sizes = [2, 8, 8, 128], strides = [1, 1, 1, 1]} : vector<2x10x10x128xbf16> to vector<2x8x8x128xbf16>
    %35 = vector.shape_cast %34 : vector<2x8x8x128xbf16> to vector<128x128xbf16>
    %36 = vector.extract_strided_slice %19 {offsets = [0, 2, 2, 0], sizes = [2, 8, 8, 128], strides = [1, 1, 1, 1]} : vector<2x10x10x128xbf16> to vector<2x8x8x128xbf16>
    %37 = vector.shape_cast %36 : vector<2x8x8x128xbf16> to vector<128x128xbf16>
    %38 = tpu.concatenate %21, %23, %25, %27, %29, %31, %33, %35, %37 in 1 : vector<128x128xbf16>, vector<128x128xbf16>, vector<128x128xbf16>, vector<128x128xbf16>, vector<128x128xbf16>, vector<128x128xbf16>, vector<128x128xbf16>, vector<128x128xbf16>, vector<128x128xbf16> -> vector<128x1152xbf16>
    %c0_12 = arith.constant 0 : index
    %c0_13 = arith.constant 0 : index
    %39 = vector.load %arg5[%c0_12, %c0_13] : memref<1152x128xbf16, #tpu.memory_space<vmem>>, vector<1152x128xbf16>
    %cst_14 = arith.constant dense<0.000000e+00> : vector<128x128xf32>
    %40 = tpu.matmul %38, %39, %cst_14 {dimension_numbers = #tpu.dot_dimension_numbers<[1], [0], [0], [1], [0, 0, 1, 1], [], []>} : vector<128x1152xbf16>, vector<1152x128xbf16>, vector<128x128xf32> -> vector<128x128xf32>
    %c0_15 = arith.constant 0 : index
    %c0_16 = arith.constant 0 : index
    %41 = vector.load %arg6[%c0_15, %c0_16] : memref<1x128xf32, #tpu.memory_space<vmem>>, vector<1x128xf32>
    %42 = vector.broadcast %41 : vector<1x128xf32> to vector<128x128xf32>
    %43 = arith.addf %40, %42 : vector<128x128xf32>
    %cst_17 = arith.constant 0.000000e+00 : f32
    %44 = vector.broadcast %cst_17 : f32 to vector<128x128xf32>
    %45 = arith.maximumf %43, %44 : vector<128x128xf32>
    %46 = arith.truncf %45 : vector<128x128xf32> to vector<128x128xbf16>
    %c0_18 = arith.constant 0 : index
    %c0_19 = arith.constant 0 : index
    %47 = vector.load %arg7[%c0_18, %c0_19] : memref<128x256xbf16, #tpu.memory_space<vmem>>, vector<128x256xbf16>
    %cst_20 = arith.constant dense<0.000000e+00> : vector<128x256xf32>
    %48 = tpu.matmul %46, %47, %cst_20 {dimension_numbers = #tpu.dot_dimension_numbers<[1], [0], [0], [1], [0, 0, 1, 1], [], []>} : vector<128x128xbf16>, vector<128x256xbf16>, vector<128x256xf32> -> vector<128x256xf32>
    %c0_21 = arith.constant 0 : index
    %c0_22 = arith.constant 0 : index
    %49 = vector.load %arg8[%c0_21, %c0_22] : memref<1x256xf32, #tpu.memory_space<vmem>>, vector<1x256xf32>
    %50 = vector.broadcast %49 : vector<1x256xf32> to vector<128x256xf32>
    %51 = arith.addf %48, %50 : vector<128x256xf32>
    %52 = arith.addf %51, %13 : vector<128x256xf32>
    %cst_23 = arith.constant 0.000000e+00 : f32
    %53 = vector.broadcast %cst_23 : f32 to vector<128x256xf32>
    %54 = arith.maximumf %52, %53 : vector<128x256xf32>
    %55 = arith.truncf %54 : vector<128x256xf32> to vector<128x256xbf16>
    %c0_24 = arith.constant 0 : index
    %c0_25 = arith.constant 0 : index
    %56 = vector.load %arg9[%c0_24, %c0_25] : memref<256x128xbf16, #tpu.memory_space<vmem>>, vector<256x128xbf16>
    %cst_26 = arith.constant dense<0.000000e+00> : vector<128x128xf32>
    %57 = tpu.matmul %55, %56, %cst_26 {dimension_numbers = #tpu.dot_dimension_numbers<[1], [0], [0], [1], [0, 0, 1, 1], [], []>} : vector<128x256xbf16>, vector<256x128xbf16>, vector<128x128xf32> -> vector<128x128xf32>
    %c0_27 = arith.constant 0 : index
    %c0_28 = arith.constant 0 : index
    %58 = vector.load %arg10[%c0_27, %c0_28] : memref<1x128xf32, #tpu.memory_space<vmem>>, vector<1x128xf32>
    %59 = vector.broadcast %58 : vector<1x128xf32> to vector<128x128xf32>
    %60 = arith.addf %57, %59 : vector<128x128xf32>
    %cst_29 = arith.constant 0.000000e+00 : f32
    %61 = vector.broadcast %cst_29 : f32 to vector<128x128xf32>
    %62 = arith.maximumf %60, %61 : vector<128x128xf32>
    %63 = arith.truncf %62 : vector<128x128xf32> to vector<128x128xbf16>
    %64 = vector.shape_cast %63 : vector<128x128xbf16> to vector<2x8x8x128xbf16>
    %cst_30 = arith.constant 0.000000e+00 : bf16
    %65 = vector.broadcast %cst_30 : bf16 to vector<2x1x8x128xbf16>
    %66 = tpu.concatenate %65, %64, %65 in 1 : vector<2x1x8x128xbf16>, vector<2x8x8x128xbf16>, vector<2x1x8x128xbf16> -> vector<2x10x8x128xbf16>
    %cst_31 = arith.constant 0.000000e+00 : bf16
    %67 = vector.broadcast %cst_31 : bf16 to vector<2x10x1x128xbf16>
    %68 = tpu.concatenate %67, %66, %67 in 2 : vector<2x10x1x128xbf16>, vector<2x10x8x128xbf16>, vector<2x10x1x128xbf16> -> vector<2x10x10x128xbf16>
    %69 = vector.extract_strided_slice %68 {offsets = [0, 0, 0, 0], sizes = [2, 8, 8, 128], strides = [1, 1, 1, 1]} : vector<2x10x10x128xbf16> to vector<2x8x8x128xbf16>
    %70 = vector.shape_cast %69 : vector<2x8x8x128xbf16> to vector<128x128xbf16>
    %71 = vector.extract_strided_slice %68 {offsets = [0, 0, 1, 0], sizes = [2, 8, 8, 128], strides = [1, 1, 1, 1]} : vector<2x10x10x128xbf16> to vector<2x8x8x128xbf16>
    %72 = vector.shape_cast %71 : vector<2x8x8x128xbf16> to vector<128x128xbf16>
    %73 = vector.extract_strided_slice %68 {offsets = [0, 0, 2, 0], sizes = [2, 8, 8, 128], strides = [1, 1, 1, 1]} : vector<2x10x10x128xbf16> to vector<2x8x8x128xbf16>
    %74 = vector.shape_cast %73 : vector<2x8x8x128xbf16> to vector<128x128xbf16>
    %75 = vector.extract_strided_slice %68 {offsets = [0, 1, 0, 0], sizes = [2, 8, 8, 128], strides = [1, 1, 1, 1]} : vector<2x10x10x128xbf16> to vector<2x8x8x128xbf16>
    %76 = vector.shape_cast %75 : vector<2x8x8x128xbf16> to vector<128x128xbf16>
    %77 = vector.extract_strided_slice %68 {offsets = [0, 1, 1, 0], sizes = [2, 8, 8, 128], strides = [1, 1, 1, 1]} : vector<2x10x10x128xbf16> to vector<2x8x8x128xbf16>
    %78 = vector.shape_cast %77 : vector<2x8x8x128xbf16> to vector<128x128xbf16>
    %79 = vector.extract_strided_slice %68 {offsets = [0, 1, 2, 0], sizes = [2, 8, 8, 128], strides = [1, 1, 1, 1]} : vector<2x10x10x128xbf16> to vector<2x8x8x128xbf16>
    %80 = vector.shape_cast %79 : vector<2x8x8x128xbf16> to vector<128x128xbf16>
    %81 = vector.extract_strided_slice %68 {offsets = [0, 2, 0, 0], sizes = [2, 8, 8, 128], strides = [1, 1, 1, 1]} : vector<2x10x10x128xbf16> to vector<2x8x8x128xbf16>
    %82 = vector.shape_cast %81 : vector<2x8x8x128xbf16> to vector<128x128xbf16>
    %83 = vector.extract_strided_slice %68 {offsets = [0, 2, 1, 0], sizes = [2, 8, 8, 128], strides = [1, 1, 1, 1]} : vector<2x10x10x128xbf16> to vector<2x8x8x128xbf16>
    %84 = vector.shape_cast %83 : vector<2x8x8x128xbf16> to vector<128x128xbf16>
    %85 = vector.extract_strided_slice %68 {offsets = [0, 2, 2, 0], sizes = [2, 8, 8, 128], strides = [1, 1, 1, 1]} : vector<2x10x10x128xbf16> to vector<2x8x8x128xbf16>
    %86 = vector.shape_cast %85 : vector<2x8x8x128xbf16> to vector<128x128xbf16>
    %87 = tpu.concatenate %70, %72, %74, %76, %78, %80, %82, %84, %86 in 1 : vector<128x128xbf16>, vector<128x128xbf16>, vector<128x128xbf16>, vector<128x128xbf16>, vector<128x128xbf16>, vector<128x128xbf16>, vector<128x128xbf16>, vector<128x128xbf16>, vector<128x128xbf16> -> vector<128x1152xbf16>
    %c0_32 = arith.constant 0 : index
    %c0_33 = arith.constant 0 : index
    %88 = vector.load %arg11[%c0_32, %c0_33] : memref<1152x128xbf16, #tpu.memory_space<vmem>>, vector<1152x128xbf16>
    %cst_34 = arith.constant dense<0.000000e+00> : vector<128x128xf32>
    %89 = tpu.matmul %87, %88, %cst_34 {dimension_numbers = #tpu.dot_dimension_numbers<[1], [0], [0], [1], [0, 0, 1, 1], [], []>} : vector<128x1152xbf16>, vector<1152x128xbf16>, vector<128x128xf32> -> vector<128x128xf32>
    %c0_35 = arith.constant 0 : index
    %c0_36 = arith.constant 0 : index
    %90 = vector.load %arg12[%c0_35, %c0_36] : memref<1x128xf32, #tpu.memory_space<vmem>>, vector<1x128xf32>
    %91 = vector.broadcast %90 : vector<1x128xf32> to vector<128x128xf32>
    %92 = arith.addf %89, %91 : vector<128x128xf32>
    %cst_37 = arith.constant 0.000000e+00 : f32
    %93 = vector.broadcast %cst_37 : f32 to vector<128x128xf32>
    %94 = arith.maximumf %92, %93 : vector<128x128xf32>
    %95 = arith.truncf %94 : vector<128x128xf32> to vector<128x128xbf16>
    %c0_38 = arith.constant 0 : index
    %c0_39 = arith.constant 0 : index
    %96 = vector.load %arg13[%c0_38, %c0_39] : memref<128x256xbf16, #tpu.memory_space<vmem>>, vector<128x256xbf16>
    %cst_40 = arith.constant dense<0.000000e+00> : vector<128x256xf32>
    %97 = tpu.matmul %95, %96, %cst_40 {dimension_numbers = #tpu.dot_dimension_numbers<[1], [0], [0], [1], [0, 0, 1, 1], [], []>} : vector<128x128xbf16>, vector<128x256xbf16>, vector<128x256xf32> -> vector<128x256xf32>
    %c0_41 = arith.constant 0 : index
    %c0_42 = arith.constant 0 : index
    %98 = vector.load %arg14[%c0_41, %c0_42] : memref<1x256xf32, #tpu.memory_space<vmem>>, vector<1x256xf32>
    %99 = vector.broadcast %98 : vector<1x256xf32> to vector<128x256xf32>
    %100 = arith.addf %97, %99 : vector<128x256xf32>
    %101 = arith.addf %100, %54 : vector<128x256xf32>
    %cst_43 = arith.constant 0.000000e+00 : f32
    %102 = vector.broadcast %cst_43 : f32 to vector<128x256xf32>
    %103 = arith.maximumf %101, %102 : vector<128x256xf32>
    %104 = vector.shape_cast %103 : vector<128x256xf32> to vector<2x64x256xf32>
    %cst_44 = arith.constant dense<0.000000e+00> : vector<2x256xf32>
    %105 = vector.multi_reduction <add>, %104, %cst_44 [1] : vector<2x64x256xf32> to vector<2x256xf32>
    %cst_45 = arith.constant 6.400000e+01 : f32
    %106 = vector.broadcast %cst_45 : f32 to vector<2x256xf32>
    %107 = arith.divf %105, %106 : vector<2x256xf32>
    %108 = arith.truncf %107 : vector<2x256xf32> to vector<2x256xbf16>
    %c0_46 = arith.constant 0 : index
    %c0_47 = arith.constant 0 : index
    %109 = vector.load %arg15[%c0_46, %c0_47] : memref<256x128xbf16, #tpu.memory_space<vmem>>, vector<256x128xbf16>
    %cst_48 = arith.constant dense<0.000000e+00> : vector<2x128xf32>
    %110 = tpu.matmul %108, %109, %cst_48 {dimension_numbers = #tpu.dot_dimension_numbers<[1], [0], [0], [1], [0, 0, 1, 1], [], []>} : vector<2x256xbf16>, vector<256x128xbf16>, vector<2x128xf32> -> vector<2x128xf32>
    %c0_49 = arith.constant 0 : index
    %c0_50 = arith.constant 0 : index
    %111 = vector.load %arg16[%c0_49, %c0_50] : memref<1x128xf32, #tpu.memory_space<vmem>>, vector<1x128xf32>
    %112 = vector.broadcast %111 : vector<1x128xf32> to vector<2x128xf32>
    %113 = arith.addf %110, %112 : vector<2x128xf32>
    %c0_51 = arith.constant 0 : index
    %c0_52 = arith.constant 0 : index
    %114 = vector.load %arg17[%c0_51, %c0_52] : memref<2x128xf32, #tpu.memory_space<vmem>>, vector<2x128xf32>
    tpu.vector_store %arg17[%c0_51, %c0_52], %113 {strides = array<i32>} : memref<2x128xf32, #tpu.memory_space<vmem>>, vector<2x128xf32>,
    return
  }
  func.func @transform_0(%arg0: i32) -> (i32, i32, i32, i32) {
    %c0_i32 = arith.constant 0 : i32
    %c0_i32_0 = arith.constant 0 : i32
    %c0_i32_1 = arith.constant 0 : i32
    %c0_i32_2 = arith.constant 0 : i32
    return %arg0, %c0_i32, %c0_i32_0, %c0_i32_1 : i32, i32, i32, i32
  }
  func.func @transform_1(%arg0: i32) -> (i32, i32) {
    %c0_i32 = arith.constant 0 : i32
    %c0_i32_0 = arith.constant 0 : i32
    %c0_i32_1 = arith.constant 0 : i32
    return %c0_i32, %c0_i32_0 : i32, i32
  }
  func.func @transform_2(%arg0: i32) -> (i32, i32) {
    %c0_i32 = arith.constant 0 : i32
    %c0_i32_0 = arith.constant 0 : i32
    %c0_i32_1 = arith.constant 0 : i32
    return %c0_i32, %c0_i32_0 : i32, i32
  }
  func.func @transform_3(%arg0: i32) -> (i32, i32) {
    %c0_i32 = arith.constant 0 : i32
    %c0_i32_0 = arith.constant 0 : i32
    %c0_i32_1 = arith.constant 0 : i32
    return %c0_i32, %c0_i32_0 : i32, i32
  }
  func.func @transform_4(%arg0: i32) -> (i32, i32) {
    %c0_i32 = arith.constant 0 : i32
    %c0_i32_0 = arith.constant 0 : i32
    %c0_i32_1 = arith.constant 0 : i32
    return %c0_i32, %c0_i32_0 : i32, i32
  }
  func.func @transform_5(%arg0: i32) -> (i32, i32) {
    %c0_i32 = arith.constant 0 : i32
    %c0_i32_0 = arith.constant 0 : i32
    %c0_i32_1 = arith.constant 0 : i32
    return %c0_i32, %c0_i32_0 : i32, i32
  }
  func.func @transform_6(%arg0: i32) -> (i32, i32) {
    %c0_i32 = arith.constant 0 : i32
    %c0_i32_0 = arith.constant 0 : i32
    %c0_i32_1 = arith.constant 0 : i32
    return %c0_i32, %c0_i32_0 : i32, i32
  }
  func.func @transform_7(%arg0: i32) -> (i32, i32) {
    %c0_i32 = arith.constant 0 : i32
    %c0_i32_0 = arith.constant 0 : i32
    %c0_i32_1 = arith.constant 0 : i32
    return %c0_i32, %c0_i32_0 : i32, i32
  }
  func.func @transform_8(%arg0: i32) -> (i32, i32) {
    %c0_i32 = arith.constant 0 : i32
    %c0_i32_0 = arith.constant 0 : i32
    %c0_i32_1 = arith.constant 0 : i32
    return %c0_i32, %c0_i32_0 : i32, i32
  }
  func.func @transform_9(%arg0: i32) -> (i32, i32) {
    %c0_i32 = arith.constant 0 : i32
    %c0_i32_0 = arith.constant 0 : i32
    %c0_i32_1 = arith.constant 0 : i32
    return %c0_i32, %c0_i32_0 : i32, i32
  }
  func.func @transform_10(%arg0: i32) -> (i32, i32) {
    %c0_i32 = arith.constant 0 : i32
    %c0_i32_0 = arith.constant 0 : i32
    %c0_i32_1 = arith.constant 0 : i32
    return %c0_i32, %c0_i32_0 : i32, i32
  }
  func.func @transform_11(%arg0: i32) -> (i32, i32) {
    %c0_i32 = arith.constant 0 : i32
    %c0_i32_0 = arith.constant 0 : i32
    %c0_i32_1 = arith.constant 0 : i32
    return %c0_i32, %c0_i32_0 : i32, i32
  }
  func.func @transform_12(%arg0: i32) -> (i32, i32) {
    %c0_i32 = arith.constant 0 : i32
    %c0_i32_0 = arith.constant 0 : i32
    %c0_i32_1 = arith.constant 0 : i32
    return %c0_i32, %c0_i32_0 : i32, i32
  }
  func.func @transform_13(%arg0: i32) -> (i32, i32) {
    %c0_i32 = arith.constant 0 : i32
    %c0_i32_0 = arith.constant 0 : i32
    %c0_i32_1 = arith.constant 0 : i32
    return %c0_i32, %c0_i32_0 : i32, i32
  }
  func.func @transform_14(%arg0: i32) -> (i32, i32) {
    %c0_i32 = arith.constant 0 : i32
    %c0_i32_0 = arith.constant 0 : i32
    %c0_i32_1 = arith.constant 0 : i32
    return %c0_i32, %c0_i32_0 : i32, i32
  }
  func.func @transform_15(%arg0: i32) -> (i32, i32) {
    %c0_i32 = arith.constant 0 : i32
    %c0_i32_0 = arith.constant 0 : i32
    %c0_i32_1 = arith.constant 0 : i32
    return %c0_i32, %c0_i32_0 : i32, i32
  }
  func.func @transform_16(%arg0: i32) -> (i32, i32) {
    %c0_i32 = arith.constant 0 : i32
    %c0_i32_0 = arith.constant 0 : i32
    return %arg0, %c0_i32 : i32, i32
  }
}

</mosaic_0001>

<llo_original>
// kernel: network_wrn101_forward.2
$region0: #{network_wrn101_forward.2}
  #allocation0 [shape = 'u32[]', space=smem, size = 0x4, offset = 0x4, fixed_abs, tag = 'smem constant byte address 0x4 - core index']
  #allocation1 [shape = 'u32[144,128]{1,0:T(1,128)}', space=vmem, size = 0x12000, scoped, tag = 'internal scratch']
  %s0 = inlined_call_operand.vmem [shape: bf16[512,160], index: 0, kind: input, shape index: {}]
  %s1 = inlined_call_operand.vmem [shape: bf16[160,128], index: 1, kind: input, shape index: {}]
  %s2 = inlined_call_operand.vmem [shape: f32[1,128], index: 2, kind: input, shape index: {}]
  %s3 = inlined_call_operand.vmem [shape: bf16[2,8,8,128], index: 3, kind: output, shape index: {}]
  %s4 = sld [smem:[#allocation0]]
  $region22: #{network_wrn101_forward.2} parent=0
    _
  %s6 = ssub.s32 1, %s4
  %s7 = scalar_select 0, %s6, %s4
  // Predicated region
  $region2: #{network_wrn101_forward.2} parent=0 // pred_check
    _
  $region3: #{network_wrn101_forward.2} parent=0 // pred_check_branch
    %9 = sbr.rel (0) target = $region5
  $region4: #{network_wrn101_forward.2} parent=0 // pred_region
    _
  $region5: #{network_wrn101_forward.2} parent=0 // pred_fallthru
    _
  // Predicated region
  $region6: #{network_wrn101_forward.2} parent=0 // pred_check
    _
  $region7: #{network_wrn101_forward.2} parent=0 // pred_check_branch
    %11 = sbr.rel (0) target = $region9
  $region8: #{network_wrn101_forward.2} parent=0 // pred_region
    _
  $region9: #{network_wrn101_forward.2} parent=0 // pred_fallthru
    _
  // Predicated region
  $region10: #{network_wrn101_forward.2} parent=0 // pred_check
    _
  $region11: #{network_wrn101_forward.2} parent=0 // pred_check_branch
    %13 = sbr.rel (0) target = $region13
  $region12: #{network_wrn101_forward.2} parent=0 // pred_region
    _
  $region13: #{network_wrn101_forward.2} parent=0 // pred_fallthru
    _
  %v15 = vld [vmem:[%s0] sm:$0xff]
  %v16 = vld [vmem:[%s0 + $0x8] sm:$0xff]
  %v17 = vld [vmem:[%s0 + $0x10] sm:$0xff]
  %v18 = vld [vmem:[%s0 + $0x18] sm:$0xff]
  %v19 = vld [vmem:[%s0 + $0x20] sm:$0xff]
  %v20 = vld [vmem:[%s0 + $0x28] sm:$0xff]
  %v21 = vld [vmem:[%s0 + $0x30] sm:$0xff]
  %v22 = vld [vmem:[%s0 + $0x38] sm:$0xff]
  %v23 = vld [vmem:[%s0 + $0x40] sm:$0xff]
  %v24 = vld [vmem:[%s0 + $0x48] sm:$0xff]
  %v25 = vld [vmem:[%s0 + $0x50] sm:$0xff]
  %v26 = vld [vmem:[%s0 + $0x58] sm:$0xff]
  %v27 = vld [vmem:[%s0 + $0x60] sm:$0xff]
  %v28 = vld [vmem:[%s0 + $0x68] sm:$0xff]
  %v29 = vld [vmem:[%s0 + $0x70] sm:$0xff]
  %v30 = vld [vmem:[%s0 + $0x78] sm:$0xff]
  %v31 = vld [vmem:[%s0 + $0x80] sm:$0xff]
  %v32 = vld [vmem:[%s0 + $0x88] sm:$0xff]
  %v33 = vld [vmem:[%s0 + $0x90] sm:$0xff]
  %v34 = vld [vmem:[%s0 + $0x98] sm:$0xff]
  %v35 = vld [vmem:[%s0 + $0xa0] sm:$0xff]
  %v36 = vld [vmem:[%s0 + $0xa8] sm:$0xff]
  %v37 = vld [vmem:[%s0 + $0xb0] sm:$0xff]
  %v38 = vld [vmem:[%s0 + $0xb8] sm:$0xff]
  %v39 = vld [vmem:[%s0 + $0xc0] sm:$0xff]
  %v40 = vld [vmem:[%s0 + $0xc8] sm:$0xff]
  %v41 = vld [vmem:[%s0 + $0xd0] sm:$0xff]
  %v42 = vld [vmem:[%s0 + $0xd8] sm:$0xff]
  %v43 = vld [vmem:[%s0 + $0xe0] sm:$0xff]
  %v44 = vld [vmem:[%s0 + $0xe8] sm:$0xff]
  %v45 = vld [vmem:[%s0 + $0xf0] sm:$0xff]
  %v46 = vld [vmem:[%s0 + $0xf8] sm:$0xff]
  %v47 = vld [vmem:[%s0 + $0x100] sm:$0xff]
  %v48 = vld [vmem:[%s0 + $0x108] sm:$0xff]
  %v49 = vld [vmem:[%s0 + $0x110] sm:$0xff]
  %v50 = vld [vmem:[%s0 + $0x118] sm:$0xff]
  %v51 = vld [vmem:[%s0 + $0x120] sm:$0xff]
  %v52 = vld [vmem:[%s0 + $0x128] sm:$0xff]
  %v53 = vld [vmem:[%s0 + $0x130] sm:$0xff]
  %v54 = vld [vmem:[%s0 + $0x138] sm:$0xff]
  %v55 = vld [vmem:[%s0 + $0x140] sm:$0xff]
  %v56 = vld [vmem:[%s0 + $0x148] sm:$0xff]
  %v57 = vld [vmem:[%s0 + $0x150] sm:$0xff]
  %v58 = vld [vmem:[%s0 + $0x158] sm:$0xff]
  %v59 = vld [vmem:[%s0 + $0x160] sm:$0xff]
  %v60 = vld [vmem:[%s0 + $0x168] sm:$0xff]
  %v61 = vld [vmem:[%s0 + $0x170] sm:$0xff]
  %v62 = vld [vmem:[%s0 + $0x178] sm:$0xff]
  %v63 = vld [vmem:[%s0 + $0x180] sm:$0xff]
  %v64 = vld [vmem:[%s0 + $0x188] sm:$0xff]
  %v65 = vld [vmem:[%s0 + $0x190] sm:$0xff]
  %v66 = vld [vmem:[%s0 + $0x198] sm:$0xff]
  %v67 = vld [vmem:[%s0 + $0x1a0] sm:$0xff]
  %v68 = vld [vmem:[%s0 + $0x1a8] sm:$0xff]
  %v69 = vld [vmem:[%s0 + $0x1b0] sm:$0xff]
  %v70 = vld [vmem:[%s0 + $0x1b8] sm:$0xff]
  %v71 = vld [vmem:[%s0 + $0x1c0] sm:$0xff]
  %v72 = vld [vmem:[%s0 + $0x1c8] sm:$0xff]
  %v73 = vld [vmem:[%s0 + $0x1d0] sm:$0xff]
  %v74 = vld [vmem:[%s0 + $0x1d8] sm:$0xff]
  %v75 = vld [vmem:[%s0 + $0x1e0] sm:$0xff]
  %v76 = vld [vmem:[%s0 + $0x1e8] sm:$0xff]
  %v77 = vld [vmem:[%s0 + $0x1f0] sm:$0xff]
  %v78 = vld [vmem:[%s0 + $0x1f8] sm:$0xff]
  %v79 = vld [vmem:[%s1] sm:$0xf]
  %v80 = vld [vmem:[%s1 + $0x4] sm:$0xf]
  %v81 = vld [vmem:[%s1 + $0x8] sm:$0xf]
  %v82 = vld [vmem:[%s1 + $0xc] sm:$0xf]
  %v83 = vld [vmem:[%s1 + $0x10] sm:$0xf]
  %v84 = vld [vmem:[%s1 + $0x14] sm:$0xf]
  %v85 = vld [vmem:[%s1 + $0x18] sm:$0xf]
  %v86 = vld [vmem:[%s1 + $0x1c] sm:$0xf]
  %v87 = vld [vmem:[%s1 + $0x20] sm:$0xf]
  %v88 = vld [vmem:[%s1 + $0x24] sm:$0xf]
  %v89 = vld [vmem:[%s1 + $0x28] sm:$0xf]
  %v90 = vld [vmem:[%s1 + $0x2c] sm:$0xf]
  %v91 = vld [vmem:[%s1 + $0x30] sm:$0xf]
  %v92 = vld [vmem:[%s1 + $0x34] sm:$0xf]
  %v93 = vld [vmem:[%s1 + $0x38] sm:$0xf]
  %v94 = vld [vmem:[%s1 + $0x3c] sm:$0xf]
  %v95 = vld [vmem:[%s1 + $0x40] sm:$0xf]
  %v96 = vld [vmem:[%s1 + $0x44] sm:$0xf]
  %v97 = vld [vmem:[%s1 + $0x48] sm:$0xf]
  %v98 = vld [vmem:[%s1 + $0x4c] sm:$0xf]
  %v99 = vld [vmem:[%s2] sm:$0x1]
  %v101 = vlaneseq
  %v102 = vshrl.u32 %v101, 7
  %v103 = vsub.s32 0, %v102
  %v104 = vrot.slane %v99, %v103
  %v170 = vunpack.c.l.b16 %v15
  %v171 = vunpack.c.h.b16 %v15
  %v172 = vunpack.c.l.b16 %v16
  %v173 = vunpack.c.h.b16 %v16
  %v174 = vunpack.c.l.b16 %v17
  %v175 = vunpack.c.h.b16 %v17
  %v176 = vunpack.c.l.b16 %v18
  %v177 = vunpack.c.h.b16 %v18
  %v178 = vunpack.c.l.b16 %v19
  %v179 = vunpack.c.h.b16 %v19
  %v180 = vunpack.c.l.b16 %v20
  %v181 = vunpack.c.h.b16 %v20
  %v182 = vunpack.c.l.b16 %v21
  %v183 = vunpack.c.h.b16 %v21
  %v184 = vunpack.c.l.b16 %v22
  %v185 = vunpack.c.h.b16 %v22
  %v186 = vunpack.c.l.b16 %v23
  %v187 = vunpack.c.h.b16 %v23
  %v188 = vunpack.c.l.b16 %v24
  %v189 = vunpack.c.h.b16 %v24
  %v190 = vunpack.c.l.b16 %v25
  %v191 = vunpack.c.h.b16 %v25
  %v192 = vunpack.c.l.b16 %v26
  %v193 = vunpack.c.h.b16 %v26
  %v194 = vunpack.c.l.b16 %v27
  %v195 = vunpack.c.h.b16 %v27
  %v196 = vunpack.c.l.b16 %v28
  %v197 = vunpack.c.h.b16 %v28
  %v198 = vunpack.c.l.b16 %v29
  %v199 = vunpack.c.h.b16 %v29
  %v200 = vunpack.c.l.b16 %v30
  %v201 = vunpack.c.h.b16 %v30
  %v202 = vunpack.c.l.b16 %v31
  %v203 = vunpack.c.h.b16 %v31
  %v204 = vunpack.c.l.b16 %v32
  %v205 = vunpack.c.h.b16 %v32
  %v206 = vunpack.c.l.b16 %v33
  %v207 = vunpack.c.h.b16 %v33
  %v208 = vunpack.c.l.b16 %v34
  %v209 = vunpack.c.h.b16 %v34
  %v210 = vunpack.c.l.b16 %v35
  %v211 = vunpack.c.h.b16 %v35
  %v212 = vunpack.c.l.b16 %v36
  %v213 = vunpack.c.h.b16 %v36
  %v214 = vunpack.c.l.b16 %v37
  %v215 = vunpack.c.h.b16 %v37
  %v216 = vunpack.c.l.b16 %v38
  %v217 = vunpack.c.h.b16 %v38
  %v218 = vunpack.c.l.b16 %v39
  %v219 = vunpack.c.h.b16 %v39
  %v220 = vunpack.c.l.b16 %v40
  %v221 = vunpack.c.h.b16 %v40
  %v222 = vunpack.c.l.b16 %v41
  %v223 = vunpack.c.h.b16 %v41
  %v224 = vunpack.c.l.b16 %v42
  %v225 = vunpack.c.h.b16 %v42
  %v226 = vunpack.c.l.b16 %v43
  %v227 = vunpack.c.h.b16 %v43
  %v228 = vunpack.c.l.b16 %v44
  %v229 = vunpack.c.h.b16 %v44
  %v230 = vunpack.c.l.b16 %v45
  %v231 = vunpack.c.h.b16 %v45
  %v232 = vunpack.c.l.b16 %v46
  %v233 = vunpack.c.h.b16 %v46
  %v234 = vunpack.c.l.b16 %v47
  %v235 = vunpack.c.h.b16 %v47
  %v236 = vunpack.c.l.b16 %v48
  %v237 = vunpack.c.h.b16 %v48
  %v238 = vunpack.c.l.b16 %v49
  %v239 = vunpack.c.h.b16 %v49
  %v240 = vunpack.c.l.b16 %v50
  %v241 = vunpack.c.h.b16 %v50
  %v242 = vunpack.c.l.b16 %v51
  %v243 = vunpack.c.h.b16 %v51
  %v244 = vunpack.c.l.b16 %v52
  %v245 = vunpack.c.h.b16 %v52
  %v246 = vunpack.c.l.b16 %v53
  %v247 = vunpack.c.h.b16 %v53
  %v248 = vunpack.c.l.b16 %v54
  %v249 = vunpack.c.h.b16 %v54
  %v250 = vunpack.c.l.b16 %v55
  %v251 = vunpack.c.h.b16 %v55
  %v252 = vunpack.c.l.b16 %v56
  %v253 = vunpack.c.h.b16 %v56
  %v254 = vunpack.c.l.b16 %v57
  %v255 = vunpack.c.h.b16 %v57
  %v256 = vunpack.c.l.b16 %v58
  %v257 = vunpack.c.h.b16 %v58
  %v258 = vunpack.c.l.b16 %v59
  %v259 = vunpack.c.h.b16 %v59
  %v260 = vunpack.c.l.b16 %v60
  %v261 = vunpack.c.h.b16 %v60
  %v262 = vunpack.c.l.b16 %v61
  %v263 = vunpack.c.h.b16 %v61
  %v264 = vunpack.c.l.b16 %v62
  %v265 = vunpack.c.h.b16 %v62
  %v266 = vunpack.c.l.b16 %v63
  %v267 = vunpack.c.h.b16 %v63
  %v268 = vunpack.c.l.b16 %v64
  %v269 = vunpack.c.h.b16 %v64
  %v270 = vunpack.c.l.b16 %v65
  %v271 = vunpack.c.h.b16 %v65
  %v272 = vunpack.c.l.b16 %v66
  %v273 = vunpack.c.h.b16 %v66
  %v274 = vunpack.c.l.b16 %v67
  %v275 = vunpack.c.h.b16 %v67
  %v276 = vunpack.c.l.b16 %v68
  %v277 = vunpack.c.h.b16 %v68
  %v278 = vunpack.c.l.b16 %v69
  %v279 = vunpack.c.h.b16 %v69
  %v280 = vunpack.c.l.b16 %v70
  %v281 = vunpack.c.h.b16 %v70
  %v282 = vunpack.c.l.b16 %v71
  %v283 = vunpack.c.h.b16 %v71
  %v284 = vunpack.c.l.b16 %v72
  %v285 = vunpack.c.h.b16 %v72
  %v286 = vunpack.c.l.b16 %v73
  %v287 = vunpack.c.h.b16 %v73
  %v288 = vunpack.c.l.b16 %v74
  %v289 = vunpack.c.h.b16 %v74
  %v290 = vunpack.c.l.b16 %v75
  %v291 = vunpack.c.h.b16 %v75
  %v292 = vunpack.c.l.b16 %v76
  %v293 = vunpack.c.h.b16 %v76
  %v294 = vunpack.c.l.b16 %v77
  %v295 = vunpack.c.h.b16 %v77
  %v296 = vunpack.c.l.b16 %v78
  %v297 = vunpack.c.h.b16 %v78
  %v298 = vpack.c.b16 %v172, %v170
  %v299 = vpack.c.b16 %v173, %v171
  %v300 = vpack.c.b16 %v176, %v174
  %v301 = vpack.c.b16 %v177, %v175
  %v302 = vpack.c.b16 %v180, %v178
  %v303 = vpack.c.b16 %v181, %v179
  %v304 = vpack.c.b16 %v184, %v182
  %v305 = vpack.c.b16 %v185, %v183
  %v306 = vpack.c.b16 %v188, %v186
  %v307 = vpack.c.b16 %v189, %v187
  %v308 = vpack.c.b16 %v192, %v190
  %v309 = vpack.c.b16 %v193, %v191
  %v310 = vpack.c.b16 %v196, %v194
  %v311 = vpack.c.b16 %v197, %v195
  %v312 = vpack.c.b16 %v200, %v198
  %v313 = vpack.c.b16 %v201, %v199
  %v314 = vpack.c.b16 %v204, %v202
  %v315 = vpack.c.b16 %v205, %v203
  %v316 = vpack.c.b16 %v208, %v206
  %v317 = vpack.c.b16 %v209, %v207
  %v318 = vpack.c.b16 %v212, %v210
  %v319 = vpack.c.b16 %v213, %v211
  %v320 = vpack.c.b16 %v216, %v214
  %v321 = vpack.c.b16 %v217, %v215
  %v322 = vpack.c.b16 %v220, %v218
  %v323 = vpack.c.b16 %v221, %v219
  %v324 = vpack.c.b16 %v224, %v222
  %v325 = vpack.c.b16 %v225, %v223
  %v326 = vpack.c.b16 %v228, %v226
  %v327 = vpack.c.b16 %v229, %v227
  %v328 = vpack.c.b16 %v232, %v230
  %v329 = vpack.c.b16 %v233, %v231
  %v330 = vpack.c.b16 %v236, %v234
  %v331 = vpack.c.b16 %v237, %v235
  %v332 = vpack.c.b16 %v240, %v238
  %v333 = vpack.c.b16 %v241, %v239
  %v334 = vpack.c.b16 %v244, %v242
  %v335 = vpack.c.b16 %v245, %v243
  %v336 = vpack.c.b16 %v248, %v246
  %v337 = vpack.c.b16 %v249, %v247
  %v338 = vpack.c.b16 %v252, %v250
  %v339 = vpack.c.b16 %v253, %v251
  %v340 = vpack.c.b16 %v256, %v254
  %v341 = vpack.c.b16 %v257, %v255
  %v342 = vpack.c.b16 %v260, %v258
  %v343 = vpack.c.b16 %v261, %v259
  %v344 = vpack.c.b16 %v264, %v262
  %v345 = vpack.c.b16 %v265, %v263
  %v346 = vpack.c.b16 %v268, %v266
  %v347 = vpack.c.b16 %v269, %v267
  %v348 = vpack.c.b16 %v272, %v270
  %v349 = vpack.c.b16 %v273, %v271
  %v350 = vpack.c.b16 %v276, %v274
  %v351 = vpack.c.b16 %v277, %v275
  %v352 = vpack.c.b16 %v280, %v278
  %v353 = vpack.c.b16 %v281, %v279
  %v354 = vpack.c.b16 %v284, %v282
  %v355 = vpack.c.b16 %v285, %v283
  %v356 = vpack.c.b16 %v288, %v286
  %v357 = vpack.c.b16 %v289, %v287
  %v358 = vpack.c.b16 %v292, %v290
  %v359 = vpack.c.b16 %v293, %v291
  %v360 = vpack.c.b16 %v296, %v294
  %v361 = vpack.c.b16 %v297, %v295
  %v414 = vunpack.c.l.b16 %v79
  %v415 = vunpack.c.l.b16 %v80
  %v416 = vunpack.c.l.b16 %v81
  %v417 = vunpack.c.l.b16 %v82
  %v418 = vunpack.c.l.b16 %v83
  %v419 = vunpack.c.l.b16 %v84
  %v420 = vunpack.c.l.b16 %v85
  %v421 = vunpack.c.l.b16 %v86
  %v422 = vunpack.c.l.b16 %v87
  %v423 = vunpack.c.l.b16 %v88
  %v424 = vunpack.c.l.b16 %v89
  %v425 = vunpack.c.l.b16 %v90
  %v426 = vunpack.c.l.b16 %v91
  %v427 = vunpack.c.l.b16 %v92
  %v428 = vunpack.c.l.b16 %v93
  %v429 = vunpack.c.l.b16 %v94
  %v430 = vunpack.c.l.b16 %v95
  %v431 = vunpack.c.l.b16 %v96
  %v432 = vunpack.c.l.b16 %v97
  %v433 = vunpack.c.l.b16 %v98
  %v434 = vpack.c.b16 %v415, %v414
  %v435 = vpack.c.b16 %v417, %v416
  %v436 = vpack.c.b16 %v419, %v418
  %v437 = vpack.c.b16 %v421, %v420
  %v438 = vpack.c.b16 %v423, %v422
  %v439 = vpack.c.b16 %v425, %v424
  %v440 = vpack.c.b16 %v427, %v426
  %v441 = vpack.c.b16 %v429, %v428
  %v442 = vpack.c.b16 %v431, %v430
  %v443 = vpack.c.b16 %v433, %v432
  %vm454 = vcmask 261120
  %v456 = vsel %vm454, %v299, 0
  %v459 = vsel %vm454, %v301, 0
  %v462 = vsel %vm454, %v303, 0
  %v465 = vsel %vm454, %v305, 0
  %v468 = vsel %vm454, %v307, 0
  %v471 = vsel %vm454, %v309, 0
  %v474 = vsel %vm454, %v311, 0
  %v477 = vsel %vm454, %v313, 0
  %v480 = vsel %vm454, %v315, 0
  %v483 = vsel %vm454, %v317, 0
  %v486 = vsel %vm454, %v319, 0
  %v489 = vsel %vm454, %v321, 0
  %v492 = vsel %vm454, %v323, 0
  %v495 = vsel %vm454, %v325, 0
  %v498 = vsel %vm454, %v327, 0
  %v501 = vsel %vm454, %v329, 0
  %v504 = vsel %vm454, %v331, 0
  %v507 = vsel %vm454, %v333, 0
  %v510 = vsel %vm454, %v335, 0
  %v513 = vsel %vm454, %v337, 0
  %v516 = vsel %vm454, %v339, 0
  %v519 = vsel %vm454, %v341, 0
  %v522 = vsel %vm454, %v343, 0
  %v525 = vsel %vm454, %v345, 0
  %v528 = vsel %vm454, %v347, 0
  %v531 = vsel %vm454, %v349, 0
  %v534 = vsel %vm454, %v351, 0
  %v537 = vsel %vm454, %v353, 0
  %v540 = vsel %vm454, %v355, 0
  %v543 = vsel %vm454, %v357, 0
  %v546 = vsel %vm454, %v359, 0
  %v549 = vsel %vm454, %v361, 0
  %551 = vmatprep.subr.bf16.mxu0 0
  %552 = vmatpush1.bf16.msra.mxu0 %v434
  %553 = vmatprep.subr.bf16.mxu0 0
  %554 = vmatpush1.bf16.msra.mxu0 %v435
  %555 = vmatprep.subr.bf16.mxu0 0
  %556 = vmatpush1.bf16.msra.mxu0 %v436
  %557 = vmatprep.subr.bf16.mxu0 0
  %558 = vmatpush1.bf16.msra.mxu0 %v437
  %559 = vmatprep.subr.bf16.mxu0 0
  %560 = vmatpush1.bf16.msra.mxu0 %v438
  %561 = vmatprep.subr.bf16.mxu0 0
  %562 = vmatpush1.bf16.msra.mxu0 %v439
  %563 = vmatprep.subr.bf16.mxu0 0
  %564 = vmatpush1.bf16.msra.mxu0 %v440
  %565 = vmatprep.subr.bf16.mxu0 0
  %566 = vmatpush1.bf16.msra.mxu0 %v441
  %567 = vmatprep.subr.bf16.mxu0 0
  %568 = vmatpush1.bf16.msra.mxu0 %v442
  %569 = vmatprep.subr.bf16.mxu0 0
  %570 = vmatpush1.bf16.msra.mxu0 %v443
  %571 = vmatprep.subr.bf16.mxu0 0
  %572 = vmatpush1.bf16.msra.mxu0 0
  %573 = vmatprep.subr.bf16.mxu0 0
  %574 = vmatpush1.bf16.msra.mxu0 0
  %575 = vmatprep.subr.bf16.mxu0 0
  %576 = vmatpush1.bf16.msra.mxu0 0
  %577 = vmatprep.subr.bf16.mxu0 0
  %578 = vmatpush1.bf16.msra.mxu0 0
  %579 = vmatprep.subr.bf16.mxu0 0
  %580 = vmatpush1.bf16.msra.mxu0 0
  %581 = vmatprep.subr.bf16.mxu0 0
  %582 = vmatpush1.bf16.msra.mxu0 0
  %583 = vmatprep.mubr.bf16.mxu0 %v456
  %584 = vmatmul.mubr.bf16.gmra.mrb[0].mxu0 %v298
  %v585 = vpop.f32.mrb[0].mxu0
  %v586 = vadd.f32 %v104, %v585
  %v587 = vpop.f32.mrb[0].mxu0
  %v588 = vpop.f32.mrb[0].mxu0
  %v589 = vadd.f32 %v104, %v588
  %v590 = vpop.f32.mrb[0].mxu0
  %591 = vmatprep.mubr.bf16.mxu0 %v459
  %592 = vmatmul.mubr.bf16.gmra.mrb[0].mxu0 %v300
  %v593 = vpop.f32.mrb[0].mxu0
  %v594 = vadd.f32 %v104, %v593
  %v595 = vpop.f32.mrb[0].mxu0
  %v596 = vpop.f32.mrb[0].mxu0
  %v597 = vadd.f32 %v104, %v596
  %v598 = vpop.f32.mrb[0].mxu0
  %599 = vmatprep.mubr.bf16.mxu0 %v462
  %600 = vmatmul.mubr.bf16.gmra.mrb[0].mxu0 %v302
  %v601 = vpop.f32.mrb[0].mxu0
  %v602 = vadd.f32 %v104, %v601
  %v603 = vpop.f32.mrb[0].mxu0
  %v604 = vpop.f32.mrb[0].mxu0
  %v605 = vadd.f32 %v104, %v604
  %v606 = vpop.f32.mrb[0].mxu0
  %607 = vmatprep.mubr.bf16.mxu0 %v465
  %608 = vmatmul.mubr.bf16.gmra.mrb[0].mxu0 %v304
  %v609 = vpop.f32.mrb[0].mxu0
  %v610 = vadd.f32 %v104, %v609
  %v611 = vpop.f32.mrb[0].mxu0
  %v612 = vpop.f32.mrb[0].mxu0
  %v613 = vadd.f32 %v104, %v612
  %v614 = vpop.f32.mrb[0].mxu0
  %615 = vmatprep.mubr.bf16.mxu0 %v468
  %616 = vmatmul.mubr.bf16.gmra.mrb[0].mxu0 %v306
  %v617 = vpop.f32.mrb[0].mxu0
  %v618 = vadd.f32 %v104, %v617
  %v619 = vpop.f32.mrb[0].mxu0
  %v620 = vpop.f32.mrb[0].mxu0
  %v621 = vadd.f32 %v104, %v620
  %v622 = vpop.f32.mrb[0].mxu0
  %623 = vmatprep.mubr.bf16.mxu0 %v471
  %624 = vmatmul.mubr.bf16.gmra.mrb[0].mxu0 %v308
  %v625 = vpop.f32.mrb[0].mxu0
  %v626 = vadd.f32 %v104, %v625
  %v627 = vpop.f32.mrb[0].mxu0
  %v628 = vpop.f32.mrb[0].mxu0
  %v629 = vadd.f32 %v104, %v628
  %v630 = vpop.f32.mrb[0].mxu0
  %631 = vmatprep.mubr.bf16.mxu0 %v474
  %632 = vmatmul.mubr.bf16.gmra.mrb[0].mxu0 %v310
  %v633 = vpop.f32.mrb[0].mxu0
  %v634 = vadd.f32 %v104, %v633
  %v635 = vpop.f32.mrb[0].mxu0
  %v636 = vpop.f32.mrb[0].mxu0
  %v637 = vadd.f32 %v104, %v636
  %v638 = vpop.f32.mrb[0].mxu0
  %639 = vmatprep.mubr.bf16.mxu0 %v477
  %640 = vmatmul.mubr.bf16.gmra.mrb[0].mxu0 %v312
  %v641 = vpop.f32.mrb[0].mxu0
  %v642 = vadd.f32 %v104, %v641
  %v643 = vpop.f32.mrb[0].mxu0
  %v644 = vpop.f32.mrb[0].mxu0
  %v645 = vadd.f32 %v104, %v644
  %v646 = vpop.f32.mrb[0].mxu0
  %647 = vmatprep.mubr.bf16.mxu0 %v480
  %648 = vmatmul.mubr.bf16.gmra.mrb[0].mxu0 %v314
  %v649 = vpop.f32.mrb[0].mxu0
  %v650 = vadd.f32 %v104, %v649
  %v651 = vpop.f32.mrb[0].mxu0
  %v652 = vpop.f32.mrb[0].mxu0
  %v653 = vadd.f32 %v104, %v652
  %v654 = vpop.f32.mrb[0].mxu0
  %655 = vmatprep.mubr.bf16.mxu0 %v483
  %656 = vmatmul.mubr.bf16.gmra.mrb[0].mxu0 %v316
  %v657 = vpop.f32.mrb[0].mxu0
  %v658 = vadd.f32 %v104, %v657
  %v659 = vpop.f32.mrb[0].mxu0
  %v660 = vpop.f32.mrb[0].mxu0
  %v661 = vadd.f32 %v104, %v660
  %v662 = vpop.f32.mrb[0].mxu0
  %663 = vmatprep.mubr.bf16.mxu0 %v486
  %664 = vmatmul.mubr.bf16.gmra.mrb[0].mxu0 %v318
  %v665 = vpop.f32.mrb[0].mxu0
  %v666 = vadd.f32 %v104, %v665
  %v667 = vpop.f32.mrb[0].mxu0
  %v668 = vpop.f32.mrb[0].mxu0
  %v669 = vadd.f32 %v104, %v668
  %v670 = vpop.f32.mrb[0].mxu0
  %671 = vmatprep.mubr.bf16.mxu0 %v489
  %672 = vmatmul.mubr.bf16.gmra.mrb[0].mxu0 %v320
  %v673 = vpop.f32.mrb[0].mxu0
  %v674 = vadd.f32 %v104, %v673
  %v675 = vpop.f32.mrb[0].mxu0
  %v676 = vpop.f32.mrb[0].mxu0
  %v677 = vadd.f32 %v104, %v676
  %v678 = vpop.f32.mrb[0].mxu0
  %679 = vmatprep.mubr.bf16.mxu0 %v492
  %680 = vmatmul.mubr.bf16.gmra.mrb[0].mxu0 %v322
  %v681 = vpop.f32.mrb[0].mxu0
  %v682 = vadd.f32 %v104, %v681
  %v683 = vpop.f32.mrb[0].mxu0
  %v684 = vpop.f32.mrb[0].mxu0
  %v685 = vadd.f32 %v104, %v684
  %v686 = vpop.f32.mrb[0].mxu0
  %687 = vmatprep.mubr.bf16.mxu0 %v495
  %688 = vmatmul.mubr.bf16.gmra.mrb[0].mxu0 %v324
  %v689 = vpop.f32.mrb[0].mxu0
  %v690 = vadd.f32 %v104, %v689
  %v691 = vpop.f32.mrb[0].mxu0
  %v692 = vpop.f32.mrb[0].mxu0
  %v693 = vadd.f32 %v104, %v692
  %v694 = vpop.f32.mrb[0].mxu0
  %695 = vmatprep.mubr.bf16.mxu0 %v498
  %696 = vmatmul.mubr.bf16.gmra.mrb[0].mxu0 %v326
  %v697 = vpop.f32.mrb[0].mxu0
  %v698 = vadd.f32 %v104, %v697
  %v699 = vpop.f32.mrb[0].mxu0
  %v700 = vpop.f32.mrb[0].mxu0
  %v701 = vadd.f32 %v104, %v700
  %v702 = vpop.f32.mrb[0].mxu0
  %703 = vmatprep.mubr.bf16.mxu0 %v501
  %704 = vmatmul.mubr.bf16.gmra.mrb[0].mxu0 %v328
  %v705 = vpop.f32.mrb[0].mxu0
  %v706 = vadd.f32 %v104, %v705
  %v707 = vpop.f32.mrb[0].mxu0
  %v708 = vpop.f32.mrb[0].mxu0
  %v709 = vadd.f32 %v104, %v708
  %v710 = vpop.f32.mrb[0].mxu0
  %711 = vmatprep.mubr.bf16.mxu0 %v504
  %712 = vmatmul.mubr.bf16.gmra.mrb[0].mxu0 %v330
  %v713 = vpop.f32.mrb[0].mxu0
  %v714 = vadd.f32 %v104, %v713
  %v715 = vpop.f32.mrb[0].mxu0
  %v716 = vpop.f32.mrb[0].mxu0
  %v717 = vadd.f32 %v104, %v716
  %v718 = vpop.f32.mrb[0].mxu0
  %719 = vmatprep.mubr.bf16.mxu0 %v507
  %720 = vmatmul.mubr.bf16.gmra.mrb[0].mxu0 %v332
  %v721 = vpop.f32.mrb[0].mxu0
  %v722 = vadd.f32 %v104, %v721
  %v723 = vpop.f32.mrb[0].mxu0
  %v724 = vpop.f32.mrb[0].mxu0
  %v725 = vadd.f32 %v104, %v724
  %v726 = vpop.f32.mrb[0].mxu0
  %727 = vmatprep.mubr.bf16.mxu0 %v510
  %728 = vmatmul.mubr.bf16.gmra.mrb[0].mxu0 %v334
  %v729 = vpop.f32.mrb[0].mxu0
  %v730 = vadd.f32 %v104, %v729
  %v731 = vpop.f32.mrb[0].mxu0
  %v732 = vpop.f32.mrb[0].mxu0
  %v733 = vadd.f32 %v104, %v732
  %v734 = vpop.f32.mrb[0].mxu0
  %735 = vmatprep.mubr.bf16.mxu0 %v513
  %736 = vmatmul.mubr.bf16.gmra.mrb[0].mxu0 %v336
  %v737 = vpop.f32.mrb[0].mxu0
  %v738 = vadd.f32 %v104, %v737
  %v739 = vpop.f32.mrb[0].mxu0
  %v740 = vpop.f32.mrb[0].mxu0
  %v741 = vadd.f32 %v104, %v740
  %v742 = vpop.f32.mrb[0].mxu0
  %743 = vmatprep.mubr.bf16.mxu0 %v516
  %744 = vmatmul.mubr.bf16.gmra.mrb[0].mxu0 %v338
  %v745 = vpop.f32.mrb[0].mxu0
  %v746 = vadd.f32 %v104, %v745
  %v747 = vpop.f32.mrb[0].mxu0
  %v748 = vpop.f32.mrb[0].mxu0
  %v749 = vadd.f32 %v104, %v748
  %v750 = vpop.f32.mrb[0].mxu0
  %751 = vmatprep.mubr.bf16.mxu0 %v519
  %752 = vmatmul.mubr.bf16.gmra.mrb[0].mxu0 %v340
  %v753 = vpop.f32.mrb[0].mxu0
  %v754 = vadd.f32 %v104, %v753
  %v755 = vpop.f32.mrb[0].mxu0
  %v756 = vpop.f32.mrb[0].mxu0
  %v757 = vadd.f32 %v104, %v756
  %v758 = vpop.f32.mrb[0].mxu0
  %759 = vmatprep.mubr.bf16.mxu0 %v522
  %760 = vmatmul.mubr.bf16.gmra.mrb[0].mxu0 %v342
  %v761 = vpop.f32.mrb[0].mxu0
  %v762 = vadd.f32 %v104, %v761
  %v763 = vpop.f32.mrb[0].mxu0
  %v764 = vpop.f32.mrb[0].mxu0
  %v765 = vadd.f32 %v104, %v764
  %v766 = vpop.f32.mrb[0].mxu0
  %767 = vmatprep.mubr.bf16.mxu0 %v525
  %768 = vmatmul.mubr.bf16.gmra.mrb[0].mxu0 %v344
  %v769 = vpop.f32.mrb[0].mxu0
  %v770 = vadd.f32 %v104, %v769
  %v771 = vpop.f32.mrb[0].mxu0
  %v772 = vpop.f32.mrb[0].mxu0
  %v773 = vadd.f32 %v104, %v772
  %v774 = vpop.f32.mrb[0].mxu0
  %775 = vmatprep.mubr.bf16.mxu0 %v528
  %776 = vmatmul.mubr.bf16.gmra.mrb[0].mxu0 %v346
  %v777 = vpop.f32.mrb[0].mxu0
  %v778 = vadd.f32 %v104, %v777
  %v779 = vpop.f32.mrb[0].mxu0
  %v780 = vpop.f32.mrb[0].mxu0
  %v781 = vadd.f32 %v104, %v780
  %v782 = vpop.f32.mrb[0].mxu0
  %783 = vmatprep.mubr.bf16.mxu0 %v531
  %784 = vmatmul.mubr.bf16.gmra.mrb[0].mxu0 %v348
  %v785 = vpop.f32.mrb[0].mxu0
  %v786 = vadd.f32 %v104, %v785
  %v787 = vpop.f32.mrb[0].mxu0
  %v788 = vpop.f32.mrb[0].mxu0
  %v789 = vadd.f32 %v104, %v788
  %v790 = vpop.f32.mrb[0].mxu0
  %791 = vmatprep.mubr.bf16.mxu0 %v534
  %792 = vmatmul.mubr.bf16.gmra.mrb[0].mxu0 %v350
  %v793 = vpop.f32.mrb[0].mxu0
  %v794 = vadd.f32 %v104, %v793
  %v795 = vpop.f32.mrb[0].mxu0
  %v796 = vpop.f32.mrb[0].mxu0
  %v797 = vadd.f32 %v104, %v796
  %v798 = vpop.f32.mrb[0].mxu0
  %799 = vmatprep.mubr.bf16.mxu0 %v537
  %800 = vmatmul.mubr.bf16.gmra.mrb[0].mxu0 %v352
  %v801 = vpop.f32.mrb[0].mxu0
  %v802 = vadd.f32 %v104, %v801
  %v803 = vpop.f32.mrb[0].mxu0
  %v804 = vpop.f32.mrb[0].mxu0
  %v805 = vadd.f32 %v104, %v804
  %v806 = vpop.f32.mrb[0].mxu0
  %807 = vmatprep.mubr.bf16.mxu0 %v540
  %808 = vmatmul.mubr.bf16.gmra.mrb[0].mxu0 %v354
  %v809 = vpop.f32.mrb[0].mxu0
  %v810 = vadd.f32 %v104, %v809
  %v811 = vpop.f32.mrb[0].mxu0
  %v812 = vpop.f32.mrb[0].mxu0
  %v813 = vadd.f32 %v104, %v812
  %v814 = vpop.f32.mrb[0].mxu0
  %815 = vmatprep.mubr.bf16.mxu0 %v543
  %816 = vmatmul.mubr.bf16.gmra.mrb[0].mxu0 %v356
  %v817 = vpop.f32.mrb[0].mxu0
  %v818 = vadd.f32 %v104, %v817
  %v819 = vpop.f32.mrb[0].mxu0
  %v820 = vpop.f32.mrb[0].mxu0
  %v821 = vadd.f32 %v104, %v820
  %v822 = vpop.f32.mrb[0].mxu0
  %823 = vmatprep.mubr.bf16.mxu0 %v546
  %824 = vmatmul.mubr.bf16.gmra.mrb[0].mxu0 %v358
  %v825 = vpop.f32.mrb[0].mxu0
  %v826 = vadd.f32 %v104, %v825
  %v827 = vpop.f32.mrb[0].mxu0
  %v828 = vpop.f32.mrb[0].mxu0
  %v829 = vadd.f32 %v104, %v828
  %v830 = vpop.f32.mrb[0].mxu0
  %831 = vmatprep.mubr.bf16.mxu0 %v549
  %832 = vmatmul.mubr.bf16.gmra.mrb[0].mxu0 %v360
  %v833 = vpop.f32.mrb[0].mxu0
  %v834 = vadd.f32 %v104, %v833
  %v835 = vpop.f32.mrb[0].mxu0
  %v836 = vpop.f32.mrb[0].mxu0
  %v837 = vadd.f32 %v104, %v836
  %v838 = vpop.f32.mrb[0].mxu0
  %839 = vdwg.mxu0
  %v840 = vmax.f32 %v586, 0.0
  %v841 = vmax.f32 %v589, 0.0
  %v842 = vmax.f32 %v594, 0.0
  %v843 = vmax.f32 %v597, 0.0
  %v844 = vmax.f32 %v602, 0.0
  %v845 = vmax.f32 %v605, 0.0
  %v846 = vmax.f32 %v610, 0.0
  %v847 = vmax.f32 %v613, 0.0
  %v848 = vmax.f32 %v618, 0.0
  %v849 = vmax.f32 %v621, 0.0
  %v850 = vmax.f32 %v626, 0.0
  %v851 = vmax.f32 %v629, 0.0
  %v852 = vmax.f32 %v634, 0.0
  %v853 = vmax.f32 %v637, 0.0
  %v854 = vmax.f32 %v642, 0.0
  %v855 = vmax.f32 %v645, 0.0
  %v856 = vmax.f32 %v650, 0.0
  %v857 = vmax.f32 %v653, 0.0
  %v858 = vmax.f32 %v658, 0.0
  %v859 = vmax.f32 %v661, 0.0
  %v860 = vmax.f32 %v666, 0.0
  %v861 = vmax.f32 %v669, 0.0
  %v862 = vmax.f32 %v674, 0.0
  %v863 = vmax.f32 %v677, 0.0
  %v864 = vmax.f32 %v682, 0.0
  %v865 = vmax.f32 %v685, 0.0
  %v866 = vmax.f32 %v690, 0.0
  %v867 = vmax.f32 %v693, 0.0
  %v868 = vmax.f32 %v698, 0.0
  %v869 = vmax.f32 %v701, 0.0
  %v870 = vmax.f32 %v706, 0.0
  %v871 = vmax.f32 %v709, 0.0
  %v872 = vmax.f32 %v714, 0.0
  %v873 = vmax.f32 %v717, 0.0
  %v874 = vmax.f32 %v722, 0.0
  %v875 = vmax.f32 %v725, 0.0
  %v876 = vmax.f32 %v730, 0.0
  %v877 = vmax.f32 %v733, 0.0
  %v878 = vmax.f32 %v738, 0.0
  %v879 = vmax.f32 %v741, 0.0
  %v880 = vmax.f32 %v746, 0.0
  %v881 = vmax.f32 %v749, 0.0
  %v882 = vmax.f32 %v754, 0.0
  %v883 = vmax.f32 %v757, 0.0
  %v884 = vmax.f32 %v762, 0.0
  %v885 = vmax.f32 %v765, 0.0
  %v886 = vmax.f32 %v770, 0.0
  %v887 = vmax.f32 %v773, 0.0
  %v888 = vmax.f32 %v778, 0.0
  %v889 = vmax.f32 %v781, 0.0
  %v890 = vmax.f32 %v786, 0.0
  %v891 = vmax.f32 %v789, 0.0
  %v892 = vmax.f32 %v794, 0.0
  %v893 = vmax.f32 %v797, 0.0
  %v894 = vmax.f32 %v802, 0.0
  %v895 = vmax.f32 %v805, 0.0
  %v896 = vmax.f32 %v810, 0.0
  %v897 = vmax.f32 %v813, 0.0
  %v898 = vmax.f32 %v818, 0.0
  %v899 = vmax.f32 %v821, 0.0
  %v900 = vmax.f32 %v826, 0.0
  %v901 = vmax.f32 %v829, 0.0
  %v902 = vmax.f32 %v834, 0.0
  %v903 = vmax.f32 %v837, 0.0
  %v904 = vmax.f32 %v840, %v842
  %v905 = vmax.f32 %v841, %v843
  %v906 = vmax.f32 %v844, %v846
  %v907 = vmax.f32 %v845, %v847
  %v908 = vmax.f32 %v848, %v850
  %v909 = vmax.f32 %v849, %v851
  %v910 = vmax.f32 %v852, %v854
  %v911 = vmax.f32 %v853, %v855
  %v912 = vmax.f32 %v856, %v858
  %v913 = vmax.f32 %v857, %v859
  %v914 = vmax.f32 %v860, %v862
  %v915 = vmax.f32 %v861, %v863
  %v916 = vmax.f32 %v864, %v866
  %v917 = vmax.f32 %v865, %v867
  %v918 = vmax.f32 %v868, %v870
  %v919 = vmax.f32 %v869, %v871
  %v920 = vmax.f32 %v872, %v874
  %v921 = vmax.f32 %v873, %v875
  %v922 = vmax.f32 %v876, %v878
  %v923 = vmax.f32 %v877, %v879
  %v924 = vmax.f32 %v880, %v882
  %v925 = vmax.f32 %v881, %v883
  %v926 = vmax.f32 %v884, %v886
  %v927 = vmax.f32 %v885, %v887
  %v928 = vmax.f32 %v888, %v890
  %v929 = vmax.f32 %v889, %v891
  %v930 = vmax.f32 %v892, %v894
  %v931 = vmax.f32 %v893, %v895
  %v932 = vmax.f32 %v896, %v898
  %v933 = vmax.f32 %v897, %v899
  %v934 = vmax.f32 %v900, %v902
  %v935 = vmax.f32 %v901, %v903
  %v936 = vmax.f32 %v904, 0.0
  %v937 = vmax.f32 %v905, 0.0
  %v938 = vmax.f32 %v906, %v842
  %v939 = vmax.f32 %v907, %v843
  %v940 = vmax.f32 %v908, %v846
  %v941 = vmax.f32 %v909, %v847
  %v942 = vmax.f32 %v910, %v850
  %v943 = vmax.f32 %v911, %v851
  %v944 = vmax.f32 %v912, %v854
  %v945 = vmax.f32 %v913, %v855
  %v946 = vmax.f32 %v914, %v858
  %v947 = vmax.f32 %v915, %v859
  %v948 = vmax.f32 %v916, %v862
  %v949 = vmax.f32 %v917, %v863
  %v950 = vmax.f32 %v918, %v866
  %v951 = vmax.f32 %v919, %v867
  %v952 = vmax.f32 %v920, 0.0
  %v953 = vmax.f32 %v921, 0.0
  %v954 = vmax.f32 %v922, %v874
  %v955 = vmax.f32 %v923, %v875
  %v956 = vmax.f32 %v924, %v878
  %v957 = vmax.f32 %v925, %v879
  %v958 = vmax.f32 %v926, %v882
  %v959 = vmax.f32 %v927, %v883
  %v960 = vmax.f32 %v928, %v886
  %v961 = vmax.f32 %v929, %v887
  %v962 = vmax.f32 %v930, %v890
  %v963 = vmax.f32 %v931, %v891
  %v964 = vmax.f32 %v932, %v894
  %v965 = vmax.f32 %v933, %v895
  %v966 = vmax.f32 %v934, %v898
  %v967 = vmax.f32 %v935, %v899
  %v1000 = vcombine.high %v936, %v936
  %v1002 = vunpack.c.l.s4 1983009808
  %v1003 = vunpack.c.0.s8 %v1002
  %v1004 = vlaneseq
  %v1005 = vshrl.u32 %v1004, 7
  %v1006 = vsub.s32 %v1003, %v1005
  %v1007 = vrot.slane %v936, %v1006
  %v1009 = vunpack.c.l.s4 1983009808
  %v1010 = vunpack.c.0.s8 %v1009
  %v1011 = vlaneseq
  %v1012 = vshrl.u32 %v1011, 7
  %v1013 = vsub.s32 %v1010, %v1012
  %v1014 = vrot.slane %v1000, %v1013
  %v1015 = vcombine.high %v1007, %v1007
  %v1016 = vcombine.high %v1014, %v1014
  %v1017 = vcombine.high %v937, %v937
  %v1019 = vunpack.c.l.s4 1983009808
  %v1020 = vunpack.c.0.s8 %v1019
  %v1021 = vlaneseq
  %v1022 = vshrl.u32 %v1021, 7
  %v1023 = vsub.s32 %v1020, %v1022
  %v1024 = vrot.slane %v937, %v1023
  %v1026 = vunpack.c.l.s4 1983009808
  %v1027 = vunpack.c.0.s8 %v1026
  %v1028 = vlaneseq
  %v1029 = vshrl.u32 %v1028, 7
  %v1030 = vsub.s32 %v1027, %v1029
  %v1031 = vrot.slane %v1017, %v1030
  %v1032 = vcombine.high %v1024, %v1024
  %v1033 = vcombine.high %v1031, %v1031
  %v1034 = vcombine.high %v938, %v938
  %v1036 = vunpack.c.l.s4 1983009808
  %v1037 = vunpack.c.0.s8 %v1036
  %v1038 = vlaneseq
  %v1039 = vshrl.u32 %v1038, 7
  %v1040 = vsub.s32 %v1037, %v1039
  %v1041 = vrot.slane %v938, %v1040
  %v1043 = vunpack.c.l.s4 1983009808
  %v1044 = vunpack.c.0.s8 %v1043
  %v1045 = vlaneseq
  %v1046 = vshrl.u32 %v1045, 7
  %v1047 = vsub.s32 %v1044, %v1046
  %v1048 = vrot.slane %v1034, %v1047
  %v1049 = vcombine.high %v1041, %v1041
  %v1050 = vcombine.high %v1048, %v1048
  %v1051 = vcombine.high %v939, %v939
  %v1053 = vunpack.c.l.s4 1983009808
  %v1054 = vunpack.c.0.s8 %v1053
  %v1055 = vlaneseq
  %v1056 = vshrl.u32 %v1055, 7
  %v1057 = vsub.s32 %v1054, %v1056
  %v1058 = vrot.slane %v939, %v1057
  %v1060 = vunpack.c.l.s4 1983009808
  %v1061 = vunpack.c.0.s8 %v1060
  %v1062 = vlaneseq
  %v1063 = vshrl.u32 %v1062, 7
  %v1064 = vsub.s32 %v1061, %v1063
  %v1065 = vrot.slane %v1051, %v1064
  %v1066 = vcombine.high %v1058, %v1058
  %v1067 = vcombine.high %v1065, %v1065
  %v1068 = vcombine.high %v940, %v940
  %v1070 = vunpack.c.l.s4 1983009808
  %v1071 = vunpack.c.0.s8 %v1070
  %v1072 = vlaneseq
  %v1073 = vshrl.u32 %v1072, 7
  %v1074 = vsub.s32 %v1071, %v1073
  %v1075 = vrot.slane %v940, %v1074
  %v1077 = vunpack.c.l.s4 1983009808
  %v1078 = vunpack.c.0.s8 %v1077
  %v1079 = vlaneseq
  %v1080 = vshrl.u32 %v1079, 7
  %v1081 = vsub.s32 %v1078, %v1080
  %v1082 = vrot.slane %v1068, %v1081
  %v1083 = vcombine.high %v1075, %v1075
  %v1084 = vcombine.high %v1082, %v1082
  %v1085 = vcombine.high %v941, %v941
  %v1087 = vunpack.c.l.s4 1983009808
  %v1088 = vunpack.c.0.s8 %v1087
  %v1089 = vlaneseq
  %v1090 = vshrl.u32 %v1089, 7
  %v1091 = vsub.s32 %v1088, %v1090
  %v1092 = vrot.slane %v941, %v1091
  %v1094 = vunpack.c.l.s4 1983009808
  %v1095 = vunpack.c.0.s8 %v1094
  %v1096 = vlaneseq
  %v1097 = vshrl.u32 %v1096, 7
  %v1098 = vsub.s32 %v1095, %v1097
  %v1099 = vrot.slane %v1085, %v1098
  %v1100 = vcombine.high %v1092, %v1092
  %v1101 = vcombine.high %v1099, %v1099
  %v1102 = vcombine.high %v942, %v942
  %v1104 = vunpack.c.l.s4 1983009808
  %v1105 = vunpack.c.0.s8 %v1104
  %v1106 = vlaneseq
  %v1107 = vshrl.u32 %v1106, 7
  %v1108 = vsub.s32 %v1105, %v1107
  %v1109 = vrot.slane %v942, %v1108
  %v1111 = vunpack.c.l.s4 1983009808
  %v1112 = vunpack.c.0.s8 %v1111
  %v1113 = vlaneseq
  %v1114 = vshrl.u32 %v1113, 7
  %v1115 = vsub.s32 %v1112, %v1114
  %v1116 = vrot.slane %v1102, %v1115
  %v1117 = vcombine.high %v1109, %v1109
  %v1118 = vcombine.high %v1116, %v1116
  %v1119 = vcombine.high %v943, %v943
  %v1121 = vunpack.c.l.s4 1983009808
  %v1122 = vunpack.c.0.s8 %v1121
  %v1123 = vlaneseq
  %v1124 = vshrl.u32 %v1123, 7
  %v1125 = vsub.s32 %v1122, %v1124
  %v1126 = vrot.slane %v943, %v1125
  %v1128 = vunpack.c.l.s4 1983009808
  %v1129 = vunpack.c.0.s8 %v1128
  %v1130 = vlaneseq
  %v1131 = vshrl.u32 %v1130, 7
  %v1132 = vsub.s32 %v1129, %v1131
  %v1133 = vrot.slane %v1119, %v1132
  %v1134 = vcombine.high %v1126, %v1126
  %v1135 = vcombine.high %v1133, %v1133
  %v1136 = vcombine.high %v944, %v944
  %v1138 = vunpack.c.l.s4 1983009808
  %v1139 = vunpack.c.0.s8 %v1138
  %v1140 = vlaneseq
  %v1141 = vshrl.u32 %v1140, 7
  %v1142 = vsub.s32 %v1139, %v1141
  %v1143 = vrot.slane %v944, %v1142
  %v1145 = vunpack.c.l.s4 1983009808
  %v1146 = vunpack.c.0.s8 %v1145
  %v1147 = vlaneseq
  %v1148 = vshrl.u32 %v1147, 7
  %v1149 = vsub.s32 %v1146, %v1148
  %v1150 = vrot.slane %v1136, %v1149
  %v1151 = vcombine.high %v1143, %v1143
  %v1152 = vcombine.high %v1150, %v1150
  %v1153 = vcombine.high %v945, %v945
  %v1155 = vunpack.c.l.s4 1983009808
  %v1156 = vunpack.c.0.s8 %v1155
  %v1157 = vlaneseq
  %v1158 = vshrl.u32 %v1157, 7
  %v1159 = vsub.s32 %v1156, %v1158
  %v1160 = vrot.slane %v945, %v1159
  %v1162 = vunpack.c.l.s4 1983009808
  %v1163 = vunpack.c.0.s8 %v1162
  %v1164 = vlaneseq
  %v1165 = vshrl.u32 %v1164, 7
  %v1166 = vsub.s32 %v1163, %v1165
  %v1167 = vrot.slane %v1153, %v1166
  %v1168 = vcombine.high %v1160, %v1160
  %v1169 = vcombine.high %v1167, %v1167
  %v1170 = vcombine.high %v946, %v946
  %v1172 = vunpack.c.l.s4 1983009808
  %v1173 = vunpack.c.0.s8 %v1172
  %v1174 = vlaneseq
  %v1175 = vshrl.u32 %v1174, 7
  %v1176 = vsub.s32 %v1173, %v1175
  %v1177 = vrot.slane %v946, %v1176
  %v1179 = vunpack.c.l.s4 1983009808
  %v1180 = vunpack.c.0.s8 %v1179
  %v1181 = vlaneseq
  %v1182 = vshrl.u32 %v1181, 7
  %v1183 = vsub.s32 %v1180, %v1182
  %v1184 = vrot.slane %v1170, %v1183
  %v1185 = vcombine.high %v1177, %v1177
  %v1186 = vcombine.high %v1184, %v1184
  %v1187 = vcombine.high %v947, %v947
  %v1189 = vunpack.c.l.s4 1983009808
  %v1190 = vunpack.c.0.s8 %v1189
  %v1191 = vlaneseq
  %v1192 = vshrl.u32 %v1191, 7
  %v1193 = vsub.s32 %v1190, %v1192
  %v1194 = vrot.slane %v947, %v1193
  %v1196 = vunpack.c.l.s4 1983009808
  %v1197 = vunpack.c.0.s8 %v1196
  %v1198 = vlaneseq
  %v1199 = vshrl.u32 %v1198, 7
  %v1200 = vsub.s32 %v1197, %v1199
  %v1201 = vrot.slane %v1187, %v1200
  %v1202 = vcombine.high %v1194, %v1194
  %v1203 = vcombine.high %v1201, %v1201
  %v1204 = vcombine.high %v948, %v948
  %v1206 = vunpack.c.l.s4 1983009808
  %v1207 = vunpack.c.0.s8 %v1206
  %v1208 = vlaneseq
  %v1209 = vshrl.u32 %v1208, 7
  %v1210 = vsub.s32 %v1207, %v1209
  %v1211 = vrot.slane %v948, %v1210
  %v1213 = vunpack.c.l.s4 1983009808
  %v1214 = vunpack.c.0.s8 %v1213
  %v1215 = vlaneseq
  %v1216 = vshrl.u32 %v1215, 7
  %v1217 = vsub.s32 %v1214, %v1216
  %v1218 = vrot.slane %v1204, %v1217
  %v1219 = vcombine.high %v1211, %v1211
  %v1220 = vcombine.high %v1218, %v1218
  %v1221 = vcombine.high %v949, %v949
  %v1223 = vunpack.c.l.s4 1983009808
  %v1224 = vunpack.c.0.s8 %v1223
  %v1225 = vlaneseq
  %v1226 = vshrl.u32 %v1225, 7
  %v1227 = vsub.s32 %v1224, %v1226
  %v1228 = vrot.slane %v949, %v1227
  %v1230 = vunpack.c.l.s4 1983009808
  %v1231 = vunpack.c.0.s8 %v1230
  %v1232 = vlaneseq
  %v1233 = vshrl.u32 %v1232, 7
  %v1234 = vsub.s32 %v1231, %v1233
  %v1235 = vrot.slane %v1221, %v1234
  %v1236 = vcombine.high %v1228, %v1228
  %v1237 = vcombine.high %v1235, %v1235
  %v1238 = vcombine.high %v950, %v950
  %v1240 = vunpack.c.l.s4 1983009808
  %v1241 = vunpack.c.0.s8 %v1240
  %v1242 = vlaneseq
  %v1243 = vshrl.u32 %v1242, 7
  %v1244 = vsub.s32 %v1241, %v1243
  %v1245 = vrot.slane %v950, %v1244
  %v1247 = vunpack.c.l.s4 1983009808
  %v1248 = vunpack.c.0.s8 %v1247
  %v1249 = vlaneseq
  %v1250 = vshrl.u32 %v1249, 7
  %v1251 = vsub.s32 %v1248, %v1250
  %v1252 = vrot.slane %v1238, %v1251
  %v1253 = vcombine.high %v1245, %v1245
  %v1254 = vcombine.high %v1252, %v1252
  %v1255 = vcombine.high %v951, %v951
  %v1257 = vunpack.c.l.s4 1983009808
  %v1258 = vunpack.c.0.s8 %v1257
  %v1259 = vlaneseq
  %v1260 = vshrl.u32 %v1259, 7
  %v1261 = vsub.s32 %v1258, %v1260
  %v1262 = vrot.slane %v951, %v1261
  %v1264 = vunpack.c.l.s4 1983009808
  %v1265 = vunpack.c.0.s8 %v1264
  %v1266 = vlaneseq
  %v1267 = vshrl.u32 %v1266, 7
  %v1268 = vsub.s32 %v1265, %v1267
  %v1269 = vrot.slane %v1255, %v1268
  %v1270 = vcombine.high %v1262, %v1262
  %v1271 = vcombine.high %v1269, %v1269
  %v1272 = vcombine.high %v952, %v952
  %v1274 = vunpack.c.l.s4 1983009808
  %v1275 = vunpack.c.0.s8 %v1274
  %v1276 = vlaneseq
  %v1277 = vshrl.u32 %v1276, 7
  %v1278 = vsub.s32 %v1275, %v1277
  %v1279 = vrot.slane %v952, %v1278
  %v1281 = vunpack.c.l.s4 1983009808
  %v1282 = vunpack.c.0.s8 %v1281
  %v1283 = vlaneseq
  %v1284 = vshrl.u32 %v1283, 7
  %v1285 = vsub.s32 %v1282, %v1284
  %v1286 = vrot.slane %v1272, %v1285
  %v1287 = vcombine.high %v1279, %v1279
  %v1288 = vcombine.high %v1286, %v1286
  %v1289 = vcombine.high %v953, %v953
  %v1291 = vunpack.c.l.s4 1983009808
  %v1292 = vunpack.c.0.s8 %v1291
  %v1293 = vlaneseq
  %v1294 = vshrl.u32 %v1293, 7
  %v1295 = vsub.s32 %v1292, %v1294
  %v1296 = vrot.slane %v953, %v1295
  %v1298 = vunpack.c.l.s4 1983009808
  %v1299 = vunpack.c.0.s8 %v1298
  %v1300 = vlaneseq
  %v1301 = vshrl.u32 %v1300, 7
  %v1302 = vsub.s32 %v1299, %v1301
  %v1303 = vrot.slane %v1289, %v1302
  %v1304 = vcombine.high %v1296, %v1296
  %v1305 = vcombine.high %v1303, %v1303
  %v1306 = vcombine.high %v954, %v954
  %v1308 = vunpack.c.l.s4 1983009808
  %v1309 = vunpack.c.0.s8 %v1308
  %v1310 = vlaneseq
  %v1311 = vshrl.u32 %v1310, 7
  %v1312 = vsub.s32 %v1309, %v1311
  %v1313 = vrot.slane %v954, %v1312
  %v1315 = vunpack.c.l.s4 1983009808
  %v1316 = vunpack.c.0.s8 %v1315
  %v1317 = vlaneseq
  %v1318 = vshrl.u32 %v1317, 7
  %v1319 = vsub.s32 %v1316, %v1318
  %v1320 = vrot.slane %v1306, %v1319
  %v1321 = vcombine.high %v1313, %v1313
  %v1322 = vcombine.high %v1320, %v1320
  %v1323 = vcombine.high %v955, %v955
  %v1325 = vunpack.c.l.s4 1983009808
  %v1326 = vunpack.c.0.s8 %v1325
  %v1327 = vlaneseq
  %v1328 = vshrl.u32 %v1327, 7
  %v1329 = vsub.s32 %v1326, %v1328
  %v1330 = vrot.slane %v955, %v1329
  %v1332 = vunpack.c.l.s4 1983009808
  %v1333 = vunpack.c.0.s8 %v1332
  %v1334 = vlaneseq
  %v1335 = vshrl.u32 %v1334, 7
  %v1336 = vsub.s32 %v1333, %v1335
  %v1337 = vrot.slane %v1323, %v1336
  %v1338 = vcombine.high %v1330, %v1330
  %v1339 = vcombine.high %v1337, %v1337
  %v1340 = vcombine.high %v956, %v956
  %v1342 = vunpack.c.l.s4 1983009808
  %v1343 = vunpack.c.0.s8 %v1342
  %v1344 = vlaneseq
  %v1345 = vshrl.u32 %v1344, 7
  %v1346 = vsub.s32 %v1343, %v1345
  %v1347 = vrot.slane %v956, %v1346
  %v1349 = vunpack.c.l.s4 1983009808
  %v1350 = vunpack.c.0.s8 %v1349
  %v1351 = vlaneseq
  %v1352 = vshrl.u32 %v1351, 7
  %v1353 = vsub.s32 %v1350, %v1352
  %v1354 = vrot.slane %v1340, %v1353
  %v1355 = vcombine.high %v1347, %v1347
  %v1356 = vcombine.high %v1354, %v1354
  %v1357 = vcombine.high %v957, %v957
  %v1359 = vunpack.c.l.s4 1983009808
  %v1360 = vunpack.c.0.s8 %v1359
  %v1361 = vlaneseq
  %v1362 = vshrl.u32 %v1361, 7
  %v1363 = vsub.s32 %v1360, %v1362
  %v1364 = vrot.slane %v957, %v1363
  %v1366 = vunpack.c.l.s4 1983009808
  %v1367 = vunpack.c.0.s8 %v1366
  %v1368 = vlaneseq
  %v1369 = vshrl.u32 %v1368, 7
  %v1370 = vsub.s32 %v1367, %v1369
  %v1371 = vrot.slane %v1357, %v1370
  %v1372 = vcombine.high %v1364, %v1364
  %v1373 = vcombine.high %v1371, %v1371
  %v1374 = vcombine.high %v958, %v958
  %v1376 = vunpack.c.l.s4 1983009808
  %v1377 = vunpack.c.0.s8 %v1376
  %v1378 = vlaneseq
  %v1379 = vshrl.u32 %v1378, 7
  %v1380 = vsub.s32 %v1377, %v1379
  %v1381 = vrot.slane %v958, %v1380
  %v1383 = vunpack.c.l.s4 1983009808
  %v1384 = vunpack.c.0.s8 %v1383
  %v1385 = vlaneseq
  %v1386 = vshrl.u32 %v1385, 7
  %v1387 = vsub.s32 %v1384, %v1386
  %v1388 = vrot.slane %v1374, %v1387
  %v1389 = vcombine.high %v1381, %v1381
  %v1390 = vcombine.high %v1388, %v1388
  %v1391 = vcombine.high %v959, %v959
  %v1393 = vunpack.c.l.s4 1983009808
  %v1394 = vunpack.c.0.s8 %v1393
  %v1395 = vlaneseq
  %v1396 = vshrl.u32 %v1395, 7
  %v1397 = vsub.s32 %v1394, %v1396
  %v1398 = vrot.slane %v959, %v1397
  %v1400 = vunpack.c.l.s4 1983009808
  %v1401 = vunpack.c.0.s8 %v1400
  %v1402 = vlaneseq
  %v1403 = vshrl.u32 %v1402, 7
  %v1404 = vsub.s32 %v1401, %v1403
  %v1405 = vrot.slane %v1391, %v1404
  %v1406 = vcombine.high %v1398, %v1398
  %v1407 = vcombine.high %v1405, %v1405
  %v1408 = vcombine.high %v960, %v960
  %v1410 = vunpack.c.l.s4 1983009808
  %v1411 = vunpack.c.0.s8 %v1410
  %v1412 = vlaneseq
  %v1413 = vshrl.u32 %v1412, 7
  %v1414 = vsub.s32 %v1411, %v1413
  %v1415 = vrot.slane %v960, %v1414
  %v1417 = vunpack.c.l.s4 1983009808
  %v1418 = vunpack.c.0.s8 %v1417
  %v1419 = vlaneseq
  %v1420 = vshrl.u32 %v1419, 7
  %v1421 = vsub.s32 %v1418, %v1420
  %v1422 = vrot.slane %v1408, %v1421
  %v1423 = vcombine.high %v1415, %v1415
  %v1424 = vcombine.high %v1422, %v1422
  %v1425 = vcombine.high %v961, %v961
  %v1427 = vunpack.c.l.s4 1983009808
  %v1428 = vunpack.c.0.s8 %v1427
  %v1429 = vlaneseq
  %v1430 = vshrl.u32 %v1429, 7
  %v1431 = vsub.s32 %v1428, %v1430
  %v1432 = vrot.slane %v961, %v1431
  %v1434 = vunpack.c.l.s4 1983009808
  %v1435 = vunpack.c.0.s8 %v1434
  %v1436 = vlaneseq
  %v1437 = vshrl.u32 %v1436, 7
  %v1438 = vsub.s32 %v1435, %v1437
  %v1439 = vrot.slane %v1425, %v1438
  %v1440 = vcombine.high %v1432, %v1432
  %v1441 = vcombine.high %v1439, %v1439
  %v1442 = vcombine.high %v962, %v962
  %v1444 = vunpack.c.l.s4 1983009808
  %v1445 = vunpack.c.0.s8 %v1444
  %v1446 = vlaneseq
  %v1447 = vshrl.u32 %v1446, 7
  %v1448 = vsub.s32 %v1445, %v1447
  %v1449 = vrot.slane %v962, %v1448
  %v1451 = vunpack.c.l.s4 1983009808
  %v1452 = vunpack.c.0.s8 %v1451
  %v1453 = vlaneseq
  %v1454 = vshrl.u32 %v1453, 7
  %v1455 = vsub.s32 %v1452, %v1454
  %v1456 = vrot.slane %v1442, %v1455
  %v1457 = vcombine.high %v1449, %v1449
  %v1458 = vcombine.high %v1456, %v1456
  %v1459 = vcombine.high %v963, %v963
  %v1461 = vunpack.c.l.s4 1983009808
  %v1462 = vunpack.c.0.s8 %v1461
  %v1463 = vlaneseq
  %v1464 = vshrl.u32 %v1463, 7
  %v1465 = vsub.s32 %v1462, %v1464
  %v1466 = vrot.slane %v963, %v1465
  %v1468 = vunpack.c.l.s4 1983009808
  %v1469 = vunpack.c.0.s8 %v1468
  %v1470 = vlaneseq
  %v1471 = vshrl.u32 %v1470, 7
  %v1472 = vsub.s32 %v1469, %v1471
  %v1473 = vrot.slane %v1459, %v1472
  %v1474 = vcombine.high %v1466, %v1466
  %v1475 = vcombine.high %v1473, %v1473
  %v1476 = vcombine.high %v964, %v964
  %v1478 = vunpack.c.l.s4 1983009808
  %v1479 = vunpack.c.0.s8 %v1478
  %v1480 = vlaneseq
  %v1481 = vshrl.u32 %v1480, 7
  %v1482 = vsub.s32 %v1479, %v1481
  %v1483 = vrot.slane %v964, %v1482
  %v1485 = vunpack.c.l.s4 1983009808
  %v1486 = vunpack.c.0.s8 %v1485
  %v1487 = vlaneseq
  %v1488 = vshrl.u32 %v1487, 7
  %v1489 = vsub.s32 %v1486, %v1488
  %v1490 = vrot.slane %v1476, %v1489
  %v1491 = vcombine.high %v1483, %v1483
  %v1492 = vcombine.high %v1490, %v1490
  %v1493 = vcombine.high %v965, %v965
  %v1495 = vunpack.c.l.s4 1983009808
  %v1496 = vunpack.c.0.s8 %v1495
  %v1497 = vlaneseq
  %v1498 = vshrl.u32 %v1497, 7
  %v1499 = vsub.s32 %v1496, %v1498
  %v1500 = vrot.slane %v965, %v1499
  %v1502 = vunpack.c.l.s4 1983009808
  %v1503 = vunpack.c.0.s8 %v1502
  %v1504 = vlaneseq
  %v1505 = vshrl.u32 %v1504, 7
  %v1506 = vsub.s32 %v1503, %v1505
  %v1507 = vrot.slane %v1493, %v1506
  %v1508 = vcombine.high %v1500, %v1500
  %v1509 = vcombine.high %v1507, %v1507
  %v1510 = vcombine.high %v966, %v966
  %v1512 = vunpack.c.l.s4 1983009808
  %v1513 = vunpack.c.0.s8 %v1512
  %v1514 = vlaneseq
  %v1515 = vshrl.u32 %v1514, 7
  %v1516 = vsub.s32 %v1513, %v1515
  %v1517 = vrot.slane %v966, %v1516
  %v1519 = vunpack.c.l.s4 1983009808
  %v1520 = vunpack.c.0.s8 %v1519
  %v1521 = vlaneseq
  %v1522 = vshrl.u32 %v1521, 7
  %v1523 = vsub.s32 %v1520, %v1522
  %v1524 = vrot.slane %v1510, %v1523
  %v1525 = vcombine.high %v1517, %v1517
  %v1526 = vcombine.high %v1524, %v1524
  %v1527 = vcombine.high %v967, %v967
  %v1529 = vunpack.c.l.s4 1983009808
  %v1530 = vunpack.c.0.s8 %v1529
  %v1531 = vlaneseq
  %v1532 = vshrl.u32 %v1531, 7
  %v1533 = vsub.s32 %v1530, %v1532
  %v1534 = vrot.slane %v967, %v1533
  %v1536 = vunpack.c.l.s4 1983009808
  %v1537 = vunpack.c.0.s8 %v1536
  %v1538 = vlaneseq
  %v1539 = vshrl.u32 %v1538, 7
  %v1540 = vsub.s32 %v1537, %v1539
  %v1541 = vrot.slane %v1527, %v1540
  %v1542 = vcombine.high %v1534, %v1534
  %v1543 = vcombine.high %v1541, %v1541
  %v1672 = vlaneseq
  %v1673 = vshrl.u32 %v1672, 7
  %v1674 = vsub.s32 1, %v1673
  %v1675 = vrot.slane %v1007, %v1674
  %v1676 = vlaneseq
  %v1677 = vshrl.u32 %v1676, 7
  %v1678 = vsub.s32 1, %v1677
  %v1679 = vrot.slane %v1015, %v1678
  %v1680 = vlaneseq
  %v1681 = vshrl.u32 %v1680, 7
  %v1682 = vsub.s32 1, %v1681
  %v1683 = vrot.slane %v1014, %v1682
  %v1684 = vlaneseq
  %v1685 = vshrl.u32 %v1684, 7
  %v1686 = vsub.s32 1, %v1685
  %v1687 = vrot.slane %v1016, %v1686
  %v1688 = vlaneseq
  %v1689 = vshrl.u32 %v1688, 7
  %v1690 = vsub.s32 1, %v1689
  %v1691 = vrot.slane %v1024, %v1690
  %v1692 = vlaneseq
  %v1693 = vshrl.u32 %v1692, 7
  %v1694 = vsub.s32 1, %v1693
  %v1695 = vrot.slane %v1032, %v1694
  %v1696 = vlaneseq
  %v1697 = vshrl.u32 %v1696, 7
  %v1698 = vsub.s32 1, %v1697
  %v1699 = vrot.slane %v1031, %v1698
  %v1700 = vlaneseq
  %v1701 = vshrl.u32 %v1700, 7
  %v1702 = vsub.s32 1, %v1701
  %v1703 = vrot.slane %v1041, %v1702
  %v1704 = vlaneseq
  %v1705 = vshrl.u32 %v1704, 7
  %v1706 = vsub.s32 1, %v1705
  %v1707 = vrot.slane %v1049, %v1706
  %v1708 = vlaneseq
  %v1709 = vshrl.u32 %v1708, 7
  %v1710 = vsub.s32 1, %v1709
  %v1711 = vrot.slane %v1048, %v1710
  %v1712 = vlaneseq
  %v1713 = vshrl.u32 %v1712, 7
  %v1714 = vsub.s32 1, %v1713
  %v1715 = vrot.slane %v1050, %v1714
  %v1716 = vlaneseq
  %v1717 = vshrl.u32 %v1716, 7
  %v1718 = vsub.s32 1, %v1717
  %v1719 = vrot.slane %v1058, %v1718
  %v1720 = vlaneseq
  %v1721 = vshrl.u32 %v1720, 7
  %v1722 = vsub.s32 1, %v1721
  %v1723 = vrot.slane %v1066, %v1722
  %v1724 = vlaneseq
  %v1725 = vshrl.u32 %v1724, 7
  %v1726 = vsub.s32 1, %v1725
  %v1727 = vrot.slane %v1065, %v1726
  %v1728 = vlaneseq
  %v1729 = vshrl.u32 %v1728, 7
  %v1730 = vsub.s32 1, %v1729
  %v1731 = vrot.slane %v1075, %v1730
  %v1732 = vlaneseq
  %v1733 = vshrl.u32 %v1732, 7
  %v1734 = vsub.s32 1, %v1733
  %v1735 = vrot.slane %v1083, %v1734
  %v1736 = vlaneseq
  %v1737 = vshrl.u32 %v1736, 7
  %v1738 = vsub.s32 1, %v1737
  %v1739 = vrot.slane %v1082, %v1738
  %v1740 = vlaneseq
  %v1741 = vshrl.u32 %v1740, 7
  %v1742 = vsub.s32 1, %v1741
  %v1743 = vrot.slane %v1084, %v1742
  %v1744 = vlaneseq
  %v1745 = vshrl.u32 %v1744, 7
  %v1746 = vsub.s32 1, %v1745
  %v1747 = vrot.slane %v1092, %v1746
  %v1748 = vlaneseq
  %v1749 = vshrl.u32 %v1748, 7
  %v1750 = vsub.s32 1, %v1749
  %v1751 = vrot.slane %v1100, %v1750
  %v1752 = vlaneseq
  %v1753 = vshrl.u32 %v1752, 7
  %v1754 = vsub.s32 1, %v1753
  %v1755 = vrot.slane %v1099, %v1754
  %v1756 = vlaneseq
  %v1757 = vshrl.u32 %v1756, 7
  %v1758 = vsub.s32 1, %v1757
  %v1759 = vrot.slane %v1109, %v1758
  %v1760 = vlaneseq
  %v1761 = vshrl.u32 %v1760, 7
  %v1762 = vsub.s32 1, %v1761
  %v1763 = vrot.slane %v1117, %v1762
  %v1764 = vlaneseq
  %v1765 = vshrl.u32 %v1764, 7
  %v1766 = vsub.s32 1, %v1765
  %v1767 = vrot.slane %v1116, %v1766
  %v1768 = vlaneseq
  %v1769 = vshrl.u32 %v1768, 7
  %v1770 = vsub.s32 1, %v1769
  %v1771 = vrot.slane %v1118, %v1770
  %v1772 = vlaneseq
  %v1773 = vshrl.u32 %v1772, 7
  %v1774 = vsub.s32 1, %v1773
  %v1775 = vrot.slane %v1126, %v1774
  %v1776 = vlaneseq
  %v1777 = vshrl.u32 %v1776, 7
  %v1778 = vsub.s32 1, %v1777
  %v1779 = vrot.slane %v1134, %v1778
  %v1780 = vlaneseq
  %v1781 = vshrl.u32 %v1780, 7
  %v1782 = vsub.s32 1, %v1781
  %v1783 = vrot.slane %v1133, %v1782
  %v1784 = vlaneseq
  %v1785 = vshrl.u32 %v1784, 7
  %v1786 = vsub.s32 1, %v1785
  %v1787 = vrot.slane %v1143, %v1786
  %v1788 = vlaneseq
  %v1789 = vshrl.u32 %v1788, 7
  %v1790 = vsub.s32 1, %v1789
  %v1791 = vrot.slane %v1151, %v1790
  %v1792 = vlaneseq
  %v1793 = vshrl.u32 %v1792, 7
  %v1794 = vsub.s32 1, %v1793
  %v1795 = vrot.slane %v1150, %v1794
  %v1796 = vlaneseq
  %v1797 = vshrl.u32 %v1796, 7
  %v1798 = vsub.s32 1, %v1797
  %v1799 = vrot.slane %v1152, %v1798
  %v1800 = vlaneseq
  %v1801 = vshrl.u32 %v1800, 7
  %v1802 = vsub.s32 1, %v1801
  %v1803 = vrot.slane %v1160, %v1802
  %v1804 = vlaneseq
  %v1805 = vshrl.u32 %v1804, 7
  %v1806 = vsub.s32 1, %v1805
  %v1807 = vrot.slane %v1168, %v1806
  %v1808 = vlaneseq
  %v1809 = vshrl.u32 %v1808, 7
  %v1810 = vsub.s32 1, %v1809
  %v1811 = vrot.slane %v1167, %v1810
  %v1812 = vlaneseq
  %v1813 = vshrl.u32 %v1812, 7
  %v1814 = vsub.s32 1, %v1813
  %v1815 = vrot.slane %v1177, %v1814
  %v1816 = vlaneseq
  %v1817 = vshrl.u32 %v1816, 7
  %v1818 = vsub.s32 1, %v1817
  %v1819 = vrot.slane %v1185, %v1818
  %v1820 = vlaneseq
  %v1821 = vshrl.u32 %v1820, 7
  %v1822 = vsub.s32 1, %v1821
  %v1823 = vrot.slane %v1184, %v1822
  %v1824 = vlaneseq
  %v1825 = vshrl.u32 %v1824, 7
  %v1826 = vsub.s32 1, %v1825
  %v1827 = vrot.slane %v1186, %v1826
  %v1828 = vlaneseq
  %v1829 = vshrl.u32 %v1828, 7
  %v1830 = vsub.s32 1, %v1829
  %v1831 = vrot.slane %v1194, %v1830
  %v1832 = vlaneseq
  %v1833 = vshrl.u32 %v1832, 7
  %v1834 = vsub.s32 1, %v1833
  %v1835 = vrot.slane %v1202, %v1834
  %v1836 = vlaneseq
  %v1837 = vshrl.u32 %v1836, 7
  %v1838 = vsub.s32 1, %v1837
  %v1839 = vrot.slane %v1201, %v1838
  %v1840 = vlaneseq
  %v1841 = vshrl.u32 %v1840, 7
  %v1842 = vsub.s32 1, %v1841
  %v1843 = vrot.slane %v1211, %v1842
  %v1844 = vlaneseq
  %v1845 = vshrl.u32 %v1844, 7
  %v1846 = vsub.s32 1, %v1845
  %v1847 = vrot.slane %v1219, %v1846
  %v1848 = vlaneseq
  %v1849 = vshrl.u32 %v1848, 7
  %v1850 = vsub.s32 1, %v1849
  %v1851 = vrot.slane %v1218, %v1850
  %v1852 = vlaneseq
  %v1853 = vshrl.u32 %v1852, 7
  %v1854 = vsub.s32 1, %v1853
  %v1855 = vrot.slane %v1220, %v1854
  %v1856 = vlaneseq
  %v1857 = vshrl.u32 %v1856, 7
  %v1858 = vsub.s32 1, %v1857
  %v1859 = vrot.slane %v1228, %v1858
  %v1860 = vlaneseq
  %v1861 = vshrl.u32 %v1860, 7
  %v1862 = vsub.s32 1, %v1861
  %v1863 = vrot.slane %v1236, %v1862
  %v1864 = vlaneseq
  %v1865 = vshrl.u32 %v1864, 7
  %v1866 = vsub.s32 1, %v1865
  %v1867 = vrot.slane %v1235, %v1866
  %v1868 = vlaneseq
  %v1869 = vshrl.u32 %v1868, 7
  %v1870 = vsub.s32 1, %v1869
  %v1871 = vrot.slane %v1245, %v1870
  %v1872 = vlaneseq
  %v1873 = vshrl.u32 %v1872, 7
  %v1874 = vsub.s32 1, %v1873
  %v1875 = vrot.slane %v1253, %v1874
  %v1876 = vlaneseq
  %v1877 = vshrl.u32 %v1876, 7
  %v1878 = vsub.s32 1, %v1877
  %v1879 = vrot.slane %v1252, %v1878
  %v1880 = vlaneseq
  %v1881 = vshrl.u32 %v1880, 7
  %v1882 = vsub.s32 1, %v1881
  %v1883 = vrot.slane %v1254, %v1882
  %v1884 = vlaneseq
  %v1885 = vshrl.u32 %v1884, 7
  %v1886 = vsub.s32 1, %v1885
  %v1887 = vrot.slane %v1262, %v1886
  %v1888 = vlaneseq
  %v1889 = vshrl.u32 %v1888, 7
  %v1890 = vsub.s32 1, %v1889
  %v1891 = vrot.slane %v1270, %v1890
  %v1892 = vlaneseq
  %v1893 = vshrl.u32 %v1892, 7
  %v1894 = vsub.s32 1, %v1893
  %v1895 = vrot.slane %v1269, %v1894
  %v1896 = vlaneseq
  %v1897 = vshrl.u32 %v1896, 7
  %v1898 = vsub.s32 1, %v1897
  %v1899 = vrot.slane %v1279, %v1898
  %v1900 = vlaneseq
  %v1901 = vshrl.u32 %v1900, 7
  %v1902 = vsub.s32 1, %v1901
  %v1903 = vrot.slane %v1287, %v1902
  %v1904 = vlaneseq
  %v1905 = vshrl.u32 %v1904, 7
  %v1906 = vsub.s32 1, %v1905
  %v1907 = vrot.slane %v1286, %v1906
  %v1908 = vlaneseq
  %v1909 = vshrl.u32 %v1908, 7
  %v1910 = vsub.s32 1, %v1909
  %v1911 = vrot.slane %v1288, %v1910
  %v1912 = vlaneseq
  %v1913 = vshrl.u32 %v1912, 7
  %v1914 = vsub.s32 1, %v1913
  %v1915 = vrot.slane %v1296, %v1914
  %v1916 = vlaneseq
  %v1917 = vshrl.u32 %v1916, 7
  %v1918 = vsub.s32 1, %v1917
  %v1919 = vrot.slane %v1304, %v1918
  %v1920 = vlaneseq
  %v1921 = vshrl.u32 %v1920, 7
  %v1922 = vsub.s32 1, %v1921
  %v1923 = vrot.slane %v1303, %v1922
  %v1924 = vlaneseq
  %v1925 = vshrl.u32 %v1924, 7
  %v1926 = vsub.s32 1, %v1925
  %v1927 = vrot.slane %v1313, %v1926
  %v1928 = vlaneseq
  %v1929 = vshrl.u32 %v1928, 7
  %v1930 = vsub.s32 1, %v1929
  %v1931 = vrot.slane %v1321, %v1930
  %v1932 = vlaneseq
  %v1933 = vshrl.u32 %v1932, 7
  %v1934 = vsub.s32 1, %v1933
  %v1935 = vrot.slane %v1320, %v1934
  %v1936 = vlaneseq
  %v1937 = vshrl.u32 %v1936, 7
  %v1938 = vsub.s32 1, %v1937
  %v1939 = vrot.slane %v1322, %v1938
  %v1940 = vlaneseq
  %v1941 = vshrl.u32 %v1940, 7
  %v1942 = vsub.s32 1, %v1941
  %v1943 = vrot.slane %v1330, %v1942
  %v1944 = vlaneseq
  %v1945 = vshrl.u32 %v1944, 7
  %v1946 = vsub.s32 1, %v1945
  %v1947 = vrot.slane %v1338, %v1946
  %v1948 = vlaneseq
  %v1949 = vshrl.u32 %v1948, 7
  %v1950 = vsub.s32 1, %v1949
  %v1951 = vrot.slane %v1337, %v1950
  %v1952 = vlaneseq
  %v1953 = vshrl.u32 %v1952, 7
  %v1954 = vsub.s32 1, %v1953
  %v1955 = vrot.slane %v1347, %v1954
  %v1956 = vlaneseq
  %v1957 = vshrl.u32 %v1956, 7
  %v1958 = vsub.s32 1, %v1957
  %v1959 = vrot.slane %v1355, %v1958
  %v1960 = vlaneseq
  %v1961 = vshrl.u32 %v1960, 7
  %v1962 = vsub.s32 1, %v1961
  %v1963 = vrot.slane %v1354, %v1962
  %v1964 = vlaneseq
  %v1965 = vshrl.u32 %v1964, 7
  %v1966 = vsub.s32 1, %v1965
  %v1967 = vrot.slane %v1356, %v1966
  %v1968 = vlaneseq
  %v1969 = vshrl.u32 %v1968, 7
  %v1970 = vsub.s32 1, %v1969
  %v1971 = vrot.slane %v1364, %v1970
  %v1972 = vlaneseq
  %v1973 = vshrl.u32 %v1972, 7
  %v1974 = vsub.s32 1, %v1973
  %v1975 = vrot.slane %v1372, %v1974
  %v1976 = vlaneseq
  %v1977 = vshrl.u32 %v1976, 7
  %v1978 = vsub.s32 1, %v1977
  %v1979 = vrot.slane %v1371, %v1978
  %v1980 = vlaneseq
  %v1981 = vshrl.u32 %v1980, 7
  %v1982 = vsub.s32 1, %v1981
  %v1983 = vrot.slane %v1381, %v1982
  %v1984 = vlaneseq
  %v1985 = vshrl.u32 %v1984, 7
  %v1986 = vsub.s32 1, %v1985
  %v1987 = vrot.slane %v1389, %v1986
  %v1988 = vlaneseq
  %v1989 = vshrl.u32 %v1988, 7
  %v1990 = vsub.s32 1, %v1989
  %v1991 = vrot.slane %v1388, %v1990
  %v1992 = vlaneseq
  %v1993 = vshrl.u32 %v1992, 7
  %v1994 = vsub.s32 1, %v1993
  %v1995 = vrot.slane %v1390, %v1994
  %v1996 = vlaneseq
  %v1997 = vshrl.u32 %v1996, 7
  %v1998 = vsub.s32 1, %v1997
  %v1999 = vrot.slane %v1398, %v1998
  %v2000 = vlaneseq
  %v2001 = vshrl.u32 %v2000, 7
  %v2002 = vsub.s32 1, %v2001
  %v2003 = vrot.slane %v1406, %v2002
  %v2004 = vlaneseq
  %v2005 = vshrl.u32 %v2004, 7
  %v2006 = vsub.s32 1, %v2005
  %v2007 = vrot.slane %v1405, %v2006
  %v2008 = vlaneseq
  %v2009 = vshrl.u32 %v2008, 7
  %v2010 = vsub.s32 1, %v2009
  %v2011 = vrot.slane %v1415, %v2010
  %v2012 = vlaneseq
  %v2013 = vshrl.u32 %v2012, 7
  %v2014 = vsub.s32 1, %v2013
  %v2015 = vrot.slane %v1423, %v2014
  %v2016 = vlaneseq
  %v2017 = vshrl.u32 %v2016, 7
  %v2018 = vsub.s32 1, %v2017
  %v2019 = vrot.slane %v1422, %v2018
  %v2020 = vlaneseq
  %v2021 = vshrl.u32 %v2020, 7
  %v2022 = vsub.s32 1, %v2021
  %v2023 = vrot.slane %v1424, %v2022
  %v2024 = vlaneseq
  %v2025 = vshrl.u32 %v2024, 7
  %v2026 = vsub.s32 1, %v2025
  %v2027 = vrot.slane %v1432, %v2026
  %v2028 = vlaneseq
  %v2029 = vshrl.u32 %v2028, 7
  %v2030 = vsub.s32 1, %v2029
  %v2031 = vrot.slane %v1440, %v2030
  %v2032 = vlaneseq
  %v2033 = vshrl.u32 %v2032, 7
  %v2034 = vsub.s32 1, %v2033
  %v2035 = vrot.slane %v1439, %v2034
  %v2036 = vlaneseq
  %v2037 = vshrl.u32 %v2036, 7
  %v2038 = vsub.s32 1, %v2037
  %v2039 = vrot.slane %v1449, %v2038
  %v2040 = vlaneseq
  %v2041 = vshrl.u32 %v2040, 7
  %v2042 = vsub.s32 1, %v2041
  %v2043 = vrot.slane %v1457, %v2042
  %v2044 = vlaneseq
  %v2045 = vshrl.u32 %v2044, 7
  %v2046 = vsub.s32 1, %v2045
  %v2047 = vrot.slane %v1456, %v2046
  %v2048 = vlaneseq
  %v2049 = vshrl.u32 %v2048, 7
  %v2050 = vsub.s32 1, %v2049
  %v2051 = vrot.slane %v1458, %v2050
  %v2052 = vlaneseq
  %v2053 = vshrl.u32 %v2052, 7
  %v2054 = vsub.s32 1, %v2053
  %v2055 = vrot.slane %v1466, %v2054
  %v2056 = vlaneseq
  %v2057 = vshrl.u32 %v2056, 7
  %v2058 = vsub.s32 1, %v2057
  %v2059 = vrot.slane %v1474, %v2058
  %v2060 = vlaneseq
  %v2061 = vshrl.u32 %v2060, 7
  %v2062 = vsub.s32 1, %v2061
  %v2063 = vrot.slane %v1473, %v2062
  %v2064 = vlaneseq
  %v2065 = vshrl.u32 %v2064, 7
  %v2066 = vsub.s32 1, %v2065
  %v2067 = vrot.slane %v1483, %v2066
  %v2068 = vlaneseq
  %v2069 = vshrl.u32 %v2068, 7
  %v2070 = vsub.s32 1, %v2069
  %v2071 = vrot.slane %v1491, %v2070
  %v2072 = vlaneseq
  %v2073 = vshrl.u32 %v2072, 7
  %v2074 = vsub.s32 1, %v2073
  %v2075 = vrot.slane %v1490, %v2074
  %v2076 = vlaneseq
  %v2077 = vshrl.u32 %v2076, 7
  %v2078 = vsub.s32 1, %v2077
  %v2079 = vrot.slane %v1492, %v2078
  %v2080 = vlaneseq
  %v2081 = vshrl.u32 %v2080, 7
  %v2082 = vsub.s32 1, %v2081
  %v2083 = vrot.slane %v1500, %v2082
  %v2084 = vlaneseq
  %v2085 = vshrl.u32 %v2084, 7
  %v2086 = vsub.s32 1, %v2085
  %v2087 = vrot.slane %v1508, %v2086
  %v2088 = vlaneseq
  %v2089 = vshrl.u32 %v2088, 7
  %v2090 = vsub.s32 1, %v2089
  %v2091 = vrot.slane %v1507, %v2090
  %v2092 = vlaneseq
  %v2093 = vshrl.u32 %v2092, 7
  %v2094 = vsub.s32 1, %v2093
  %v2095 = vrot.slane %v1517, %v2094
  %v2096 = vlaneseq
  %v2097 = vshrl.u32 %v2096, 7
  %v2098 = vsub.s32 1, %v2097
  %v2099 = vrot.slane %v1525, %v2098
  %v2100 = vlaneseq
  %v2101 = vshrl.u32 %v2100, 7
  %v2102 = vsub.s32 1, %v2101
  %v2103 = vrot.slane %v1524, %v2102
  %v2104 = vlaneseq
  %v2105 = vshrl.u32 %v2104, 7
  %v2106 = vsub.s32 1, %v2105
  %v2107 = vrot.slane %v1526, %v2106
  %v2108 = vlaneseq
  %v2109 = vshrl.u32 %v2108, 7
  %v2110 = vsub.s32 1, %v2109
  %v2111 = vrot.slane %v1534, %v2110
  %v2112 = vlaneseq
  %v2113 = vshrl.u32 %v2112, 7
  %v2114 = vsub.s32 1, %v2113
  %v2115 = vrot.slane %v1542, %v2114
  %v2116 = vlaneseq
  %v2117 = vshrl.u32 %v2116, 7
  %v2118 = vsub.s32 1, %v2117
  %v2119 = vrot.slane %v1541, %v2118
  %vm2120 = vcmask 1042434
  %v2121 = vsel %vm2120, %v1679, %v1675
  %vm2122 = vcmask 1043459
  %v2123 = vsel %vm2122, %v1683, %v2121
  %vm2124 = vcmask 1044484
  %v2125 = vsel %vm2124, %v1687, %v2123
  %vm2126 = vcmask 1045509
  %v2127 = vsel %vm2126, %v1691, %v2125
  %vm2128 = vcmask 1046534
  %v2129 = vsel %vm2128, %v1695, %v2127
  %vm2130 = vcmask 1047559
  %v2131 = vsel %vm2130, %v1699, %v2129
  %v2132 = vsel %vm2120, %v1707, %v1703
  %v2133 = vsel %vm2122, %v1711, %v2132
  %v2134 = vsel %vm2124, %v1715, %v2133
  %v2135 = vsel %vm2126, %v1719, %v2134
  %v2136 = vsel %vm2128, %v1723, %v2135
  %v2137 = vsel %vm2130, %v1727, %v2136
  %v2138 = vsel %vm2120, %v1735, %v1731
  %v2139 = vsel %vm2122, %v1739, %v2138
  %v2140 = vsel %vm2124, %v1743, %v2139
  %v2141 = vsel %vm2126, %v1747, %v2140
  %v2142 = vsel %vm2128, %v1751, %v2141
  %v2143 = vsel %vm2130, %v1755, %v2142
  %v2144 = vsel %vm2120, %v1763, %v1759
  %v2145 = vsel %vm2122, %v1767, %v2144
  %v2146 = vsel %vm2124, %v1771, %v2145
  %v2147 = vsel %vm2126, %v1775, %v2146
  %v2148 = vsel %vm2128, %v1779, %v2147
  %v2149 = vsel %vm2130, %v1783, %v2148
  %v2150 = vsel %vm2120, %v1791, %v1787
  %v2151 = vsel %vm2122, %v1795, %v2150
  %v2152 = vsel %vm2124, %v1799, %v2151
  %v2153 = vsel %vm2126, %v1803, %v2152
  %v2154 = vsel %vm2128, %v1807, %v2153
  %v2155 = vsel %vm2130, %v1811, %v2154
  %v2156 = vsel %vm2120, %v1819, %v1815
  %v2157 = vsel %vm2122, %v1823, %v2156
  %v2158 = vsel %vm2124, %v1827, %v2157
  %v2159 = vsel %vm2126, %v1831, %v2158
  %v2160 = vsel %vm2128, %v1835, %v2159
  %v2161 = vsel %vm2130, %v1839, %v2160
  %v2162 = vsel %vm2120, %v1847, %v1843
  %v2163 = vsel %vm2122, %v1851, %v2162
  %v2164 = vsel %vm2124, %v1855, %v2163
  %v2165 = vsel %vm2126, %v1859, %v2164
  %v2166 = vsel %vm2128, %v1863, %v2165
  %v2167 = vsel %vm2130, %v1867, %v2166
  %v2168 = vsel %vm2120, %v1875, %v1871
  %v2169 = vsel %vm2122, %v1879, %v2168
  %v2170 = vsel %vm2124, %v1883, %v2169
  %v2171 = vsel %vm2126, %v1887, %v2170
  %v2172 = vsel %vm2128, %v1891, %v2171
  %v2173 = vsel %vm2130, %v1895, %v2172
  %v2174 = vsel %vm2120, %v1903, %v1899
  %v2175 = vsel %vm2122, %v1907, %v2174
  %v2176 = vsel %vm2124, %v1911, %v2175
  %v2177 = vsel %vm2126, %v1915, %v2176
  %v2178 = vsel %vm2128, %v1919, %v2177
  %v2179 = vsel %vm2130, %v1923, %v2178
  %v2180 = vsel %vm2120, %v1931, %v1927
  %v2181 = vsel %vm2122, %v1935, %v2180
  %v2182 = vsel %vm2124, %v1939, %v2181
  %v2183 = vsel %vm2126, %v1943, %v2182
  %v2184 = vsel %vm2128, %v1947, %v2183
  %v2185 = vsel %vm2130, %v1951, %v2184
  %v2186 = vsel %vm2120, %v1959, %v1955
  %v2187 = vsel %vm2122, %v1963, %v2186
  %v2188 = vsel %vm2124, %v1967, %v2187
  %v2189 = vsel %vm2126, %v1971, %v2188
  %v2190 = vsel %vm2128, %v1975, %v2189
  %v2191 = vsel %vm2130, %v1979, %v2190
  %v2192 = vsel %vm2120, %v1987, %v1983
  %v2193 = vsel %vm2122, %v1991, %v2192
  %v2194 = vsel %vm2124, %v1995, %v2193
  %v2195 = vsel %vm2126, %v1999, %v2194
  %v2196 = vsel %vm2128, %v2003, %v2195
  %v2197 = vsel %vm2130, %v2007, %v2196
  %v2198 = vsel %vm2120, %v2015, %v2011
  %v2199 = vsel %vm2122, %v2019, %v2198
  %v2200 = vsel %vm2124, %v2023, %v2199
  %v2201 = vsel %vm2126, %v2027, %v2200
  %v2202 = vsel %vm2128, %v2031, %v2201
  %v2203 = vsel %vm2130, %v2035, %v2202
  %v2204 = vsel %vm2120, %v2043, %v2039
  %v2205 = vsel %vm2122, %v2047, %v2204
  %v2206 = vsel %vm2124, %v2051, %v2205
  %v2207 = vsel %vm2126, %v2055, %v2206
  %v2208 = vsel %vm2128, %v2059, %v2207
  %v2209 = vsel %vm2130, %v2063, %v2208
  %v2210 = vsel %vm2120, %v2071, %v2067
  %v2211 = vsel %vm2122, %v2075, %v2210
  %v2212 = vsel %vm2124, %v2079, %v2211
  %v2213 = vsel %vm2126, %v2083, %v2212
  %v2214 = vsel %vm2128, %v2087, %v2213
  %v2215 = vsel %vm2130, %v2091, %v2214
  %v2216 = vsel %vm2120, %v2099, %v2095
  %v2217 = vsel %vm2122, %v2103, %v2216
  %v2218 = vsel %vm2124, %v2107, %v2217
  %v2219 = vsel %vm2126, %v2111, %v2218
  %v2220 = vsel %vm2128, %v2115, %v2219
  %v2221 = vsel %vm2130, %v2119, %v2220
  %vm2238 = vcmask 1040384
  %v2239 = vsel %vm2238, 0.0, %v2131
  %v2240 = vsel %vm2238, 0.0, %v2137
  %v2241 = vsel %vm2238, 0.0, %v2143
  %v2242 = vsel %vm2238, 0.0, %v2149
  %v2243 = vsel %vm2238, 0.0, %v2155
  %v2244 = vsel %vm2238, 0.0, %v2161
  %v2245 = vsel %vm2238, 0.0, %v2167
  %v2246 = vsel %vm2238, 0.0, %v2173
  %v2247 = vsel %vm2238, 0.0, %v2179
  %v2248 = vsel %vm2238, 0.0, %v2185
  %v2249 = vsel %vm2238, 0.0, %v2191
  %v2250 = vsel %vm2238, 0.0, %v2197
  %v2251 = vsel %vm2238, 0.0, %v2203
  %v2252 = vsel %vm2238, 0.0, %v2209
  %v2253 = vsel %vm2238, 0.0, %v2215
  %v2254 = vsel %vm2238, 0.0, %v2221
  %v2255 = vrot.slane %v1007, 7
  %v2256 = vrot.slane %v2255, 2
  %v2257 = vrot.slane %v1015, 7
  %v2258 = vrot.slane %v2257, 2
  %v2259 = vrot.slane %v1014, 7
  %v2260 = vrot.slane %v2259, 2
  %v2261 = vrot.slane %v1016, 7
  %v2262 = vrot.slane %v2261, 2
  %v2263 = vrot.slane %v1024, 7
  %v2264 = vrot.slane %v2263, 2
  %v2265 = vrot.slane %v1032, 7
  %v2266 = vrot.slane %v2265, 2
  %v2267 = vrot.slane %v1031, 7
  %v2268 = vrot.slane %v2267, 2
  %v2269 = vrot.slane %v1033, 7
  %v2270 = vrot.slane %v2269, 2
  %v2271 = vrot.slane %v1041, 7
  %v2272 = vrot.slane %v2271, 2
  %v2273 = vrot.slane %v1049, 7
  %v2274 = vrot.slane %v2273, 2
  %v2275 = vrot.slane %v1048, 7
  %v2276 = vrot.slane %v2275, 2
  %v2277 = vrot.slane %v1050, 7
  %v2278 = vrot.slane %v2277, 2
  %v2279 = vrot.slane %v1058, 7
  %v2280 = vrot.slane %v2279, 2
  %v2281 = vrot.slane %v1066, 7
  %v2282 = vrot.slane %v2281, 2
  %v2283 = vrot.slane %v1065, 7
  %v2284 = vrot.slane %v2283, 2
  %v2285 = vrot.slane %v1067, 7
  %v2286 = vrot.slane %v2285, 2
  %v2287 = vrot.slane %v1075, 7
  %v2288 = vrot.slane %v2287, 2
  %v2289 = vrot.slane %v1083, 7
  %v2290 = vrot.slane %v2289, 2
  %v2291 = vrot.slane %v1082, 7
  %v2292 = vrot.slane %v2291, 2
  %v2293 = vrot.slane %v1084, 7
  %v2294 = vrot.slane %v2293, 2
  %v2295 = vrot.slane %v1092, 7
  %v2296 = vrot.slane %v2295, 2
  %v2297 = vrot.slane %v1100, 7
  %v2298 = vrot.slane %v2297, 2
  %v2299 = vrot.slane %v1099, 7
  %v2300 = vrot.slane %v2299, 2
  %v2301 = vrot.slane %v1101, 7
  %v2302 = vrot.slane %v2301, 2
  %v2303 = vrot.slane %v1109, 7
  %v2304 = vrot.slane %v2303, 2
  %v2305 = vrot.slane %v1117, 7
  %v2306 = vrot.slane %v2305, 2
  %v2307 = vrot.slane %v1116, 7
  %v2308 = vrot.slane %v2307, 2
  %v2309 = vrot.slane %v1118, 7
  %v2310 = vrot.slane %v2309, 2
  %v2311 = vrot.slane %v1126, 7
  %v2312 = vrot.slane %v2311, 2
  %v2313 = vrot.slane %v1134, 7
  %v2314 = vrot.slane %v2313, 2
  %v2315 = vrot.slane %v1133, 7
  %v2316 = vrot.slane %v2315, 2
  %v2317 = vrot.slane %v1135, 7
  %v2318 = vrot.slane %v2317, 2
  %v2319 = vrot.slane %v1143, 7
  %v2320 = vrot.slane %v2319, 2
  %v2321 = vrot.slane %v1151, 7
  %v2322 = vrot.slane %v2321, 2
  %v2323 = vrot.slane %v1150, 7
  %v2324 = vrot.slane %v2323, 2
  %v2325 = vrot.slane %v1152, 7
  %v2326 = vrot.slane %v2325, 2
  %v2327 = vrot.slane %v1160, 7
  %v2328 = vrot.slane %v2327, 2
  %v2329 = vrot.slane %v1168, 7
  %v2330 = vrot.slane %v2329, 2
  %v2331 = vrot.slane %v1167, 7
  %v2332 = vrot.slane %v2331, 2
  %v2333 = vrot.slane %v1169, 7
  %v2334 = vrot.slane %v2333, 2
  %v2335 = vrot.slane %v1177, 7
  %v2336 = vrot.slane %v2335, 2
  %v2337 = vrot.slane %v1185, 7
  %v2338 = vrot.slane %v2337, 2
  %v2339 = vrot.slane %v1184, 7
  %v2340 = vrot.slane %v2339, 2
  %v2341 = vrot.slane %v1186, 7
  %v2342 = vrot.slane %v2341, 2
  %v2343 = vrot.slane %v1194, 7
  %v2344 = vrot.slane %v2343, 2
  %v2345 = vrot.slane %v1202, 7
  %v2346 = vrot.slane %v2345, 2
  %v2347 = vrot.slane %v1201, 7
  %v2348 = vrot.slane %v2347, 2
  %v2349 = vrot.slane %v1203, 7
  %v2350 = vrot.slane %v2349, 2
  %v2351 = vrot.slane %v1211, 7
  %v2352 = vrot.slane %v2351, 2
  %v2353 = vrot.slane %v1219, 7
  %v2354 = vrot.slane %v2353, 2
  %v2355 = vrot.slane %v1218, 7
  %v2356 = vrot.slane %v2355, 2
  %v2357 = vrot.slane %v1220, 7
  %v2358 = vrot.slane %v2357, 2
  %v2359 = vrot.slane %v1228, 7
  %v2360 = vrot.slane %v2359, 2
  %v2361 = vrot.slane %v1236, 7
  %v2362 = vrot.slane %v2361, 2
  %v2363 = vrot.slane %v1235, 7
  %v2364 = vrot.slane %v2363, 2
  %v2365 = vrot.slane %v1237, 7
  %v2366 = vrot.slane %v2365, 2
  %v2367 = vrot.slane %v1245, 7
  %v2368 = vrot.slane %v2367, 2
  %v2369 = vrot.slane %v1253, 7
  %v2370 = vrot.slane %v2369, 2
  %v2371 = vrot.slane %v1252, 7
  %v2372 = vrot.slane %v2371, 2
  %v2373 = vrot.slane %v1254, 7
  %v2374 = vrot.slane %v2373, 2
  %v2375 = vrot.slane %v1262, 7
  %v2376 = vrot.slane %v2375, 2
  %v2377 = vrot.slane %v1270, 7
  %v2378 = vrot.slane %v2377, 2
  %v2379 = vrot.slane %v1269, 7
  %v2380 = vrot.slane %v2379, 2
  %v2381 = vrot.slane %v1271, 7
  %v2382 = vrot.slane %v2381, 2
  %v2383 = vrot.slane %v1279, 7
  %v2384 = vrot.slane %v2383, 2
  %v2385 = vrot.slane %v1287, 7
  %v2386 = vrot.slane %v2385, 2
  %v2387 = vrot.slane %v1286, 7
  %v2388 = vrot.slane %v2387, 2
  %v2389 = vrot.slane %v1288, 7
  %v2390 = vrot.slane %v2389, 2
  %v2391 = vrot.slane %v1296, 7
  %v2392 = vrot.slane %v2391, 2
  %v2393 = vrot.slane %v1304, 7
  %v2394 = vrot.slane %v2393, 2
  %v2395 = vrot.slane %v1303, 7
  %v2396 = vrot.slane %v2395, 2
  %v2397 = vrot.slane %v1305, 7
  %v2398 = vrot.slane %v2397, 2
  %v2399 = vrot.slane %v1313, 7
  %v2400 = vrot.slane %v2399, 2
  %v2401 = vrot.slane %v1321, 7
  %v2402 = vrot.slane %v2401, 2
  %v2403 = vrot.slane %v1320, 7
  %v2404 = vrot.slane %v2403, 2
  %v2405 = vrot.slane %v1322, 7
  %v2406 = vrot.slane %v2405, 2
  %v2407 = vrot.slane %v1330, 7
  %v2408 = vrot.slane %v2407, 2
  %v2409 = vrot.slane %v1338, 7
  %v2410 = vrot.slane %v2409, 2
  %v2411 = vrot.slane %v1337, 7
  %v2412 = vrot.slane %v2411, 2
  %v2413 = vrot.slane %v1339, 7
  %v2414 = vrot.slane %v2413, 2
  %v2415 = vrot.slane %v1347, 7
  %v2416 = vrot.slane %v2415, 2
  %v2417 = vrot.slane %v1355, 7
  %v2418 = vrot.slane %v2417, 2
  %v2419 = vrot.slane %v1354, 7
  %v2420 = vrot.slane %v2419, 2
  %v2421 = vrot.slane %v1356, 7
  %v2422 = vrot.slane %v2421, 2
  %v2423 = vrot.slane %v1364, 7
  %v2424 = vrot.slane %v2423, 2
  %v2425 = vrot.slane %v1372, 7
  %v2426 = vrot.slane %v2425, 2
  %v2427 = vrot.slane %v1371, 7
  %v2428 = vrot.slane %v2427, 2
  %v2429 = vrot.slane %v1373, 7
  %v2430 = vrot.slane %v2429, 2
  %v2431 = vrot.slane %v1381, 7
  %v2432 = vrot.slane %v2431, 2
  %v2433 = vrot.slane %v1389, 7
  %v2434 = vrot.slane %v2433, 2
  %v2435 = vrot.slane %v1388, 7
  %v2436 = vrot.slane %v2435, 2
  %v2437 = vrot.slane %v1390, 7
  %v2438 = vrot.slane %v2437, 2
  %v2439 = vrot.slane %v1398, 7
  %v2440 = vrot.slane %v2439, 2
  %v2441 = vrot.slane %v1406, 7
  %v2442 = vrot.slane %v2441, 2
  %v2443 = vrot.slane %v1405, 7
  %v2444 = vrot.slane %v2443, 2
  %v2445 = vrot.slane %v1407, 7
  %v2446 = vrot.slane %v2445, 2
  %v2447 = vrot.slane %v1415, 7
  %v2448 = vrot.slane %v2447, 2
  %v2449 = vrot.slane %v1423, 7
  %v2450 = vrot.slane %v2449, 2
  %v2451 = vrot.slane %v1422, 7
  %v2452 = vrot.slane %v2451, 2
  %v2453 = vrot.slane %v1424, 7
  %v2454 = vrot.slane %v2453, 2
  %v2455 = vrot.slane %v1432, 7
  %v2456 = vrot.slane %v2455, 2
  %v2457 = vrot.slane %v1440, 7
  %v2458 = vrot.slane %v2457, 2
  %v2459 = vrot.slane %v1439, 7
  %v2460 = vrot.slane %v2459, 2
  %v2461 = vrot.slane %v1441, 7
  %v2462 = vrot.slane %v2461, 2
  %v2463 = vrot.slane %v1449, 7
  %v2464 = vrot.slane %v2463, 2
  %v2465 = vrot.slane %v1457, 7
  %v2466 = vrot.slane %v2465, 2
  %v2467 = vrot.slane %v1456, 7
  %v2468 = vrot.slane %v2467, 2
  %v2469 = vrot.slane %v1458, 7
  %v2470 = vrot.slane %v2469, 2
  %v2471 = vrot.slane %v1466, 7
  %v2472 = vrot.slane %v2471, 2
  %v2473 = vrot.slane %v1474, 7
  %v2474 = vrot.slane %v2473, 2
  %v2475 = vrot.slane %v1473, 7
  %v2476 = vrot.slane %v2475, 2
  %v2477 = vrot.slane %v1475, 7
  %v2478 = vrot.slane %v2477, 2
  %v2479 = vrot.slane %v1483, 7
  %v2480 = vrot.slane %v2479, 2
  %v2481 = vrot.slane %v1491, 7
  %v2482 = vrot.slane %v2481, 2
  %v2483 = vrot.slane %v1490, 7
  %v2484 = vrot.slane %v2483, 2
  %v2485 = vrot.slane %v1492, 7
  %v2486 = vrot.slane %v2485, 2
  %v2487 = vrot.slane %v1500, 7
  %v2488 = vrot.slane %v2487, 2
  %v2489 = vrot.slane %v1508, 7
  %v2490 = vrot.slane %v2489, 2
  %v2491 = vrot.slane %v1507, 7
  %v2492 = vrot.slane %v2491, 2
  %v2493 = vrot.slane %v1509, 7
  %v2494 = vrot.slane %v2493, 2
  %v2495 = vrot.slane %v1517, 7
  %v2496 = vrot.slane %v2495, 2
  %v2497 = vrot.slane %v1525, 7
  %v2498 = vrot.slane %v2497, 2
  %v2499 = vrot.slane %v1524, 7
  %v2500 = vrot.slane %v2499, 2
  %v2501 = vrot.slane %v1526, 7
  %v2502 = vrot.slane %v2501, 2
  %v2503 = vrot.slane %v1534, 7
  %v2504 = vrot.slane %v2503, 2
  %v2505 = vrot.slane %v1542, 7
  %v2506 = vrot.slane %v2505, 2
  %v2507 = vrot.slane %v1541, 7
  %v2508 = vrot.slane %v2507, 2
  %v2509 = vrot.slane %v1543, 7
  %v2510 = vrot.slane %v2509, 2
  %v2639 = vmax.f32 %v1007, %v2256
  %v2640 = vmax.f32 %v1015, %v2258
  %v2641 = vmax.f32 %v1014, %v2260
  %v2642 = vmax.f32 %v1016, %v2262
  %v2643 = vmax.f32 %v1024, %v2264
  %v2644 = vmax.f32 %v1032, %v2266
  %v2645 = vmax.f32 %v1031, %v2268
  %v2646 = vmax.f32 %v1033, %v2270
  %v2647 = vmax.f32 %v1041, %v2272
  %v2648 = vmax.f32 %v1049, %v2274
  %v2649 = vmax.f32 %v1048, %v2276
  %v2650 = vmax.f32 %v1050, %v2278
  %v2651 = vmax.f32 %v1058, %v2280
  %v2652 = vmax.f32 %v1066, %v2282
  %v2653 = vmax.f32 %v1065, %v2284
  %v2654 = vmax.f32 %v1067, %v2286
  %v2655 = vmax.f32 %v1075, %v2288
  %v2656 = vmax.f32 %v1083, %v2290
  %v2657 = vmax.f32 %v1082, %v2292
  %v2658 = vmax.f32 %v1084, %v2294
  %v2659 = vmax.f32 %v1092, %v2296
  %v2660 = vmax.f32 %v1100, %v2298
  %v2661 = vmax.f32 %v1099, %v2300
  %v2662 = vmax.f32 %v1101, %v2302
  %v2663 = vmax.f32 %v1109, %v2304
  %v2664 = vmax.f32 %v1117, %v2306
  %v2665 = vmax.f32 %v1116, %v2308
  %v2666 = vmax.f32 %v1118, %v2310
  %v2667 = vmax.f32 %v1126, %v2312
  %v2668 = vmax.f32 %v1134, %v2314
  %v2669 = vmax.f32 %v1133, %v2316
  %v2670 = vmax.f32 %v1135, %v2318
  %v2671 = vmax.f32 %v1143, %v2320
  %v2672 = vmax.f32 %v1151, %v2322
  %v2673 = vmax.f32 %v1150, %v2324
  %v2674 = vmax.f32 %v1152, %v2326
  %v2675 = vmax.f32 %v1160, %v2328
  %v2676 = vmax.f32 %v1168, %v2330
  %v2677 = vmax.f32 %v1167, %v2332
  %v2678 = vmax.f32 %v1169, %v2334
  %v2679 = vmax.f32 %v1177, %v2336
  %v2680 = vmax.f32 %v1185, %v2338
  %v2681 = vmax.f32 %v1184, %v2340
  %v2682 = vmax.f32 %v1186, %v2342
  %v2683 = vmax.f32 %v1194, %v2344
  %v2684 = vmax.f32 %v1202, %v2346
  %v2685 = vmax.f32 %v1201, %v2348
  %v2686 = vmax.f32 %v1203, %v2350
  %v2687 = vmax.f32 %v1211, %v2352
  %v2688 = vmax.f32 %v1219, %v2354
  %v2689 = vmax.f32 %v1218, %v2356
  %v2690 = vmax.f32 %v1220, %v2358
  %v2691 = vmax.f32 %v1228, %v2360
  %v2692 = vmax.f32 %v1236, %v2362
  %v2693 = vmax.f32 %v1235, %v2364
  %v2694 = vmax.f32 %v1237, %v2366
  %v2695 = vmax.f32 %v1245, %v2368
  %v2696 = vmax.f32 %v1253, %v2370
  %v2697 = vmax.f32 %v1252, %v2372
  %v2698 = vmax.f32 %v1254, %v2374
  %v2699 = vmax.f32 %v1262, %v2376
  %v2700 = vmax.f32 %v1270, %v2378
  %v2701 = vmax.f32 %v1269, %v2380
  %v2702 = vmax.f32 %v1271, %v2382
  %v2703 = vmax.f32 %v1279, %v2384
  %v2704 = vmax.f32 %v1287, %v2386
  %v2705 = vmax.f32 %v1286, %v2388
  %v2706 = vmax.f32 %v1288, %v2390
  %v2707 = vmax.f32 %v1296, %v2392
  %v2708 = vmax.f32 %v1304, %v2394
  %v2709 = vmax.f32 %v1303, %v2396
  %v2710 = vmax.f32 %v1305, %v2398
  %v2711 = vmax.f32 %v1313, %v2400
  %v2712 = vmax.f32 %v1321, %v2402
  %v2713 = vmax.f32 %v1320, %v2404
  %v2714 = vmax.f32 %v1322, %v2406
  %v2715 = vmax.f32 %v1330, %v2408
  %v2716 = vmax.f32 %v1338, %v2410
  %v2717 = vmax.f32 %v1337, %v2412
  %v2718 = vmax.f32 %v1339, %v2414
  %v2719 = vmax.f32 %v1347, %v2416
  %v2720 = vmax.f32 %v1355, %v2418
  %v2721 = vmax.f32 %v1354, %v2420
  %v2722 = vmax.f32 %v1356, %v2422
  %v2723 = vmax.f32 %v1364, %v2424
  %v2724 = vmax.f32 %v1372, %v2426
  %v2725 = vmax.f32 %v1371, %v2428
  %v2726 = vmax.f32 %v1373, %v2430
  %v2727 = vmax.f32 %v1381, %v2432
  %v2728 = vmax.f32 %v1389, %v2434
  %v2729 = vmax.f32 %v1388, %v2436
  %v2730 = vmax.f32 %v1390, %v2438
  %v2731 = vmax.f32 %v1398, %v2440
  %v2732 = vmax.f32 %v1406, %v2442
  %v2733 = vmax.f32 %v1405, %v2444
  %v2734 = vmax.f32 %v1407, %v2446
  %v2735 = vmax.f32 %v1415, %v2448
  %v2736 = vmax.f32 %v1423, %v2450
  %v2737 = vmax.f32 %v1422, %v2452
  %v2738 = vmax.f32 %v1424, %v2454
  %v2739 = vmax.f32 %v1432, %v2456
  %v2740 = vmax.f32 %v1440, %v2458
  %v2741 = vmax.f32 %v1439, %v2460
  %v2742 = vmax.f32 %v1441, %v2462
  %v2743 = vmax.f32 %v1449, %v2464
  %v2744 = vmax.f32 %v1457, %v2466
  %v2745 = vmax.f32 %v1456, %v2468
  %v2746 = vmax.f32 %v1458, %v2470
  %v2747 = vmax.f32 %v1466, %v2472
  %v2748 = vmax.f32 %v1474, %v2474
  %v2749 = vmax.f32 %v1473, %v2476
  %v2750 = vmax.f32 %v1475, %v2478
  %v2751 = vmax.f32 %v1483, %v2480
  %v2752 = vmax.f32 %v1491, %v2482
  %v2753 = vmax.f32 %v1490, %v2484
  %v2754 = vmax.f32 %v1492, %v2486
  %v2755 = vmax.f32 %v1500, %v2488
  %v2756 = vmax.f32 %v1508, %v2490
  %v2757 = vmax.f32 %v1507, %v2492
  %v2758 = vmax.f32 %v1509, %v2494
  %v2759 = vmax.f32 %v1517, %v2496
  %v2760 = vmax.f32 %v1525, %v2498
  %v2761 = vmax.f32 %v1524, %v2500
  %v2762 = vmax.f32 %v1526, %v2502
  %v2763 = vmax.f32 %v1534, %v2504
  %v2764 = vmax.f32 %v1542, %v2506
  %v2765 = vmax.f32 %v1541, %v2508
  %v2766 = vmax.f32 %v1543, %v2510
  %v2783 = vcombine.high %v2239, %v2239
  %v2785 = vunpack.c.l.s4 1983009808
  %v2786 = vunpack.c.0.s8 %v2785
  %v2787 = vlaneseq
  %v2788 = vshrl.u32 %v2787, 7
  %v2789 = vsub.s32 %v2786, %v2788
  %v2790 = vrot.slane %v2239, %v2789
  %v2792 = vunpack.c.l.s4 1983009808
  %v2793 = vunpack.c.0.s8 %v2792
  %v2794 = vlaneseq
  %v2795 = vshrl.u32 %v2794, 7
  %v2796 = vsub.s32 %v2793, %v2795
  %v2797 = vrot.slane %v2783, %v2796
  %v2798 = vcombine.high %v2790, %v2790
  %v2799 = vcombine.high %v2797, %v2797
  %v2800 = vcombine.high %v2240, %v2240
  %v2802 = vunpack.c.l.s4 1983009808
  %v2803 = vunpack.c.0.s8 %v2802
  %v2804 = vlaneseq
  %v2805 = vshrl.u32 %v2804, 7
  %v2806 = vsub.s32 %v2803, %v2805
  %v2807 = vrot.slane %v2240, %v2806
  %v2809 = vunpack.c.l.s4 1983009808
  %v2810 = vunpack.c.0.s8 %v2809
  %v2811 = vlaneseq
  %v2812 = vshrl.u32 %v2811, 7
  %v2813 = vsub.s32 %v2810, %v2812
  %v2814 = vrot.slane %v2800, %v2813
  %v2815 = vcombine.high %v2807, %v2807
  %v2816 = vcombine.high %v2814, %v2814
  %v2817 = vcombine.high %v2241, %v2241
  %v2819 = vunpack.c.l.s4 1983009808
  %v2820 = vunpack.c.0.s8 %v2819
  %v2821 = vlaneseq
  %v2822 = vshrl.u32 %v2821, 7
  %v2823 = vsub.s32 %v2820, %v2822
  %v2824 = vrot.slane %v2241, %v2823
  %v2826 = vunpack.c.l.s4 1983009808
  %v2827 = vunpack.c.0.s8 %v2826
  %v2828 = vlaneseq
  %v2829 = vshrl.u32 %v2828, 7
  %v2830 = vsub.s32 %v2827, %v2829
  %v2831 = vrot.slane %v2817, %v2830
  %v2832 = vcombine.high %v2824, %v2824
  %v2833 = vcombine.high %v2831, %v2831
  %v2834 = vcombine.high %v2242, %v2242
  %v2836 = vunpack.c.l.s4 1983009808
  %v2837 = vunpack.c.0.s8 %v2836
  %v2838 = vlaneseq
  %v2839 = vshrl.u32 %v2838, 7
  %v2840 = vsub.s32 %v2837, %v2839
  %v2841 = vrot.slane %v2242, %v2840
  %v2843 = vunpack.c.l.s4 1983009808
  %v2844 = vunpack.c.0.s8 %v2843
  %v2845 = vlaneseq
  %v2846 = vshrl.u32 %v2845, 7
  %v2847 = vsub.s32 %v2844, %v2846
  %v2848 = vrot.slane %v2834, %v2847
  %v2849 = vcombine.high %v2841, %v2841
  %v2850 = vcombine.high %v2848, %v2848
  %v2851 = vcombine.high %v2243, %v2243
  %v2853 = vunpack.c.l.s4 1983009808
  %v2854 = vunpack.c.0.s8 %v2853
  %v2855 = vlaneseq
  %v2856 = vshrl.u32 %v2855, 7
  %v2857 = vsub.s32 %v2854, %v2856
  %v2858 = vrot.slane %v2243, %v2857
  %v2860 = vunpack.c.l.s4 1983009808
  %v2861 = vunpack.c.0.s8 %v2860
  %v2862 = vlaneseq
  %v2863 = vshrl.u32 %v2862, 7
  %v2864 = vsub.s32 %v2861, %v2863
  %v2865 = vrot.slane %v2851, %v2864
  %v2866 = vcombine.high %v2858, %v2858
  %v2867 = vcombine.high %v2865, %v2865
  %v2868 = vcombine.high %v2244, %v2244
  %v2870 = vunpack.c.l.s4 1983009808
  %v2871 = vunpack.c.0.s8 %v2870
  %v2872 = vlaneseq
  %v2873 = vshrl.u32 %v2872, 7
  %v2874 = vsub.s32 %v2871, %v2873
  %v2875 = vrot.slane %v2244, %v2874
  %v2877 = vunpack.c.l.s4 1983009808
  %v2878 = vunpack.c.0.s8 %v2877
  %v2879 = vlaneseq
  %v2880 = vshrl.u32 %v2879, 7
  %v2881 = vsub.s32 %v2878, %v2880
  %v2882 = vrot.slane %v2868, %v2881
  %v2883 = vcombine.high %v2875, %v2875
  %v2884 = vcombine.high %v2882, %v2882
  %v2885 = vcombine.high %v2245, %v2245
  %v2887 = vunpack.c.l.s4 1983009808
  %v2888 = vunpack.c.0.s8 %v2887
  %v2889 = vlaneseq
  %v2890 = vshrl.u32 %v2889, 7
  %v2891 = vsub.s32 %v2888, %v2890
  %v2892 = vrot.slane %v2245, %v2891
  %v2894 = vunpack.c.l.s4 1983009808
  %v2895 = vunpack.c.0.s8 %v2894
  %v2896 = vlaneseq
  %v2897 = vshrl.u32 %v2896, 7
  %v2898 = vsub.s32 %v2895, %v2897
  %v2899 = vrot.slane %v2885, %v2898
  %v2900 = vcombine.high %v2892, %v2892
  %v2901 = vcombine.high %v2899, %v2899
  %v2902 = vcombine.high %v2246, %v2246
  %v2904 = vunpack.c.l.s4 1983009808
  %v2905 = vunpack.c.0.s8 %v2904
  %v2906 = vlaneseq
  %v2907 = vshrl.u32 %v2906, 7
  %v2908 = vsub.s32 %v2905, %v2907
  %v2909 = vrot.slane %v2246, %v2908
  %v2911 = vunpack.c.l.s4 1983009808
  %v2912 = vunpack.c.0.s8 %v2911
  %v2913 = vlaneseq
  %v2914 = vshrl.u32 %v2913, 7
  %v2915 = vsub.s32 %v2912, %v2914
  %v2916 = vrot.slane %v2902, %v2915
  %v2917 = vcombine.high %v2909, %v2909
  %v2918 = vcombine.high %v2916, %v2916
  %v2919 = vcombine.high %v2247, %v2247
  %v2921 = vunpack.c.l.s4 1983009808
  %v2922 = vunpack.c.0.s8 %v2921
  %v2923 = vlaneseq
  %v2924 = vshrl.u32 %v2923, 7
  %v2925 = vsub.s32 %v2922, %v2924
  %v2926 = vrot.slane %v2247, %v2925
  %v2928 = vunpack.c.l.s4 1983009808
  %v2929 = vunpack.c.0.s8 %v2928
  %v2930 = vlaneseq
  %v2931 = vshrl.u32 %v2930, 7
  %v2932 = vsub.s32 %v2929, %v2931
  %v2933 = vrot.slane %v2919, %v2932
  %v2934 = vcombine.high %v2926, %v2926
  %v2935 = vcombine.high %v2933, %v2933
  %v2936 = vcombine.high %v2248, %v2248
  %v2938 = vunpack.c.l.s4 1983009808
  %v2939 = vunpack.c.0.s8 %v2938
  %v2940 = vlaneseq
  %v2941 = vshrl.u32 %v2940, 7
  %v2942 = vsub.s32 %v2939, %v2941
  %v2943 = vrot.slane %v2248, %v2942
  %v2945 = vunpack.c.l.s4 1983009808
  %v2946 = vunpack.c.0.s8 %v2945
  %v2947 = vlaneseq
  %v2948 = vshrl.u32 %v2947, 7
  %v2949 = vsub.s32 %v2946, %v2948
  %v2950 = vrot.slane %v2936, %v2949
  %v2951 = vcombine.high %v2943, %v2943
  %v2952 = vcombine.high %v2950, %v2950
  %v2953 = vcombine.high %v2249, %v2249
  %v2955 = vunpack.c.l.s4 1983009808
  %v2956 = vunpack.c.0.s8 %v2955
  %v2957 = vlaneseq
  %v2958 = vshrl.u32 %v2957, 7
  %v2959 = vsub.s32 %v2956, %v2958
  %v2960 = vrot.slane %v2249, %v2959
  %v2962 = vunpack.c.l.s4 1983009808
  %v2963 = vunpack.c.0.s8 %v2962
  %v2964 = vlaneseq
  %v2965 = vshrl.u32 %v2964, 7
  %v2966 = vsub.s32 %v2963, %v2965
  %v2967 = vrot.slane %v2953, %v2966
  %v2968 = vcombine.high %v2960, %v2960
  %v2969 = vcombine.high %v2967, %v2967
  %v2970 = vcombine.high %v2250, %v2250
  %v2972 = vunpack.c.l.s4 1983009808
  %v2973 = vunpack.c.0.s8 %v2972
  %v2974 = vlaneseq
  %v2975 = vshrl.u32 %v2974, 7
  %v2976 = vsub.s32 %v2973, %v2975
  %v2977 = vrot.slane %v2250, %v2976
  %v2979 = vunpack.c.l.s4 1983009808
  %v2980 = vunpack.c.0.s8 %v2979
  %v2981 = vlaneseq
  %v2982 = vshrl.u32 %v2981, 7
  %v2983 = vsub.s32 %v2980, %v2982
  %v2984 = vrot.slane %v2970, %v2983
  %v2985 = vcombine.high %v2977, %v2977
  %v2986 = vcombine.high %v2984, %v2984
  %v2987 = vcombine.high %v2251, %v2251
  %v2989 = vunpack.c.l.s4 1983009808
  %v2990 = vunpack.c.0.s8 %v2989
  %v2991 = vlaneseq
  %v2992 = vshrl.u32 %v2991, 7
  %v2993 = vsub.s32 %v2990, %v2992
  %v2994 = vrot.slane %v2251, %v2993
  %v2996 = vunpack.c.l.s4 1983009808
  %v2997 = vunpack.c.0.s8 %v2996
  %v2998 = vlaneseq
  %v2999 = vshrl.u32 %v2998, 7
  %v3000 = vsub.s32 %v2997, %v2999
  %v3001 = vrot.slane %v2987, %v3000
  %v3002 = vcombine.high %v2994, %v2994
  %v3003 = vcombine.high %v3001, %v3001
  %v3004 = vcombine.high %v2252, %v2252
  %v3006 = vunpack.c.l.s4 1983009808
  %v3007 = vunpack.c.0.s8 %v3006
  %v3008 = vlaneseq
  %v3009 = vshrl.u32 %v3008, 7
  %v3010 = vsub.s32 %v3007, %v3009
  %v3011 = vrot.slane %v2252, %v3010
  %v3013 = vunpack.c.l.s4 1983009808
  %v3014 = vunpack.c.0.s8 %v3013
  %v3015 = vlaneseq
  %v3016 = vshrl.u32 %v3015, 7
  %v3017 = vsub.s32 %v3014, %v3016
  %v3018 = vrot.slane %v3004, %v3017
  %v3019 = vcombine.high %v3011, %v3011
  %v3020 = vcombine.high %v3018, %v3018
  %v3021 = vcombine.high %v2253, %v2253
  %v3023 = vunpack.c.l.s4 1983009808
  %v3024 = vunpack.c.0.s8 %v3023
  %v3025 = vlaneseq
  %v3026 = vshrl.u32 %v3025, 7
  %v3027 = vsub.s32 %v3024, %v3026
  %v3028 = vrot.slane %v2253, %v3027
  %v3030 = vunpack.c.l.s4 1983009808
  %v3031 = vunpack.c.0.s8 %v3030
  %v3032 = vlaneseq
  %v3033 = vshrl.u32 %v3032, 7
  %v3034 = vsub.s32 %v3031, %v3033
  %v3035 = vrot.slane %v3021, %v3034
  %v3036 = vcombine.high %v3028, %v3028
  %v3037 = vcombine.high %v3035, %v3035
  %v3038 = vcombine.high %v2254, %v2254
  %v3040 = vunpack.c.l.s4 1983009808
  %v3041 = vunpack.c.0.s8 %v3040
  %v3042 = vlaneseq
  %v3043 = vshrl.u32 %v3042, 7
  %v3044 = vsub.s32 %v3041, %v3043
  %v3045 = vrot.slane %v2254, %v3044
  %v3047 = vunpack.c.l.s4 1983009808
  %v3048 = vunpack.c.0.s8 %v3047
  %v3049 = vlaneseq
  %v3050 = vshrl.u32 %v3049, 7
  %v3051 = vsub.s32 %v3048, %v3050
  %v3052 = vrot.slane %v3038, %v3051
  %v3053 = vcombine.high %v3045, %v3045
  %v3054 = vcombine.high %v3052, %v3052
  %v3055 = vrot.slane %v2790, 1
  %v3056 = vrot.slane %v2798, 1
  %v3057 = vrot.slane %v2797, 1
  %v3058 = vrot.slane %v2799, 1
  %v3059 = vrot.slane %v2807, 1
  %v3060 = vrot.slane %v2815, 1
  %v3061 = vrot.slane %v2814, 1
  %v3062 = vrot.slane %v2816, 1
  %v3063 = vrot.slane %v2824, 1
  %v3064 = vrot.slane %v2832, 1
  %v3065 = vrot.slane %v2831, 1
  %v3066 = vrot.slane %v2833, 1
  %v3067 = vrot.slane %v2841, 1
  %v3068 = vrot.slane %v2849, 1
  %v3069 = vrot.slane %v2848, 1
  %v3070 = vrot.slane %v2850, 1
  %v3071 = vrot.slane %v2858, 1
  %v3072 = vrot.slane %v2866, 1
  %v3073 = vrot.slane %v2865, 1
  %v3074 = vrot.slane %v2867, 1
  %v3075 = vrot.slane %v2875, 1
  %v3076 = vrot.slane %v2883, 1
  %v3077 = vrot.slane %v2882, 1
  %v3078 = vrot.slane %v2884, 1
  %v3079 = vrot.slane %v2892, 1
  %v3080 = vrot.slane %v2900, 1
  %v3081 = vrot.slane %v2899, 1
  %v3082 = vrot.slane %v2901, 1
  %v3083 = vrot.slane %v2909, 1
  %v3084 = vrot.slane %v2917, 1
  %v3085 = vrot.slane %v2916, 1
  %v3086 = vrot.slane %v2918, 1
  %v3087 = vrot.slane %v2926, 1
  %v3088 = vrot.slane %v2934, 1
  %v3089 = vrot.slane %v2933, 1
  %v3090 = vrot.slane %v2935, 1
  %v3091 = vrot.slane %v2943, 1
  %v3092 = vrot.slane %v2951, 1
  %v3093 = vrot.slane %v2950, 1
  %v3094 = vrot.slane %v2952, 1
  %v3095 = vrot.slane %v2960, 1
  %v3096 = vrot.slane %v2968, 1
  %v3097 = vrot.slane %v2967, 1
  %v3098 = vrot.slane %v2969, 1
  %v3099 = vrot.slane %v2977, 1
  %v3100 = vrot.slane %v2985, 1
  %v3101 = vrot.slane %v2984, 1
  %v3102 = vrot.slane %v2986, 1
  %v3103 = vrot.slane %v2994, 1
  %v3104 = vrot.slane %v3002, 1
  %v3105 = vrot.slane %v3001, 1
  %v3106 = vrot.slane %v3003, 1
  %v3107 = vrot.slane %v3011, 1
  %v3108 = vrot.slane %v3019, 1
  %v3109 = vrot.slane %v3018, 1
  %v3110 = vrot.slane %v3020, 1
  %v3111 = vrot.slane %v3028, 1
  %v3112 = vrot.slane %v3036, 1
  %v3113 = vrot.slane %v3035, 1
  %v3114 = vrot.slane %v3037, 1
  %v3115 = vrot.slane %v3045, 1
  %v3116 = vrot.slane %v3053, 1
  %v3117 = vrot.slane %v3052, 1
  %v3118 = vrot.slane %v3054, 1
  %v3247 = vmax.f32 %v2639, %v2790
  %v3248 = vmax.f32 %v2640, %v3055
  %v3249 = vmax.f32 %v2641, %v2798
  %v3250 = vmax.f32 %v2642, %v3056
  %v3251 = vmax.f32 %v2643, %v2797
  %v3252 = vmax.f32 %v2644, %v3057
  %v3253 = vmax.f32 %v2645, %v2799
  %v3254 = vmax.f32 %v2646, %v3058
  %v3255 = vmax.f32 %v2647, %v2807
  %v3256 = vmax.f32 %v2648, %v3059
  %v3257 = vmax.f32 %v2649, %v2815
  %v3258 = vmax.f32 %v2650, %v3060
  %v3259 = vmax.f32 %v2651, %v2814
  %v3260 = vmax.f32 %v2652, %v3061
  %v3261 = vmax.f32 %v2653, %v2816
  %v3262 = vmax.f32 %v2654, %v3062
  %v3263 = vmax.f32 %v2655, %v2824
  %v3264 = vmax.f32 %v2656, %v3063
  %v3265 = vmax.f32 %v2657, %v2832
  %v3266 = vmax.f32 %v2658, %v3064
  %v3267 = vmax.f32 %v2659, %v2831
  %v3268 = vmax.f32 %v2660, %v3065
  %v3269 = vmax.f32 %v2661, %v2833
  %v3270 = vmax.f32 %v2662, %v3066
  %v3271 = vmax.f32 %v2663, %v2841
  %v3272 = vmax.f32 %v2664, %v3067
  %v3273 = vmax.f32 %v2665, %v2849
  %v3274 = vmax.f32 %v2666, %v3068
  %v3275 = vmax.f32 %v2667, %v2848
  %v3276 = vmax.f32 %v2668, %v3069
  %v3277 = vmax.f32 %v2669, %v2850
  %v3278 = vmax.f32 %v2670, %v3070
  %v3279 = vmax.f32 %v2671, %v2858
  %v3280 = vmax.f32 %v2672, %v3071
  %v3281 = vmax.f32 %v2673, %v2866
  %v3282 = vmax.f32 %v2674, %v3072
  %v3283 = vmax.f32 %v2675, %v2865
  %v3284 = vmax.f32 %v2676, %v3073
  %v3285 = vmax.f32 %v2677, %v2867
  %v3286 = vmax.f32 %v2678, %v3074
  %v3287 = vmax.f32 %v2679, %v2875
  %v3288 = vmax.f32 %v2680, %v3075
  %v3289 = vmax.f32 %v2681, %v2883
  %v3290 = vmax.f32 %v2682, %v3076
  %v3291 = vmax.f32 %v2683, %v2882
  %v3292 = vmax.f32 %v2684, %v3077
  %v3293 = vmax.f32 %v2685, %v2884
  %v3294 = vmax.f32 %v2686, %v3078
  %v3295 = vmax.f32 %v2687, %v2892
  %v3296 = vmax.f32 %v2688, %v3079
  %v3297 = vmax.f32 %v2689, %v2900
  %v3298 = vmax.f32 %v2690, %v3080
  %v3299 = vmax.f32 %v2691, %v2899
  %v3300 = vmax.f32 %v2692, %v3081
  %v3301 = vmax.f32 %v2693, %v2901
  %v3302 = vmax.f32 %v2694, %v3082
  %v3303 = vmax.f32 %v2695, %v2909
  %v3304 = vmax.f32 %v2696, %v3083
  %v3305 = vmax.f32 %v2697, %v2917
  %v3306 = vmax.f32 %v2698, %v3084
  %v3307 = vmax.f32 %v2699, %v2916
  %v3308 = vmax.f32 %v2700, %v3085
  %v3309 = vmax.f32 %v2701, %v2918
  %v3310 = vmax.f32 %v2702, %v3086
  %v3311 = vmax.f32 %v2703, %v2926
  %v3312 = vmax.f32 %v2704, %v3087
  %v3313 = vmax.f32 %v2705, %v2934
  %v3314 = vmax.f32 %v2706, %v3088
  %v3315 = vmax.f32 %v2707, %v2933
  %v3316 = vmax.f32 %v2708, %v3089
  %v3317 = vmax.f32 %v2709, %v2935
  %v3318 = vmax.f32 %v2710, %v3090
  %v3319 = vmax.f32 %v2711, %v2943
  %v3320 = vmax.f32 %v2712, %v3091
  %v3321 = vmax.f32 %v2713, %v2951
  %v3322 = vmax.f32 %v2714, %v3092
  %v3323 = vmax.f32 %v2715, %v2950
  %v3324 = vmax.f32 %v2716, %v3093
  %v3325 = vmax.f32 %v2717, %v2952
  %v3326 = vmax.f32 %v2718, %v3094
  %v3327 = vmax.f32 %v2719, %v2960
  %v3328 = vmax.f32 %v2720, %v3095
  %v3329 = vmax.f32 %v2721, %v2968
  %v3330 = vmax.f32 %v2722, %v3096
  %v3331 = vmax.f32 %v2723, %v2967
  %v3332 = vmax.f32 %v2724, %v3097
  %v3333 = vmax.f32 %v2725, %v2969
  %v3334 = vmax.f32 %v2726, %v3098
  %v3335 = vmax.f32 %v2727, %v2977
  %v3336 = vmax.f32 %v2728, %v3099
  %v3337 = vmax.f32 %v2729, %v2985
  %v3338 = vmax.f32 %v2730, %v3100
  %v3339 = vmax.f32 %v2731, %v2984
  %v3340 = vmax.f32 %v2732, %v3101
  %v3341 = vmax.f32 %v2733, %v2986
  %v3342 = vmax.f32 %v2734, %v3102
  %v3343 = vmax.f32 %v2735, %v2994
  %v3344 = vmax.f32 %v2736, %v3103
  %v3345 = vmax.f32 %v2737, %v3002
  %v3346 = vmax.f32 %v2738, %v3104
  %v3347 = vmax.f32 %v2739, %v3001
  %v3348 = vmax.f32 %v2740, %v3105
  %v3349 = vmax.f32 %v2741, %v3003
  %v3350 = vmax.f32 %v2742, %v3106
  %v3351 = vmax.f32 %v2743, %v3011
  %v3352 = vmax.f32 %v2744, %v3107
  %v3353 = vmax.f32 %v2745, %v3019
  %v3354 = vmax.f32 %v2746, %v3108
  %v3355 = vmax.f32 %v2747, %v3018
  %v3356 = vmax.f32 %v2748, %v3109
  %v3357 = vmax.f32 %v2749, %v3020
  %v3358 = vmax.f32 %v2750, %v3110
  %v3359 = vmax.f32 %v2751, %v3028
  %v3360 = vmax.f32 %v2752, %v3111
  %v3361 = vmax.f32 %v2753, %v3036
  %v3362 = vmax.f32 %v2754, %v3112
  %v3363 = vmax.f32 %v2755, %v3035
  %v3364 = vmax.f32 %v2756, %v3113
  %v3365 = vmax.f32 %v2757, %v3037
  %v3366 = vmax.f32 %v2758, %v3114
  %v3367 = vmax.f32 %v2759, %v3045
  %v3368 = vmax.f32 %v2760, %v3115
  %v3369 = vmax.f32 %v2761, %v3053
  %v3370 = vmax.f32 %v2762, %v3116
  %v3371 = vmax.f32 %v2763, %v3052
  %v3372 = vmax.f32 %v2764, %v3117
  %v3373 = vmax.f32 %v2765, %v3054
  %v3374 = vmax.f32 %v2766, %v3118
  %v3375 = vpack.c.bf16 %v3247, %v3247
  %v3376 = vpack.c.bf16 %v3248, %v3248
  %v3377 = vpack.c.bf16 %v3249, %v3249
  %v3378 = vpack.c.bf16 %v3250, %v3250
  %v3379 = vpack.c.bf16 %v3251, %v3251
  %v3380 = vpack.c.bf16 %v3252, %v3252
  %v3381 = vpack.c.bf16 %v3253, %v3253
  %v3382 = vpack.c.bf16 %v3254, %v3254
  %v3383 = vpack.c.bf16 %v3255, %v3255
  %v3384 = vpack.c.bf16 %v3256, %v3256
  %v3385 = vpack.c.bf16 %v3257, %v3257
  %v3386 = vpack.c.bf16 %v3258, %v3258
  %v3387 = vpack.c.bf16 %v3259, %v3259
  %v3388 = vpack.c.bf16 %v3260, %v3260
  %v3389 = vpack.c.bf16 %v3261, %v3261
  %v3390 = vpack.c.bf16 %v3262, %v3262
  %v3391 = vpack.c.bf16 %v3263, %v3263
  %v3392 = vpack.c.bf16 %v3264, %v3264
  %v3393 = vpack.c.bf16 %v3265, %v3265
  %v3394 = vpack.c.bf16 %v3266, %v3266
  %v3395 = vpack.c.bf16 %v3267, %v3267
  %v3396 = vpack.c.bf16 %v3268, %v3268
  %v3397 = vpack.c.bf16 %v3269, %v3269
  %v3398 = vpack.c.bf16 %v3270, %v3270
  %v3399 = vpack.c.bf16 %v3271, %v3271
  %v3400 = vpack.c.bf16 %v3272, %v3272
  %v3401 = vpack.c.bf16 %v3273, %v3273
  %v3402 = vpack.c.bf16 %v3274, %v3274
  %v3403 = vpack.c.bf16 %v3275, %v3275
  %v3404 = vpack.c.bf16 %v3276, %v3276
  %v3405 = vpack.c.bf16 %v3277, %v3277
  %v3406 = vpack.c.bf16 %v3278, %v3278
  %v3407 = vpack.c.bf16 %v3279, %v3279
  %v3408 = vpack.c.bf16 %v3280, %v3280
  %v3409 = vpack.c.bf16 %v3281, %v3281
  %v3410 = vpack.c.bf16 %v3282, %v3282
  %v3411 = vpack.c.bf16 %v3283, %v3283
  %v3412 = vpack.c.bf16 %v3284, %v3284
  %v3413 = vpack.c.bf16 %v3285, %v3285
  %v3414 = vpack.c.bf16 %v3286, %v3286
  %v3415 = vpack.c.bf16 %v3287, %v3287
  %v3416 = vpack.c.bf16 %v3288, %v3288
  %v3417 = vpack.c.bf16 %v3289, %v3289
  %v3418 = vpack.c.bf16 %v3290, %v3290
  %v3419 = vpack.c.bf16 %v3291, %v3291
  %v3420 = vpack.c.bf16 %v3292, %v3292
  %v3421 = vpack.c.bf16 %v3293, %v3293
  %v3422 = vpack.c.bf16 %v3294, %v3294
  %v3423 = vpack.c.bf16 %v3295, %v3295
  %v3424 = vpack.c.bf16 %v3296, %v3296
  %v3425 = vpack.c.bf16 %v3297, %v3297
  %v3426 = vpack.c.bf16 %v3298, %v3298
  %v3427 = vpack.c.bf16 %v3299, %v3299
  %v3428 = vpack.c.bf16 %v3300, %v3300
  %v3429 = vpack.c.bf16 %v3301, %v3301
  %v3430 = vpack.c.bf16 %v3302, %v3302
  %v3431 = vpack.c.bf16 %v3303, %v3303
  %v3432 = vpack.c.bf16 %v3304, %v3304
  %v3433 = vpack.c.bf16 %v3305, %v3305
  %v3434 = vpack.c.bf16 %v3306, %v3306
  %v3435 = vpack.c.bf16 %v3307, %v3307
  %v3436 = vpack.c.bf16 %v3308, %v3308
  %v3437 = vpack.c.bf16 %v3309, %v3309
  %v3438 = vpack.c.bf16 %v3310, %v3310
  %v3439 = vpack.c.bf16 %v3311, %v3311
  %v3440 = vpack.c.bf16 %v3312, %v3312
  %v3441 = vpack.c.bf16 %v3313, %v3313
  %v3442 = vpack.c.bf16 %v3314, %v3314
  %v3443 = vpack.c.bf16 %v3315, %v3315
  %v3444 = vpack.c.bf16 %v3316, %v3316
  %v3445 = vpack.c.bf16 %v3317, %v3317
  %v3446 = vpack.c.bf16 %v3318, %v3318
  %v3447 = vpack.c.bf16 %v3319, %v3319
  %v3448 = vpack.c.bf16 %v3320, %v3320
  %v3449 = vpack.c.bf16 %v3321, %v3321
  %v3450 = vpack.c.bf16 %v3322, %v3322
  %v3451 = vpack.c.bf16 %v3323, %v3323
  %v3452 = vpack.c.bf16 %v3324, %v3324
  %v3453 = vpack.c.bf16 %v3325, %v3325
  %v3454 = vpack.c.bf16 %v3326, %v3326
  %v3455 = vpack.c.bf16 %v3327, %v3327
  %v3456 = vpack.c.bf16 %v3328, %v3328
  %v3457 = vpack.c.bf16 %v3329, %v3329
  %v3458 = vpack.c.bf16 %v3330, %v3330
  %v3459 = vpack.c.bf16 %v3331, %v3331
  %v3460 = vpack.c.bf16 %v3332, %v3332
  %v3461 = vpack.c.bf16 %v3333, %v3333
  %v3462 = vpack.c.bf16 %v3334, %v3334
  %v3463 = vpack.c.bf16 %v3335, %v3335
  %v3464 = vpack.c.bf16 %v3336, %v3336
  %v3465 = vpack.c.bf16 %v3337, %v3337
  %v3466 = vpack.c.bf16 %v3338, %v3338
  %v3467 = vpack.c.bf16 %v3339, %v3339
  %v3468 = vpack.c.bf16 %v3340, %v3340
  %v3469 = vpack.c.bf16 %v3341, %v3341
  %v3470 = vpack.c.bf16 %v3342, %v3342
  %v3471 = vpack.c.bf16 %v3343, %v3343
  %v3472 = vpack.c.bf16 %v3344, %v3344
  %v3473 = vpack.c.bf16 %v3345, %v3345
  %v3474 = vpack.c.bf16 %v3346, %v3346
  %v3475 = vpack.c.bf16 %v3347, %v3347
  %v3476 = vpack.c.bf16 %v3348, %v3348
  %v3477 = vpack.c.bf16 %v3349, %v3349
  %v3478 = vpack.c.bf16 %v3350, %v3350
  %v3479 = vpack.c.bf16 %v3351, %v3351
  %v3480 = vpack.c.bf16 %v3352, %v3352
  %v3481 = vpack.c.bf16 %v3353, %v3353
  %v3482 = vpack.c.bf16 %v3354, %v3354
  %v3483 = vpack.c.bf16 %v3355, %v3355
  %v3484 = vpack.c.bf16 %v3356, %v3356
  %v3485 = vpack.c.bf16 %v3357, %v3357
  %v3486 = vpack.c.bf16 %v3358, %v3358
  %v3487 = vpack.c.bf16 %v3359, %v3359
  %v3488 = vpack.c.bf16 %v3360, %v3360
  %v3489 = vpack.c.bf16 %v3361, %v3361
  %v3490 = vpack.c.bf16 %v3362, %v3362
  %v3491 = vpack.c.bf16 %v3363, %v3363
  %v3492 = vpack.c.bf16 %v3364, %v3364
  %v3493 = vpack.c.bf16 %v3365, %v3365
  %v3494 = vpack.c.bf16 %v3366, %v3366
  %v3495 = vpack.c.bf16 %v3367, %v3367
  %v3496 = vpack.c.bf16 %v3368, %v3368
  %v3497 = vpack.c.bf16 %v3369, %v3369
  %v3498 = vpack.c.bf16 %v3370, %v3370
  %v3499 = vpack.c.bf16 %v3371, %v3371
  %v3500 = vpack.c.bf16 %v3372, %v3372
  %v3501 = vpack.c.bf16 %v3373, %v3373
  %v3502 = vpack.c.bf16 %v3374, %v3374
  %v3631 = vunpack.c.l.b16 %v3375
  %v3632 = vunpack.c.l.b16 %v3376
  %v3633 = vunpack.c.l.b16 %v3377
  %v3634 = vunpack.c.l.b16 %v3378
  %v3635 = vunpack.c.l.b16 %v3379
  %v3636 = vunpack.c.l.b16 %v3380
  %v3637 = vunpack.c.l.b16 %v3381
  %v3638 = vunpack.c.l.b16 %v3382
  %v3639 = vunpack.c.l.b16 %v3383
  %v3640 = vunpack.c.l.b16 %v3384
  %v3641 = vunpack.c.l.b16 %v3385
  %v3642 = vunpack.c.l.b16 %v3386
  %v3643 = vunpack.c.l.b16 %v3387
  %v3644 = vunpack.c.l.b16 %v3388
  %v3645 = vunpack.c.l.b16 %v3389
  %v3646 = vunpack.c.l.b16 %v3390
  %v3647 = vunpack.c.l.b16 %v3391
  %v3648 = vunpack.c.l.b16 %v3392
  %v3649 = vunpack.c.l.b16 %v3393
  %v3650 = vunpack.c.l.b16 %v3394
  %v3651 = vunpack.c.l.b16 %v3395
  %v3652 = vunpack.c.l.b16 %v3396
  %v3653 = vunpack.c.l.b16 %v3397
  %v3654 = vunpack.c.l.b16 %v3398
  %v3655 = vunpack.c.l.b16 %v3399
  %v3656 = vunpack.c.l.b16 %v3400
  %v3657 = vunpack.c.l.b16 %v3401
  %v3658 = vunpack.c.l.b16 %v3402
  %v3659 = vunpack.c.l.b16 %v3403
  %v3660 = vunpack.c.l.b16 %v3404
  %v3661 = vunpack.c.l.b16 %v3405
  %v3662 = vunpack.c.l.b16 %v3406
  %v3663 = vunpack.c.l.b16 %v3407
  %v3664 = vunpack.c.l.b16 %v3408
  %v3665 = vunpack.c.l.b16 %v3409
  %v3666 = vunpack.c.l.b16 %v3410
  %v3667 = vunpack.c.l.b16 %v3411
  %v3668 = vunpack.c.l.b16 %v3412
  %v3669 = vunpack.c.l.b16 %v3413
  %v3670 = vunpack.c.l.b16 %v3414
  %v3671 = vunpack.c.l.b16 %v3415
  %v3672 = vunpack.c.l.b16 %v3416
  %v3673 = vunpack.c.l.b16 %v3417
  %v3674 = vunpack.c.l.b16 %v3418
  %v3675 = vunpack.c.l.b16 %v3419
  %v3676 = vunpack.c.l.b16 %v3420
  %v3677 = vunpack.c.l.b16 %v3421
  %v3678 = vunpack.c.l.b16 %v3422
  %v3679 = vunpack.c.l.b16 %v3423
  %v3680 = vunpack.c.l.b16 %v3424
  %v3681 = vunpack.c.l.b16 %v3425
  %v3682 = vunpack.c.l.b16 %v3426
  %v3683 = vunpack.c.l.b16 %v3427
  %v3684 = vunpack.c.l.b16 %v3428
  %v3685 = vunpack.c.l.b16 %v3429
  %v3686 = vunpack.c.l.b16 %v3430
  %v3687 = vunpack.c.l.b16 %v3431
  %v3688 = vunpack.c.l.b16 %v3432
  %v3689 = vunpack.c.l.b16 %v3433
  %v3690 = vunpack.c.l.b16 %v3434
  %v3691 = vunpack.c.l.b16 %v3435
  %v3692 = vunpack.c.l.b16 %v3436
  %v3693 = vunpack.c.l.b16 %v3437
  %v3694 = vunpack.c.l.b16 %v3438
  %v3695 = vunpack.c.l.b16 %v3439
  %v3696 = vunpack.c.l.b16 %v3440
  %v3697 = vunpack.c.l.b16 %v3441
  %v3698 = vunpack.c.l.b16 %v3442
  %v3699 = vunpack.c.l.b16 %v3443
  %v3700 = vunpack.c.l.b16 %v3444
  %v3701 = vunpack.c.l.b16 %v3445
  %v3702 = vunpack.c.l.b16 %v3446
  %v3703 = vunpack.c.l.b16 %v3447
  %v3704 = vunpack.c.l.b16 %v3448
  %v3705 = vunpack.c.l.b16 %v3449
  %v3706 = vunpack.c.l.b16 %v3450
  %v3707 = vunpack.c.l.b16 %v3451
  %v3708 = vunpack.c.l.b16 %v3452
  %v3709 = vunpack.c.l.b16 %v3453
  %v3710 = vunpack.c.l.b16 %v3454
  %v3711 = vunpack.c.l.b16 %v3455
  %v3712 = vunpack.c.l.b16 %v3456
  %v3713 = vunpack.c.l.b16 %v3457
  %v3714 = vunpack.c.l.b16 %v3458
  %v3715 = vunpack.c.l.b16 %v3459
  %v3716 = vunpack.c.l.b16 %v3460
  %v3717 = vunpack.c.l.b16 %v3461
  %v3718 = vunpack.c.l.b16 %v3462
  %v3719 = vunpack.c.l.b16 %v3463
  %v3720 = vunpack.c.l.b16 %v3464
  %v3721 = vunpack.c.l.b16 %v3465
  %v3722 = vunpack.c.l.b16 %v3466
  %v3723 = vunpack.c.l.b16 %v3467
  %v3724 = vunpack.c.l.b16 %v3468
  %v3725 = vunpack.c.l.b16 %v3469
  %v3726 = vunpack.c.l.b16 %v3470
  %v3727 = vunpack.c.l.b16 %v3471
  %v3728 = vunpack.c.l.b16 %v3472
  %v3729 = vunpack.c.l.b16 %v3473
  %v3730 = vunpack.c.l.b16 %v3474
  %v3731 = vunpack.c.l.b16 %v3475
  %v3732 = vunpack.c.l.b16 %v3476
  %v3733 = vunpack.c.l.b16 %v3477
  %v3734 = vunpack.c.l.b16 %v3478
  %v3735 = vunpack.c.l.b16 %v3479
  %v3736 = vunpack.c.l.b16 %v3480
  %v3737 = vunpack.c.l.b16 %v3481
  %v3738 = vunpack.c.l.b16 %v3482
  %v3739 = vunpack.c.l.b16 %v3483
  %v3740 = vunpack.c.l.b16 %v3484
  %v3741 = vunpack.c.l.b16 %v3485
  %v3742 = vunpack.c.l.b16 %v3486
  %v3743 = vunpack.c.l.b16 %v3487
  %v3744 = vunpack.c.l.b16 %v3488
  %v3745 = vunpack.c.l.b16 %v3489
  %v3746 = vunpack.c.l.b16 %v3490
  %v3747 = vunpack.c.l.b16 %v3491
  %v3748 = vunpack.c.l.b16 %v3492
  %v3749 = vunpack.c.l.b16 %v3493
  %v3750 = vunpack.c.l.b16 %v3494
  %v3751 = vunpack.c.l.b16 %v3495
  %v3752 = vunpack.c.l.b16 %v3496
  %v3753 = vunpack.c.l.b16 %v3497
  %v3754 = vunpack.c.l.b16 %v3498
  %v3755 = vunpack.c.l.b16 %v3499
  %v3756 = vunpack.c.l.b16 %v3500
  %v3757 = vunpack.c.l.b16 %v3501
  %v3758 = vunpack.c.l.b16 %v3502
  %v3759 = vpack.c.b16 %v3631, %v3631
  %v3760 = vpack.c.b16 %v3632, %v3632
  %v3761 = vpack.c.b16 %v3633, %v3633
  %v3762 = vpack.c.b16 %v3634, %v3634
  %v3763 = vpack.c.b16 %v3635, %v3635
  %v3764 = vpack.c.b16 %v3636, %v3636
  %v3765 = vpack.c.b16 %v3637, %v3637
  %v3766 = vpack.c.b16 %v3638, %v3638
  %v3767 = vpack.c.b16 %v3639, %v3639
  %v3768 = vpack.c.b16 %v3640, %v3640
  %v3769 = vpack.c.b16 %v3641, %v3641
  %v3770 = vpack.c.b16 %v3642, %v3642
  %v3771 = vpack.c.b16 %v3643, %v3643
  %v3772 = vpack.c.b16 %v3644, %v3644
  %v3773 = vpack.c.b16 %v3645, %v3645
  %v3774 = vpack.c.b16 %v3646, %v3646
  %v3775 = vpack.c.b16 %v3647, %v3647
  %v3776 = vpack.c.b16 %v3648, %v3648
  %v3777 = vpack.c.b16 %v3649, %v3649
  %v3778 = vpack.c.b16 %v3650, %v3650
  %v3779 = vpack.c.b16 %v3651, %v3651
  %v3780 = vpack.c.b16 %v3652, %v3652
  %v3781 = vpack.c.b16 %v3653, %v3653
  %v3782 = vpack.c.b16 %v3654, %v3654
  %v3783 = vpack.c.b16 %v3655, %v3655
  %v3784 = vpack.c.b16 %v3656, %v3656
  %v3785 = vpack.c.b16 %v3657, %v3657
  %v3786 = vpack.c.b16 %v3658, %v3658
  %v3787 = vpack.c.b16 %v3659, %v3659
  %v3788 = vpack.c.b16 %v3660, %v3660
  %v3789 = vpack.c.b16 %v3661, %v3661
  %v3790 = vpack.c.b16 %v3662, %v3662
  %v3791 = vpack.c.b16 %v3663, %v3663
  %v3792 = vpack.c.b16 %v3664, %v3664
  %v3793 = vpack.c.b16 %v3665, %v3665
  %v3794 = vpack.c.b16 %v3666, %v3666
  %v3795 = vpack.c.b16 %v3667, %v3667
  %v3796 = vpack.c.b16 %v3668, %v3668
  %v3797 = vpack.c.b16 %v3669, %v3669
  %v3798 = vpack.c.b16 %v3670, %v3670
  %v3799 = vpack.c.b16 %v3671, %v3671
  %v3800 = vpack.c.b16 %v3672, %v3672
  %v3801 = vpack.c.b16 %v3673, %v3673
  %v3802 = vpack.c.b16 %v3674, %v3674
  %v3803 = vpack.c.b16 %v3675, %v3675
  %v3804 = vpack.c.b16 %v3676, %v3676
  %v3805 = vpack.c.b16 %v3677, %v3677
  %v3806 = vpack.c.b16 %v3678, %v3678
  %v3807 = vpack.c.b16 %v3679, %v3679
  %v3808 = vpack.c.b16 %v3680, %v3680
  %v3809 = vpack.c.b16 %v3681, %v3681
  %v3810 = vpack.c.b16 %v3682, %v3682
  %v3811 = vpack.c.b16 %v3683, %v3683
  %v3812 = vpack.c.b16 %v3684, %v3684
  %v3813 = vpack.c.b16 %v3685, %v3685
  %v3814 = vpack.c.b16 %v3686, %v3686
  %v3815 = vpack.c.b16 %v3687, %v3687
  %v3816 = vpack.c.b16 %v3688, %v3688
  %v3817 = vpack.c.b16 %v3689, %v3689
  %v3818 = vpack.c.b16 %v3690, %v3690
  %v3819 = vpack.c.b16 %v3691, %v3691
  %v3820 = vpack.c.b16 %v3692, %v3692
  %v3821 = vpack.c.b16 %v3693, %v3693
  %v3822 = vpack.c.b16 %v3694, %v3694
  %v3823 = vpack.c.b16 %v3695, %v3695
  %v3824 = vpack.c.b16 %v3696, %v3696
  %v3825 = vpack.c.b16 %v3697, %v3697
  %v3826 = vpack.c.b16 %v3698, %v3698
  %v3827 = vpack.c.b16 %v3699, %v3699
  %v3828 = vpack.c.b16 %v3700, %v3700
  %v3829 = vpack.c.b16 %v3701, %v3701
  %v3830 = vpack.c.b16 %v3702, %v3702
  %v3831 = vpack.c.b16 %v3703, %v3703
  %v3832 = vpack.c.b16 %v3704, %v3704
  %v3833 = vpack.c.b16 %v3705, %v3705
  %v3834 = vpack.c.b16 %v3706, %v3706
  %v3835 = vpack.c.b16 %v3707, %v3707
  %v3836 = vpack.c.b16 %v3708, %v3708
  %v3837 = vpack.c.b16 %v3709, %v3709
  %v3838 = vpack.c.b16 %v3710, %v3710
  %v3839 = vpack.c.b16 %v3711, %v3711
  %v3840 = vpack.c.b16 %v3712, %v3712
  %v3841 = vpack.c.b16 %v3713, %v3713
  %v3842 = vpack.c.b16 %v3714, %v3714
  %v3843 = vpack.c.b16 %v3715, %v3715
  %v3844 = vpack.c.b16 %v3716, %v3716
  %v3845 = vpack.c.b16 %v3717, %v3717
  %v3846 = vpack.c.b16 %v3718, %v3718
  %v3847 = vpack.c.b16 %v3719, %v3719
  %v3848 = vpack.c.b16 %v3720, %v3720
  %v3849 = vpack.c.b16 %v3721, %v3721
  %v3850 = vpack.c.b16 %v3722, %v3722
  %v3851 = vpack.c.b16 %v3723, %v3723
  %v3852 = vpack.c.b16 %v3724, %v3724
  %v3853 = vpack.c.b16 %v3725, %v3725
  %v3854 = vpack.c.b16 %v3726, %v3726
  %v3855 = vpack.c.b16 %v3727, %v3727
  %v3856 = vpack.c.b16 %v3728, %v3728
  %v3857 = vpack.c.b16 %v3729, %v3729
  %v3858 = vpack.c.b16 %v3730, %v3730
  %v3859 = vpack.c.b16 %v3731, %v3731
  %v3860 = vpack.c.b16 %v3732, %v3732
  %v3861 = vpack.c.b16 %v3733, %v3733
  %v3862 = vpack.c.b16 %v3734, %v3734
  %v3863 = vpack.c.b16 %v3735, %v3735
  %v3864 = vpack.c.b16 %v3736, %v3736
  %v3865 = vpack.c.b16 %v3737, %v3737
  %v3866 = vpack.c.b16 %v3738, %v3738
  %v3867 = vpack.c.b16 %v3739, %v3739
  %v3868 = vpack.c.b16 %v3740, %v3740
  %v3869 = vpack.c.b16 %v3741, %v3741
  %v3870 = vpack.c.b16 %v3742, %v3742
  %v3871 = vpack.c.b16 %v3743, %v3743
  %v3872 = vpack.c.b16 %v3744, %v3744
  %v3873 = vpack.c.b16 %v3745, %v3745
  %v3874 = vpack.c.b16 %v3746, %v3746
  %v3875 = vpack.c.b16 %v3747, %v3747
  %v3876 = vpack.c.b16 %v3748, %v3748
  %v3877 = vpack.c.b16 %v3749, %v3749
  %v3878 = vpack.c.b16 %v3750, %v3750
  %v3879 = vpack.c.b16 %v3751, %v3751
  %v3880 = vpack.c.b16 %v3752, %v3752
  %v3881 = vpack.c.b16 %v3753, %v3753
  %v3882 = vpack.c.b16 %v3754, %v3754
  %v3883 = vpack.c.b16 %v3755, %v3755
  %v3884 = vpack.c.b16 %v3756, %v3756
  %v3885 = vpack.c.b16 %v3757, %v3757
  %v3886 = vpack.c.b16 %v3758, %v3758
  %v3887 = vunpack.c.l.b16 %v3759
  %v3888 = vunpack.c.l.b16 %v3760
  %v3889 = vunpack.c.l.b16 %v3761
  %v3890 = vunpack.c.l.b16 %v3762
  %v3891 = vunpack.c.l.b16 %v3763
  %v3892 = vunpack.c.l.b16 %v3764
  %v3893 = vunpack.c.l.b16 %v3765
  %v3894 = vunpack.c.l.b16 %v3766
  %v3895 = vunpack.c.l.b16 %v3767
  %v3896 = vunpack.c.l.b16 %v3768
  %v3897 = vunpack.c.l.b16 %v3769
  %v3898 = vunpack.c.l.b16 %v3770
  %v3899 = vunpack.c.l.b16 %v3771
  %v3900 = vunpack.c.l.b16 %v3772
  %v3901 = vunpack.c.l.b16 %v3773
  %v3902 = vunpack.c.l.b16 %v3774
  %v3903 = vunpack.c.l.b16 %v3775
  %v3904 = vunpack.c.l.b16 %v3776
  %v3905 = vunpack.c.l.b16 %v3777
  %v3906 = vunpack.c.l.b16 %v3778
  %v3907 = vunpack.c.l.b16 %v3779
  %v3908 = vunpack.c.l.b16 %v3780
  %v3909 = vunpack.c.l.b16 %v3781
  %v3910 = vunpack.c.l.b16 %v3782
  %v3911 = vunpack.c.l.b16 %v3783
  %v3912 = vunpack.c.l.b16 %v3784
  %v3913 = vunpack.c.l.b16 %v3785
  %v3914 = vunpack.c.l.b16 %v3786
  %v3915 = vunpack.c.l.b16 %v3787
  %v3916 = vunpack.c.l.b16 %v3788
  %v3917 = vunpack.c.l.b16 %v3789
  %v3918 = vunpack.c.l.b16 %v3790
  %v3919 = vunpack.c.l.b16 %v3791
  %v3920 = vunpack.c.l.b16 %v3792
  %v3921 = vunpack.c.l.b16 %v3793
  %v3922 = vunpack.c.l.b16 %v3794
  %v3923 = vunpack.c.l.b16 %v3795
  %v3924 = vunpack.c.l.b16 %v3796
  %v3925 = vunpack.c.l.b16 %v3797
  %v3926 = vunpack.c.l.b16 %v3798
  %v3927 = vunpack.c.l.b16 %v3799
  %v3928 = vunpack.c.l.b16 %v3800
  %v3929 = vunpack.c.l.b16 %v3801
  %v3930 = vunpack.c.l.b16 %v3802
  %v3931 = vunpack.c.l.b16 %v3803
  %v3932 = vunpack.c.l.b16 %v3804
  %v3933 = vunpack.c.l.b16 %v3805
  %v3934 = vunpack.c.l.b16 %v3806
  %v3935 = vunpack.c.l.b16 %v3807
  %v3936 = vunpack.c.l.b16 %v3808
  %v3937 = vunpack.c.l.b16 %v3809
  %v3938 = vunpack.c.l.b16 %v3810
  %v3939 = vunpack.c.l.b16 %v3811
  %v3940 = vunpack.c.l.b16 %v3812
  %v3941 = vunpack.c.l.b16 %v3813
  %v3942 = vunpack.c.l.b16 %v3814
  %v3943 = vunpack.c.l.b16 %v3815
  %v3944 = vunpack.c.l.b16 %v3816
  %v3945 = vunpack.c.l.b16 %v3817
  %v3946 = vunpack.c.l.b16 %v3818
  %v3947 = vunpack.c.l.b16 %v3819
  %v3948 = vunpack.c.l.b16 %v3820
  %v3949 = vunpack.c.l.b16 %v3821
  %v3950 = vunpack.c.l.b16 %v3822
  %v3951 = vunpack.c.l.b16 %v3823
  %v3952 = vunpack.c.l.b16 %v3824
  %v3953 = vunpack.c.l.b16 %v3825
  %v3954 = vunpack.c.l.b16 %v3826
  %v3955 = vunpack.c.l.b16 %v3827
  %v3956 = vunpack.c.l.b16 %v3828
  %v3957 = vunpack.c.l.b16 %v3829
  %v3958 = vunpack.c.l.b16 %v3830
  %v3959 = vunpack.c.l.b16 %v3831
  %v3960 = vunpack.c.l.b16 %v3832
  %v3961 = vunpack.c.l.b16 %v3833
  %v3962 = vunpack.c.l.b16 %v3834
  %v3963 = vunpack.c.l.b16 %v3835
  %v3964 = vunpack.c.l.b16 %v3836
  %v3965 = vunpack.c.l.b16 %v3837
  %v3966 = vunpack.c.l.b16 %v3838
  %v3967 = vunpack.c.l.b16 %v3839
  %v3968 = vunpack.c.l.b16 %v3840
  %v3969 = vunpack.c.l.b16 %v3841
  %v3970 = vunpack.c.l.b16 %v3842
  %v3971 = vunpack.c.l.b16 %v3843
  %v3972 = vunpack.c.l.b16 %v3844
  %v3973 = vunpack.c.l.b16 %v3845
  %v3974 = vunpack.c.l.b16 %v3846
  %v3975 = vunpack.c.l.b16 %v3847
  %v3976 = vunpack.c.l.b16 %v3848
  %v3977 = vunpack.c.l.b16 %v3849
  %v3978 = vunpack.c.l.b16 %v3850
  %v3979 = vunpack.c.l.b16 %v3851
  %v3980 = vunpack.c.l.b16 %v3852
  %v3981 = vunpack.c.l.b16 %v3853
  %v3982 = vunpack.c.l.b16 %v3854
  %v3983 = vunpack.c.l.b16 %v3855
  %v3984 = vunpack.c.l.b16 %v3856
  %v3985 = vunpack.c.l.b16 %v3857
  %v3986 = vunpack.c.l.b16 %v3858
  %v3987 = vunpack.c.l.b16 %v3859
  %v3988 = vunpack.c.l.b16 %v3860
  %v3989 = vunpack.c.l.b16 %v3861
  %v3990 = vunpack.c.l.b16 %v3862
  %v3991 = vunpack.c.l.b16 %v3863
  %v3992 = vunpack.c.l.b16 %v3864
  %v3993 = vunpack.c.l.b16 %v3865
  %v3994 = vunpack.c.l.b16 %v3866
  %v3995 = vunpack.c.l.b16 %v3867
  %v3996 = vunpack.c.l.b16 %v3868
  %v3997 = vunpack.c.l.b16 %v3869
  %v3998 = vunpack.c.l.b16 %v3870
  %v3999 = vunpack.c.l.b16 %v3871
  %v4000 = vunpack.c.l.b16 %v3872
  %v4001 = vunpack.c.l.b16 %v3873
  %v4002 = vunpack.c.l.b16 %v3874
  %v4003 = vunpack.c.l.b16 %v3875
  %v4004 = vunpack.c.l.b16 %v3876
  %v4005 = vunpack.c.l.b16 %v3877
  %v4006 = vunpack.c.l.b16 %v3878
  %v4007 = vunpack.c.l.b16 %v3879
  %v4008 = vunpack.c.l.b16 %v3880
  %v4009 = vunpack.c.l.b16 %v3881
  %v4010 = vunpack.c.l.b16 %v3882
  %v4011 = vunpack.c.l.b16 %v3883
  %v4012 = vunpack.c.l.b16 %v3884
  %v4013 = vunpack.c.l.b16 %v3885
  %v4014 = vunpack.c.l.b16 %v3886
  %v4015 = vrot.slane %v3888, 7
  %vm4016 = vcmask 1041409
  %v4017 = vsel %vm4016, %v4015, %v3887
  %v4018 = vrot.slane %v3889, 6
  %v4019 = vsel %vm2120, %v4018, %v4017
  %v4020 = vrot.slane %v3890, 5
  %v4021 = vsel %vm2122, %v4020, %v4019
  %v4022 = vrot.slane %v3891, 4
  %v4023 = vsel %vm2124, %v4022, %v4021
  %v4024 = vrot.slane %v3892, 3
  %v4025 = vsel %vm2126, %v4024, %v4023
  %v4026 = vrot.slane %v3893, 2
  %v4027 = vsel %vm2128, %v4026, %v4025
  %v4028 = vrot.slane %v3894, 1
  %v4029 = vsel %vm2130, %v4028, %v4027
  %v4030 = vrot.slane %v3896, 7
  %v4031 = vsel %vm4016, %v4030, %v3895
  %v4032 = vrot.slane %v3897, 6
  %v4033 = vsel %vm2120, %v4032, %v4031
  %v4034 = vrot.slane %v3898, 5
  %v4035 = vsel %vm2122, %v4034, %v4033
  %v4036 = vrot.slane %v3899, 4
  %v4037 = vsel %vm2124, %v4036, %v4035
  %v4038 = vrot.slane %v3900, 3
  %v4039 = vsel %vm2126, %v4038, %v4037
  %v4040 = vrot.slane %v3901, 2
  %v4041 = vsel %vm2128, %v4040, %v4039
  %v4042 = vrot.slane %v3902, 1
  %v4043 = vsel %vm2130, %v4042, %v4041
  %v4044 = vrot.slane %v3904, 7
  %v4045 = vsel %vm4016, %v4044, %v3903
  %v4046 = vrot.slane %v3905, 6
  %v4047 = vsel %vm2120, %v4046, %v4045
  %v4048 = vrot.slane %v3906, 5
  %v4049 = vsel %vm2122, %v4048, %v4047
  %v4050 = vrot.slane %v3907, 4
  %v4051 = vsel %vm2124, %v4050, %v4049
  %v4052 = vrot.slane %v3908, 3
  %v4053 = vsel %vm2126, %v4052, %v4051
  %v4054 = vrot.slane %v3909, 2
  %v4055 = vsel %vm2128, %v4054, %v4053
  %v4056 = vrot.slane %v3910, 1
  %v4057 = vsel %vm2130, %v4056, %v4055
  %v4058 = vrot.slane %v3912, 7
  %v4059 = vsel %vm4016, %v4058, %v3911
  %v4060 = vrot.slane %v3913, 6
  %v4061 = vsel %vm2120, %v4060, %v4059
  %v4062 = vrot.slane %v3914, 5
  %v4063 = vsel %vm2122, %v4062, %v4061
  %v4064 = vrot.slane %v3915, 4
  %v4065 = vsel %vm2124, %v4064, %v4063
  %v4066 = vrot.slane %v3916, 3
  %v4067 = vsel %vm2126, %v4066, %v4065
  %v4068 = vrot.slane %v3917, 2
  %v4069 = vsel %vm2128, %v4068, %v4067
  %v4070 = vrot.slane %v3918, 1
  %v4071 = vsel %vm2130, %v4070, %v4069
  %v4072 = vrot.slane %v3920, 7
  %v4073 = vsel %vm4016, %v4072, %v3919
  %v4074 = vrot.slane %v3921, 6
  %v4075 = vsel %vm2120, %v4074, %v4073
  %v4076 = vrot.slane %v3922, 5
  %v4077 = vsel %vm2122, %v4076, %v4075
  %v4078 = vrot.slane %v3923, 4
  %v4079 = vsel %vm2124, %v4078, %v4077
  %v4080 = vrot.slane %v3924, 3
  %v4081 = vsel %vm2126, %v4080, %v4079
  %v4082 = vrot.slane %v3925, 2
  %v4083 = vsel %vm2128, %v4082, %v4081
  %v4084 = vrot.slane %v3926, 1
  %v4085 = vsel %vm2130, %v4084, %v4083
  %v4086 = vrot.slane %v3928, 7
  %v4087 = vsel %vm4016, %v4086, %v3927
  %v4088 = vrot.slane %v3929, 6
  %v4089 = vsel %vm2120, %v4088, %v4087
  %v4090 = vrot.slane %v3930, 5
  %v4091 = vsel %vm2122, %v4090, %v4089
  %v4092 = vrot.slane %v3931, 4
  %v4093 = vsel %vm2124, %v4092, %v4091
  %v4094 = vrot.slane %v3932, 3
  %v4095 = vsel %vm2126, %v4094, %v4093
  %v4096 = vrot.slane %v3933, 2
  %v4097 = vsel %vm2128, %v4096, %v4095
  %v4098 = vrot.slane %v3934, 1
  %v4099 = vsel %vm2130, %v4098, %v4097
  %v4100 = vrot.slane %v3936, 7
  %v4101 = vsel %vm4016, %v4100, %v3935
  %v4102 = vrot.slane %v3937, 6
  %v4103 = vsel %vm2120, %v4102, %v4101
  %v4104 = vrot.slane %v3938, 5
  %v4105 = vsel %vm2122, %v4104, %v4103
  %v4106 = vrot.slane %v3939, 4
  %v4107 = vsel %vm2124, %v4106, %v4105
  %v4108 = vrot.slane %v3940, 3
  %v4109 = vsel %vm2126, %v4108, %v4107
  %v4110 = vrot.slane %v3941, 2
  %v4111 = vsel %vm2128, %v4110, %v4109
  %v4112 = vrot.slane %v3942, 1
  %v4113 = vsel %vm2130, %v4112, %v4111
  %v4114 = vrot.slane %v3944, 7
  %v4115 = vsel %vm4016, %v4114, %v3943
  %v4116 = vrot.slane %v3945, 6
  %v4117 = vsel %vm2120, %v4116, %v4115
  %v4118 = vrot.slane %v3946, 5
  %v4119 = vsel %vm2122, %v4118, %v4117
  %v4120 = vrot.slane %v3947, 4
  %v4121 = vsel %vm2124, %v4120, %v4119
  %v4122 = vrot.slane %v3948, 3
  %v4123 = vsel %vm2126, %v4122, %v4121
  %v4124 = vrot.slane %v3949, 2
  %v4125 = vsel %vm2128, %v4124, %v4123
  %v4126 = vrot.slane %v3950, 1
  %v4127 = vsel %vm2130, %v4126, %v4125
  %v4128 = vrot.slane %v3952, 7
  %v4129 = vsel %vm4016, %v4128, %v3951
  %v4130 = vrot.slane %v3953, 6
  %v4131 = vsel %vm2120, %v4130, %v4129
  %v4132 = vrot.slane %v3954, 5
  %v4133 = vsel %vm2122, %v4132, %v4131
  %v4134 = vrot.slane %v3955, 4
  %v4135 = vsel %vm2124, %v4134, %v4133
  %v4136 = vrot.slane %v3956, 3
  %v4137 = vsel %vm2126, %v4136, %v4135
  %v4138 = vrot.slane %v3957, 2
  %v4139 = vsel %vm2128, %v4138, %v4137
  %v4140 = vrot.slane %v3958, 1
  %v4141 = vsel %vm2130, %v4140, %v4139
  %v4142 = vrot.slane %v3960, 7
  %v4143 = vsel %vm4016, %v4142, %v3959
  %v4144 = vrot.slane %v3961, 6
  %v4145 = vsel %vm2120, %v4144, %v4143
  %v4146 = vrot.slane %v3962, 5
  %v4147 = vsel %vm2122, %v4146, %v4145
  %v4148 = vrot.slane %v3963, 4
  %v4149 = vsel %vm2124, %v4148, %v4147
  %v4150 = vrot.slane %v3964, 3
  %v4151 = vsel %vm2126, %v4150, %v4149
  %v4152 = vrot.slane %v3965, 2
  %v4153 = vsel %vm2128, %v4152, %v4151
  %v4154 = vrot.slane %v3966, 1
  %v4155 = vsel %vm2130, %v4154, %v4153
  %v4156 = vrot.slane %v3968, 7
  %v4157 = vsel %vm4016, %v4156, %v3967
  %v4158 = vrot.slane %v3969, 6
  %v4159 = vsel %vm2120, %v4158, %v4157
  %v4160 = vrot.slane %v3970, 5
  %v4161 = vsel %vm2122, %v4160, %v4159
  %v4162 = vrot.slane %v3971, 4
  %v4163 = vsel %vm2124, %v4162, %v4161
  %v4164 = vrot.slane %v3972, 3
  %v4165 = vsel %vm2126, %v4164, %v4163
  %v4166 = vrot.slane %v3973, 2
  %v4167 = vsel %vm2128, %v4166, %v4165
  %v4168 = vrot.slane %v3974, 1
  %v4169 = vsel %vm2130, %v4168, %v4167
  %v4170 = vrot.slane %v3976, 7
  %v4171 = vsel %vm4016, %v4170, %v3975
  %v4172 = vrot.slane %v3977, 6
  %v4173 = vsel %vm2120, %v4172, %v4171
  %v4174 = vrot.slane %v3978, 5
  %v4175 = vsel %vm2122, %v4174, %v4173
  %v4176 = vrot.slane %v3979, 4
  %v4177 = vsel %vm2124, %v4176, %v4175
  %v4178 = vrot.slane %v3980, 3
  %v4179 = vsel %vm2126, %v4178, %v4177
  %v4180 = vrot.slane %v3981, 2
  %v4181 = vsel %vm2128, %v4180, %v4179
  %v4182 = vrot.slane %v3982, 1
  %v4183 = vsel %vm2130, %v4182, %v4181
  %v4184 = vrot.slane %v3984, 7
  %v4185 = vsel %vm4016, %v4184, %v3983
  %v4186 = vrot.slane %v3985, 6
  %v4187 = vsel %vm2120, %v4186, %v4185
  %v4188 = vrot.slane %v3986, 5
  %v4189 = vsel %vm2122, %v4188, %v4187
  %v4190 = vrot.slane %v3987, 4
  %v4191 = vsel %vm2124, %v4190, %v4189
  %v4192 = vrot.slane %v3988, 3
  %v4193 = vsel %vm2126, %v4192, %v4191
  %v4194 = vrot.slane %v3989, 2
  %v4195 = vsel %vm2128, %v4194, %v4193
  %v4196 = vrot.slane %v3990, 1
  %v4197 = vsel %vm2130, %v4196, %v4195
  %v4198 = vrot.slane %v3992, 7
  %v4199 = vsel %vm4016, %v4198, %v3991
  %v4200 = vrot.slane %v3993, 6
  %v4201 = vsel %vm2120, %v4200, %v4199
  %v4202 = vrot.slane %v3994, 5
  %v4203 = vsel %vm2122, %v4202, %v4201
  %v4204 = vrot.slane %v3995, 4
  %v4205 = vsel %vm2124, %v4204, %v4203
  %v4206 = vrot.slane %v3996, 3
  %v4207 = vsel %vm2126, %v4206, %v4205
  %v4208 = vrot.slane %v3997, 2
  %v4209 = vsel %vm2128, %v4208, %v4207
  %v4210 = vrot.slane %v3998, 1
  %v4211 = vsel %vm2130, %v4210, %v4209
  %v4212 = vrot.slane %v4000, 7
  %v4213 = vsel %vm4016, %v4212, %v3999
  %v4214 = vrot.slane %v4001, 6
  %v4215 = vsel %vm2120, %v4214, %v4213
  %v4216 = vrot.slane %v4002, 5
  %v4217 = vsel %vm2122, %v4216, %v4215
  %v4218 = vrot.slane %v4003, 4
  %v4219 = vsel %vm2124, %v4218, %v4217
  %v4220 = vrot.slane %v4004, 3
  %v4221 = vsel %vm2126, %v4220, %v4219
  %v4222 = vrot.slane %v4005, 2
  %v4223 = vsel %vm2128, %v4222, %v4221
  %v4224 = vrot.slane %v4006, 1
  %v4225 = vsel %vm2130, %v4224, %v4223
  %v4226 = vrot.slane %v4008, 7
  %v4227 = vsel %vm4016, %v4226, %v4007
  %v4228 = vrot.slane %v4009, 6
  %v4229 = vsel %vm2120, %v4228, %v4227
  %v4230 = vrot.slane %v4010, 5
  %v4231 = vsel %vm2122, %v4230, %v4229
  %v4232 = vrot.slane %v4011, 4
  %v4233 = vsel %vm2124, %v4232, %v4231
  %v4234 = vrot.slane %v4012, 3
  %v4235 = vsel %vm2126, %v4234, %v4233
  %v4236 = vrot.slane %v4013, 2
  %v4237 = vsel %vm2128, %v4236, %v4235
  %v4238 = vrot.slane %v4014, 1
  %v4239 = vsel %vm2130, %v4238, %v4237
  %v4240 = vpack.c.b16 %v4029, %v4029
  %v4241 = vpack.c.b16 %v4043, %v4043
  %v4242 = vpack.c.b16 %v4057, %v4057
  %v4243 = vpack.c.b16 %v4071, %v4071
  %v4244 = vpack.c.b16 %v4085, %v4085
  %v4245 = vpack.c.b16 %v4099, %v4099
  %v4246 = vpack.c.b16 %v4113, %v4113
  %v4247 = vpack.c.b16 %v4127, %v4127
  %v4248 = vpack.c.b16 %v4141, %v4141
  %v4249 = vpack.c.b16 %v4155, %v4155
  %v4250 = vpack.c.b16 %v4169, %v4169
  %v4251 = vpack.c.b16 %v4183, %v4183
  %v4252 = vpack.c.b16 %v4197, %v4197
  %v4253 = vpack.c.b16 %v4211, %v4211
  %v4254 = vpack.c.b16 %v4225, %v4225
  %v4255 = vpack.c.b16 %v4239, %v4239
  %4272 = vst [vmem:[%s3] sm:$0xf] %v4240
  %4273 = vst [vmem:[%s3 + $0x4] sm:$0xf] %v4241
  %4274 = vst [vmem:[%s3 + $0x8] sm:$0xf] %v4242
  %4275 = vst [vmem:[%s3 + $0xc] sm:$0xf] %v4243
  %4276 = vst [vmem:[%s3 + $0x10] sm:$0xf] %v4244
  %4277 = vst [vmem:[%s3 + $0x14] sm:$0xf] %v4245
  %4278 = vst [vmem:[%s3 + $0x18] sm:$0xf] %v4246
  %4279 = vst [vmem:[%s3 + $0x1c] sm:$0xf] %v4247
  %4280 = vst [vmem:[%s3 + $0x20] sm:$0xf] %v4248
  %4281 = vst [vmem:[%s3 + $0x24] sm:$0xf] %v4249
  %4282 = vst [vmem:[%s3 + $0x28] sm:$0xf] %v4250
  %4283 = vst [vmem:[%s3 + $0x2c] sm:$0xf] %v4251
  %4284 = vst [vmem:[%s3 + $0x30] sm:$0xf] %v4252
  %4285 = vst [vmem:[%s3 + $0x34] sm:$0xf] %v4253
  %4286 = vst [vmem:[%s3 + $0x38] sm:$0xf] %v4254
  %4287 = vst [vmem:[%s3 + $0x3c] sm:$0xf] %v4255
  // Predicated region
  $region14: #{network_wrn101_forward.2} parent=0 // pred_check
    _
  $region15: #{network_wrn101_forward.2} parent=0 // pred_check_branch
    %4289 = sbr.rel (0) target = $region17
  $region16: #{network_wrn101_forward.2} parent=0 // pred_region
    _
  $region17: #{network_wrn101_forward.2} parent=0 // pred_fallthru
    _
  // Predicated region
  $region18: #{network_wrn101_forward.2} parent=0 // pred_check
    _
  $region19: #{network_wrn101_forward.2} parent=0 // pred_check_branch
    %4291 = sbr.rel (0) target = $region21
  $region20: #{network_wrn101_forward.2} parent=0 // pred_region
    _
  $region21: #{network_wrn101_forward.2} parent=0 // pred_fallthru
    _

// kernel: network_wrn101_forward.3
$region0: #{network_wrn101_forward.3}
  #allocation0 [shape = 'u32[]', space=smem, size = 0x4, offset = 0x4, fixed_abs, tag = 'smem constant byte address 0x4 - core index']
  #allocation1 [shape = 'u32[144,128]{1,0:T(1,128)}', space=vmem, size = 0x12000, scoped, tag = 'internal scratch']
  %s0 = inlined_call_operand.vmem [shape: bf16[2,8,8,128], index: 0, kind: input, shape index: {}]
  %s1 = inlined_call_operand.vmem [shape: bf16[128,384], index: 1, kind: input, shape index: {}]
  %s2 = inlined_call_operand.vmem [shape: f32[1,128], index: 2, kind: input, shape index: {}]
  %s3 = inlined_call_operand.vmem [shape: f32[1,256], index: 3, kind: input, shape index: {}]
  %s4 = inlined_call_operand.vmem [shape: bf16[1152,128], index: 4, kind: input, shape index: {}]
  %s5 = inlined_call_operand.vmem [shape: f32[1,128], index: 5, kind: input, shape index: {}]
  %s6 = inlined_call_operand.vmem [shape: bf16[128,256], index: 6, kind: input, shape index: {}]
  %s7 = inlined_call_operand.vmem [shape: f32[1,256], index: 7, kind: input, shape index: {}]
  %s8 = inlined_call_operand.vmem [shape: bf16[256,128], index: 8, kind: input, shape index: {}]
  %s9 = inlined_call_operand.vmem [shape: f32[1,128], index: 9, kind: input, shape index: {}]
  %s10 = inlined_call_operand.vmem [shape: bf16[1152,128], index: 10, kind: input, shape index: {}]
  %s11 = inlined_call_operand.vmem [shape: f32[1,128], index: 11, kind: input, shape index: {}]
  %s12 = inlined_call_operand.vmem [shape: bf16[128,256], index: 12, kind: input, shape index: {}]
  %s13 = inlined_call_operand.vmem [shape: f32[1,256], index: 13, kind: input, shape index: {}]
  %s14 = inlined_call_operand.vmem [shape: bf16[256,128], index: 14, kind: input, shape index: {}]
  %s15 = inlined_call_operand.vmem [shape: f32[1,128], index: 15, kind: input, shape index: {}]
  %s16 = inlined_call_operand.hbm [shape: f32[2,128], index: 16, kind: output, shape index: {}]
  %s17 = sld [smem:[#allocation0]]
  $region74: #{network_wrn101_forward.3} parent=0
    _
  %s19 = ssub.s32 1, %s17
  %s20 = scalar_select 0, %s19, %s17
  $region1: #{network_wrn101_forward.3} parent=0
    #allocation2 [shape = 'u8[1024]{0}', space=vmem, size = 0x400, scoped, tag = 'output window, operand 0, single buffered']
    #allocation3 [shape = 's32[1]{0}', space=sflag, size = 0x4, scoped, tag = 'scoped memory for network_wrn101_forward.3']
    %21 = vsyncpa [#allocation3], 0
    // Predicated region
    $region2: #{network_wrn101_forward.3} parent=1 // pred_check
      _
    $region3: #{network_wrn101_forward.3} parent=1 // pred_check_branch
      %23 = sbr.rel (0) target = $region5
    $region4: #{network_wrn101_forward.3} parent=1 // pred_region
      _
    $region5: #{network_wrn101_forward.3} parent=1 // pred_fallthru
      _
    // Predicated region
    $region6: #{network_wrn101_forward.3} parent=1 // pred_check
      _
    $region7: #{network_wrn101_forward.3} parent=1 // pred_check_branch
      %25 = sbr.rel (0) target = $region9
    $region8: #{network_wrn101_forward.3} parent=1 // pred_region
      _
    $region9: #{network_wrn101_forward.3} parent=1 // pred_fallthru
      _
    // Predicated region
    $region10: #{network_wrn101_forward.3} parent=1 // pred_check
      _
    $region11: #{network_wrn101_forward.3} parent=1 // pred_check_branch
      %27 = sbr.rel (0) target = $region13
    $region12: #{network_wrn101_forward.3} parent=1 // pred_region
      _
    $region13: #{network_wrn101_forward.3} parent=1 // pred_fallthru
      _
    // Predicated region
    $region14: #{network_wrn101_forward.3} parent=1 // pred_check
      _
    $region15: #{network_wrn101_forward.3} parent=1 // pred_check_branch
      %29 = sbr.rel (0) target = $region17
    $region16: #{network_wrn101_forward.3} parent=1 // pred_region
      _
    $region17: #{network_wrn101_forward.3} parent=1 // pred_fallthru
      _
    // Predicated region
    $region18: #{network_wrn101_forward.3} parent=1 // pred_check
      _
    $region19: #{network_wrn101_forward.3} parent=1 // pred_check_branch
      %31 = sbr.rel (0) target = $region21
    $region20: #{network_wrn101_forward.3} parent=1 // pred_region
      _
    $region21: #{network_wrn101_forward.3} parent=1 // pred_fallthru
      _
    // Predicated region
    $region22: #{network_wrn101_forward.3} parent=1 // pred_check
      _
    $region23: #{network_wrn101_forward.3} parent=1 // pred_check_branch
      %33 = sbr.rel (0) target = $region25
    $region24: #{network_wrn101_forward.3} parent=1 // pred_region
      _
    $region25: #{network_wrn101_forward.3} parent=1 // pred_fallthru
      _
    // Predicated region
    $region26: #{network_wrn101_forward.3} parent=1 // pred_check
      _
    $region27: #{network_wrn101_forward.3} parent=1 // pred_check_branch
      %35 = sbr.rel (0) target = $region29
    $region28: #{network_wrn101_forward.3} parent=1 // pred_region
      _
    $region29: #{network_wrn101_forward.3} parent=1 // pred_fallthru
      _
    // Predicated region
    $region30: #{network_wrn101_forward.3} parent=1 // pred_check
      _
    $region31: #{network_wrn101_forward.3} parent=1 // pred_check_branch
      %37 = sbr.rel (0) target = $region33
    $region32: #{network_wrn101_forward.3} parent=1 // pred_region
      _
    $region33: #{network_wrn101_forward.3} parent=1 // pred_fallthru
      _
    // Predicated region
    $region34: #{network_wrn101_forward.3} parent=1 // pred_check
      _
    $region35: #{network_wrn101_forward.3} parent=1 // pred_check_branch
      %39 = sbr.rel (0) target = $region37
    $region36: #{network_wrn101_forward.3} parent=1 // pred_region
      _
    $region37: #{network_wrn101_forward.3} parent=1 // pred_fallthru
      _
    // Predicated region
    $region38: #{network_wrn101_forward.3} parent=1 // pred_check
      _
    $region39: #{network_wrn101_forward.3} parent=1 // pred_check_branch
      %41 = sbr.rel (0) target = $region41
    $region40: #{network_wrn101_forward.3} parent=1 // pred_region
      _
    $region41: #{network_wrn101_forward.3} parent=1 // pred_fallthru
      _
    // Predicated region
    $region42: #{network_wrn101_forward.3} parent=1 // pred_check
      _
    $region43: #{network_wrn101_forward.3} parent=1 // pred_check_branch
      %43 = sbr.rel (0) target = $region45
    $region44: #{network_wrn101_forward.3} parent=1 // pred_region
      _
    $region45: #{network_wrn101_forward.3} parent=1 // pred_fallthru
      _
    // Predicated region
    $region46: #{network_wrn101_forward.3} parent=1 // pred_check
      _
    $region47: #{network_wrn101_forward.3} parent=1 // pred_check_branch
      %45 = sbr.rel (0) target = $region49
    $region48: #{network_wrn101_forward.3} parent=1 // pred_region
      _
    $region49: #{network_wrn101_forward.3} parent=1 // pred_fallthru
      _
    // Predicated region
    $region50: #{network_wrn101_forward.3} parent=1 // pred_check
      _
    $region51: #{network_wrn101_forward.3} parent=1 // pred_check_branch
      %47 = sbr.rel (0) target = $region53
    $region52: #{network_wrn101_forward.3} parent=1 // pred_region
      _
    $region53: #{network_wrn101_forward.3} parent=1 // pred_fallthru
      _
    // Predicated region
    $region54: #{network_wrn101_forward.3} parent=1 // pred_check
      _
    $region55: #{network_wrn101_forward.3} parent=1 // pred_check_branch
      %49 = sbr.rel (0) target = $region57
    $region56: #{network_wrn101_forward.3} parent=1 // pred_region
      _
    $region57: #{network_wrn101_forward.3} parent=1 // pred_fallthru
      _
    // Predicated region
    $region58: #{network_wrn101_forward.3} parent=1 // pred_check
      _
    $region59: #{network_wrn101_forward.3} parent=1 // pred_check_branch
      %51 = sbr.rel (0) target = $region61
    $region60: #{network_wrn101_forward.3} parent=1 // pred_region
      _
    $region61: #{network_wrn101_forward.3} parent=1 // pred_fallthru
      _
    // Predicated region
    $region62: #{network_wrn101_forward.3} parent=1 // pred_check
      _
    $region63: #{network_wrn101_forward.3} parent=1 // pred_check_branch
      %53 = sbr.rel (0) target = $region65
    $region64: #{network_wrn101_forward.3} parent=1 // pred_region
      _
    $region65: #{network_wrn101_forward.3} parent=1 // pred_fallthru
      _
    %v55 = vld [vmem:[%s0] sm:$0xf]
    %v56 = vld [vmem:[%s0 + $0x4] sm:$0xf]
    %v57 = vld [vmem:[%s0 + $0x8] sm:$0xf]
    %v58 = vld [vmem:[%s0 + $0xc] sm:$0xf]
    %v59 = vld [vmem:[%s0 + $0x10] sm:$0xf]
    %v60 = vld [vmem:[%s0 + $0x14] sm:$0xf]
    %v61 = vld [vmem:[%s0 + $0x18] sm:$0xf]
    %v62 = vld [vmem:[%s0 + $0x1c] sm:$0xf]
    %v63 = vld [vmem:[%s0 + $0x20] sm:$0xf]
    %v64 = vld [vmem:[%s0 + $0x24] sm:$0xf]
    %v65 = vld [vmem:[%s0 + $0x28] sm:$0xf]
    %v66 = vld [vmem:[%s0 + $0x2c] sm:$0xf]
    %v67 = vld [vmem:[%s0 + $0x30] sm:$0xf]
    %v68 = vld [vmem:[%s0 + $0x34] sm:$0xf]
    %v69 = vld [vmem:[%s0 + $0x38] sm:$0xf]
    %v70 = vld [vmem:[%s0 + $0x3c] sm:$0xf]
    %v71 = vld [vmem:[%s1] sm:$0xff]
    %v72 = vld [vmem:[%s1 + $0x8] sm:$0xf]
    %v73 = vld [vmem:[%s1 + $0xc] sm:$0xff]
    %v74 = vld [vmem:[%s1 + $0x14] sm:$0xf]
    %v75 = vld [vmem:[%s1 + $0x18] sm:$0xff]
    %v76 = vld [vmem:[%s1 + $0x20] sm:$0xf]
    %v77 = vld [vmem:[%s1 + $0x24] sm:$0xff]
    %v78 = vld [vmem:[%s1 + $0x2c] sm:$0xf]
    %v79 = vld [vmem:[%s1 + $0x30] sm:$0xff]
    %v80 = vld [vmem:[%s1 + $0x38] sm:$0xf]
    %v81 = vld [vmem:[%s1 + $0x3c] sm:$0xff]
    %v82 = vld [vmem:[%s1 + $0x44] sm:$0xf]
    %v83 = vld [vmem:[%s1 + $0x48] sm:$0xff]
    %v84 = vld [vmem:[%s1 + $0x50] sm:$0xf]
    %v85 = vld [vmem:[%s1 + $0x54] sm:$0xff]
    %v86 = vld [vmem:[%s1 + $0x5c] sm:$0xf]
    %v87 = vld [vmem:[%s1 + $0x60] sm:$0xff]
    %v88 = vld [vmem:[%s1 + $0x68] sm:$0xf]
    %v89 = vld [vmem:[%s1 + $0x6c] sm:$0xff]
    %v90 = vld [vmem:[%s1 + $0x74] sm:$0xf]
    %v91 = vld [vmem:[%s1 + $0x78] sm:$0xff]
    %v92 = vld [vmem:[%s1 + $0x80] sm:$0xf]
    %v93 = vld [vmem:[%s1 + $0x84] sm:$0xff]
    %v94 = vld [vmem:[%s1 + $0x8c] sm:$0xf]
    %v95 = vld [vmem:[%s1 + $0x90] sm:$0xff]
    %v96 = vld [vmem:[%s1 + $0x98] sm:$0xf]
    %v97 = vld [vmem:[%s1 + $0x9c] sm:$0xff]
    %v98 = vld [vmem:[%s1 + $0xa4] sm:$0xf]
    %v99 = vld [vmem:[%s1 + $0xa8] sm:$0xff]
    %v100 = vld [vmem:[%s1 + $0xb0] sm:$0xf]
    %v101 = vld [vmem:[%s1 + $0xb4] sm:$0xff]
    %v102 = vld [vmem:[%s1 + $0xbc] sm:$0xf]
    %v119 = vunpack.c.l.b16 %v55
    %v120 = vunpack.c.l.b16 %v56
    %v121 = vunpack.c.l.b16 %v57
    %v122 = vunpack.c.l.b16 %v58
    %v123 = vunpack.c.l.b16 %v59
    %v124 = vunpack.c.l.b16 %v60
    %v125 = vunpack.c.l.b16 %v61
    %v126 = vunpack.c.l.b16 %v62
    %v127 = vunpack.c.l.b16 %v63
    %v128 = vunpack.c.l.b16 %v64
    %v129 = vunpack.c.l.b16 %v65
    %v130 = vunpack.c.l.b16 %v66
    %v131 = vunpack.c.l.b16 %v67
    %v132 = vunpack.c.l.b16 %v68
    %v133 = vunpack.c.l.b16 %v69
    %v134 = vunpack.c.l.b16 %v70
    %v135 = vpack.c.b16 %v120, %v119
    %v136 = vpack.c.b16 %v122, %v121
    %v137 = vpack.c.b16 %v124, %v123
    %v138 = vpack.c.b16 %v126, %v125
    %v139 = vpack.c.b16 %v128, %v127
    %v140 = vpack.c.b16 %v130, %v129
    %v141 = vpack.c.b16 %v132, %v131
    %v142 = vpack.c.b16 %v134, %v133
    %v183 = vunpack.c.l.b16 %v71
    %v184 = vunpack.c.h.b16 %v71
    %v185 = vunpack.c.l.b16 %v72
    %v186 = vunpack.c.l.b16 %v73
    %v187 = vunpack.c.h.b16 %v73
    %v188 = vunpack.c.l.b16 %v74
    %v189 = vunpack.c.l.b16 %v75
    %v190 = vunpack.c.h.b16 %v75
    %v191 = vunpack.c.l.b16 %v76
    %v192 = vunpack.c.l.b16 %v77
    %v193 = vunpack.c.h.b16 %v77
    %v194 = vunpack.c.l.b16 %v78
    %v195 = vunpack.c.l.b16 %v79
    %v196 = vunpack.c.h.b16 %v79
    %v197 = vunpack.c.l.b16 %v80
    %v198 = vunpack.c.l.b16 %v81
    %v199 = vunpack.c.h.b16 %v81
    %v200 = vunpack.c.l.b16 %v82
    %v201 = vunpack.c.l.b16 %v83
    %v202 = vunpack.c.h.b16 %v83
    %v203 = vunpack.c.l.b16 %v84
    %v204 = vunpack.c.l.b16 %v85
    %v205 = vunpack.c.h.b16 %v85
    %v206 = vunpack.c.l.b16 %v86
    %v207 = vunpack.c.l.b16 %v87
    %v208 = vunpack.c.h.b16 %v87
    %v209 = vunpack.c.l.b16 %v88
    %v210 = vunpack.c.l.b16 %v89
    %v211 = vunpack.c.h.b16 %v89
    %v212 = vunpack.c.l.b16 %v90
    %v213 = vunpack.c.l.b16 %v91
    %v214 = vunpack.c.h.b16 %v91
    %v215 = vunpack.c.l.b16 %v92
    %v216 = vunpack.c.l.b16 %v93
    %v217 = vunpack.c.h.b16 %v93
    %v218 = vunpack.c.l.b16 %v94
    %v219 = vunpack.c.l.b16 %v95
    %v220 = vunpack.c.h.b16 %v95
    %v221 = vunpack.c.l.b16 %v96
    %v222 = vunpack.c.l.b16 %v97
    %v223 = vunpack.c.h.b16 %v97
    %v224 = vunpack.c.l.b16 %v98
    %v225 = vunpack.c.l.b16 %v99
    %v226 = vunpack.c.h.b16 %v99
    %v227 = vunpack.c.l.b16 %v100
    %v228 = vunpack.c.l.b16 %v101
    %v229 = vunpack.c.h.b16 %v101
    %v230 = vunpack.c.l.b16 %v102
    %v231 = vpack.c.b16 %v186, %v183
    %v232 = vpack.c.b16 %v187, %v184
    %v233 = vpack.c.b16 %v188, %v185
    %v234 = vpack.c.b16 %v192, %v189
    %v235 = vpack.c.b16 %v193, %v190
    %v236 = vpack.c.b16 %v194, %v191
    %v237 = vpack.c.b16 %v198, %v195
    %v238 = vpack.c.b16 %v199, %v196
    %v239 = vpack.c.b16 %v200, %v197
    %v240 = vpack.c.b16 %v204, %v201
    %v241 = vpack.c.b16 %v205, %v202
    %v242 = vpack.c.b16 %v206, %v203
    %v243 = vpack.c.b16 %v210, %v207
    %v244 = vpack.c.b16 %v211, %v208
    %v245 = vpack.c.b16 %v212, %v209
    %v246 = vpack.c.b16 %v216, %v213
    %v247 = vpack.c.b16 %v217, %v214
    %v248 = vpack.c.b16 %v218, %v215
    %v249 = vpack.c.b16 %v222, %v219
    %v250 = vpack.c.b16 %v223, %v220
    %v251 = vpack.c.b16 %v224, %v221
    %v252 = vpack.c.b16 %v228, %v225
    %v253 = vpack.c.b16 %v229, %v226
    %v254 = vpack.c.b16 %v230, %v227
    %279 = vmatprep.subr.bf16.mxu0 %v232
    %280 = vmatpush1.bf16.msra.mxu0 %v231
    %281 = vmatprep.subr.bf16.mxu0 %v235
    %282 = vmatpush1.bf16.msra.mxu0 %v234
    %283 = vmatprep.subr.bf16.mxu0 %v238
    %284 = vmatpush1.bf16.msra.mxu0 %v237
    %285 = vmatprep.subr.bf16.mxu0 %v241
    %286 = vmatpush1.bf16.msra.mxu0 %v240
    %287 = vmatprep.subr.bf16.mxu0 %v244
    %288 = vmatpush1.bf16.msra.mxu0 %v243
    %289 = vmatprep.subr.bf16.mxu0 %v247
    %290 = vmatpush1.bf16.msra.mxu0 %v246
    %291 = vmatprep.subr.bf16.mxu0 %v250
    %292 = vmatpush1.bf16.msra.mxu0 %v249
    %293 = vmatprep.subr.bf16.mxu0 %v253
    %294 = vmatpush1.bf16.msra.mxu0 %v252
    %295 = vmatprep.subr.bf16.mxu0 0
    %296 = vmatpush1.bf16.msra.mxu0 0
    %297 = vmatprep.subr.bf16.mxu0 0
    %298 = vmatpush1.bf16.msra.mxu0 0
    %299 = vmatprep.subr.bf16.mxu0 0
    %300 = vmatpush1.bf16.msra.mxu0 0
    %301 = vmatprep.subr.bf16.mxu0 0
    %302 = vmatpush1.bf16.msra.mxu0 0
    %303 = vmatprep.subr.bf16.mxu0 0
    %304 = vmatpush1.bf16.msra.mxu0 0
    %305 = vmatprep.subr.bf16.mxu0 0
    %306 = vmatpush1.bf16.msra.mxu0 0
    %307 = vmatprep.subr.bf16.mxu0 0
    %308 = vmatpush1.bf16.msra.mxu0 0
    %309 = vmatprep.subr.bf16.mxu0 0
    %310 = vmatpush1.bf16.msra.mxu0 0
    %311 = vmatprep.mubr.bf16.mxu0 0
    %312 = vmatmul.mubr.bf16.gmra.mrb[0].mxu0 %v135
    %v313 = vpop.f32.mrb[0].mxu0
    %v314 = vadd.f32 0.0, %v313
    %v315 = vpop.f32.mrb[0].mxu0
    %v316 = vadd.f32 0.0, %v315
    %v317 = vpop.f32.mrb[0].mxu0
    %v318 = vadd.f32 0.0, %v317
    %v319 = vpop.f32.mrb[0].mxu0
    %v320 = vadd.f32 0.0, %v319
    %321 = vmatprep.mubr.bf16.mxu0 0
    %322 = vmatmul.mubr.bf16.gmra.mrb[0].mxu0 %v136
    %v323 = vpop.f32.mrb[0].mxu0
    %v324 = vadd.f32 0.0, %v323
    %v325 = vpop.f32.mrb[0].mxu0
    %v326 = vadd.f32 0.0, %v325
    %v327 = vpop.f32.mrb[0].mxu0
    %v328 = vadd.f32 0.0, %v327
    %v329 = vpop.f32.mrb[0].mxu0
    %v330 = vadd.f32 0.0, %v329
    %331 = vmatprep.mubr.bf16.mxu0 0
    %332 = vmatmul.mubr.bf16.gmra.mrb[0].mxu0 %v137
    %v333 = vpop.f32.mrb[0].mxu0
    %v334 = vadd.f32 0.0, %v333
    %v335 = vpop.f32.mrb[0].mxu0
    %v336 = vadd.f32 0.0, %v335
    %v337 = vpop.f32.mrb[0].mxu0
    %v338 = vadd.f32 0.0, %v337
    %v339 = vpop.f32.mrb[0].mxu0
    %v340 = vadd.f32 0.0, %v339
    %341 = vmatprep.mubr.bf16.mxu0 0
    %342 = vmatmul.mubr.bf16.gmra.mrb[0].mxu0 %v138
    %v343 = vpop.f32.mrb[0].mxu0
    %v344 = vadd.f32 0.0, %v343
    %v345 = vpop.f32.mrb[0].mxu0
    %v346 = vadd.f32 0.0, %v345
    %v347 = vpop.f32.mrb[0].mxu0
    %v348 = vadd.f32 0.0, %v347
    %v349 = vpop.f32.mrb[0].mxu0
    %v350 = vadd.f32 0.0, %v349
    %351 = vmatprep.mubr.bf16.mxu0 0
    %352 = vmatmul.mubr.bf16.gmra.mrb[0].mxu0 %v139
    %v353 = vpop.f32.mrb[0].mxu0
    %v354 = vadd.f32 0.0, %v353
    %v355 = vpop.f32.mrb[0].mxu0
    %v356 = vadd.f32 0.0, %v355
    %v357 = vpop.f32.mrb[0].mxu0
    %v358 = vadd.f32 0.0, %v357
    %v359 = vpop.f32.mrb[0].mxu0
    %v360 = vadd.f32 0.0, %v359
    %361 = vmatprep.mubr.bf16.mxu0 0
    %362 = vmatmul.mubr.bf16.gmra.mrb[0].mxu0 %v140
    %v363 = vpop.f32.mrb[0].mxu0
    %v364 = vadd.f32 0.0, %v363
    %v365 = vpop.f32.mrb[0].mxu0
    %v366 = vadd.f32 0.0, %v365
    %v367 = vpop.f32.mrb[0].mxu0
    %v368 = vadd.f32 0.0, %v367
    %v369 = vpop.f32.mrb[0].mxu0
    %v370 = vadd.f32 0.0, %v369
    %371 = vmatprep.mubr.bf16.mxu0 0
    %372 = vmatmul.mubr.bf16.gmra.mrb[0].mxu0 %v141
    %v373 = vpop.f32.mrb[0].mxu0
    %v374 = vadd.f32 0.0, %v373
    %v375 = vpop.f32.mrb[0].mxu0
    %v376 = vadd.f32 0.0, %v375
    %v377 = vpop.f32.mrb[0].mxu0
    %v378 = vadd.f32 0.0, %v377
    %v379 = vpop.f32.mrb[0].mxu0
    %v380 = vadd.f32 0.0, %v379
    %381 = vmatprep.mubr.bf16.mxu0 0
    %382 = vmatmul.mubr.bf16.gmra.mrb[0].mxu0 %v142
    %v383 = vpop.f32.mrb[0].mxu0
    %v384 = vadd.f32 0.0, %v383
    %v385 = vpop.f32.mrb[0].mxu0
    %v386 = vadd.f32 0.0, %v385
    %v387 = vpop.f32.mrb[0].mxu0
    %v388 = vadd.f32 0.0, %v387
    %v389 = vpop.f32.mrb[0].mxu0
    %v390 = vadd.f32 0.0, %v389
    %391 = vdwg.mxu0
    %392 = vmatprep.subr.bf16.mxu0 0
    %393 = vmatpush1.bf16.msra.mxu0 %v233
    %394 = vmatprep.subr.bf16.mxu0 0
    %395 = vmatpush1.bf16.msra.mxu0 %v236
    %396 = vmatprep.subr.bf16.mxu0 0
    %397 = vmatpush1.bf16.msra.mxu0 %v239
    %398 = vmatprep.subr.bf16.mxu0 0
    %399 = vmatpush1.bf16.msra.mxu0 %v242
    %400 = vmatprep.subr.bf16.mxu0 0
    %401 = vmatpush1.bf16.msra.mxu0 %v245
    %402 = vmatprep.subr.bf16.mxu0 0
    %403 = vmatpush1.bf16.msra.mxu0 %v248
    %404 = vmatprep.subr.bf16.mxu0 0
    %405 = vmatpush1.bf16.msra.mxu0 %v251
    %406 = vmatprep.subr.bf16.mxu0 0
    %407 = vmatpush1.bf16.msra.mxu0 %v254
    %408 = vmatprep.subr.bf16.mxu0 0
    %409 = vmatpush1.bf16.msra.mxu0 0
    %410 = vmatprep.subr.bf16.mxu0 0
    %411 = vmatpush1.bf16.msra.mxu0 0
    %412 = vmatprep.subr.bf16.mxu0 0
    %413 = vmatpush1.bf16.msra.mxu0 0
    %414 = vmatprep.subr.bf16.mxu0 0
    %415 = vmatpush1.bf16.msra.mxu0 0
    %416 = vmatprep.subr.bf16.mxu0 0
    %417 = vmatpush1.bf16.msra.mxu0 0
    %418 = vmatprep.subr.bf16.mxu0 0
    %419 = vmatpush1.bf16.msra.mxu0 0
    %420 = vmatprep.subr.bf16.mxu0 0
    %421 = vmatpush1.bf16.msra.mxu0 0
    %422 = vmatprep.subr.bf16.mxu0 0
    %423 = vmatpush1.bf16.msra.mxu0 0
    %424 = vmatprep.mubr.bf16.mxu0 0
    %425 = vmatmul.mubr.bf16.gmra.mrb[0].mxu0 %v135
    %v426 = vpop.f32.mrb[0].mxu0
    %v427 = vadd.f32 0.0, %v426
    %v428 = vpop.f32.mrb[0].mxu0
    %v429 = vpop.f32.mrb[0].mxu0
    %v430 = vadd.f32 0.0, %v429
    %v431 = vpop.f32.mrb[0].mxu0
    %432 = vmatprep.mubr.bf16.mxu0 0
    %433 = vmatmul.mubr.bf16.gmra.mrb[0].mxu0 %v136
    %v434 = vpop.f32.mrb[0].mxu0
    %v435 = vadd.f32 0.0, %v434
    %v436 = vpop.f32.mrb[0].mxu0
    %v437 = vpop.f32.mrb[0].mxu0
    %v438 = vadd.f32 0.0, %v437
    %v439 = vpop.f32.mrb[0].mxu0
    %440 = vmatprep.mubr.bf16.mxu0 0
    %441 = vmatmul.mubr.bf16.gmra.mrb[0].mxu0 %v137
    %v442 = vpop.f32.mrb[0].mxu0
    %v443 = vadd.f32 0.0, %v442
    %v444 = vpop.f32.mrb[0].mxu0
    %v445 = vpop.f32.mrb[0].mxu0
    %v446 = vadd.f32 0.0, %v445
    %v447 = vpop.f32.mrb[0].mxu0
    %448 = vmatprep.mubr.bf16.mxu0 0
    %449 = vmatmul.mubr.bf16.gmra.mrb[0].mxu0 %v138
    %v450 = vpop.f32.mrb[0].mxu0
    %v451 = vadd.f32 0.0, %v450
    %v452 = vpop.f32.mrb[0].mxu0
    %v453 = vpop.f32.mrb[0].mxu0
    %v454 = vadd.f32 0.0, %v453
    %v455 = vpop.f32.mrb[0].mxu0
    %456 = vmatprep.mubr.bf16.mxu0 0
    %457 = vmatmul.mubr.bf16.gmra.mrb[0].mxu0 %v139
    %v458 = vpop.f32.mrb[0].mxu0
    %v459 = vadd.f32 0.0, %v458
    %v460 = vpop.f32.mrb[0].mxu0
    %v461 = vpop.f32.mrb[0].mxu0
    %v462 = vadd.f32 0.0, %v461
    %v463 = vpop.f32.mrb[0].mxu0
    %464 = vmatprep.mubr.bf16.mxu0 0
    %465 = vmatmul.mubr.bf16.gmra.mrb[0].mxu0 %v140
    %v466 = vpop.f32.mrb[0].mxu0
    %v467 = vadd.f32 0.0, %v466
    %v468 = vpop.f32.mrb[0].mxu0
    %v469 = vpop.f32.mrb[0].mxu0
    %v470 = vadd.f32 0.0, %v469
    %v471 = vpop.f32.mrb[0].mxu0
    %472 = vmatprep.mubr.bf16.mxu0 0
    %473 = vmatmul.mubr.bf16.gmra.mrb[0].mxu0 %v141
    %v474 = vpop.f32.mrb[0].mxu0
    %v475 = vadd.f32 0.0, %v474
    %v476 = vpop.f32.mrb[0].mxu0
    %v477 = vpop.f32.mrb[0].mxu0
    %v478 = vadd.f32 0.0, %v477
    %v479 = vpop.f32.mrb[0].mxu0
    %480 = vmatprep.mubr.bf16.mxu0 0
    %481 = vmatmul.mubr.bf16.gmra.mrb[0].mxu0 %v142
    %v482 = vpop.f32.mrb[0].mxu0
    %v483 = vadd.f32 0.0, %v482
    %v484 = vpop.f32.mrb[0].mxu0
    %v485 = vpop.f32.mrb[0].mxu0
    %v486 = vadd.f32 0.0, %v485
    %v487 = vpop.f32.mrb[0].mxu0
    %488 = vdwg.mxu0
    %v489 = vld [vmem:[%s2] sm:$0x1]
    %v491 = vlaneseq
    %v492 = vshrl.u32 %v491, 7
    %v493 = vsub.s32 0, %v492
    %v494 = vrot.slane %v489, %v493
    %v496 = vadd.f32 %v314, %v494
    %v497 = vadd.f32 %v318, %v494
    %v498 = vadd.f32 %v324, %v494
    %v499 = vadd.f32 %v328, %v494
    %v500 = vadd.f32 %v334, %v494
    %v501 = vadd.f32 %v338, %v494
    %v502 = vadd.f32 %v344, %v494
    %v503 = vadd.f32 %v348, %v494
    %v504 = vadd.f32 %v354, %v494
    %v505 = vadd.f32 %v358, %v494
    %v506 = vadd.f32 %v364, %v494
    %v507 = vadd.f32 %v368, %v494
    %v508 = vadd.f32 %v374, %v494
    %v509 = vadd.f32 %v378, %v494
    %v510 = vadd.f32 %v384, %v494
    %v511 = vadd.f32 %v388, %v494
    %v512 = vmax.f32 %v496, 0.0
    %v513 = vmax.f32 %v497, 0.0
    %v514 = vmax.f32 %v498, 0.0
    %v515 = vmax.f32 %v499, 0.0
    %v516 = vmax.f32 %v500, 0.0
    %v517 = vmax.f32 %v501, 0.0
    %v518 = vmax.f32 %v502, 0.0
    %v519 = vmax.f32 %v503, 0.0
    %v520 = vmax.f32 %v504, 0.0
    %v521 = vmax.f32 %v505, 0.0
    %v522 = vmax.f32 %v506, 0.0
    %v523 = vmax.f32 %v507, 0.0
    %v524 = vmax.f32 %v508, 0.0
    %v525 = vmax.f32 %v509, 0.0
    %v526 = vmax.f32 %v510, 0.0
    %v527 = vmax.f32 %v511, 0.0
    %v528 = vld [vmem:[%s3] sm:$0x3]
    %v530 = vlaneseq
    %v531 = vshrl.u32 %v530, 7
    %v532 = vsub.s32 0, %v531
    %v533 = vrot.slane %v528, %v532
    %v534 = vlaneseq
    %v535 = vshrl.u32 %v534, 7
    %v536 = vsub.s32 1, %v535
    %v537 = vrot.slane %v528, %v536
    %v540 = vadd.f32 %v316, %v533
    %v541 = vadd.f32 %v427, %v537
    %v542 = vadd.f32 %v320, %v533
    %v543 = vadd.f32 %v430, %v537
    %v544 = vadd.f32 %v326, %v533
    %v545 = vadd.f32 %v435, %v537
    %v546 = vadd.f32 %v330, %v533
    %v547 = vadd.f32 %v438, %v537
    %v548 = vadd.f32 %v336, %v533
    %v549 = vadd.f32 %v443, %v537
    %v550 = vadd.f32 %v340, %v533
    %v551 = vadd.f32 %v446, %v537
    %v552 = vadd.f32 %v346, %v533
    %v553 = vadd.f32 %v451, %v537
    %v554 = vadd.f32 %v350, %v533
    %v555 = vadd.f32 %v454, %v537
    %v556 = vadd.f32 %v356, %v533
    %v557 = vadd.f32 %v459, %v537
    %v558 = vadd.f32 %v360, %v533
    %v559 = vadd.f32 %v462, %v537
    %v560 = vadd.f32 %v366, %v533
    %v561 = vadd.f32 %v467, %v537
    %v562 = vadd.f32 %v370, %v533
    %v563 = vadd.f32 %v470, %v537
    %v564 = vadd.f32 %v376, %v533
    %v565 = vadd.f32 %v475, %v537
    %v566 = vadd.f32 %v380, %v533
    %v567 = vadd.f32 %v478, %v537
    %v568 = vadd.f32 %v386, %v533
    %v569 = vadd.f32 %v483, %v537
    %v570 = vadd.f32 %v390, %v533
    %v571 = vadd.f32 %v486, %v537
    %v572 = vpack.c.bf16 %v513, %v512
    %v573 = vpack.c.bf16 %v515, %v514
    %v574 = vpack.c.bf16 %v517, %v516
    %v575 = vpack.c.bf16 %v519, %v518
    %v576 = vpack.c.bf16 %v521, %v520
    %v577 = vpack.c.bf16 %v523, %v522
    %v578 = vpack.c.bf16 %v525, %v524
    %v579 = vpack.c.bf16 %v527, %v526
    %v588 = vunpack.c.l.b16 %v572
    %v589 = vunpack.c.h.b16 %v572
    %v590 = vunpack.c.l.b16 %v573
    %v591 = vunpack.c.h.b16 %v573
    %v592 = vunpack.c.l.b16 %v574
    %v593 = vunpack.c.h.b16 %v574
    %v594 = vunpack.c.l.b16 %v575
    %v595 = vunpack.c.h.b16 %v575
    %v596 = vunpack.c.l.b16 %v576
    %v597 = vunpack.c.h.b16 %v576
    %v598 = vunpack.c.l.b16 %v577
    %v599 = vunpack.c.h.b16 %v577
    %v600 = vunpack.c.l.b16 %v578
    %v601 = vunpack.c.h.b16 %v578
    %v602 = vunpack.c.l.b16 %v579
    %v603 = vunpack.c.h.b16 %v579
    %v604 = vpack.c.b16 %v588, %v588
    %v605 = vpack.c.b16 %v589, %v589
    %v606 = vpack.c.b16 %v590, %v590
    %v607 = vpack.c.b16 %v591, %v591
    %v608 = vpack.c.b16 %v592, %v592
    %v609 = vpack.c.b16 %v593, %v593
    %v610 = vpack.c.b16 %v594, %v594
    %v611 = vpack.c.b16 %v595, %v595
    %v612 = vpack.c.b16 %v596, %v596
    %v613 = vpack.c.b16 %v597, %v597
    %v614 = vpack.c.b16 %v598, %v598
    %v615 = vpack.c.b16 %v599, %v599
    %v616 = vpack.c.b16 %v600, %v600
    %v617 = vpack.c.b16 %v601, %v601
    %v618 = vpack.c.b16 %v602, %v602
    %v619 = vpack.c.b16 %v603, %v603
    %v621 = vshrl.u32 0, 16
    %v623 = vrot.slane %v621, 7
    %v624 = vshll.u32 0, 16
    %v626 = vor.u32 %v623, %v624
    %v628 = vshrl.u32 %v604, 16
    %v630 = vrot.slane %v628, 7
    %v631 = vshll.u32 %v604, 16
    %v633 = vor.u32 %v630, %v631
    %v635 = vshrl.u32 %v605, 16
    %v637 = vrot.slane %v635, 7
    %v638 = vshll.u32 %v605, 16
    %v640 = vor.u32 %v637, %v638
    %v642 = vshrl.u32 %v606, 16
    %v644 = vrot.slane %v642, 7
    %v645 = vshll.u32 %v606, 16
    %v647 = vor.u32 %v644, %v645
    %v649 = vshrl.u32 %v607, 16
    %v651 = vrot.slane %v649, 7
    %v652 = vshll.u32 %v607, 16
    %v654 = vor.u32 %v651, %v652
    %v656 = vshrl.u32 %v608, 16
    %v658 = vrot.slane %v656, 7
    %v659 = vshll.u32 %v608, 16
    %v661 = vor.u32 %v658, %v659
    %v663 = vshrl.u32 %v609, 16
    %v665 = vrot.slane %v663, 7
    %v666 = vshll.u32 %v609, 16
    %v668 = vor.u32 %v665, %v666
    %v670 = vshrl.u32 %v610, 16
    %v672 = vrot.slane %v670, 7
    %v673 = vshll.u32 %v610, 16
    %v675 = vor.u32 %v672, %v673
    %v677 = vshrl.u32 %v611, 16
    %v679 = vrot.slane %v677, 7
    %v680 = vshll.u32 %v611, 16
    %v682 = vor.u32 %v679, %v680
    %v684 = vshrl.u32 %v612, 16
    %v686 = vrot.slane %v684, 7
    %v687 = vshll.u32 %v612, 16
    %v689 = vor.u32 %v686, %v687
    %v691 = vshrl.u32 %v613, 16
    %v693 = vrot.slane %v691, 7
    %v694 = vshll.u32 %v613, 16
    %v696 = vor.u32 %v693, %v694
    %v698 = vshrl.u32 %v614, 16
    %v700 = vrot.slane %v698, 7
    %v701 = vshll.u32 %v614, 16
    %v703 = vor.u32 %v700, %v701
    %v705 = vshrl.u32 %v615, 16
    %v707 = vrot.slane %v705, 7
    %v708 = vshll.u32 %v615, 16
    %v710 = vor.u32 %v707, %v708
    %v712 = vshrl.u32 %v616, 16
    %v714 = vrot.slane %v712, 7
    %v715 = vshll.u32 %v616, 16
    %v717 = vor.u32 %v714, %v715
    %v719 = vshrl.u32 %v617, 16
    %v721 = vrot.slane %v719, 7
    %v722 = vshll.u32 %v617, 16
    %v724 = vor.u32 %v721, %v722
    %v726 = vshrl.u32 %v618, 16
    %v728 = vrot.slane %v726, 7
    %v729 = vshll.u32 %v618, 16
    %v731 = vor.u32 %v728, %v729
    %v733 = vshrl.u32 %v619, 16
    %v735 = vrot.slane %v733, 7
    %v736 = vshll.u32 %v619, 16
    %v738 = vor.u32 %v735, %v736
    %vm756 = vcmask 1040384
    %vm757 = vsmask.f32 256
    %vm758 = vmand %vm756, %vm757
    %v759 = vsel %vm758, 0, %v626
    %v760 = vsel %vm758, 0, %v633
    %v761 = vsel %vm758, 0, %v640
    %v762 = vsel %vm758, 0, %v647
    %v763 = vsel %vm758, 0, %v654
    %v764 = vsel %vm758, 0, %v661
    %v765 = vsel %vm758, 0, %v668
    %v766 = vsel %vm758, 0, %v675
    %v767 = vsel %vm758, 0, %v682
    %v768 = vsel %vm758, 0, %v689
    %v769 = vsel %vm758, 0, %v696
    %v770 = vsel %vm758, 0, %v703
    %v771 = vsel %vm758, 0, %v710
    %v772 = vsel %vm758, 0, %v717
    %v773 = vsel %vm758, 0, %v724
    %v774 = vsel %vm758, 0, %v731
    %v775 = vsel %vm758, 0, %v738
    %vm776 = vcmask 1044480
    %vm777 = vsmask.f32 4352
    %vm778 = vmand %vm776, %vm777
    %v779 = vsel %vm778, %v759, 0
    %v780 = vsel %vm778, %v760, 0
    %v781 = vsel %vm778, %v761, 0
    %v782 = vsel %vm778, %v762, 0
    %v783 = vsel %vm778, %v763, 0
    %v784 = vsel %vm778, %v764, 0
    %v785 = vsel %vm778, %v765, 0
    %v786 = vsel %vm778, %v766, 0
    %v787 = vsel %vm778, %v767, 0
    %v788 = vsel %vm778, %v768, 0
    %v789 = vsel %vm778, %v769, 0
    %v790 = vsel %vm778, %v770, 0
    %v791 = vsel %vm778, %v771, 0
    %v792 = vsel %vm778, %v772, 0
    %v793 = vsel %vm778, %v773, 0
    %v794 = vsel %vm778, %v774, 0
    %v795 = vsel %vm778, %v775, 0
    %v811 = vunpack.c.l.b16 %v779
    %v812 = vunpack.c.h.b16 %v779
    %v813 = vunpack.c.l.b16 %v780
    %v814 = vunpack.c.h.b16 %v780
    %v815 = vunpack.c.l.b16 %v781
    %v816 = vunpack.c.h.b16 %v781
    %v817 = vunpack.c.l.b16 %v782
    %v818 = vunpack.c.h.b16 %v782
    %v819 = vunpack.c.l.b16 %v783
    %v820 = vunpack.c.h.b16 %v783
    %v821 = vunpack.c.l.b16 %v784
    %v822 = vunpack.c.h.b16 %v784
    %v823 = vunpack.c.l.b16 %v785
    %v824 = vunpack.c.h.b16 %v785
    %v825 = vunpack.c.l.b16 %v786
    %v826 = vunpack.c.h.b16 %v786
    %v827 = vunpack.c.l.b16 %v788
    %v828 = vunpack.c.h.b16 %v788
    %v829 = vunpack.c.l.b16 %v789
    %v830 = vunpack.c.h.b16 %v789
    %v831 = vunpack.c.l.b16 %v790
    %v832 = vunpack.c.h.b16 %v790
    %v833 = vunpack.c.l.b16 %v791
    %v834 = vunpack.c.h.b16 %v791
    %v835 = vunpack.c.l.b16 %v792
    %v836 = vunpack.c.h.b16 %v792
    %v837 = vunpack.c.l.b16 %v793
    %v838 = vunpack.c.h.b16 %v793
    %v839 = vunpack.c.l.b16 %v794
    %v840 = vunpack.c.h.b16 %v794
    %v841 = vpack.c.b16 %v811, %v811
    %v842 = vpack.c.b16 %v812, %v812
    %v843 = vpack.c.b16 %v813, %v813
    %v844 = vpack.c.b16 %v814, %v814
    %v845 = vpack.c.b16 %v815, %v815
    %v846 = vpack.c.b16 %v816, %v816
    %v847 = vpack.c.b16 %v817, %v817
    %v848 = vpack.c.b16 %v818, %v818
    %v849 = vpack.c.b16 %v819, %v819
    %v850 = vpack.c.b16 %v820, %v820
    %v851 = vpack.c.b16 %v821, %v821
    %v852 = vpack.c.b16 %v822, %v822
    %v853 = vpack.c.b16 %v823, %v823
    %v854 = vpack.c.b16 %v824, %v824
    %v855 = vpack.c.b16 %v825, %v825
    %v856 = vpack.c.b16 %v826, %v826
    %v857 = vpack.c.b16 %v827, %v827
    %v858 = vpack.c.b16 %v828, %v828
    %v859 = vpack.c.b16 %v829, %v829
    %v860 = vpack.c.b16 %v830, %v830
    %v861 = vpack.c.b16 %v831, %v831
    %v862 = vpack.c.b16 %v832, %v832
    %v863 = vpack.c.b16 %v833, %v833
    %v864 = vpack.c.b16 %v834, %v834
    %v865 = vpack.c.b16 %v835, %v835
    %v866 = vpack.c.b16 %v836, %v836
    %v867 = vpack.c.b16 %v837, %v837
    %v868 = vpack.c.b16 %v838, %v838
    %v869 = vpack.c.b16 %v839, %v839
    %v870 = vpack.c.b16 %v840, %v840
    %vm871 = vsmask.f32 3328
    %vm872 = vsmask.f32 7440
    %vm873 = vmor %vm871, %vm872
    %v875 = vshrl.u32 %v841, 16
    %v877 = vrot.slane %v875, 4
    %v878 = vshll.u32 %v841, 16
    %v880 = vrot.slane %v878, 5
    %v881 = vor.u32 %v877, %v880
    %v882 = vrot.slane %v881, 4
    %v884 = vshll.u32 %v842, 16
    %v886 = vrot.slane %v884, 5
    %v887 = vsel %vm873, %v882, %v886
    %v889 = vshrl.u32 %v843, 16
    %v891 = vrot.slane %v889, 4
    %v892 = vshll.u32 %v843, 16
    %v894 = vrot.slane %v892, 5
    %v895 = vor.u32 %v891, %v894
    %v896 = vrot.slane %v895, 4
    %v898 = vshll.u32 %v844, 16
    %v900 = vrot.slane %v898, 5
    %v901 = vsel %vm873, %v896, %v900
    %v903 = vshrl.u32 %v845, 16
    %v905 = vrot.slane %v903, 4
    %v906 = vshll.u32 %v845, 16
    %v908 = vrot.slane %v906, 5
    %v909 = vor.u32 %v905, %v908
    %v910 = vrot.slane %v909, 4
    %v912 = vshll.u32 %v846, 16
    %v914 = vrot.slane %v912, 5
    %v915 = vsel %vm873, %v910, %v914
    %v917 = vshrl.u32 %v847, 16
    %v919 = vrot.slane %v917, 4
    %v920 = vshll.u32 %v847, 16
    %v922 = vrot.slane %v920, 5
    %v923 = vor.u32 %v919, %v922
    %v924 = vrot.slane %v923, 4
    %v926 = vshll.u32 %v848, 16
    %v928 = vrot.slane %v926, 5
    %v929 = vsel %vm873, %v924, %v928
    %v931 = vshrl.u32 %v849, 16
    %v933 = vrot.slane %v931, 4
    %v934 = vshll.u32 %v849, 16
    %v936 = vrot.slane %v934, 5
    %v937 = vor.u32 %v933, %v936
    %v938 = vrot.slane %v937, 4
    %v940 = vshll.u32 %v850, 16
    %v942 = vrot.slane %v940, 5
    %v943 = vsel %vm873, %v938, %v942
    %v945 = vshrl.u32 %v851, 16
    %v947 = vrot.slane %v945, 4
    %v948 = vshll.u32 %v851, 16
    %v950 = vrot.slane %v948, 5
    %v951 = vor.u32 %v947, %v950
    %v952 = vrot.slane %v951, 4
    %v954 = vshll.u32 %v852, 16
    %v956 = vrot.slane %v954, 5
    %v957 = vsel %vm873, %v952, %v956
    %v959 = vshrl.u32 %v853, 16
    %v961 = vrot.slane %v959, 4
    %v962 = vshll.u32 %v853, 16
    %v964 = vrot.slane %v962, 5
    %v965 = vor.u32 %v961, %v964
    %v966 = vrot.slane %v965, 4
    %v968 = vshll.u32 %v854, 16
    %v970 = vrot.slane %v968, 5
    %v971 = vsel %vm873, %v966, %v970
    %v973 = vshrl.u32 %v855, 16
    %v975 = vrot.slane %v973, 4
    %v976 = vshll.u32 %v855, 16
    %v978 = vrot.slane %v976, 5
    %v979 = vor.u32 %v975, %v978
    %v980 = vrot.slane %v979, 4
    %v982 = vshll.u32 %v856, 16
    %v984 = vrot.slane %v982, 5
    %v985 = vsel %vm873, %v980, %v984
    %v987 = vshrl.u32 %v857, 16
    %v989 = vrot.slane %v987, 4
    %v990 = vshll.u32 %v857, 16
    %v992 = vrot.slane %v990, 5
    %v993 = vor.u32 %v989, %v992
    %v994 = vrot.slane %v993, 4
    %v996 = vshll.u32 %v858, 16
    %v998 = vrot.slane %v996, 5
    %v999 = vsel %vm873, %v994, %v998
    %v1001 = vshrl.u32 %v859, 16
    %v1003 = vrot.slane %v1001, 4
    %v1004 = vshll.u32 %v859, 16
    %v1006 = vrot.slane %v1004, 5
    %v1007 = vor.u32 %v1003, %v1006
    %v1008 = vrot.slane %v1007, 4
    %v1010 = vshll.u32 %v860, 16
    %v1012 = vrot.slane %v1010, 5
    %v1013 = vsel %vm873, %v1008, %v1012
    %v1015 = vshrl.u32 %v861, 16
    %v1017 = vrot.slane %v1015, 4
    %v1018 = vshll.u32 %v861, 16
    %v1020 = vrot.slane %v1018, 5
    %v1021 = vor.u32 %v1017, %v1020
    %v1022 = vrot.slane %v1021, 4
    %v1024 = vshll.u32 %v862, 16
    %v1026 = vrot.slane %v1024, 5
    %v1027 = vsel %vm873, %v1022, %v1026
    %v1029 = vshrl.u32 %v863, 16
    %v1031 = vrot.slane %v1029, 4
    %v1032 = vshll.u32 %v863, 16
    %v1034 = vrot.slane %v1032, 5
    %v1035 = vor.u32 %v1031, %v1034
    %v1036 = vrot.slane %v1035, 4
    %v1038 = vshll.u32 %v864, 16
    %v1040 = vrot.slane %v1038, 5
    %v1041 = vsel %vm873, %v1036, %v1040
    %v1043 = vshrl.u32 %v865, 16
    %v1045 = vrot.slane %v1043, 4
    %v1046 = vshll.u32 %v865, 16
    %v1048 = vrot.slane %v1046, 5
    %v1049 = vor.u32 %v1045, %v1048
    %v1050 = vrot.slane %v1049, 4
    %v1052 = vshll.u32 %v866, 16
    %v1054 = vrot.slane %v1052, 5
    %v1055 = vsel %vm873, %v1050, %v1054
    %v1057 = vshrl.u32 %v867, 16
    %v1059 = vrot.slane %v1057, 4
    %v1060 = vshll.u32 %v867, 16
    %v1062 = vrot.slane %v1060, 5
    %v1063 = vor.u32 %v1059, %v1062
    %v1064 = vrot.slane %v1063, 4
    %v1066 = vshll.u32 %v868, 16
    %v1068 = vrot.slane %v1066, 5
    %v1069 = vsel %vm873, %v1064, %v1068
    %v1071 = vshrl.u32 %v869, 16
    %v1073 = vrot.slane %v1071, 4
    %v1074 = vshll.u32 %v869, 16
    %v1076 = vrot.slane %v1074, 5
    %v1077 = vor.u32 %v1073, %v1076
    %v1078 = vrot.slane %v1077, 4
    %v1080 = vshll.u32 %v870, 16
    %v1082 = vrot.slane %v1080, 5
    %v1083 = vsel %vm873, %v1078, %v1082
    %vm1084 = vcmask 1042432
    %vm1085 = vcmask 1046532
    %vm1086 = vmor %vm1084, %vm1085
    %v1087 = vrot.slane %v841, 5
    %v1088 = vrot.slane %v1087, 4
    %v1089 = vrot.slane %v842, 5
    %v1090 = vsel %vm1086, %v1088, %v1089
    %v1091 = vrot.slane %v843, 5
    %v1092 = vrot.slane %v1091, 4
    %v1093 = vrot.slane %v844, 5
    %v1094 = vsel %vm1086, %v1092, %v1093
    %v1095 = vrot.slane %v845, 5
    %v1096 = vrot.slane %v1095, 4
    %v1097 = vrot.slane %v846, 5
    %v1098 = vsel %vm1086, %v1096, %v1097
    %v1099 = vrot.slane %v847, 5
    %v1100 = vrot.slane %v1099, 4
    %v1101 = vrot.slane %v848, 5
    %v1102 = vsel %vm1086, %v1100, %v1101
    %v1103 = vrot.slane %v849, 5
    %v1104 = vrot.slane %v1103, 4
    %v1105 = vrot.slane %v850, 5
    %v1106 = vsel %vm1086, %v1104, %v1105
    %v1107 = vrot.slane %v851, 5
    %v1108 = vrot.slane %v1107, 4
    %v1109 = vrot.slane %v852, 5
    %v1110 = vsel %vm1086, %v1108, %v1109
    %v1111 = vrot.slane %v853, 5
    %v1112 = vrot.slane %v1111, 4
    %v1113 = vrot.slane %v854, 5
    %v1114 = vsel %vm1086, %v1112, %v1113
    %v1115 = vrot.slane %v855, 5
    %v1116 = vrot.slane %v1115, 4
    %v1117 = vrot.slane %v856, 5
    %v1118 = vsel %vm1086, %v1116, %v1117
    %v1119 = vrot.slane %v857, 5
    %v1120 = vrot.slane %v1119, 4
    %v1121 = vrot.slane %v858, 5
    %v1122 = vsel %vm1086, %v1120, %v1121
    %v1123 = vrot.slane %v859, 5
    %v1124 = vrot.slane %v1123, 4
    %v1125 = vrot.slane %v860, 5
    %v1126 = vsel %vm1086, %v1124, %v1125
    %v1127 = vrot.slane %v861, 5
    %v1128 = vrot.slane %v1127, 4
    %v1129 = vrot.slane %v862, 5
    %v1130 = vsel %vm1086, %v1128, %v1129
    %v1131 = vrot.slane %v863, 5
    %v1132 = vrot.slane %v1131, 4
    %v1133 = vrot.slane %v864, 5
    %v1134 = vsel %vm1086, %v1132, %v1133
    %v1135 = vrot.slane %v865, 5
    %v1136 = vrot.slane %v1135, 4
    %v1137 = vrot.slane %v866, 5
    %v1138 = vsel %vm1086, %v1136, %v1137
    %v1139 = vrot.slane %v867, 5
    %v1140 = vrot.slane %v1139, 4
    %v1141 = vrot.slane %v868, 5
    %v1142 = vsel %vm1086, %v1140, %v1141
    %v1143 = vrot.slane %v869, 5
    %v1144 = vrot.slane %v1143, 4
    %v1145 = vrot.slane %v870, 5
    %v1146 = vsel %vm1086, %v1144, %v1145
    %v1149 = vunpack.c.l.b16 %v787
    %v1150 = vunpack.c.h.b16 %v787
    %v1151 = vunpack.c.l.b16 %v795
    %v1152 = vunpack.c.h.b16 %v795
    %v1153 = vpack.c.b16 %v1149, %v1149
    %v1154 = vpack.c.b16 %v1150, %v1150
    %v1155 = vpack.c.b16 %v1151, %v1151
    %v1156 = vpack.c.b16 %v1152, %v1152
    %v1158 = vshrl.u32 %v1153, 16
    %v1160 = vrot.slane %v1158, 4
    %v1161 = vshll.u32 %v1153, 16
    %v1163 = vrot.slane %v1161, 5
    %v1164 = vor.u32 %v1160, %v1163
    %v1165 = vrot.slane %v1164, 4
    %v1167 = vshll.u32 %v1154, 16
    %v1169 = vrot.slane %v1167, 5
    %v1170 = vsel %vm873, %v1165, %v1169
    %v1172 = vshrl.u32 %v1155, 16
    %v1174 = vrot.slane %v1172, 4
    %v1175 = vshll.u32 %v1155, 16
    %v1177 = vrot.slane %v1175, 5
    %v1178 = vor.u32 %v1174, %v1177
    %v1179 = vrot.slane %v1178, 4
    %v1181 = vshll.u32 %v1156, 16
    %v1183 = vrot.slane %v1181, 5
    %v1184 = vsel %vm873, %v1179, %v1183
    %v1185 = vrot.slane %v1153, 5
    %v1186 = vrot.slane %v1185, 4
    %v1187 = vrot.slane %v1154, 5
    %v1188 = vsel %vm1086, %v1186, %v1187
    %v1189 = vrot.slane %v1155, 5
    %v1190 = vrot.slane %v1189, 4
    %v1191 = vrot.slane %v1156, 5
    %v1192 = vsel %vm1086, %v1190, %v1191
    %v1193 = vpack.c.b16 %v813, %v811
    %v1194 = vpack.c.b16 %v817, %v815
    %v1195 = vpack.c.b16 %v821, %v819
    %v1196 = vpack.c.b16 %v825, %v823
    %v1197 = vpack.c.b16 %v827, %v811
    %v1198 = vpack.c.b16 %v831, %v829
    %v1199 = vpack.c.b16 %v835, %v833
    %v1200 = vpack.c.b16 %v839, %v837
    %v1209 = vunpack.c.l.b16 %v887
    %v1210 = vunpack.c.l.b16 %v901
    %v1211 = vunpack.c.l.b16 %v915
    %v1212 = vunpack.c.l.b16 %v929
    %v1213 = vunpack.c.l.b16 %v943
    %v1214 = vunpack.c.l.b16 %v957
    %v1215 = vunpack.c.l.b16 %v971
    %v1216 = vunpack.c.l.b16 %v985
    %v1217 = vunpack.c.l.b16 %v999
    %v1218 = vunpack.c.l.b16 %v1013
    %v1219 = vunpack.c.l.b16 %v1027
    %v1220 = vunpack.c.l.b16 %v1041
    %v1221 = vunpack.c.l.b16 %v1055
    %v1222 = vunpack.c.l.b16 %v1069
    %v1223 = vunpack.c.l.b16 %v1083
    %v1224 = vpack.c.b16 %v1210, %v1209
    %v1225 = vpack.c.b16 %v1212, %v1211
    %v1226 = vpack.c.b16 %v1214, %v1213
    %v1227 = vpack.c.b16 %v1216, %v1215
    %v1228 = vpack.c.b16 %v1217, %v1209
    %v1229 = vpack.c.b16 %v1219, %v1218
    %v1230 = vpack.c.b16 %v1221, %v1220
    %v1231 = vpack.c.b16 %v1223, %v1222
    %v1240 = vunpack.c.l.b16 %v1090
    %v1241 = vunpack.c.l.b16 %v1094
    %v1242 = vunpack.c.l.b16 %v1098
    %v1243 = vunpack.c.l.b16 %v1102
    %v1244 = vunpack.c.l.b16 %v1106
    %v1245 = vunpack.c.l.b16 %v1110
    %v1246 = vunpack.c.l.b16 %v1114
    %v1247 = vunpack.c.l.b16 %v1118
    %v1248 = vunpack.c.l.b16 %v1122
    %v1249 = vunpack.c.l.b16 %v1126
    %v1250 = vunpack.c.l.b16 %v1130
    %v1251 = vunpack.c.l.b16 %v1134
    %v1252 = vunpack.c.l.b16 %v1138
    %v1253 = vunpack.c.l.b16 %v1142
    %v1254 = vunpack.c.l.b16 %v1146
    %v1255 = vpack.c.b16 %v1241, %v1240
    %v1256 = vpack.c.b16 %v1243, %v1242
    %v1257 = vpack.c.b16 %v1245, %v1244
    %v1258 = vpack.c.b16 %v1247, %v1246
    %v1259 = vpack.c.b16 %v1248, %v1240
    %v1260 = vpack.c.b16 %v1250, %v1249
    %v1261 = vpack.c.b16 %v1252, %v1251
    %v1262 = vpack.c.b16 %v1254, %v1253
    %v1271 = vpack.c.b16 %v815, %v813
    %v1272 = vpack.c.b16 %v819, %v817
    %v1273 = vpack.c.b16 %v823, %v821
    %v1274 = vpack.c.b16 %v1149, %v825
    %v1275 = vpack.c.b16 %v829, %v827
    %v1276 = vpack.c.b16 %v833, %v831
    %v1277 = vpack.c.b16 %v837, %v835
    %v1278 = vpack.c.b16 %v1151, %v839
    %v1287 = vunpack.c.l.b16 %v1170
    %v1288 = vunpack.c.l.b16 %v1184
    %v1289 = vpack.c.b16 %v1211, %v1210
    %v1290 = vpack.c.b16 %v1213, %v1212
    %v1291 = vpack.c.b16 %v1215, %v1214
    %v1292 = vpack.c.b16 %v1287, %v1216
    %v1293 = vpack.c.b16 %v1218, %v1217
    %v1294 = vpack.c.b16 %v1220, %v1219
    %v1295 = vpack.c.b16 %v1222, %v1221
    %v1296 = vpack.c.b16 %v1288, %v1223
    %v1305 = vunpack.c.l.b16 %v1188
    %v1306 = vunpack.c.l.b16 %v1192
    %v1307 = vpack.c.b16 %v1242, %v1241
    %v1308 = vpack.c.b16 %v1244, %v1243
    %v1309 = vpack.c.b16 %v1246, %v1245
    %v1310 = vpack.c.b16 %v1305, %v1247
    %v1311 = vpack.c.b16 %v1249, %v1248
    %v1312 = vpack.c.b16 %v1251, %v1250
    %v1313 = vpack.c.b16 %v1253, %v1252
    %v1314 = vpack.c.b16 %v1306, %v1254
    %v1323 = vpack.c.b16 %v811, %v1149
    %v1324 = vpack.c.b16 %v811, %v1151
    %v1327 = vpack.c.b16 %v1209, %v1287
    %v1328 = vpack.c.b16 %v1209, %v1288
    %v1331 = vpack.c.b16 %v1240, %v1305
    %v1332 = vpack.c.b16 %v1240, %v1306
    %v1335 = vld [vmem:[%s4] sm:$0xf]
    %v1336 = vld [vmem:[%s4 + $0x4] sm:$0xf]
    %v1337 = vld [vmem:[%s4 + $0x8] sm:$0xf]
    %v1338 = vld [vmem:[%s4 + $0xc] sm:$0xf]
    %v1339 = vld [vmem:[%s4 + $0x10] sm:$0xf]
    %v1340 = vld [vmem:[%s4 + $0x14] sm:$0xf]
    %v1341 = vld [vmem:[%s4 + $0x18] sm:$0xf]
    %v1342 = vld [vmem:[%s4 + $0x1c] sm:$0xf]
    %v1343 = vld [vmem:[%s4 + $0x20] sm:$0xf]
    %v1344 = vld [vmem:[%s4 + $0x24] sm:$0xf]
    %v1345 = vld [vmem:[%s4 + $0x28] sm:$0xf]
    %v1346 = vld [vmem:[%s4 + $0x2c] sm:$0xf]
    %v1347 = vld [vmem:[%s4 + $0x30] sm:$0xf]
    %v1348 = vld [vmem:[%s4 + $0x34] sm:$0xf]
    %v1349 = vld [vmem:[%s4 + $0x38] sm:$0xf]
    %v1350 = vld [vmem:[%s4 + $0x3c] sm:$0xf]
    %v1351 = vld [vmem:[%s4 + $0x40] sm:$0xf]
    %v1352 = vld [vmem:[%s4 + $0x44] sm:$0xf]
    %v1353 = vld [vmem:[%s4 + $0x48] sm:$0xf]
    %v1354 = vld [vmem:[%s4 + $0x4c] sm:$0xf]
    %v1355 = vld [vmem:[%s4 + $0x50] sm:$0xf]
    %v1356 = vld [vmem:[%s4 + $0x54] sm:$0xf]
    %v1357 = vld [vmem:[%s4 + $0x58] sm:$0xf]
    %v1358 = vld [vmem:[%s4 + $0x5c] sm:$0xf]
    %v1359 = vld [vmem:[%s4 + $0x60] sm:$0xf]
    %v1360 = vld [vmem:[%s4 + $0x64] sm:$0xf]
    %v1361 = vld [vmem:[%s4 + $0x68] sm:$0xf]
    %v1362 = vld [vmem:[%s4 + $0x6c] sm:$0xf]
    %v1363 = vld [vmem:[%s4 + $0x70] sm:$0xf]
    %v1364 = vld [vmem:[%s4 + $0x74] sm:$0xf]
    %v1365 = vld [vmem:[%s4 + $0x78] sm:$0xf]
    %v1366 = vld [vmem:[%s4 + $0x7c] sm:$0xf]
    %v1367 = vld [vmem:[%s4 + $0x80] sm:$0xf]
    %v1368 = vld [vmem:[%s4 + $0x84] sm:$0xf]
    %v1369 = vld [vmem:[%s4 + $0x88] sm:$0xf]
    %v1370 = vld [vmem:[%s4 + $0x8c] sm:$0xf]
    %v1371 = vld [vmem:[%s4 + $0x90] sm:$0xf]
    %v1372 = vld [vmem:[%s4 + $0x94] sm:$0xf]
    %v1373 = vld [vmem:[%s4 + $0x98] sm:$0xf]
    %v1374 = vld [vmem:[%s4 + $0x9c] sm:$0xf]
    %v1375 = vld [vmem:[%s4 + $0xa0] sm:$0xf]
    %v1376 = vld [vmem:[%s4 + $0xa4] sm:$0xf]
    %v1377 = vld [vmem:[%s4 + $0xa8] sm:$0xf]
    %v1378 = vld [vmem:[%s4 + $0xac] sm:$0xf]
    %v1379 = vld [vmem:[%s4 + $0xb0] sm:$0xf]
    %v1380 = vld [vmem:[%s4 + $0xb4] sm:$0xf]
    %v1381 = vld [vmem:[%s4 + $0xb8] sm:$0xf]
    %v1382 = vld [vmem:[%s4 + $0xbc] sm:$0xf]
    %v1383 = vld [vmem:[%s4 + $0xc0] sm:$0xf]
    %v1384 = vld [vmem:[%s4 + $0xc4] sm:$0xf]
    %v1385 = vld [vmem:[%s4 + $0xc8] sm:$0xf]
    %v1386 = vld [vmem:[%s4 + $0xcc] sm:$0xf]
    %v1387 = vld [vmem:[%s4 + $0xd0] sm:$0xf]
    %v1388 = vld [vmem:[%s4 + $0xd4] sm:$0xf]
    %v1389 = vld [vmem:[%s4 + $0xd8] sm:$0xf]
    %v1390 = vld [vmem:[%s4 + $0xdc] sm:$0xf]
    %v1391 = vld [vmem:[%s4 + $0xe0] sm:$0xf]
    %v1392 = vld [vmem:[%s4 + $0xe4] sm:$0xf]
    %v1393 = vld [vmem:[%s4 + $0xe8] sm:$0xf]
    %v1394 = vld [vmem:[%s4 + $0xec] sm:$0xf]
    %v1395 = vld [vmem:[%s4 + $0xf0] sm:$0xf]
    %v1396 = vld [vmem:[%s4 + $0xf4] sm:$0xf]
    %v1397 = vld [vmem:[%s4 + $0xf8] sm:$0xf]
    %v1398 = vld [vmem:[%s4 + $0xfc] sm:$0xf]
    %v1399 = vld [vmem:[%s4 + $0x100] sm:$0xf]
    %v1400 = vld [vmem:[%s4 + $0x104] sm:$0xf]
    %v1401 = vld [vmem:[%s4 + $0x108] sm:$0xf]
    %v1402 = vld [vmem:[%s4 + $0x10c] sm:$0xf]
    %v1403 = vld [vmem:[%s4 + $0x110] sm:$0xf]
    %v1404 = vld [vmem:[%s4 + $0x114] sm:$0xf]
    %v1405 = vld [vmem:[%s4 + $0x118] sm:$0xf]
    %v1406 = vld [vmem:[%s4 + $0x11c] sm:$0xf]
    %v1407 = vld [vmem:[%s4 + $0x120] sm:$0xf]
    %v1408 = vld [vmem:[%s4 + $0x124] sm:$0xf]
    %v1409 = vld [vmem:[%s4 + $0x128] sm:$0xf]
    %v1410 = vld [vmem:[%s4 + $0x12c] sm:$0xf]
    %v1411 = vld [vmem:[%s4 + $0x130] sm:$0xf]
    %v1412 = vld [vmem:[%s4 + $0x134] sm:$0xf]
    %v1413 = vld [vmem:[%s4 + $0x138] sm:$0xf]
    %v1414 = vld [vmem:[%s4 + $0x13c] sm:$0xf]
    %v1415 = vld [vmem:[%s4 + $0x140] sm:$0xf]
    %v1416 = vld [vmem:[%s4 + $0x144] sm:$0xf]
    %v1417 = vld [vmem:[%s4 + $0x148] sm:$0xf]
    %v1418 = vld [vmem:[%s4 + $0x14c] sm:$0xf]
    %v1419 = vld [vmem:[%s4 + $0x150] sm:$0xf]
    %v1420 = vld [vmem:[%s4 + $0x154] sm:$0xf]
    %v1421 = vld [vmem:[%s4 + $0x158] sm:$0xf]
    %v1422 = vld [vmem:[%s4 + $0x15c] sm:$0xf]
    %v1423 = vld [vmem:[%s4 + $0x160] sm:$0xf]
    %v1424 = vld [vmem:[%s4 + $0x164] sm:$0xf]
    %v1425 = vld [vmem:[%s4 + $0x168] sm:$0xf]
    %v1426 = vld [vmem:[%s4 + $0x16c] sm:$0xf]
    %v1427 = vld [vmem:[%s4 + $0x170] sm:$0xf]
    %v1428 = vld [vmem:[%s4 + $0x174] sm:$0xf]
    %v1429 = vld [vmem:[%s4 + $0x178] sm:$0xf]
    %v1430 = vld [vmem:[%s4 + $0x17c] sm:$0xf]
    %v1431 = vld [vmem:[%s4 + $0x180] sm:$0xf]
    %v1432 = vld [vmem:[%s4 + $0x184] sm:$0xf]
    %v1433 = vld [vmem:[%s4 + $0x188] sm:$0xf]
    %v1434 = vld [vmem:[%s4 + $0x18c] sm:$0xf]
    %v1435 = vld [vmem:[%s4 + $0x190] sm:$0xf]
    %v1436 = vld [vmem:[%s4 + $0x194] sm:$0xf]
    %v1437 = vld [vmem:[%s4 + $0x198] sm:$0xf]
    %v1438 = vld [vmem:[%s4 + $0x19c] sm:$0xf]
    %v1439 = vld [vmem:[%s4 + $0x1a0] sm:$0xf]
    %v1440 = vld [vmem:[%s4 + $0x1a4] sm:$0xf]
    %v1441 = vld [vmem:[%s4 + $0x1a8] sm:$0xf]
    %v1442 = vld [vmem:[%s4 + $0x1ac] sm:$0xf]
    %v1443 = vld [vmem:[%s4 + $0x1b0] sm:$0xf]
    %v1444 = vld [vmem:[%s4 + $0x1b4] sm:$0xf]
    %v1445 = vld [vmem:[%s4 + $0x1b8] sm:$0xf]
    %v1446 = vld [vmem:[%s4 + $0x1bc] sm:$0xf]
    %v1447 = vld [vmem:[%s4 + $0x1c0] sm:$0xf]
    %v1448 = vld [vmem:[%s4 + $0x1c4] sm:$0xf]
    %v1449 = vld [vmem:[%s4 + $0x1c8] sm:$0xf]
    %v1450 = vld [vmem:[%s4 + $0x1cc] sm:$0xf]
    %v1451 = vld [vmem:[%s4 + $0x1d0] sm:$0xf]
    %v1452 = vld [vmem:[%s4 + $0x1d4] sm:$0xf]
    %v1453 = vld [vmem:[%s4 + $0x1d8] sm:$0xf]
    %v1454 = vld [vmem:[%s4 + $0x1dc] sm:$0xf]
    %v1455 = vld [vmem:[%s4 + $0x1e0] sm:$0xf]
    %v1456 = vld [vmem:[%s4 + $0x1e4] sm:$0xf]
    %v1457 = vld [vmem:[%s4 + $0x1e8] sm:$0xf]
    %v1458 = vld [vmem:[%s4 + $0x1ec] sm:$0xf]
    %v1459 = vld [vmem:[%s4 + $0x1f0] sm:$0xf]
    %v1460 = vld [vmem:[%s4 + $0x1f4] sm:$0xf]
    %v1461 = vld [vmem:[%s4 + $0x1f8] sm:$0xf]
    %v1462 = vld [vmem:[%s4 + $0x1fc] sm:$0xf]
    %v1463 = vld [vmem:[%s4 + $0x200] sm:$0xf]
    %v1464 = vld [vmem:[%s4 + $0x204] sm:$0xf]
    %v1465 = vld [vmem:[%s4 + $0x208] sm:$0xf]
    %v1466 = vld [vmem:[%s4 + $0x20c] sm:$0xf]
    %v1467 = vld [vmem:[%s4 + $0x210] sm:$0xf]
    %v1468 = vld [vmem:[%s4 + $0x214] sm:$0xf]
    %v1469 = vld [vmem:[%s4 + $0x218] sm:$0xf]
    %v1470 = vld [vmem:[%s4 + $0x21c] sm:$0xf]
    %v1471 = vld [vmem:[%s4 + $0x220] sm:$0xf]
    %v1472 = vld [vmem:[%s4 + $0x224] sm:$0xf]
    %v1473 = vld [vmem:[%s4 + $0x228] sm:$0xf]
    %v1474 = vld [vmem:[%s4 + $0x22c] sm:$0xf]
    %v1475 = vld [vmem:[%s4 + $0x230] sm:$0xf]
    %v1476 = vld [vmem:[%s4 + $0x234] sm:$0xf]
    %v1477 = vld [vmem:[%s4 + $0x238] sm:$0xf]
    %v1478 = vld [vmem:[%s4 + $0x23c] sm:$0xf]
    %v1479 = vld [vmem:[%s5] sm:$0x1]
    %v1481 = vlaneseq
    %v1482 = vshrl.u32 %v1481, 7
    %v1483 = vsub.s32 0, %v1482
    %v1484 = vrot.slane %v1479, %v1483
    %v1630 = vunpack.c.l.b16 %v1335
    %v1631 = vunpack.c.l.b16 %v1336
    %v1632 = vunpack.c.l.b16 %v1337
    %v1633 = vunpack.c.l.b16 %v1338
    %v1634 = vunpack.c.l.b16 %v1339
    %v1635 = vunpack.c.l.b16 %v1340
    %v1636 = vunpack.c.l.b16 %v1341
    %v1637 = vunpack.c.l.b16 %v1342
    %v1638 = vunpack.c.l.b16 %v1343
    %v1639 = vunpack.c.l.b16 %v1344
    %v1640 = vunpack.c.l.b16 %v1345
    %v1641 = vunpack.c.l.b16 %v1346
    %v1642 = vunpack.c.l.b16 %v1347
    %v1643 = vunpack.c.l.b16 %v1348
    %v1644 = vunpack.c.l.b16 %v1349
    %v1645 = vunpack.c.l.b16 %v1350
    %v1646 = vunpack.c.l.b16 %v1351
    %v1647 = vunpack.c.l.b16 %v1352
    %v1648 = vunpack.c.l.b16 %v1353
    %v1649 = vunpack.c.l.b16 %v1354
    %v1650 = vunpack.c.l.b16 %v1355
    %v1651 = vunpack.c.l.b16 %v1356
    %v1652 = vunpack.c.l.b16 %v1357
    %v1653 = vunpack.c.l.b16 %v1358
    %v1654 = vunpack.c.l.b16 %v1359
    %v1655 = vunpack.c.l.b16 %v1360
    %v1656 = vunpack.c.l.b16 %v1361
    %v1657 = vunpack.c.l.b16 %v1362
    %v1658 = vunpack.c.l.b16 %v1363
    %v1659 = vunpack.c.l.b16 %v1364
    %v1660 = vunpack.c.l.b16 %v1365
    %v1661 = vunpack.c.l.b16 %v1366
    %v1662 = vunpack.c.l.b16 %v1367
    %v1663 = vunpack.c.l.b16 %v1368
    %v1664 = vunpack.c.l.b16 %v1369
    %v1665 = vunpack.c.l.b16 %v1370
    %v1666 = vunpack.c.l.b16 %v1371
    %v1667 = vunpack.c.l.b16 %v1372
    %v1668 = vunpack.c.l.b16 %v1373
    %v1669 = vunpack.c.l.b16 %v1374
    %v1670 = vunpack.c.l.b16 %v1375
    %v1671 = vunpack.c.l.b16 %v1376
    %v1672 = vunpack.c.l.b16 %v1377
    %v1673 = vunpack.c.l.b16 %v1378
    %v1674 = vunpack.c.l.b16 %v1379
    %v1675 = vunpack.c.l.b16 %v1380
    %v1676 = vunpack.c.l.b16 %v1381
    %v1677 = vunpack.c.l.b16 %v1382
    %v1678 = vunpack.c.l.b16 %v1383
    %v1679 = vunpack.c.l.b16 %v1384
    %v1680 = vunpack.c.l.b16 %v1385
    %v1681 = vunpack.c.l.b16 %v1386
    %v1682 = vunpack.c.l.b16 %v1387
    %v1683 = vunpack.c.l.b16 %v1388
    %v1684 = vunpack.c.l.b16 %v1389
    %v1685 = vunpack.c.l.b16 %v1390
    %v1686 = vunpack.c.l.b16 %v1391
    %v1687 = vunpack.c.l.b16 %v1392
    %v1688 = vunpack.c.l.b16 %v1393
    %v1689 = vunpack.c.l.b16 %v1394
    %v1690 = vunpack.c.l.b16 %v1395
    %v1691 = vunpack.c.l.b16 %v1396
    %v1692 = vunpack.c.l.b16 %v1397
    %v1693 = vunpack.c.l.b16 %v1398
    %v1694 = vunpack.c.l.b16 %v1399
    %v1695 = vunpack.c.l.b16 %v1400
    %v1696 = vunpack.c.l.b16 %v1401
    %v1697 = vunpack.c.l.b16 %v1402
    %v1698 = vunpack.c.l.b16 %v1403
    %v1699 = vunpack.c.l.b16 %v1404
    %v1700 = vunpack.c.l.b16 %v1405
    %v1701 = vunpack.c.l.b16 %v1406
    %v1702 = vunpack.c.l.b16 %v1407
    %v1703 = vunpack.c.l.b16 %v1408
    %v1704 = vunpack.c.l.b16 %v1409
    %v1705 = vunpack.c.l.b16 %v1410
    %v1706 = vunpack.c.l.b16 %v1411
    %v1707 = vunpack.c.l.b16 %v1412
    %v1708 = vunpack.c.l.b16 %v1413
    %v1709 = vunpack.c.l.b16 %v1414
    %v1710 = vunpack.c.l.b16 %v1415
    %v1711 = vunpack.c.l.b16 %v1416
    %v1712 = vunpack.c.l.b16 %v1417
    %v1713 = vunpack.c.l.b16 %v1418
    %v1714 = vunpack.c.l.b16 %v1419
    %v1715 = vunpack.c.l.b16 %v1420
    %v1716 = vunpack.c.l.b16 %v1421
    %v1717 = vunpack.c.l.b16 %v1422
    %v1718 = vunpack.c.l.b16 %v1423
    %v1719 = vunpack.c.l.b16 %v1424
    %v1720 = vunpack.c.l.b16 %v1425
    %v1721 = vunpack.c.l.b16 %v1426
    %v1722 = vunpack.c.l.b16 %v1427
    %v1723 = vunpack.c.l.b16 %v1428
    %v1724 = vunpack.c.l.b16 %v1429
    %v1725 = vunpack.c.l.b16 %v1430
    %v1726 = vunpack.c.l.b16 %v1431
    %v1727 = vunpack.c.l.b16 %v1432
    %v1728 = vunpack.c.l.b16 %v1433
    %v1729 = vunpack.c.l.b16 %v1434
    %v1730 = vunpack.c.l.b16 %v1435
    %v1731 = vunpack.c.l.b16 %v1436
    %v1732 = vunpack.c.l.b16 %v1437
    %v1733 = vunpack.c.l.b16 %v1438
    %v1734 = vunpack.c.l.b16 %v1439
    %v1735 = vunpack.c.l.b16 %v1440
    %v1736 = vunpack.c.l.b16 %v1441
    %v1737 = vunpack.c.l.b16 %v1442
    %v1738 = vunpack.c.l.b16 %v1443
    %v1739 = vunpack.c.l.b16 %v1444
    %v1740 = vunpack.c.l.b16 %v1445
    %v1741 = vunpack.c.l.b16 %v1446
    %v1742 = vunpack.c.l.b16 %v1447
    %v1743 = vunpack.c.l.b16 %v1448
    %v1744 = vunpack.c.l.b16 %v1449
    %v1745 = vunpack.c.l.b16 %v1450
    %v1746 = vunpack.c.l.b16 %v1451
    %v1747 = vunpack.c.l.b16 %v1452
    %v1748 = vunpack.c.l.b16 %v1453
    %v1749 = vunpack.c.l.b16 %v1454
    %v1750 = vunpack.c.l.b16 %v1455
    %v1751 = vunpack.c.l.b16 %v1456
    %v1752 = vunpack.c.l.b16 %v1457
    %v1753 = vunpack.c.l.b16 %v1458
    %v1754 = vunpack.c.l.b16 %v1459
    %v1755 = vunpack.c.l.b16 %v1460
    %v1756 = vunpack.c.l.b16 %v1461
    %v1757 = vunpack.c.l.b16 %v1462
    %v1758 = vunpack.c.l.b16 %v1463
    %v1759 = vunpack.c.l.b16 %v1464
    %v1760 = vunpack.c.l.b16 %v1465
    %v1761 = vunpack.c.l.b16 %v1466
    %v1762 = vunpack.c.l.b16 %v1467
    %v1763 = vunpack.c.l.b16 %v1468
    %v1764 = vunpack.c.l.b16 %v1469
    %v1765 = vunpack.c.l.b16 %v1470
    %v1766 = vunpack.c.l.b16 %v1471
    %v1767 = vunpack.c.l.b16 %v1472
    %v1768 = vunpack.c.l.b16 %v1473
    %v1769 = vunpack.c.l.b16 %v1474
    %v1770 = vunpack.c.l.b16 %v1475
    %v1771 = vunpack.c.l.b16 %v1476
    %v1772 = vunpack.c.l.b16 %v1477
    %v1773 = vunpack.c.l.b16 %v1478
    %v1774 = vpack.c.b16 %v1631, %v1630
    %v1775 = vpack.c.b16 %v1633, %v1632
    %v1776 = vpack.c.b16 %v1635, %v1634
    %v1777 = vpack.c.b16 %v1637, %v1636
    %v1778 = vpack.c.b16 %v1639, %v1638
    %v1779 = vpack.c.b16 %v1641, %v1640
    %v1780 = vpack.c.b16 %v1643, %v1642
    %v1781 = vpack.c.b16 %v1645, %v1644
    %v1782 = vpack.c.b16 %v1647, %v1646
    %v1783 = vpack.c.b16 %v1649, %v1648
    %v1784 = vpack.c.b16 %v1651, %v1650
    %v1785 = vpack.c.b16 %v1653, %v1652
    %v1786 = vpack.c.b16 %v1655, %v1654
    %v1787 = vpack.c.b16 %v1657, %v1656
    %v1788 = vpack.c.b16 %v1659, %v1658
    %v1789 = vpack.c.b16 %v1661, %v1660
    %v1790 = vpack.c.b16 %v1663, %v1662
    %v1791 = vpack.c.b16 %v1665, %v1664
    %v1792 = vpack.c.b16 %v1667, %v1666
    %v1793 = vpack.c.b16 %v1669, %v1668
    %v1794 = vpack.c.b16 %v1671, %v1670
    %v1795 = vpack.c.b16 %v1673, %v1672
    %v1796 = vpack.c.b16 %v1675, %v1674
    %v1797 = vpack.c.b16 %v1677, %v1676
    %v1798 = vpack.c.b16 %v1679, %v1678
    %v1799 = vpack.c.b16 %v1681, %v1680
    %v1800 = vpack.c.b16 %v1683, %v1682
    %v1801 = vpack.c.b16 %v1685, %v1684
    %v1802 = vpack.c.b16 %v1687, %v1686
    %v1803 = vpack.c.b16 %v1689, %v1688
    %v1804 = vpack.c.b16 %v1691, %v1690
    %v1805 = vpack.c.b16 %v1693, %v1692
    %v1806 = vpack.c.b16 %v1695, %v1694
    %v1807 = vpack.c.b16 %v1697, %v1696
    %v1808 = vpack.c.b16 %v1699, %v1698
    %v1809 = vpack.c.b16 %v1701, %v1700
    %v1810 = vpack.c.b16 %v1703, %v1702
    %v1811 = vpack.c.b16 %v1705, %v1704
    %v1812 = vpack.c.b16 %v1707, %v1706
    %v1813 = vpack.c.b16 %v1709, %v1708
    %v1814 = vpack.c.b16 %v1711, %v1710
    %v1815 = vpack.c.b16 %v1713, %v1712
    %v1816 = vpack.c.b16 %v1715, %v1714
    %v1817 = vpack.c.b16 %v1717, %v1716
    %v1818 = vpack.c.b16 %v1719, %v1718
    %v1819 = vpack.c.b16 %v1721, %v1720
    %v1820 = vpack.c.b16 %v1723, %v1722
    %v1821 = vpack.c.b16 %v1725, %v1724
    %v1822 = vpack.c.b16 %v1727, %v1726
    %v1823 = vpack.c.b16 %v1729, %v1728
    %v1824 = vpack.c.b16 %v1731, %v1730
    %v1825 = vpack.c.b16 %v1733, %v1732
    %v1826 = vpack.c.b16 %v1735, %v1734
    %v1827 = vpack.c.b16 %v1737, %v1736
    %v1828 = vpack.c.b16 %v1739, %v1738
    %v1829 = vpack.c.b16 %v1741, %v1740
    %v1830 = vpack.c.b16 %v1743, %v1742
    %v1831 = vpack.c.b16 %v1745, %v1744
    %v1832 = vpack.c.b16 %v1747, %v1746
    %v1833 = vpack.c.b16 %v1749, %v1748
    %v1834 = vpack.c.b16 %v1751, %v1750
    %v1835 = vpack.c.b16 %v1753, %v1752
    %v1836 = vpack.c.b16 %v1755, %v1754
    %v1837 = vpack.c.b16 %v1757, %v1756
    %v1838 = vpack.c.b16 %v1759, %v1758
    %v1839 = vpack.c.b16 %v1761, %v1760
    %v1840 = vpack.c.b16 %v1763, %v1762
    %v1841 = vpack.c.b16 %v1765, %v1764
    %v1842 = vpack.c.b16 %v1767, %v1766
    %v1843 = vpack.c.b16 %v1769, %v1768
    %v1844 = vpack.c.b16 %v1771, %v1770
    %v1845 = vpack.c.b16 %v1773, %v1772
    %1918 = vmatprep.subr.bf16.mxu0 0
    %1919 = vmatpush1.bf16.msra.mxu0 %v1774
    %1920 = vmatprep.subr.bf16.mxu0 0
    %1921 = vmatpush1.bf16.msra.mxu0 %v1775
    %1922 = vmatprep.subr.bf16.mxu0 0
    %1923 = vmatpush1.bf16.msra.mxu0 %v1776
    %1924 = vmatprep.subr.bf16.mxu0 0
    %1925 = vmatpush1.bf16.msra.mxu0 %v1777
    %1926 = vmatprep.subr.bf16.mxu0 0
    %1927 = vmatpush1.bf16.msra.mxu0 %v1778
    %1928 = vmatprep.subr.bf16.mxu0 0
    %1929 = vmatpush1.bf16.msra.mxu0 %v1779
    %1930 = vmatprep.subr.bf16.mxu0 0
    %1931 = vmatpush1.bf16.msra.mxu0 %v1780
    %1932 = vmatprep.subr.bf16.mxu0 0
    %1933 = vmatpush1.bf16.msra.mxu0 %v1781
    %1934 = vmatprep.subr.bf16.mxu0 0
    %1935 = vmatpush1.bf16.msra.mxu0 %v1782
    %1936 = vmatprep.subr.bf16.mxu0 0
    %1937 = vmatpush1.bf16.msra.mxu0 %v1783
    %1938 = vmatprep.subr.bf16.mxu0 0
    %1939 = vmatpush1.bf16.msra.mxu0 %v1784
    %1940 = vmatprep.subr.bf16.mxu0 0
    %1941 = vmatpush1.bf16.msra.mxu0 %v1785
    %1942 = vmatprep.subr.bf16.mxu0 0
    %1943 = vmatpush1.bf16.msra.mxu0 %v1786
    %1944 = vmatprep.subr.bf16.mxu0 0
    %1945 = vmatpush1.bf16.msra.mxu0 %v1787
    %1946 = vmatprep.subr.bf16.mxu0 0
    %1947 = vmatpush1.bf16.msra.mxu0 %v1788
    %1948 = vmatprep.subr.bf16.mxu0 0
    %1949 = vmatpush1.bf16.msra.mxu0 %v1789
    %1950 = vmatprep.mubr.bf16.mxu0 %v1224
    %1951 = vmatmul.mubr.bf16.gmra.mrb[0].mxu0 %v1193
    %v1952 = vpop.f32.mrb[0].mxu0
    %v1953 = vadd.f32 %v1484, %v1952
    %v1954 = vpop.f32.mrb[0].mxu0
    %v1955 = vpop.f32.mrb[0].mxu0
    %v1956 = vadd.f32 %v1484, %v1955
    %v1957 = vpop.f32.mrb[0].mxu0
    %1958 = vmatprep.mubr.bf16.mxu0 %v1225
    %1959 = vmatmul.mubr.bf16.gmra.mrb[0].mxu0 %v1194
    %v1960 = vpop.f32.mrb[0].mxu0
    %v1961 = vadd.f32 %v1484, %v1960
    %v1962 = vpop.f32.mrb[0].mxu0
    %v1963 = vpop.f32.mrb[0].mxu0
    %v1964 = vadd.f32 %v1484, %v1963
    %v1965 = vpop.f32.mrb[0].mxu0
    %1966 = vmatprep.mubr.bf16.mxu0 %v1226
    %1967 = vmatmul.mubr.bf16.gmra.mrb[0].mxu0 %v1195
    %v1968 = vpop.f32.mrb[0].mxu0
    %v1969 = vadd.f32 %v1484, %v1968
    %v1970 = vpop.f32.mrb[0].mxu0
    %v1971 = vpop.f32.mrb[0].mxu0
    %v1972 = vadd.f32 %v1484, %v1971
    %v1973 = vpop.f32.mrb[0].mxu0
    %1974 = vmatprep.mubr.bf16.mxu0 %v1227
    %1975 = vmatmul.mubr.bf16.gmra.mrb[0].mxu0 %v1196
    %v1976 = vpop.f32.mrb[0].mxu0
    %v1977 = vadd.f32 %v1484, %v1976
    %v1978 = vpop.f32.mrb[0].mxu0
    %v1979 = vpop.f32.mrb[0].mxu0
    %v1980 = vadd.f32 %v1484, %v1979
    %v1981 = vpop.f32.mrb[0].mxu0
    %1982 = vmatprep.mubr.bf16.mxu0 %v1228
    %1983 = vmatmul.mubr.bf16.gmra.mrb[0].mxu0 %v1197
    %v1984 = vpop.f32.mrb[0].mxu0
    %v1985 = vadd.f32 %v1484, %v1984
    %v1986 = vpop.f32.mrb[0].mxu0
    %v1987 = vpop.f32.mrb[0].mxu0
    %v1988 = vadd.f32 %v1484, %v1987
    %v1989 = vpop.f32.mrb[0].mxu0
    %1990 = vmatprep.mubr.bf16.mxu0 %v1229
    %1991 = vmatmul.mubr.bf16.gmra.mrb[0].mxu0 %v1198
    %v1992 = vpop.f32.mrb[0].mxu0
    %v1993 = vadd.f32 %v1484, %v1992
    %v1994 = vpop.f32.mrb[0].mxu0
    %v1995 = vpop.f32.mrb[0].mxu0
    %v1996 = vadd.f32 %v1484, %v1995
    %v1997 = vpop.f32.mrb[0].mxu0
    %1998 = vmatprep.mubr.bf16.mxu0 %v1230
    %1999 = vmatmul.mubr.bf16.gmra.mrb[0].mxu0 %v1199
    %v2000 = vpop.f32.mrb[0].mxu0
    %v2001 = vadd.f32 %v1484, %v2000
    %v2002 = vpop.f32.mrb[0].mxu0
    %v2003 = vpop.f32.mrb[0].mxu0
    %v2004 = vadd.f32 %v1484, %v2003
    %v2005 = vpop.f32.mrb[0].mxu0
    %2006 = vmatprep.mubr.bf16.mxu0 %v1231
    %2007 = vmatmul.mubr.bf16.gmra.mrb[0].mxu0 %v1200
    %v2008 = vpop.f32.mrb[0].mxu0
    %v2009 = vadd.f32 %v1484, %v2008
    %v2010 = vpop.f32.mrb[0].mxu0
    %v2011 = vpop.f32.mrb[0].mxu0
    %v2012 = vadd.f32 %v1484, %v2011
    %v2013 = vpop.f32.mrb[0].mxu0
    %2014 = vdwg.mxu0
    %2015 = vmatprep.subr.bf16.mxu0 0
    %2016 = vmatpush1.bf16.msra.mxu0 %v1790
    %2017 = vmatprep.subr.bf16.mxu0 0
    %2018 = vmatpush1.bf16.msra.mxu0 %v1791
    %2019 = vmatprep.subr.bf16.mxu0 0
    %2020 = vmatpush1.bf16.msra.mxu0 %v1792
    %2021 = vmatprep.subr.bf16.mxu0 0
    %2022 = vmatpush1.bf16.msra.mxu0 %v1793
    %2023 = vmatprep.subr.bf16.mxu0 0
    %2024 = vmatpush1.bf16.msra.mxu0 %v1794
    %2025 = vmatprep.subr.bf16.mxu0 0
    %2026 = vmatpush1.bf16.msra.mxu0 %v1795
    %2027 = vmatprep.subr.bf16.mxu0 0
    %2028 = vmatpush1.bf16.msra.mxu0 %v1796
    %2029 = vmatprep.subr.bf16.mxu0 0
    %2030 = vmatpush1.bf16.msra.mxu0 %v1797
    %2031 = vmatprep.subr.bf16.mxu0 0
    %2032 = vmatpush1.bf16.msra.mxu0 %v1798
    %2033 = vmatprep.subr.bf16.mxu0 0
    %2034 = vmatpush1.bf16.msra.mxu0 %v1799
    %2035 = vmatprep.subr.bf16.mxu0 0
    %2036 = vmatpush1.bf16.msra.mxu0 %v1800
    %2037 = vmatprep.subr.bf16.mxu0 0
    %2038 = vmatpush1.bf16.msra.mxu0 %v1801
    %2039 = vmatprep.subr.bf16.mxu0 0
    %2040 = vmatpush1.bf16.msra.mxu0 %v1802
    %2041 = vmatprep.subr.bf16.mxu0 0
    %2042 = vmatpush1.bf16.msra.mxu0 %v1803
    %2043 = vmatprep.subr.bf16.mxu0 0
    %2044 = vmatpush1.bf16.msra.mxu0 %v1804
    %2045 = vmatprep.subr.bf16.mxu0 0
    %2046 = vmatpush1.bf16.msra.mxu0 %v1805
    %2047 = vmatprep.mubr.bf16.mxu0 %v1271
    %2048 = vmatmul.mubr.bf16.gmra.mrb[0].mxu0 %v1255
    %v2049 = vpop.f32.mrb[0].mxu0
    %v2050 = vadd.f32 %v1953, %v2049
    %v2051 = vpop.f32.mrb[0].mxu0
    %v2052 = vpop.f32.mrb[0].mxu0
    %v2053 = vadd.f32 %v1956, %v2052
    %v2054 = vpop.f32.mrb[0].mxu0
    %2055 = vmatprep.mubr.bf16.mxu0 %v1272
    %2056 = vmatmul.mubr.bf16.gmra.mrb[0].mxu0 %v1256
    %v2057 = vpop.f32.mrb[0].mxu0
    %v2058 = vadd.f32 %v1961, %v2057
    %v2059 = vpop.f32.mrb[0].mxu0
    %v2060 = vpop.f32.mrb[0].mxu0
    %v2061 = vadd.f32 %v1964, %v2060
    %v2062 = vpop.f32.mrb[0].mxu0
    %2063 = vmatprep.mubr.bf16.mxu0 %v1273
    %2064 = vmatmul.mubr.bf16.gmra.mrb[0].mxu0 %v1257
    %v2065 = vpop.f32.mrb[0].mxu0
    %v2066 = vadd.f32 %v1969, %v2065
    %v2067 = vpop.f32.mrb[0].mxu0
    %v2068 = vpop.f32.mrb[0].mxu0
    %v2069 = vadd.f32 %v1972, %v2068
    %v2070 = vpop.f32.mrb[0].mxu0
    %2071 = vmatprep.mubr.bf16.mxu0 %v1274
    %2072 = vmatmul.mubr.bf16.gmra.mrb[0].mxu0 %v1258
    %v2073 = vpop.f32.mrb[0].mxu0
    %v2074 = vadd.f32 %v1977, %v2073
    %v2075 = vpop.f32.mrb[0].mxu0
    %v2076 = vpop.f32.mrb[0].mxu0
    %v2077 = vadd.f32 %v1980, %v2076
    %v2078 = vpop.f32.mrb[0].mxu0
    %2079 = vmatprep.mubr.bf16.mxu0 %v1275
    %2080 = vmatmul.mubr.bf16.gmra.mrb[0].mxu0 %v1259
    %v2081 = vpop.f32.mrb[0].mxu0
    %v2082 = vadd.f32 %v1985, %v2081
    %v2083 = vpop.f32.mrb[0].mxu0
    %v2084 = vpop.f32.mrb[0].mxu0
    %v2085 = vadd.f32 %v1988, %v2084
    %v2086 = vpop.f32.mrb[0].mxu0
    %2087 = vmatprep.mubr.bf16.mxu0 %v1276
    %2088 = vmatmul.mubr.bf16.gmra.mrb[0].mxu0 %v1260
    %v2089 = vpop.f32.mrb[0].mxu0
    %v2090 = vadd.f32 %v1993, %v2089
    %v2091 = vpop.f32.mrb[0].mxu0
    %v2092 = vpop.f32.mrb[0].mxu0
    %v2093 = vadd.f32 %v1996, %v2092
    %v2094 = vpop.f32.mrb[0].mxu0
    %2095 = vmatprep.mubr.bf16.mxu0 %v1277
    %2096 = vmatmul.mubr.bf16.gmra.mrb[0].mxu0 %v1261
    %v2097 = vpop.f32.mrb[0].mxu0
    %v2098 = vadd.f32 %v2001, %v2097
    %v2099 = vpop.f32.mrb[0].mxu0
    %v2100 = vpop.f32.mrb[0].mxu0
    %v2101 = vadd.f32 %v2004, %v2100
    %v2102 = vpop.f32.mrb[0].mxu0
    %2103 = vmatprep.mubr.bf16.mxu0 %v1278
    %2104 = vmatmul.mubr.bf16.gmra.mrb[0].mxu0 %v1262
    %v2105 = vpop.f32.mrb[0].mxu0
    %v2106 = vadd.f32 %v2009, %v2105
    %v2107 = vpop.f32.mrb[0].mxu0
    %v2108 = vpop.f32.mrb[0].mxu0
    %v2109 = vadd.f32 %v2012, %v2108
    %v2110 = vpop.f32.mrb[0].mxu0
    %2111 = vdwg.mxu0
    %2112 = vmatprep.subr.bf16.mxu0 0
    %2113 = vmatpush1.bf16.msra.mxu0 %v1806
    %2114 = vmatprep.subr.bf16.mxu0 0
    %2115 = vmatpush1.bf16.msra.mxu0 %v1807
    %2116 = vmatprep.subr.bf16.mxu0 0
    %2117 = vmatpush1.bf16.msra.mxu0 %v1808
    %2118 = vmatprep.subr.bf16.mxu0 0
    %2119 = vmatpush1.bf16.msra.mxu0 %v1809
    %2120 = vmatprep.subr.bf16.mxu0 0
    %2121 = vmatpush1.bf16.msra.mxu0 %v1810
    %2122 = vmatprep.subr.bf16.mxu0 0
    %2123 = vmatpush1.bf16.msra.mxu0 %v1811
    %2124 = vmatprep.subr.bf16.mxu0 0
    %2125 = vmatpush1.bf16.msra.mxu0 %v1812
    %2126 = vmatprep.subr.bf16.mxu0 0
    %2127 = vmatpush1.bf16.msra.mxu0 %v1813
    %2128 = vmatprep.subr.bf16.mxu0 0
    %2129 = vmatpush1.bf16.msra.mxu0 %v1814
    %2130 = vmatprep.subr.bf16.mxu0 0
    %2131 = vmatpush1.bf16.msra.mxu0 %v1815
    %2132 = vmatprep.subr.bf16.mxu0 0
    %2133 = vmatpush1.bf16.msra.mxu0 %v1816
    %2134 = vmatprep.subr.bf16.mxu0 0
    %2135 = vmatpush1.bf16.msra.mxu0 %v1817
    %2136 = vmatprep.subr.bf16.mxu0 0
    %2137 = vmatpush1.bf16.msra.mxu0 %v1818
    %2138 = vmatprep.subr.bf16.mxu0 0
    %2139 = vmatpush1.bf16.msra.mxu0 %v1819
    %2140 = vmatprep.subr.bf16.mxu0 0
    %2141 = vmatpush1.bf16.msra.mxu0 %v1820
    %2142 = vmatprep.subr.bf16.mxu0 0
    %2143 = vmatpush1.bf16.msra.mxu0 %v1821
    %2144 = vmatprep.mubr.bf16.mxu0 %v1307
    %2145 = vmatmul.mubr.bf16.gmra.mrb[0].mxu0 %v1289
    %v2146 = vpop.f32.mrb[0].mxu0
    %v2147 = vadd.f32 %v2050, %v2146
    %v2148 = vpop.f32.mrb[0].mxu0
    %v2149 = vpop.f32.mrb[0].mxu0
    %v2150 = vadd.f32 %v2053, %v2149
    %v2151 = vpop.f32.mrb[0].mxu0
    %2152 = vmatprep.mubr.bf16.mxu0 %v1308
    %2153 = vmatmul.mubr.bf16.gmra.mrb[0].mxu0 %v1290
    %v2154 = vpop.f32.mrb[0].mxu0
    %v2155 = vadd.f32 %v2058, %v2154
    %v2156 = vpop.f32.mrb[0].mxu0
    %v2157 = vpop.f32.mrb[0].mxu0
    %v2158 = vadd.f32 %v2061, %v2157
    %v2159 = vpop.f32.mrb[0].mxu0
    %2160 = vmatprep.mubr.bf16.mxu0 %v1309
    %2161 = vmatmul.mubr.bf16.gmra.mrb[0].mxu0 %v1291
    %v2162 = vpop.f32.mrb[0].mxu0
    %v2163 = vadd.f32 %v2066, %v2162
    %v2164 = vpop.f32.mrb[0].mxu0
    %v2165 = vpop.f32.mrb[0].mxu0
    %v2166 = vadd.f32 %v2069, %v2165
    %v2167 = vpop.f32.mrb[0].mxu0
    %2168 = vmatprep.mubr.bf16.mxu0 %v1310
    %2169 = vmatmul.mubr.bf16.gmra.mrb[0].mxu0 %v1292
    %v2170 = vpop.f32.mrb[0].mxu0
    %v2171 = vadd.f32 %v2074, %v2170
    %v2172 = vpop.f32.mrb[0].mxu0
    %v2173 = vpop.f32.mrb[0].mxu0
    %v2174 = vadd.f32 %v2077, %v2173
    %v2175 = vpop.f32.mrb[0].mxu0
    %2176 = vmatprep.mubr.bf16.mxu0 %v1311
    %2177 = vmatmul.mubr.bf16.gmra.mrb[0].mxu0 %v1293
    %v2178 = vpop.f32.mrb[0].mxu0
    %v2179 = vadd.f32 %v2082, %v2178
    %v2180 = vpop.f32.mrb[0].mxu0
    %v2181 = vpop.f32.mrb[0].mxu0
    %v2182 = vadd.f32 %v2085, %v2181
    %v2183 = vpop.f32.mrb[0].mxu0
    %2184 = vmatprep.mubr.bf16.mxu0 %v1312
    %2185 = vmatmul.mubr.bf16.gmra.mrb[0].mxu0 %v1294
    %v2186 = vpop.f32.mrb[0].mxu0
    %v2187 = vadd.f32 %v2090, %v2186
    %v2188 = vpop.f32.mrb[0].mxu0
    %v2189 = vpop.f32.mrb[0].mxu0
    %v2190 = vadd.f32 %v2093, %v2189
    %v2191 = vpop.f32.mrb[0].mxu0
    %2192 = vmatprep.mubr.bf16.mxu0 %v1313
    %2193 = vmatmul.mubr.bf16.gmra.mrb[0].mxu0 %v1295
    %v2194 = vpop.f32.mrb[0].mxu0
    %v2195 = vadd.f32 %v2098, %v2194
    %v2196 = vpop.f32.mrb[0].mxu0
    %v2197 = vpop.f32.mrb[0].mxu0
    %v2198 = vadd.f32 %v2101, %v2197
    %v2199 = vpop.f32.mrb[0].mxu0
    %2200 = vmatprep.mubr.bf16.mxu0 %v1314
    %2201 = vmatmul.mubr.bf16.gmra.mrb[0].mxu0 %v1296
    %v2202 = vpop.f32.mrb[0].mxu0
    %v2203 = vadd.f32 %v2106, %v2202
    %v2204 = vpop.f32.mrb[0].mxu0
    %v2205 = vpop.f32.mrb[0].mxu0
    %v2206 = vadd.f32 %v2109, %v2205
    %v2207 = vpop.f32.mrb[0].mxu0
    %2208 = vdwg.mxu0
    %2209 = vmatprep.subr.bf16.mxu0 0
    %2210 = vmatpush1.bf16.msra.mxu0 %v1822
    %2211 = vmatprep.subr.bf16.mxu0 0
    %2212 = vmatpush1.bf16.msra.mxu0 %v1823
    %2213 = vmatprep.subr.bf16.mxu0 0
    %2214 = vmatpush1.bf16.msra.mxu0 %v1824
    %2215 = vmatprep.subr.bf16.mxu0 0
    %2216 = vmatpush1.bf16.msra.mxu0 %v1825
    %2217 = vmatprep.subr.bf16.mxu0 0
    %2218 = vmatpush1.bf16.msra.mxu0 %v1826
    %2219 = vmatprep.subr.bf16.mxu0 0
    %2220 = vmatpush1.bf16.msra.mxu0 %v1827
    %2221 = vmatprep.subr.bf16.mxu0 0
    %2222 = vmatpush1.bf16.msra.mxu0 %v1828
    %2223 = vmatprep.subr.bf16.mxu0 0
    %2224 = vmatpush1.bf16.msra.mxu0 %v1829
    %2225 = vmatprep.subr.bf16.mxu0 0
    %2226 = vmatpush1.bf16.msra.mxu0 %v1830
    %2227 = vmatprep.subr.bf16.mxu0 0
    %2228 = vmatpush1.bf16.msra.mxu0 %v1831
    %2229 = vmatprep.subr.bf16.mxu0 0
    %2230 = vmatpush1.bf16.msra.mxu0 %v1832
    %2231 = vmatprep.subr.bf16.mxu0 0
    %2232 = vmatpush1.bf16.msra.mxu0 %v1833
    %2233 = vmatprep.subr.bf16.mxu0 0
    %2234 = vmatpush1.bf16.msra.mxu0 %v1834
    %2235 = vmatprep.subr.bf16.mxu0 0
    %2236 = vmatpush1.bf16.msra.mxu0 %v1835
    %2237 = vmatprep.subr.bf16.mxu0 0
    %2238 = vmatpush1.bf16.msra.mxu0 %v1836
    %2239 = vmatprep.subr.bf16.mxu0 0
    %2240 = vmatpush1.bf16.msra.mxu0 %v1837
    %2241 = vmatprep.mubr.bf16.mxu0 %v1225
    %2242 = vmatmul.mubr.bf16.gmra.mrb[0].mxu0 %v1194
    %v2243 = vpop.f32.mrb[0].mxu0
    %v2244 = vadd.f32 %v2147, %v2243
    %v2245 = vpop.f32.mrb[0].mxu0
    %v2246 = vpop.f32.mrb[0].mxu0
    %v2247 = vadd.f32 %v2150, %v2246
    %v2248 = vpop.f32.mrb[0].mxu0
    %2249 = vmatprep.mubr.bf16.mxu0 %v1226
    %2250 = vmatmul.mubr.bf16.gmra.mrb[0].mxu0 %v1195
    %v2251 = vpop.f32.mrb[0].mxu0
    %v2252 = vadd.f32 %v2155, %v2251
    %v2253 = vpop.f32.mrb[0].mxu0
    %v2254 = vpop.f32.mrb[0].mxu0
    %v2255 = vadd.f32 %v2158, %v2254
    %v2256 = vpop.f32.mrb[0].mxu0
    %2257 = vmatprep.mubr.bf16.mxu0 %v1227
    %2258 = vmatmul.mubr.bf16.gmra.mrb[0].mxu0 %v1196
    %v2259 = vpop.f32.mrb[0].mxu0
    %v2260 = vadd.f32 %v2163, %v2259
    %v2261 = vpop.f32.mrb[0].mxu0
    %v2262 = vpop.f32.mrb[0].mxu0
    %v2263 = vadd.f32 %v2166, %v2262
    %v2264 = vpop.f32.mrb[0].mxu0
    %2265 = vmatprep.mubr.bf16.mxu0 %v1327
    %2266 = vmatmul.mubr.bf16.gmra.mrb[0].mxu0 %v1323
    %v2267 = vpop.f32.mrb[0].mxu0
    %v2268 = vadd.f32 %v2171, %v2267
    %v2269 = vpop.f32.mrb[0].mxu0
    %v2270 = vpop.f32.mrb[0].mxu0
    %v2271 = vadd.f32 %v2174, %v2270
    %v2272 = vpop.f32.mrb[0].mxu0
    %2273 = vmatprep.mubr.bf16.mxu0 %v1229
    %2274 = vmatmul.mubr.bf16.gmra.mrb[0].mxu0 %v1198
    %v2275 = vpop.f32.mrb[0].mxu0
    %v2276 = vadd.f32 %v2179, %v2275
    %v2277 = vpop.f32.mrb[0].mxu0
    %v2278 = vpop.f32.mrb[0].mxu0
    %v2279 = vadd.f32 %v2182, %v2278
    %v2280 = vpop.f32.mrb[0].mxu0
    %2281 = vmatprep.mubr.bf16.mxu0 %v1230
    %2282 = vmatmul.mubr.bf16.gmra.mrb[0].mxu0 %v1199
    %v2283 = vpop.f32.mrb[0].mxu0
    %v2284 = vadd.f32 %v2187, %v2283
    %v2285 = vpop.f32.mrb[0].mxu0
    %v2286 = vpop.f32.mrb[0].mxu0
    %v2287 = vadd.f32 %v2190, %v2286
    %v2288 = vpop.f32.mrb[0].mxu0
    %2289 = vmatprep.mubr.bf16.mxu0 %v1231
    %2290 = vmatmul.mubr.bf16.gmra.mrb[0].mxu0 %v1200
    %v2291 = vpop.f32.mrb[0].mxu0
    %v2292 = vadd.f32 %v2195, %v2291
    %v2293 = vpop.f32.mrb[0].mxu0
    %v2294 = vpop.f32.mrb[0].mxu0
    %v2295 = vadd.f32 %v2198, %v2294
    %v2296 = vpop.f32.mrb[0].mxu0
    %2297 = vmatprep.mubr.bf16.mxu0 %v1328
    %2298 = vmatmul.mubr.bf16.gmra.mrb[0].mxu0 %v1324
    %v2299 = vpop.f32.mrb[0].mxu0
    %v2300 = vadd.f32 %v2203, %v2299
    %v2301 = vpop.f32.mrb[0].mxu0
    %v2302 = vpop.f32.mrb[0].mxu0
    %v2303 = vadd.f32 %v2206, %v2302
    %v2304 = vpop.f32.mrb[0].mxu0
    %2305 = vdwg.mxu0
    %2306 = vmatprep.subr.bf16.mxu0 0
    %2307 = vmatpush1.bf16.msra.mxu0 %v1838
    %2308 = vmatprep.subr.bf16.mxu0 0
    %2309 = vmatpush1.bf16.msra.mxu0 %v1839
    %2310 = vmatprep.subr.bf16.mxu0 0
    %2311 = vmatpush1.bf16.msra.mxu0 %v1840
    %2312 = vmatprep.subr.bf16.mxu0 0
    %2313 = vmatpush1.bf16.msra.mxu0 %v1841
    %2314 = vmatprep.subr.bf16.mxu0 0
    %2315 = vmatpush1.bf16.msra.mxu0 %v1842
    %2316 = vmatprep.subr.bf16.mxu0 0
    %2317 = vmatpush1.bf16.msra.mxu0 %v1843
    %2318 = vmatprep.subr.bf16.mxu0 0
    %2319 = vmatpush1.bf16.msra.mxu0 %v1844
    %2320 = vmatprep.subr.bf16.mxu0 0
    %2321 = vmatpush1.bf16.msra.mxu0 %v1845
    %2322 = vmatprep.subr.bf16.mxu0 0
    %2323 = vmatpush1.bf16.msra.mxu0 0
    %2324 = vmatprep.subr.bf16.mxu0 0
    %2325 = vmatpush1.bf16.msra.mxu0 0
    %2326 = vmatprep.subr.bf16.mxu0 0
    %2327 = vmatpush1.bf16.msra.mxu0 0
    %2328 = vmatprep.subr.bf16.mxu0 0
    %2329 = vmatpush1.bf16.msra.mxu0 0
    %2330 = vmatprep.subr.bf16.mxu0 0
    %2331 = vmatpush1.bf16.msra.mxu0 0
    %2332 = vmatprep.subr.bf16.mxu0 0
    %2333 = vmatpush1.bf16.msra.mxu0 0
    %2334 = vmatprep.subr.bf16.mxu0 0
    %2335 = vmatpush1.bf16.msra.mxu0 0
    %2336 = vmatprep.subr.bf16.mxu0 0
    %2337 = vmatpush1.bf16.msra.mxu0 0
    %2338 = vmatprep.mubr.bf16.mxu0 0
    %2339 = vmatmul.mubr.bf16.gmra.mrb[0].mxu0 %v1256
    %v2340 = vpop.f32.mrb[0].mxu0
    %v2341 = vadd.f32 %v2244, %v2340
    %v2342 = vpop.f32.mrb[0].mxu0
    %v2343 = vpop.f32.mrb[0].mxu0
    %v2344 = vadd.f32 %v2247, %v2343
    %v2345 = vpop.f32.mrb[0].mxu0
    %2346 = vmatprep.mubr.bf16.mxu0 0
    %2347 = vmatmul.mubr.bf16.gmra.mrb[0].mxu0 %v1257
    %v2348 = vpop.f32.mrb[0].mxu0
    %v2349 = vadd.f32 %v2252, %v2348
    %v2350 = vpop.f32.mrb[0].mxu0
    %v2351 = vpop.f32.mrb[0].mxu0
    %v2352 = vadd.f32 %v2255, %v2351
    %v2353 = vpop.f32.mrb[0].mxu0
    %2354 = vmatprep.mubr.bf16.mxu0 0
    %2355 = vmatmul.mubr.bf16.gmra.mrb[0].mxu0 %v1258
    %v2356 = vpop.f32.mrb[0].mxu0
    %v2357 = vadd.f32 %v2260, %v2356
    %v2358 = vpop.f32.mrb[0].mxu0
    %v2359 = vpop.f32.mrb[0].mxu0
    %v2360 = vadd.f32 %v2263, %v2359
    %v2361 = vpop.f32.mrb[0].mxu0
    %2362 = vmatprep.mubr.bf16.mxu0 0
    %2363 = vmatmul.mubr.bf16.gmra.mrb[0].mxu0 %v1331
    %v2364 = vpop.f32.mrb[0].mxu0
    %v2365 = vadd.f32 %v2268, %v2364
    %v2366 = vpop.f32.mrb[0].mxu0
    %v2367 = vpop.f32.mrb[0].mxu0
    %v2368 = vadd.f32 %v2271, %v2367
    %v2369 = vpop.f32.mrb[0].mxu0
    %2370 = vmatprep.mubr.bf16.mxu0 0
    %2371 = vmatmul.mubr.bf16.gmra.mrb[0].mxu0 %v1260
    %v2372 = vpop.f32.mrb[0].mxu0
    %v2373 = vadd.f32 %v2276, %v2372
    %v2374 = vpop.f32.mrb[0].mxu0
    %v2375 = vpop.f32.mrb[0].mxu0
    %v2376 = vadd.f32 %v2279, %v2375
    %v2377 = vpop.f32.mrb[0].mxu0
    %2378 = vmatprep.mubr.bf16.mxu0 0
    %2379 = vmatmul.mubr.bf16.gmra.mrb[0].mxu0 %v1261
    %v2380 = vpop.f32.mrb[0].mxu0
    %v2381 = vadd.f32 %v2284, %v2380
    %v2382 = vpop.f32.mrb[0].mxu0
    %v2383 = vpop.f32.mrb[0].mxu0
    %v2384 = vadd.f32 %v2287, %v2383
    %v2385 = vpop.f32.mrb[0].mxu0
    %2386 = vmatprep.mubr.bf16.mxu0 0
    %2387 = vmatmul.mubr.bf16.gmra.mrb[0].mxu0 %v1262
    %v2388 = vpop.f32.mrb[0].mxu0
    %v2389 = vadd.f32 %v2292, %v2388
    %v2390 = vpop.f32.mrb[0].mxu0
    %v2391 = vpop.f32.mrb[0].mxu0
    %v2392 = vadd.f32 %v2295, %v2391
    %v2393 = vpop.f32.mrb[0].mxu0
    %2394 = vmatprep.mubr.bf16.mxu0 0
    %2395 = vmatmul.mubr.bf16.gmra.mrb[0].mxu0 %v1332
    %v2396 = vpop.f32.mrb[0].mxu0
    %v2397 = vadd.f32 %v2300, %v2396
    %v2398 = vpop.f32.mrb[0].mxu0
    %v2399 = vpop.f32.mrb[0].mxu0
    %v2400 = vadd.f32 %v2303, %v2399
    %v2401 = vpop.f32.mrb[0].mxu0
    %2402 = vdwg.mxu0
    %v2403 = vmax.f32 %v2341, 0.0
    %v2404 = vmax.f32 %v2344, 0.0
    %v2405 = vmax.f32 %v2349, 0.0
    %v2406 = vmax.f32 %v2352, 0.0
    %v2407 = vmax.f32 %v2357, 0.0
    %v2408 = vmax.f32 %v2360, 0.0
    %v2409 = vmax.f32 %v2365, 0.0
    %v2410 = vmax.f32 %v2368, 0.0
    %v2411 = vmax.f32 %v2373, 0.0
    %v2412 = vmax.f32 %v2376, 0.0
    %v2413 = vmax.f32 %v2381, 0.0
    %v2414 = vmax.f32 %v2384, 0.0
    %v2415 = vmax.f32 %v2389, 0.0
    %v2416 = vmax.f32 %v2392, 0.0
    %v2417 = vmax.f32 %v2397, 0.0
    %v2418 = vmax.f32 %v2400, 0.0
    %v2419 = vpack.c.bf16 %v2404, %v2403
    %v2420 = vpack.c.bf16 %v2406, %v2405
    %v2421 = vpack.c.bf16 %v2408, %v2407
    %v2422 = vpack.c.bf16 %v2410, %v2409
    %v2423 = vpack.c.bf16 %v2412, %v2411
    %v2424 = vpack.c.bf16 %v2414, %v2413
    %v2425 = vpack.c.bf16 %v2416, %v2415
    %v2426 = vpack.c.bf16 %v2418, %v2417
    %v2427 = vld [vmem:[%s6] sm:$0xff]
    %v2428 = vld [vmem:[%s6 + $0x8] sm:$0xff]
    %v2429 = vld [vmem:[%s6 + $0x10] sm:$0xff]
    %v2430 = vld [vmem:[%s6 + $0x18] sm:$0xff]
    %v2431 = vld [vmem:[%s6 + $0x20] sm:$0xff]
    %v2432 = vld [vmem:[%s6 + $0x28] sm:$0xff]
    %v2433 = vld [vmem:[%s6 + $0x30] sm:$0xff]
    %v2434 = vld [vmem:[%s6 + $0x38] sm:$0xff]
    %v2435 = vld [vmem:[%s6 + $0x40] sm:$0xff]
    %v2436 = vld [vmem:[%s6 + $0x48] sm:$0xff]
    %v2437 = vld [vmem:[%s6 + $0x50] sm:$0xff]
    %v2438 = vld [vmem:[%s6 + $0x58] sm:$0xff]
    %v2439 = vld [vmem:[%s6 + $0x60] sm:$0xff]
    %v2440 = vld [vmem:[%s6 + $0x68] sm:$0xff]
    %v2441 = vld [vmem:[%s6 + $0x70] sm:$0xff]
    %v2442 = vld [vmem:[%s6 + $0x78] sm:$0xff]
    %v2443 = vld [vmem:[%s7] sm:$0x3]
    %v2445 = vlaneseq
    %v2446 = vshrl.u32 %v2445, 7
    %v2447 = vsub.s32 0, %v2446
    %v2448 = vrot.slane %v2443, %v2447
    %v2449 = vlaneseq
    %v2450 = vshrl.u32 %v2449, 7
    %v2451 = vsub.s32 1, %v2450
    %v2452 = vrot.slane %v2443, %v2451
    %v2471 = vunpack.c.l.b16 %v2427
    %v2472 = vunpack.c.h.b16 %v2427
    %v2473 = vunpack.c.l.b16 %v2428
    %v2474 = vunpack.c.h.b16 %v2428
    %v2475 = vunpack.c.l.b16 %v2429
    %v2476 = vunpack.c.h.b16 %v2429
    %v2477 = vunpack.c.l.b16 %v2430
    %v2478 = vunpack.c.h.b16 %v2430
    %v2479 = vunpack.c.l.b16 %v2431
    %v2480 = vunpack.c.h.b16 %v2431
    %v2481 = vunpack.c.l.b16 %v2432
    %v2482 = vunpack.c.h.b16 %v2432
    %v2483 = vunpack.c.l.b16 %v2433
    %v2484 = vunpack.c.h.b16 %v2433
    %v2485 = vunpack.c.l.b16 %v2434
    %v2486 = vunpack.c.h.b16 %v2434
    %v2487 = vunpack.c.l.b16 %v2435
    %v2488 = vunpack.c.h.b16 %v2435
    %v2489 = vunpack.c.l.b16 %v2436
    %v2490 = vunpack.c.h.b16 %v2436
    %v2491 = vunpack.c.l.b16 %v2437
    %v2492 = vunpack.c.h.b16 %v2437
    %v2493 = vunpack.c.l.b16 %v2438
    %v2494 = vunpack.c.h.b16 %v2438
    %v2495 = vunpack.c.l.b16 %v2439
    %v2496 = vunpack.c.h.b16 %v2439
    %v2497 = vunpack.c.l.b16 %v2440
    %v2498 = vunpack.c.h.b16 %v2440
    %v2499 = vunpack.c.l.b16 %v2441
    %v2500 = vunpack.c.h.b16 %v2441
    %v2501 = vunpack.c.l.b16 %v2442
    %v2502 = vunpack.c.h.b16 %v2442
    %v2503 = vpack.c.b16 %v2473, %v2471
    %v2504 = vpack.c.b16 %v2474, %v2472
    %v2505 = vpack.c.b16 %v2477, %v2475
    %v2506 = vpack.c.b16 %v2478, %v2476
    %v2507 = vpack.c.b16 %v2481, %v2479
    %v2508 = vpack.c.b16 %v2482, %v2480
    %v2509 = vpack.c.b16 %v2485, %v2483
    %v2510 = vpack.c.b16 %v2486, %v2484
    %v2511 = vpack.c.b16 %v2489, %v2487
    %v2512 = vpack.c.b16 %v2490, %v2488
    %v2513 = vpack.c.b16 %v2493, %v2491
    %v2514 = vpack.c.b16 %v2494, %v2492
    %v2515 = vpack.c.b16 %v2497, %v2495
    %v2516 = vpack.c.b16 %v2498, %v2496
    %v2517 = vpack.c.b16 %v2501, %v2499
    %v2518 = vpack.c.b16 %v2502, %v2500
    %2535 = vmatprep.subr.bf16.mxu0 %v2504
    %2536 = vmatpush1.bf16.msra.mxu0 %v2503
    %2537 = vmatprep.subr.bf16.mxu0 %v2506
    %2538 = vmatpush1.bf16.msra.mxu0 %v2505
    %2539 = vmatprep.subr.bf16.mxu0 %v2508
    %2540 = vmatpush1.bf16.msra.mxu0 %v2507
    %2541 = vmatprep.subr.bf16.mxu0 %v2510
    %2542 = vmatpush1.bf16.msra.mxu0 %v2509
    %2543 = vmatprep.subr.bf16.mxu0 %v2512
    %2544 = vmatpush1.bf16.msra.mxu0 %v2511
    %2545 = vmatprep.subr.bf16.mxu0 %v2514
    %2546 = vmatpush1.bf16.msra.mxu0 %v2513
    %2547 = vmatprep.subr.bf16.mxu0 %v2516
    %2548 = vmatpush1.bf16.msra.mxu0 %v2515
    %2549 = vmatprep.subr.bf16.mxu0 %v2518
    %2550 = vmatpush1.bf16.msra.mxu0 %v2517
    %2551 = vmatprep.subr.bf16.mxu0 0
    %2552 = vmatpush1.bf16.msra.mxu0 0
    %2553 = vmatprep.subr.bf16.mxu0 0
    %2554 = vmatpush1.bf16.msra.mxu0 0
    %2555 = vmatprep.subr.bf16.mxu0 0
    %2556 = vmatpush1.bf16.msra.mxu0 0
    %2557 = vmatprep.subr.bf16.mxu0 0
    %2558 = vmatpush1.bf16.msra.mxu0 0
    %2559 = vmatprep.subr.bf16.mxu0 0
    %2560 = vmatpush1.bf16.msra.mxu0 0
    %2561 = vmatprep.subr.bf16.mxu0 0
    %2562 = vmatpush1.bf16.msra.mxu0 0
    %2563 = vmatprep.subr.bf16.mxu0 0
    %2564 = vmatpush1.bf16.msra.mxu0 0
    %2565 = vmatprep.subr.bf16.mxu0 0
    %2566 = vmatpush1.bf16.msra.mxu0 0
    %2567 = vmatprep.mubr.bf16.mxu0 0
    %2568 = vmatmul.mubr.bf16.gmra.mrb[0].mxu0 %v2419
    %v2569 = vpop.f32.mrb[0].mxu0
    %v2570 = vadd.f32 %v2448, %v2569
    %v2571 = vpop.f32.mrb[0].mxu0
    %v2572 = vadd.f32 %v2452, %v2571
    %v2573 = vpop.f32.mrb[0].mxu0
    %v2574 = vadd.f32 %v2448, %v2573
    %v2575 = vpop.f32.mrb[0].mxu0
    %v2576 = vadd.f32 %v2452, %v2575
    %2577 = vmatprep.mubr.bf16.mxu0 0
    %2578 = vmatmul.mubr.bf16.gmra.mrb[0].mxu0 %v2420
    %v2579 = vpop.f32.mrb[0].mxu0
    %v2580 = vadd.f32 %v2448, %v2579
    %v2581 = vpop.f32.mrb[0].mxu0
    %v2582 = vadd.f32 %v2452, %v2581
    %v2583 = vpop.f32.mrb[0].mxu0
    %v2584 = vadd.f32 %v2448, %v2583
    %v2585 = vpop.f32.mrb[0].mxu0
    %v2586 = vadd.f32 %v2452, %v2585
    %2587 = vmatprep.mubr.bf16.mxu0 0
    %2588 = vmatmul.mubr.bf16.gmra.mrb[0].mxu0 %v2421
    %v2589 = vpop.f32.mrb[0].mxu0
    %v2590 = vadd.f32 %v2448, %v2589
    %v2591 = vpop.f32.mrb[0].mxu0
    %v2592 = vadd.f32 %v2452, %v2591
    %v2593 = vpop.f32.mrb[0].mxu0
    %v2594 = vadd.f32 %v2448, %v2593
    %v2595 = vpop.f32.mrb[0].mxu0
    %v2596 = vadd.f32 %v2452, %v2595
    %2597 = vmatprep.mubr.bf16.mxu0 0
    %2598 = vmatmul.mubr.bf16.gmra.mrb[0].mxu0 %v2422
    %v2599 = vpop.f32.mrb[0].mxu0
    %v2600 = vadd.f32 %v2448, %v2599
    %v2601 = vpop.f32.mrb[0].mxu0
    %v2602 = vadd.f32 %v2452, %v2601
    %v2603 = vpop.f32.mrb[0].mxu0
    %v2604 = vadd.f32 %v2448, %v2603
    %v2605 = vpop.f32.mrb[0].mxu0
    %v2606 = vadd.f32 %v2452, %v2605
    %2607 = vmatprep.mubr.bf16.mxu0 0
    %2608 = vmatmul.mubr.bf16.gmra.mrb[0].mxu0 %v2423
    %v2609 = vpop.f32.mrb[0].mxu0
    %v2610 = vadd.f32 %v2448, %v2609
    %v2611 = vpop.f32.mrb[0].mxu0
    %v2612 = vadd.f32 %v2452, %v2611
    %v2613 = vpop.f32.mrb[0].mxu0
    %v2614 = vadd.f32 %v2448, %v2613
    %v2615 = vpop.f32.mrb[0].mxu0
    %v2616 = vadd.f32 %v2452, %v2615
    %2617 = vmatprep.mubr.bf16.mxu0 0
    %2618 = vmatmul.mubr.bf16.gmra.mrb[0].mxu0 %v2424
    %v2619 = vpop.f32.mrb[0].mxu0
    %v2620 = vadd.f32 %v2448, %v2619
    %v2621 = vpop.f32.mrb[0].mxu0
    %v2622 = vadd.f32 %v2452, %v2621
    %v2623 = vpop.f32.mrb[0].mxu0
    %v2624 = vadd.f32 %v2448, %v2623
    %v2625 = vpop.f32.mrb[0].mxu0
    %v2626 = vadd.f32 %v2452, %v2625
    %2627 = vmatprep.mubr.bf16.mxu0 0
    %2628 = vmatmul.mubr.bf16.gmra.mrb[0].mxu0 %v2425
    %v2629 = vpop.f32.mrb[0].mxu0
    %v2630 = vadd.f32 %v2448, %v2629
    %v2631 = vpop.f32.mrb[0].mxu0
    %v2632 = vadd.f32 %v2452, %v2631
    %v2633 = vpop.f32.mrb[0].mxu0
    %v2634 = vadd.f32 %v2448, %v2633
    %v2635 = vpop.f32.mrb[0].mxu0
    %v2636 = vadd.f32 %v2452, %v2635
    %2637 = vmatprep.mubr.bf16.mxu0 0
    %2638 = vmatmul.mubr.bf16.gmra.mrb[0].mxu0 %v2426
    %v2639 = vpop.f32.mrb[0].mxu0
    %v2640 = vadd.f32 %v2448, %v2639
    %v2641 = vpop.f32.mrb[0].mxu0
    %v2642 = vadd.f32 %v2452, %v2641
    %v2643 = vpop.f32.mrb[0].mxu0
    %v2644 = vadd.f32 %v2448, %v2643
    %v2645 = vpop.f32.mrb[0].mxu0
    %v2646 = vadd.f32 %v2452, %v2645
    %2647 = vdwg.mxu0
    %v2648 = vadd.f32 %v2570, %v540
    %v2649 = vadd.f32 %v2572, %v541
    %v2650 = vadd.f32 %v2574, %v542
    %v2651 = vadd.f32 %v2576, %v543
    %v2652 = vadd.f32 %v2580, %v544
    %v2653 = vadd.f32 %v2582, %v545
    %v2654 = vadd.f32 %v2584, %v546
    %v2655 = vadd.f32 %v2586, %v547
    %v2656 = vadd.f32 %v2590, %v548
    %v2657 = vadd.f32 %v2592, %v549
    %v2658 = vadd.f32 %v2594, %v550
    %v2659 = vadd.f32 %v2596, %v551
    %v2660 = vadd.f32 %v2600, %v552
    %v2661 = vadd.f32 %v2602, %v553
    %v2662 = vadd.f32 %v2604, %v554
    %v2663 = vadd.f32 %v2606, %v555
    %v2664 = vadd.f32 %v2610, %v556
    %v2665 = vadd.f32 %v2612, %v557
    %v2666 = vadd.f32 %v2614, %v558
    %v2667 = vadd.f32 %v2616, %v559
    %v2668 = vadd.f32 %v2620, %v560
    %v2669 = vadd.f32 %v2622, %v561
    %v2670 = vadd.f32 %v2624, %v562
    %v2671 = vadd.f32 %v2626, %v563
    %v2672 = vadd.f32 %v2630, %v564
    %v2673 = vadd.f32 %v2632, %v565
    %v2674 = vadd.f32 %v2634, %v566
    %v2675 = vadd.f32 %v2636, %v567
    %v2676 = vadd.f32 %v2640, %v568
    %v2677 = vadd.f32 %v2642, %v569
    %v2678 = vadd.f32 %v2644, %v570
    %v2679 = vadd.f32 %v2646, %v571
    %v2680 = vmax.f32 %v2648, 0.0
    %v2681 = vmax.f32 %v2649, 0.0
    %v2682 = vmax.f32 %v2650, 0.0
    %v2683 = vmax.f32 %v2651, 0.0
    %v2684 = vmax.f32 %v2652, 0.0
    %v2685 = vmax.f32 %v2653, 0.0
    %v2686 = vmax.f32 %v2654, 0.0
    %v2687 = vmax.f32 %v2655, 0.0
    %v2688 = vmax.f32 %v2656, 0.0
    %v2689 = vmax.f32 %v2657, 0.0
    %v2690 = vmax.f32 %v2658, 0.0
    %v2691 = vmax.f32 %v2659, 0.0
    %v2692 = vmax.f32 %v2660, 0.0
    %v2693 = vmax.f32 %v2661, 0.0
    %v2694 = vmax.f32 %v2662, 0.0
    %v2695 = vmax.f32 %v2663, 0.0
    %v2696 = vmax.f32 %v2664, 0.0
    %v2697 = vmax.f32 %v2665, 0.0
    %v2698 = vmax.f32 %v2666, 0.0
    %v2699 = vmax.f32 %v2667, 0.0
    %v2700 = vmax.f32 %v2668, 0.0
    %v2701 = vmax.f32 %v2669, 0.0
    %v2702 = vmax.f32 %v2670, 0.0
    %v2703 = vmax.f32 %v2671, 0.0
    %v2704 = vmax.f32 %v2672, 0.0
    %v2705 = vmax.f32 %v2673, 0.0
    %v2706 = vmax.f32 %v2674, 0.0
    %v2707 = vmax.f32 %v2675, 0.0
    %v2708 = vmax.f32 %v2676, 0.0
    %v2709 = vmax.f32 %v2677, 0.0
    %v2710 = vmax.f32 %v2678, 0.0
    %v2711 = vmax.f32 %v2679, 0.0
    %v2712 = vpack.c.bf16 %v2682, %v2680
    %v2713 = vpack.c.bf16 %v2683, %v2681
    %v2714 = vpack.c.bf16 %v2686, %v2684
    %v2715 = vpack.c.bf16 %v2687, %v2685
    %v2716 = vpack.c.bf16 %v2690, %v2688
    %v2717 = vpack.c.bf16 %v2691, %v2689
    %v2718 = vpack.c.bf16 %v2694, %v2692
    %v2719 = vpack.c.bf16 %v2695, %v2693
    %v2720 = vpack.c.bf16 %v2698, %v2696
    %v2721 = vpack.c.bf16 %v2699, %v2697
    %v2722 = vpack.c.bf16 %v2702, %v2700
    %v2723 = vpack.c.bf16 %v2703, %v2701
    %v2724 = vpack.c.bf16 %v2706, %v2704
    %v2725 = vpack.c.bf16 %v2707, %v2705
    %v2726 = vpack.c.bf16 %v2710, %v2708
    %v2727 = vpack.c.bf16 %v2711, %v2709
    %v2728 = vld [vmem:[%s8] sm:$0xf]
    %v2729 = vld [vmem:[%s8 + $0x4] sm:$0xf]
    %v2730 = vld [vmem:[%s8 + $0x8] sm:$0xf]
    %v2731 = vld [vmem:[%s8 + $0xc] sm:$0xf]
    %v2732 = vld [vmem:[%s8 + $0x10] sm:$0xf]
    %v2733 = vld [vmem:[%s8 + $0x14] sm:$0xf]
    %v2734 = vld [vmem:[%s8 + $0x18] sm:$0xf]
    %v2735 = vld [vmem:[%s8 + $0x1c] sm:$0xf]
    %v2736 = vld [vmem:[%s8 + $0x20] sm:$0xf]
    %v2737 = vld [vmem:[%s8 + $0x24] sm:$0xf]
    %v2738 = vld [vmem:[%s8 + $0x28] sm:$0xf]
    %v2739 = vld [vmem:[%s8 + $0x2c] sm:$0xf]
    %v2740 = vld [vmem:[%s8 + $0x30] sm:$0xf]
    %v2741 = vld [vmem:[%s8 + $0x34] sm:$0xf]
    %v2742 = vld [vmem:[%s8 + $0x38] sm:$0xf]
    %v2743 = vld [vmem:[%s8 + $0x3c] sm:$0xf]
    %v2744 = vld [vmem:[%s8 + $0x40] sm:$0xf]
    %v2745 = vld [vmem:[%s8 + $0x44] sm:$0xf]
    %v2746 = vld [vmem:[%s8 + $0x48] sm:$0xf]
    %v2747 = vld [vmem:[%s8 + $0x4c] sm:$0xf]
    %v2748 = vld [vmem:[%s8 + $0x50] sm:$0xf]
    %v2749 = vld [vmem:[%s8 + $0x54] sm:$0xf]
    %v2750 = vld [vmem:[%s8 + $0x58] sm:$0xf]
    %v2751 = vld [vmem:[%s8 + $0x5c] sm:$0xf]
    %v2752 = vld [vmem:[%s8 + $0x60] sm:$0xf]
    %v2753 = vld [vmem:[%s8 + $0x64] sm:$0xf]
    %v2754 = vld [vmem:[%s8 + $0x68] sm:$0xf]
    %v2755 = vld [vmem:[%s8 + $0x6c] sm:$0xf]
    %v2756 = vld [vmem:[%s8 + $0x70] sm:$0xf]
    %v2757 = vld [vmem:[%s8 + $0x74] sm:$0xf]
    %v2758 = vld [vmem:[%s8 + $0x78] sm:$0xf]
    %v2759 = vld [vmem:[%s8 + $0x7c] sm:$0xf]
    %v2760 = vld [vmem:[%s9] sm:$0x1]
    %v2762 = vlaneseq
    %v2763 = vshrl.u32 %v2762, 7
    %v2764 = vsub.s32 0, %v2763
    %v2765 = vrot.slane %v2760, %v2764
    %v2799 = vunpack.c.l.b16 %v2728
    %v2800 = vunpack.c.l.b16 %v2729
    %v2801 = vunpack.c.l.b16 %v2730
    %v2802 = vunpack.c.l.b16 %v2731
    %v2803 = vunpack.c.l.b16 %v2732
    %v2804 = vunpack.c.l.b16 %v2733
    %v2805 = vunpack.c.l.b16 %v2734
    %v2806 = vunpack.c.l.b16 %v2735
    %v2807 = vunpack.c.l.b16 %v2736
    %v2808 = vunpack.c.l.b16 %v2737
    %v2809 = vunpack.c.l.b16 %v2738
    %v2810 = vunpack.c.l.b16 %v2739
    %v2811 = vunpack.c.l.b16 %v2740
    %v2812 = vunpack.c.l.b16 %v2741
    %v2813 = vunpack.c.l.b16 %v2742
    %v2814 = vunpack.c.l.b16 %v2743
    %v2815 = vunpack.c.l.b16 %v2744
    %v2816 = vunpack.c.l.b16 %v2745
    %v2817 = vunpack.c.l.b16 %v2746
    %v2818 = vunpack.c.l.b16 %v2747
    %v2819 = vunpack.c.l.b16 %v2748
    %v2820 = vunpack.c.l.b16 %v2749
    %v2821 = vunpack.c.l.b16 %v2750
    %v2822 = vunpack.c.l.b16 %v2751
    %v2823 = vunpack.c.l.b16 %v2752
    %v2824 = vunpack.c.l.b16 %v2753
    %v2825 = vunpack.c.l.b16 %v2754
    %v2826 = vunpack.c.l.b16 %v2755
    %v2827 = vunpack.c.l.b16 %v2756
    %v2828 = vunpack.c.l.b16 %v2757
    %v2829 = vunpack.c.l.b16 %v2758
    %v2830 = vunpack.c.l.b16 %v2759
    %v2831 = vpack.c.b16 %v2800, %v2799
    %v2832 = vpack.c.b16 %v2802, %v2801
    %v2833 = vpack.c.b16 %v2804, %v2803
    %v2834 = vpack.c.b16 %v2806, %v2805
    %v2835 = vpack.c.b16 %v2808, %v2807
    %v2836 = vpack.c.b16 %v2810, %v2809
    %v2837 = vpack.c.b16 %v2812, %v2811
    %v2838 = vpack.c.b16 %v2814, %v2813
    %v2839 = vpack.c.b16 %v2816, %v2815
    %v2840 = vpack.c.b16 %v2818, %v2817
    %v2841 = vpack.c.b16 %v2820, %v2819
    %v2842 = vpack.c.b16 %v2822, %v2821
    %v2843 = vpack.c.b16 %v2824, %v2823
    %v2844 = vpack.c.b16 %v2826, %v2825
    %v2845 = vpack.c.b16 %v2828, %v2827
    %v2846 = vpack.c.b16 %v2830, %v2829
    %2863 = vmatprep.subr.bf16.mxu0 0
    %2864 = vmatpush1.bf16.msra.mxu0 %v2831
    %2865 = vmatprep.subr.bf16.mxu0 0
    %2866 = vmatpush1.bf16.msra.mxu0 %v2832
    %2867 = vmatprep.subr.bf16.mxu0 0
    %2868 = vmatpush1.bf16.msra.mxu0 %v2833
    %2869 = vmatprep.subr.bf16.mxu0 0
    %2870 = vmatpush1.bf16.msra.mxu0 %v2834
    %2871 = vmatprep.subr.bf16.mxu0 0
    %2872 = vmatpush1.bf16.msra.mxu0 %v2835
    %2873 = vmatprep.subr.bf16.mxu0 0
    %2874 = vmatpush1.bf16.msra.mxu0 %v2836
    %2875 = vmatprep.subr.bf16.mxu0 0
    %2876 = vmatpush1.bf16.msra.mxu0 %v2837
    %2877 = vmatprep.subr.bf16.mxu0 0
    %2878 = vmatpush1.bf16.msra.mxu0 %v2838
    %2879 = vmatprep.subr.bf16.mxu0 0
    %2880 = vmatpush1.bf16.msra.mxu0 %v2839
    %2881 = vmatprep.subr.bf16.mxu0 0
    %2882 = vmatpush1.bf16.msra.mxu0 %v2840
    %2883 = vmatprep.subr.bf16.mxu0 0
    %2884 = vmatpush1.bf16.msra.mxu0 %v2841
    %2885 = vmatprep.subr.bf16.mxu0 0
    %2886 = vmatpush1.bf16.msra.mxu0 %v2842
    %2887 = vmatprep.subr.bf16.mxu0 0
    %2888 = vmatpush1.bf16.msra.mxu0 %v2843
    %2889 = vmatprep.subr.bf16.mxu0 0
    %2890 = vmatpush1.bf16.msra.mxu0 %v2844
    %2891 = vmatprep.subr.bf16.mxu0 0
    %2892 = vmatpush1.bf16.msra.mxu0 %v2845
    %2893 = vmatprep.subr.bf16.mxu0 0
    %2894 = vmatpush1.bf16.msra.mxu0 %v2846
    %2895 = vmatprep.mubr.bf16.mxu0 %v2713
    %2896 = vmatmul.mubr.bf16.gmra.mrb[0].mxu0 %v2712
    %v2897 = vpop.f32.mrb[0].mxu0
    %v2898 = vadd.f32 %v2765, %v2897
    %v2899 = vpop.f32.mrb[0].mxu0
    %v2900 = vpop.f32.mrb[0].mxu0
    %v2901 = vadd.f32 %v2765, %v2900
    %v2902 = vpop.f32.mrb[0].mxu0
    %2903 = vmatprep.mubr.bf16.mxu0 %v2715
    %2904 = vmatmul.mubr.bf16.gmra.mrb[0].mxu0 %v2714
    %v2905 = vpop.f32.mrb[0].mxu0
    %v2906 = vadd.f32 %v2765, %v2905
    %v2907 = vpop.f32.mrb[0].mxu0
    %v2908 = vpop.f32.mrb[0].mxu0
    %v2909 = vadd.f32 %v2765, %v2908
    %v2910 = vpop.f32.mrb[0].mxu0
    %2911 = vmatprep.mubr.bf16.mxu0 %v2717
    %2912 = vmatmul.mubr.bf16.gmra.mrb[0].mxu0 %v2716
    %v2913 = vpop.f32.mrb[0].mxu0
    %v2914 = vadd.f32 %v2765, %v2913
    %v2915 = vpop.f32.mrb[0].mxu0
    %v2916 = vpop.f32.mrb[0].mxu0
    %v2917 = vadd.f32 %v2765, %v2916
    %v2918 = vpop.f32.mrb[0].mxu0
    %2919 = vmatprep.mubr.bf16.mxu0 %v2719
    %2920 = vmatmul.mubr.bf16.gmra.mrb[0].mxu0 %v2718
    %v2921 = vpop.f32.mrb[0].mxu0
    %v2922 = vadd.f32 %v2765, %v2921
    %v2923 = vpop.f32.mrb[0].mxu0
    %v2924 = vpop.f32.mrb[0].mxu0
    %v2925 = vadd.f32 %v2765, %v2924
    %v2926 = vpop.f32.mrb[0].mxu0
    %2927 = vmatprep.mubr.bf16.mxu0 %v2721
    %2928 = vmatmul.mubr.bf16.gmra.mrb[0].mxu0 %v2720
    %v2929 = vpop.f32.mrb[0].mxu0
    %v2930 = vadd.f32 %v2765, %v2929
    %v2931 = vpop.f32.mrb[0].mxu0
    %v2932 = vpop.f32.mrb[0].mxu0
    %v2933 = vadd.f32 %v2765, %v2932
    %v2934 = vpop.f32.mrb[0].mxu0
    %2935 = vmatprep.mubr.bf16.mxu0 %v2723
    %2936 = vmatmul.mubr.bf16.gmra.mrb[0].mxu0 %v2722
    %v2937 = vpop.f32.mrb[0].mxu0
    %v2938 = vadd.f32 %v2765, %v2937
    %v2939 = vpop.f32.mrb[0].mxu0
    %v2940 = vpop.f32.mrb[0].mxu0
    %v2941 = vadd.f32 %v2765, %v2940
    %v2942 = vpop.f32.mrb[0].mxu0
    %2943 = vmatprep.mubr.bf16.mxu0 %v2725
    %2944 = vmatmul.mubr.bf16.gmra.mrb[0].mxu0 %v2724
    %v2945 = vpop.f32.mrb[0].mxu0
    %v2946 = vadd.f32 %v2765, %v2945
    %v2947 = vpop.f32.mrb[0].mxu0
    %v2948 = vpop.f32.mrb[0].mxu0
    %v2949 = vadd.f32 %v2765, %v2948
    %v2950 = vpop.f32.mrb[0].mxu0
    %2951 = vmatprep.mubr.bf16.mxu0 %v2727
    %2952 = vmatmul.mubr.bf16.gmra.mrb[0].mxu0 %v2726
    %v2953 = vpop.f32.mrb[0].mxu0
    %v2954 = vadd.f32 %v2765, %v2953
    %v2955 = vpop.f32.mrb[0].mxu0
    %v2956 = vpop.f32.mrb[0].mxu0
    %v2957 = vadd.f32 %v2765, %v2956
    %v2958 = vpop.f32.mrb[0].mxu0
    %2959 = vdwg.mxu0
    %v2960 = vmax.f32 %v2898, 0.0
    %v2961 = vmax.f32 %v2901, 0.0
    %v2962 = vmax.f32 %v2906, 0.0
    %v2963 = vmax.f32 %v2909, 0.0
    %v2964 = vmax.f32 %v2914, 0.0
    %v2965 = vmax.f32 %v2917, 0.0
    %v2966 = vmax.f32 %v2922, 0.0
    %v2967 = vmax.f32 %v2925, 0.0
    %v2968 = vmax.f32 %v2930, 0.0
    %v2969 = vmax.f32 %v2933, 0.0
    %v2970 = vmax.f32 %v2938, 0.0
    %v2971 = vmax.f32 %v2941, 0.0
    %v2972 = vmax.f32 %v2946, 0.0
    %v2973 = vmax.f32 %v2949, 0.0
    %v2974 = vmax.f32 %v2954, 0.0
    %v2975 = vmax.f32 %v2957, 0.0
    %v2976 = vpack.c.bf16 %v2961, %v2960
    %v2977 = vpack.c.bf16 %v2963, %v2962
    %v2978 = vpack.c.bf16 %v2965, %v2964
    %v2979 = vpack.c.bf16 %v2967, %v2966
    %v2980 = vpack.c.bf16 %v2969, %v2968
    %v2981 = vpack.c.bf16 %v2971, %v2970
    %v2982 = vpack.c.bf16 %v2973, %v2972
    %v2983 = vpack.c.bf16 %v2975, %v2974
    %v2992 = vunpack.c.l.b16 %v2976
    %v2993 = vunpack.c.h.b16 %v2976
    %v2994 = vunpack.c.l.b16 %v2977
    %v2995 = vunpack.c.h.b16 %v2977
    %v2996 = vunpack.c.l.b16 %v2978
    %v2997 = vunpack.c.h.b16 %v2978
    %v2998 = vunpack.c.l.b16 %v2979
    %v2999 = vunpack.c.h.b16 %v2979
    %v3000 = vunpack.c.l.b16 %v2980
    %v3001 = vunpack.c.h.b16 %v2980
    %v3002 = vunpack.c.l.b16 %v2981
    %v3003 = vunpack.c.h.b16 %v2981
    %v3004 = vunpack.c.l.b16 %v2982
    %v3005 = vunpack.c.h.b16 %v2982
    %v3006 = vunpack.c.l.b16 %v2983
    %v3007 = vunpack.c.h.b16 %v2983
    %v3008 = vpack.c.b16 %v2992, %v2992
    %v3009 = vpack.c.b16 %v2993, %v2993
    %v3010 = vpack.c.b16 %v2994, %v2994
    %v3011 = vpack.c.b16 %v2995, %v2995
    %v3012 = vpack.c.b16 %v2996, %v2996
    %v3013 = vpack.c.b16 %v2997, %v2997
    %v3014 = vpack.c.b16 %v2998, %v2998
    %v3015 = vpack.c.b16 %v2999, %v2999
    %v3016 = vpack.c.b16 %v3000, %v3000
    %v3017 = vpack.c.b16 %v3001, %v3001
    %v3018 = vpack.c.b16 %v3002, %v3002
    %v3019 = vpack.c.b16 %v3003, %v3003
    %v3020 = vpack.c.b16 %v3004, %v3004
    %v3021 = vpack.c.b16 %v3005, %v3005
    %v3022 = vpack.c.b16 %v3006, %v3006
    %v3023 = vpack.c.b16 %v3007, %v3007
    %v3025 = vshrl.u32 %v3008, 16
    %v3027 = vrot.slane %v3025, 7
    %v3028 = vshll.u32 %v3008, 16
    %v3030 = vor.u32 %v3027, %v3028
    %v3032 = vshrl.u32 %v3009, 16
    %v3034 = vrot.slane %v3032, 7
    %v3035 = vshll.u32 %v3009, 16
    %v3037 = vor.u32 %v3034, %v3035
    %v3039 = vshrl.u32 %v3010, 16
    %v3041 = vrot.slane %v3039, 7
    %v3042 = vshll.u32 %v3010, 16
    %v3044 = vor.u32 %v3041, %v3042
    %v3046 = vshrl.u32 %v3011, 16
    %v3048 = vrot.slane %v3046, 7
    %v3049 = vshll.u32 %v3011, 16
    %v3051 = vor.u32 %v3048, %v3049
    %v3053 = vshrl.u32 %v3012, 16
    %v3055 = vrot.slane %v3053, 7
    %v3056 = vshll.u32 %v3012, 16
    %v3058 = vor.u32 %v3055, %v3056
    %v3060 = vshrl.u32 %v3013, 16
    %v3062 = vrot.slane %v3060, 7
    %v3063 = vshll.u32 %v3013, 16
    %v3065 = vor.u32 %v3062, %v3063
    %v3067 = vshrl.u32 %v3014, 16
    %v3069 = vrot.slane %v3067, 7
    %v3070 = vshll.u32 %v3014, 16
    %v3072 = vor.u32 %v3069, %v3070
    %v3074 = vshrl.u32 %v3015, 16
    %v3076 = vrot.slane %v3074, 7
    %v3077 = vshll.u32 %v3015, 16
    %v3079 = vor.u32 %v3076, %v3077
    %v3081 = vshrl.u32 %v3016, 16
    %v3083 = vrot.slane %v3081, 7
    %v3084 = vshll.u32 %v3016, 16
    %v3086 = vor.u32 %v3083, %v3084
    %v3088 = vshrl.u32 %v3017, 16
    %v3090 = vrot.slane %v3088, 7
    %v3091 = vshll.u32 %v3017, 16
    %v3093 = vor.u32 %v3090, %v3091
    %v3095 = vshrl.u32 %v3018, 16
    %v3097 = vrot.slane %v3095, 7
    %v3098 = vshll.u32 %v3018, 16
    %v3100 = vor.u32 %v3097, %v3098
    %v3102 = vshrl.u32 %v3019, 16
    %v3104 = vrot.slane %v3102, 7
    %v3105 = vshll.u32 %v3019, 16
    %v3107 = vor.u32 %v3104, %v3105
    %v3109 = vshrl.u32 %v3020, 16
    %v3111 = vrot.slane %v3109, 7
    %v3112 = vshll.u32 %v3020, 16
    %v3114 = vor.u32 %v3111, %v3112
    %v3116 = vshrl.u32 %v3021, 16
    %v3118 = vrot.slane %v3116, 7
    %v3119 = vshll.u32 %v3021, 16
    %v3121 = vor.u32 %v3118, %v3119
    %v3123 = vshrl.u32 %v3022, 16
    %v3125 = vrot.slane %v3123, 7
    %v3126 = vshll.u32 %v3022, 16
    %v3128 = vor.u32 %v3125, %v3126
    %v3130 = vshrl.u32 %v3023, 16
    %v3132 = vrot.slane %v3130, 7
    %v3133 = vshll.u32 %v3023, 16
    %v3135 = vor.u32 %v3132, %v3133
    %v3152 = vsel %vm758, 0, %v3030
    %v3153 = vsel %vm758, 0, %v3037
    %v3154 = vsel %vm758, 0, %v3044
    %v3155 = vsel %vm758, 0, %v3051
    %v3156 = vsel %vm758, 0, %v3058
    %v3157 = vsel %vm758, 0, %v3065
    %v3158 = vsel %vm758, 0, %v3072
    %v3159 = vsel %vm758, 0, %v3079
    %v3160 = vsel %vm758, 0, %v3086
    %v3161 = vsel %vm758, 0, %v3093
    %v3162 = vsel %vm758, 0, %v3100
    %v3163 = vsel %vm758, 0, %v3107
    %v3164 = vsel %vm758, 0, %v3114
    %v3165 = vsel %vm758, 0, %v3121
    %v3166 = vsel %vm758, 0, %v3128
    %v3167 = vsel %vm758, 0, %v3135
    %v3168 = vsel %vm778, %v3152, 0
    %v3169 = vsel %vm778, %v3153, 0
    %v3170 = vsel %vm778, %v3154, 0
    %v3171 = vsel %vm778, %v3155, 0
    %v3172 = vsel %vm778, %v3156, 0
    %v3173 = vsel %vm778, %v3157, 0
    %v3174 = vsel %vm778, %v3158, 0
    %v3175 = vsel %vm778, %v3159, 0
    %v3176 = vsel %vm778, %v3160, 0
    %v3177 = vsel %vm778, %v3161, 0
    %v3178 = vsel %vm778, %v3162, 0
    %v3179 = vsel %vm778, %v3163, 0
    %v3180 = vsel %vm778, %v3164, 0
    %v3181 = vsel %vm778, %v3165, 0
    %v3182 = vsel %vm778, %v3166, 0
    %v3183 = vsel %vm778, %v3167, 0
    %v3198 = vunpack.c.l.b16 %v3168
    %v3199 = vunpack.c.h.b16 %v3168
    %v3200 = vunpack.c.l.b16 %v3169
    %v3201 = vunpack.c.h.b16 %v3169
    %v3202 = vunpack.c.l.b16 %v3170
    %v3203 = vunpack.c.h.b16 %v3170
    %v3204 = vunpack.c.l.b16 %v3171
    %v3205 = vunpack.c.h.b16 %v3171
    %v3206 = vunpack.c.l.b16 %v3172
    %v3207 = vunpack.c.h.b16 %v3172
    %v3208 = vunpack.c.l.b16 %v3173
    %v3209 = vunpack.c.h.b16 %v3173
    %v3210 = vunpack.c.l.b16 %v3174
    %v3211 = vunpack.c.h.b16 %v3174
    %v3212 = vunpack.c.l.b16 %v3176
    %v3213 = vunpack.c.h.b16 %v3176
    %v3214 = vunpack.c.l.b16 %v3177
    %v3215 = vunpack.c.h.b16 %v3177
    %v3216 = vunpack.c.l.b16 %v3178
    %v3217 = vunpack.c.h.b16 %v3178
    %v3218 = vunpack.c.l.b16 %v3179
    %v3219 = vunpack.c.h.b16 %v3179
    %v3220 = vunpack.c.l.b16 %v3180
    %v3221 = vunpack.c.h.b16 %v3180
    %v3222 = vunpack.c.l.b16 %v3181
    %v3223 = vunpack.c.h.b16 %v3181
    %v3224 = vunpack.c.l.b16 %v3182
    %v3225 = vunpack.c.h.b16 %v3182
    %v3226 = vpack.c.b16 %v3198, %v3198
    %v3227 = vpack.c.b16 %v3199, %v3199
    %v3228 = vpack.c.b16 %v3200, %v3200
    %v3229 = vpack.c.b16 %v3201, %v3201
    %v3230 = vpack.c.b16 %v3202, %v3202
    %v3231 = vpack.c.b16 %v3203, %v3203
    %v3232 = vpack.c.b16 %v3204, %v3204
    %v3233 = vpack.c.b16 %v3205, %v3205
    %v3234 = vpack.c.b16 %v3206, %v3206
    %v3235 = vpack.c.b16 %v3207, %v3207
    %v3236 = vpack.c.b16 %v3208, %v3208
    %v3237 = vpack.c.b16 %v3209, %v3209
    %v3238 = vpack.c.b16 %v3210, %v3210
    %v3239 = vpack.c.b16 %v3211, %v3211
    %v3240 = vpack.c.b16 %v3212, %v3212
    %v3241 = vpack.c.b16 %v3213, %v3213
    %v3242 = vpack.c.b16 %v3214, %v3214
    %v3243 = vpack.c.b16 %v3215, %v3215
    %v3244 = vpack.c.b16 %v3216, %v3216
    %v3245 = vpack.c.b16 %v3217, %v3217
    %v3246 = vpack.c.b16 %v3218, %v3218
    %v3247 = vpack.c.b16 %v3219, %v3219
    %v3248 = vpack.c.b16 %v3220, %v3220
    %v3249 = vpack.c.b16 %v3221, %v3221
    %v3250 = vpack.c.b16 %v3222, %v3222
    %v3251 = vpack.c.b16 %v3223, %v3223
    %v3252 = vpack.c.b16 %v3224, %v3224
    %v3253 = vpack.c.b16 %v3225, %v3225
    %v3255 = vshrl.u32 %v3226, 16
    %v3257 = vrot.slane %v3255, 4
    %v3258 = vshll.u32 %v3226, 16
    %v3260 = vrot.slane %v3258, 5
    %v3261 = vor.u32 %v3257, %v3260
    %v3262 = vrot.slane %v3261, 4
    %v3264 = vshll.u32 %v3227, 16
    %v3266 = vrot.slane %v3264, 5
    %v3267 = vsel %vm873, %v3262, %v3266
    %v3269 = vshrl.u32 %v3228, 16
    %v3271 = vrot.slane %v3269, 4
    %v3272 = vshll.u32 %v3228, 16
    %v3274 = vrot.slane %v3272, 5
    %v3275 = vor.u32 %v3271, %v3274
    %v3276 = vrot.slane %v3275, 4
    %v3278 = vshll.u32 %v3229, 16
    %v3280 = vrot.slane %v3278, 5
    %v3281 = vsel %vm873, %v3276, %v3280
    %v3283 = vshrl.u32 %v3230, 16
    %v3285 = vrot.slane %v3283, 4
    %v3286 = vshll.u32 %v3230, 16
    %v3288 = vrot.slane %v3286, 5
    %v3289 = vor.u32 %v3285, %v3288
    %v3290 = vrot.slane %v3289, 4
    %v3292 = vshll.u32 %v3231, 16
    %v3294 = vrot.slane %v3292, 5
    %v3295 = vsel %vm873, %v3290, %v3294
    %v3297 = vshrl.u32 %v3232, 16
    %v3299 = vrot.slane %v3297, 4
    %v3300 = vshll.u32 %v3232, 16
    %v3302 = vrot.slane %v3300, 5
    %v3303 = vor.u32 %v3299, %v3302
    %v3304 = vrot.slane %v3303, 4
    %v3306 = vshll.u32 %v3233, 16
    %v3308 = vrot.slane %v3306, 5
    %v3309 = vsel %vm873, %v3304, %v3308
    %v3311 = vshrl.u32 %v3234, 16
    %v3313 = vrot.slane %v3311, 4
    %v3314 = vshll.u32 %v3234, 16
    %v3316 = vrot.slane %v3314, 5
    %v3317 = vor.u32 %v3313, %v3316
    %v3318 = vrot.slane %v3317, 4
    %v3320 = vshll.u32 %v3235, 16
    %v3322 = vrot.slane %v3320, 5
    %v3323 = vsel %vm873, %v3318, %v3322
    %v3325 = vshrl.u32 %v3236, 16
    %v3327 = vrot.slane %v3325, 4
    %v3328 = vshll.u32 %v3236, 16
    %v3330 = vrot.slane %v3328, 5
    %v3331 = vor.u32 %v3327, %v3330
    %v3332 = vrot.slane %v3331, 4
    %v3334 = vshll.u32 %v3237, 16
    %v3336 = vrot.slane %v3334, 5
    %v3337 = vsel %vm873, %v3332, %v3336
    %v3339 = vshrl.u32 %v3238, 16
    %v3341 = vrot.slane %v3339, 4
    %v3342 = vshll.u32 %v3238, 16
    %v3344 = vrot.slane %v3342, 5
    %v3345 = vor.u32 %v3341, %v3344
    %v3346 = vrot.slane %v3345, 4
    %v3348 = vshll.u32 %v3239, 16
    %v3350 = vrot.slane %v3348, 5
    %v3351 = vsel %vm873, %v3346, %v3350
    %v3353 = vshrl.u32 %v3240, 16
    %v3355 = vrot.slane %v3353, 4
    %v3356 = vshll.u32 %v3240, 16
    %v3358 = vrot.slane %v3356, 5
    %v3359 = vor.u32 %v3355, %v3358
    %v3360 = vrot.slane %v3359, 4
    %v3362 = vshll.u32 %v3241, 16
    %v3364 = vrot.slane %v3362, 5
    %v3365 = vsel %vm873, %v3360, %v3364
    %v3367 = vshrl.u32 %v3242, 16
    %v3369 = vrot.slane %v3367, 4
    %v3370 = vshll.u32 %v3242, 16
    %v3372 = vrot.slane %v3370, 5
    %v3373 = vor.u32 %v3369, %v3372
    %v3374 = vrot.slane %v3373, 4
    %v3376 = vshll.u32 %v3243, 16
    %v3378 = vrot.slane %v3376, 5
    %v3379 = vsel %vm873, %v3374, %v3378
    %v3381 = vshrl.u32 %v3244, 16
    %v3383 = vrot.slane %v3381, 4
    %v3384 = vshll.u32 %v3244, 16
    %v3386 = vrot.slane %v3384, 5
    %v3387 = vor.u32 %v3383, %v3386
    %v3388 = vrot.slane %v3387, 4
    %v3390 = vshll.u32 %v3245, 16
    %v3392 = vrot.slane %v3390, 5
    %v3393 = vsel %vm873, %v3388, %v3392
    %v3395 = vshrl.u32 %v3246, 16
    %v3397 = vrot.slane %v3395, 4
    %v3398 = vshll.u32 %v3246, 16
    %v3400 = vrot.slane %v3398, 5
    %v3401 = vor.u32 %v3397, %v3400
    %v3402 = vrot.slane %v3401, 4
    %v3404 = vshll.u32 %v3247, 16
    %v3406 = vrot.slane %v3404, 5
    %v3407 = vsel %vm873, %v3402, %v3406
    %v3409 = vshrl.u32 %v3248, 16
    %v3411 = vrot.slane %v3409, 4
    %v3412 = vshll.u32 %v3248, 16
    %v3414 = vrot.slane %v3412, 5
    %v3415 = vor.u32 %v3411, %v3414
    %v3416 = vrot.slane %v3415, 4
    %v3418 = vshll.u32 %v3249, 16
    %v3420 = vrot.slane %v3418, 5
    %v3421 = vsel %vm873, %v3416, %v3420
    %v3423 = vshrl.u32 %v3250, 16
    %v3425 = vrot.slane %v3423, 4
    %v3426 = vshll.u32 %v3250, 16
    %v3428 = vrot.slane %v3426, 5
    %v3429 = vor.u32 %v3425, %v3428
    %v3430 = vrot.slane %v3429, 4
    %v3432 = vshll.u32 %v3251, 16
    %v3434 = vrot.slane %v3432, 5
    %v3435 = vsel %vm873, %v3430, %v3434
    %v3437 = vshrl.u32 %v3252, 16
    %v3439 = vrot.slane %v3437, 4
    %v3440 = vshll.u32 %v3252, 16
    %v3442 = vrot.slane %v3440, 5
    %v3443 = vor.u32 %v3439, %v3442
    %v3444 = vrot.slane %v3443, 4
    %v3446 = vshll.u32 %v3253, 16
    %v3448 = vrot.slane %v3446, 5
    %v3449 = vsel %vm873, %v3444, %v3448
    %v3450 = vrot.slane %v3226, 5
    %v3451 = vrot.slane %v3450, 4
    %v3452 = vrot.slane %v3227, 5
    %v3453 = vsel %vm1086, %v3451, %v3452
    %v3454 = vrot.slane %v3228, 5
    %v3455 = vrot.slane %v3454, 4
    %v3456 = vrot.slane %v3229, 5
    %v3457 = vsel %vm1086, %v3455, %v3456
    %v3458 = vrot.slane %v3230, 5
    %v3459 = vrot.slane %v3458, 4
    %v3460 = vrot.slane %v3231, 5
    %v3461 = vsel %vm1086, %v3459, %v3460
    %v3462 = vrot.slane %v3232, 5
    %v3463 = vrot.slane %v3462, 4
    %v3464 = vrot.slane %v3233, 5
    %v3465 = vsel %vm1086, %v3463, %v3464
    %v3466 = vrot.slane %v3234, 5
    %v3467 = vrot.slane %v3466, 4
    %v3468 = vrot.slane %v3235, 5
    %v3469 = vsel %vm1086, %v3467, %v3468
    %v3470 = vrot.slane %v3236, 5
    %v3471 = vrot.slane %v3470, 4
    %v3472 = vrot.slane %v3237, 5
    %v3473 = vsel %vm1086, %v3471, %v3472
    %v3474 = vrot.slane %v3238, 5
    %v3475 = vrot.slane %v3474, 4
    %v3476 = vrot.slane %v3239, 5
    %v3477 = vsel %vm1086, %v3475, %v3476
    %v3478 = vrot.slane %v3240, 5
    %v3479 = vrot.slane %v3478, 4
    %v3480 = vrot.slane %v3241, 5
    %v3481 = vsel %vm1086, %v3479, %v3480
    %v3482 = vrot.slane %v3242, 5
    %v3483 = vrot.slane %v3482, 4
    %v3484 = vrot.slane %v3243, 5
    %v3485 = vsel %vm1086, %v3483, %v3484
    %v3486 = vrot.slane %v3244, 5
    %v3487 = vrot.slane %v3486, 4
    %v3488 = vrot.slane %v3245, 5
    %v3489 = vsel %vm1086, %v3487, %v3488
    %v3490 = vrot.slane %v3246, 5
    %v3491 = vrot.slane %v3490, 4
    %v3492 = vrot.slane %v3247, 5
    %v3493 = vsel %vm1086, %v3491, %v3492
    %v3494 = vrot.slane %v3248, 5
    %v3495 = vrot.slane %v3494, 4
    %v3496 = vrot.slane %v3249, 5
    %v3497 = vsel %vm1086, %v3495, %v3496
    %v3498 = vrot.slane %v3250, 5
    %v3499 = vrot.slane %v3498, 4
    %v3500 = vrot.slane %v3251, 5
    %v3501 = vsel %vm1086, %v3499, %v3500
    %v3502 = vrot.slane %v3252, 5
    %v3503 = vrot.slane %v3502, 4
    %v3504 = vrot.slane %v3253, 5
    %v3505 = vsel %vm1086, %v3503, %v3504
    %v3508 = vunpack.c.l.b16 %v3175
    %v3509 = vunpack.c.h.b16 %v3175
    %v3510 = vunpack.c.l.b16 %v3183
    %v3511 = vunpack.c.h.b16 %v3183
    %v3512 = vpack.c.b16 %v3508, %v3508
    %v3513 = vpack.c.b16 %v3509, %v3509
    %v3514 = vpack.c.b16 %v3510, %v3510
    %v3515 = vpack.c.b16 %v3511, %v3511
    %v3517 = vshrl.u32 %v3512, 16
    %v3519 = vrot.slane %v3517, 4
    %v3520 = vshll.u32 %v3512, 16
    %v3522 = vrot.slane %v3520, 5
    %v3523 = vor.u32 %v3519, %v3522
    %v3524 = vrot.slane %v3523, 4
    %v3526 = vshll.u32 %v3513, 16
    %v3528 = vrot.slane %v3526, 5
    %v3529 = vsel %vm873, %v3524, %v3528
    %v3531 = vshrl.u32 %v3514, 16
    %v3533 = vrot.slane %v3531, 4
    %v3534 = vshll.u32 %v3514, 16
    %v3536 = vrot.slane %v3534, 5
    %v3537 = vor.u32 %v3533, %v3536
    %v3538 = vrot.slane %v3537, 4
    %v3540 = vshll.u32 %v3515, 16
    %v3542 = vrot.slane %v3540, 5
    %v3543 = vsel %vm873, %v3538, %v3542
    %v3544 = vrot.slane %v3512, 5
    %v3545 = vrot.slane %v3544, 4
    %v3546 = vrot.slane %v3513, 5
    %v3547 = vsel %vm1086, %v3545, %v3546
    %v3548 = vrot.slane %v3514, 5
    %v3549 = vrot.slane %v3548, 4
    %v3550 = vrot.slane %v3515, 5
    %v3551 = vsel %vm1086, %v3549, %v3550
    %v3552 = vpack.c.b16 %v3198, %v811
    %v3553 = vpack.c.b16 %v3202, %v3200
    %v3554 = vpack.c.b16 %v3206, %v3204
    %v3555 = vpack.c.b16 %v3210, %v3208
    %v3556 = vpack.c.b16 %v3212, %v811
    %v3557 = vpack.c.b16 %v3216, %v3214
    %v3558 = vpack.c.b16 %v3220, %v3218
    %v3559 = vpack.c.b16 %v3224, %v3222
    %v3568 = vunpack.c.l.b16 %v3267
    %v3569 = vunpack.c.l.b16 %v3281
    %v3570 = vunpack.c.l.b16 %v3295
    %v3571 = vunpack.c.l.b16 %v3309
    %v3572 = vunpack.c.l.b16 %v3323
    %v3573 = vunpack.c.l.b16 %v3337
    %v3574 = vunpack.c.l.b16 %v3351
    %v3575 = vunpack.c.l.b16 %v3365
    %v3576 = vunpack.c.l.b16 %v3379
    %v3577 = vunpack.c.l.b16 %v3393
    %v3578 = vunpack.c.l.b16 %v3407
    %v3579 = vunpack.c.l.b16 %v3421
    %v3580 = vunpack.c.l.b16 %v3435
    %v3581 = vunpack.c.l.b16 %v3449
    %v3582 = vpack.c.b16 %v3568, %v1209
    %v3583 = vpack.c.b16 %v3570, %v3569
    %v3584 = vpack.c.b16 %v3572, %v3571
    %v3585 = vpack.c.b16 %v3574, %v3573
    %v3586 = vpack.c.b16 %v3575, %v1209
    %v3587 = vpack.c.b16 %v3577, %v3576
    %v3588 = vpack.c.b16 %v3579, %v3578
    %v3589 = vpack.c.b16 %v3581, %v3580
    %v3598 = vunpack.c.l.b16 %v3453
    %v3599 = vunpack.c.l.b16 %v3457
    %v3600 = vunpack.c.l.b16 %v3461
    %v3601 = vunpack.c.l.b16 %v3465
    %v3602 = vunpack.c.l.b16 %v3469
    %v3603 = vunpack.c.l.b16 %v3473
    %v3604 = vunpack.c.l.b16 %v3477
    %v3605 = vunpack.c.l.b16 %v3481
    %v3606 = vunpack.c.l.b16 %v3485
    %v3607 = vunpack.c.l.b16 %v3489
    %v3608 = vunpack.c.l.b16 %v3493
    %v3609 = vunpack.c.l.b16 %v3497
    %v3610 = vunpack.c.l.b16 %v3501
    %v3611 = vunpack.c.l.b16 %v3505
    %v3612 = vpack.c.b16 %v3598, %v1240
    %v3613 = vpack.c.b16 %v3600, %v3599
    %v3614 = vpack.c.b16 %v3602, %v3601
    %v3615 = vpack.c.b16 %v3604, %v3603
    %v3616 = vpack.c.b16 %v3605, %v1240
    %v3617 = vpack.c.b16 %v3607, %v3606
    %v3618 = vpack.c.b16 %v3609, %v3608
    %v3619 = vpack.c.b16 %v3611, %v3610
    %v3628 = vpack.c.b16 %v3200, %v3198
    %v3629 = vpack.c.b16 %v3204, %v3202
    %v3630 = vpack.c.b16 %v3208, %v3206
    %v3631 = vpack.c.b16 %v3508, %v3210
    %v3632 = vpack.c.b16 %v3214, %v3212
    %v3633 = vpack.c.b16 %v3218, %v3216
    %v3634 = vpack.c.b16 %v3222, %v3220
    %v3635 = vpack.c.b16 %v3510, %v3224
    %v3644 = vunpack.c.l.b16 %v3529
    %v3645 = vunpack.c.l.b16 %v3543
    %v3646 = vpack.c.b16 %v3569, %v3568
    %v3647 = vpack.c.b16 %v3571, %v3570
    %v3648 = vpack.c.b16 %v3573, %v3572
    %v3649 = vpack.c.b16 %v3644, %v3574
    %v3650 = vpack.c.b16 %v3576, %v3575
    %v3651 = vpack.c.b16 %v3578, %v3577
    %v3652 = vpack.c.b16 %v3580, %v3579
    %v3653 = vpack.c.b16 %v3645, %v3581
    %v3662 = vunpack.c.l.b16 %v3547
    %v3663 = vunpack.c.l.b16 %v3551
    %v3664 = vpack.c.b16 %v3599, %v3598
    %v3665 = vpack.c.b16 %v3601, %v3600
    %v3666 = vpack.c.b16 %v3603, %v3602
    %v3667 = vpack.c.b16 %v3662, %v3604
    %v3668 = vpack.c.b16 %v3606, %v3605
    %v3669 = vpack.c.b16 %v3608, %v3607
    %v3670 = vpack.c.b16 %v3610, %v3609
    %v3671 = vpack.c.b16 %v3663, %v3611
    %v3680 = vpack.c.b16 %v811, %v3508
    %v3681 = vpack.c.b16 %v811, %v3510
    %v3684 = vpack.c.b16 %v1209, %v3644
    %v3685 = vpack.c.b16 %v1209, %v3645
    %v3688 = vpack.c.b16 %v1240, %v3662
    %v3689 = vpack.c.b16 %v1240, %v3663
    %v3692 = vld [vmem:[%s10] sm:$0xf]
    %v3693 = vld [vmem:[%s10 + $0x4] sm:$0xf]
    %v3694 = vld [vmem:[%s10 + $0x8] sm:$0xf]
    %v3695 = vld [vmem:[%s10 + $0xc] sm:$0xf]
    %v3696 = vld [vmem:[%s10 + $0x10] sm:$0xf]
    %v3697 = vld [vmem:[%s10 + $0x14] sm:$0xf]
    %v3698 = vld [vmem:[%s10 + $0x18] sm:$0xf]
    %v3699 = vld [vmem:[%s10 + $0x1c] sm:$0xf]
    %v3700 = vld [vmem:[%s10 + $0x20] sm:$0xf]
    %v3701 = vld [vmem:[%s10 + $0x24] sm:$0xf]
    %v3702 = vld [vmem:[%s10 + $0x28] sm:$0xf]
    %v3703 = vld [vmem:[%s10 + $0x2c] sm:$0xf]
    %v3704 = vld [vmem:[%s10 + $0x30] sm:$0xf]
    %v3705 = vld [vmem:[%s10 + $0x34] sm:$0xf]
    %v3706 = vld [vmem:[%s10 + $0x38] sm:$0xf]
    %v3707 = vld [vmem:[%s10 + $0x3c] sm:$0xf]
    %v3708 = vld [vmem:[%s10 + $0x40] sm:$0xf]
    %v3709 = vld [vmem:[%s10 + $0x44] sm:$0xf]
    %v3710 = vld [vmem:[%s10 + $0x48] sm:$0xf]
    %v3711 = vld [vmem:[%s10 + $0x4c] sm:$0xf]
    %v3712 = vld [vmem:[%s10 + $0x50] sm:$0xf]
    %v3713 = vld [vmem:[%s10 + $0x54] sm:$0xf]
    %v3714 = vld [vmem:[%s10 + $0x58] sm:$0xf]
    %v3715 = vld [vmem:[%s10 + $0x5c] sm:$0xf]
    %v3716 = vld [vmem:[%s10 + $0x60] sm:$0xf]
    %v3717 = vld [vmem:[%s10 + $0x64] sm:$0xf]
    %v3718 = vld [vmem:[%s10 + $0x68] sm:$0xf]
    %v3719 = vld [vmem:[%s10 + $0x6c] sm:$0xf]
    %v3720 = vld [vmem:[%s10 + $0x70] sm:$0xf]
    %v3721 = vld [vmem:[%s10 + $0x74] sm:$0xf]
    %v3722 = vld [vmem:[%s10 + $0x78] sm:$0xf]
    %v3723 = vld [vmem:[%s10 + $0x7c] sm:$0xf]
    %v3724 = vld [vmem:[%s10 + $0x80] sm:$0xf]
    %v3725 = vld [vmem:[%s10 + $0x84] sm:$0xf]
    %v3726 = vld [vmem:[%s10 + $0x88] sm:$0xf]
    %v3727 = vld [vmem:[%s10 + $0x8c] sm:$0xf]
    %v3728 = vld [vmem:[%s10 + $0x90] sm:$0xf]
    %v3729 = vld [vmem:[%s10 + $0x94] sm:$0xf]
    %v3730 = vld [vmem:[%s10 + $0x98] sm:$0xf]
    %v3731 = vld [vmem:[%s10 + $0x9c] sm:$0xf]
    %v3732 = vld [vmem:[%s10 + $0xa0] sm:$0xf]
    %v3733 = vld [vmem:[%s10 + $0xa4] sm:$0xf]
    %v3734 = vld [vmem:[%s10 + $0xa8] sm:$0xf]
    %v3735 = vld [vmem:[%s10 + $0xac] sm:$0xf]
    %v3736 = vld [vmem:[%s10 + $0xb0] sm:$0xf]
    %v3737 = vld [vmem:[%s10 + $0xb4] sm:$0xf]
    %v3738 = vld [vmem:[%s10 + $0xb8] sm:$0xf]
    %v3739 = vld [vmem:[%s10 + $0xbc] sm:$0xf]
    %v3740 = vld [vmem:[%s10 + $0xc0] sm:$0xf]
    %v3741 = vld [vmem:[%s10 + $0xc4] sm:$0xf]
    %v3742 = vld [vmem:[%s10 + $0xc8] sm:$0xf]
    %v3743 = vld [vmem:[%s10 + $0xcc] sm:$0xf]
    %v3744 = vld [vmem:[%s10 + $0xd0] sm:$0xf]
    %v3745 = vld [vmem:[%s10 + $0xd4] sm:$0xf]
    %v3746 = vld [vmem:[%s10 + $0xd8] sm:$0xf]
    %v3747 = vld [vmem:[%s10 + $0xdc] sm:$0xf]
    %v3748 = vld [vmem:[%s10 + $0xe0] sm:$0xf]
    %v3749 = vld [vmem:[%s10 + $0xe4] sm:$0xf]
    %v3750 = vld [vmem:[%s10 + $0xe8] sm:$0xf]
    %v3751 = vld [vmem:[%s10 + $0xec] sm:$0xf]
    %v3752 = vld [vmem:[%s10 + $0xf0] sm:$0xf]
    %v3753 = vld [vmem:[%s10 + $0xf4] sm:$0xf]
    %v3754 = vld [vmem:[%s10 + $0xf8] sm:$0xf]
    %v3755 = vld [vmem:[%s10 + $0xfc] sm:$0xf]
    %v3756 = vld [vmem:[%s10 + $0x100] sm:$0xf]
    %v3757 = vld [vmem:[%s10 + $0x104] sm:$0xf]
    %v3758 = vld [vmem:[%s10 + $0x108] sm:$0xf]
    %v3759 = vld [vmem:[%s10 + $0x10c] sm:$0xf]
    %v3760 = vld [vmem:[%s10 + $0x110] sm:$0xf]
    %v3761 = vld [vmem:[%s10 + $0x114] sm:$0xf]
    %v3762 = vld [vmem:[%s10 + $0x118] sm:$0xf]
    %v3763 = vld [vmem:[%s10 + $0x11c] sm:$0xf]
    %v3764 = vld [vmem:[%s10 + $0x120] sm:$0xf]
    %v3765 = vld [vmem:[%s10 + $0x124] sm:$0xf]
    %v3766 = vld [vmem:[%s10 + $0x128] sm:$0xf]
    %v3767 = vld [vmem:[%s10 + $0x12c] sm:$0xf]
    %v3768 = vld [vmem:[%s10 + $0x130] sm:$0xf]
    %v3769 = vld [vmem:[%s10 + $0x134] sm:$0xf]
    %v3770 = vld [vmem:[%s10 + $0x138] sm:$0xf]
    %v3771 = vld [vmem:[%s10 + $0x13c] sm:$0xf]
    %v3772 = vld [vmem:[%s10 + $0x140] sm:$0xf]
    %v3773 = vld [vmem:[%s10 + $0x144] sm:$0xf]
    %v3774 = vld [vmem:[%s10 + $0x148] sm:$0xf]
    %v3775 = vld [vmem:[%s10 + $0x14c] sm:$0xf]
    %v3776 = vld [vmem:[%s10 + $0x150] sm:$0xf]
    %v3777 = vld [vmem:[%s10 + $0x154] sm:$0xf]
    %v3778 = vld [vmem:[%s10 + $0x158] sm:$0xf]
    %v3779 = vld [vmem:[%s10 + $0x15c] sm:$0xf]
    %v3780 = vld [vmem:[%s10 + $0x160] sm:$0xf]
    %v3781 = vld [vmem:[%s10 + $0x164] sm:$0xf]
    %v3782 = vld [vmem:[%s10 + $0x168] sm:$0xf]
    %v3783 = vld [vmem:[%s10 + $0x16c] sm:$0xf]
    %v3784 = vld [vmem:[%s10 + $0x170] sm:$0xf]
    %v3785 = vld [vmem:[%s10 + $0x174] sm:$0xf]
    %v3786 = vld [vmem:[%s10 + $0x178] sm:$0xf]
    %v3787 = vld [vmem:[%s10 + $0x17c] sm:$0xf]
    %v3788 = vld [vmem:[%s10 + $0x180] sm:$0xf]
    %v3789 = vld [vmem:[%s10 + $0x184] sm:$0xf]
    %v3790 = vld [vmem:[%s10 + $0x188] sm:$0xf]
    %v3791 = vld [vmem:[%s10 + $0x18c] sm:$0xf]
    %v3792 = vld [vmem:[%s10 + $0x190] sm:$0xf]
    %v3793 = vld [vmem:[%s10 + $0x194] sm:$0xf]
    %v3794 = vld [vmem:[%s10 + $0x198] sm:$0xf]
    %v3795 = vld [vmem:[%s10 + $0x19c] sm:$0xf]
    %v3796 = vld [vmem:[%s10 + $0x1a0] sm:$0xf]
    %v3797 = vld [vmem:[%s10 + $0x1a4] sm:$0xf]
    %v3798 = vld [vmem:[%s10 + $0x1a8] sm:$0xf]
    %v3799 = vld [vmem:[%s10 + $0x1ac] sm:$0xf]
    %v3800 = vld [vmem:[%s10 + $0x1b0] sm:$0xf]
    %v3801 = vld [vmem:[%s10 + $0x1b4] sm:$0xf]
    %v3802 = vld [vmem:[%s10 + $0x1b8] sm:$0xf]
    %v3803 = vld [vmem:[%s10 + $0x1bc] sm:$0xf]
    %v3804 = vld [vmem:[%s10 + $0x1c0] sm:$0xf]
    %v3805 = vld [vmem:[%s10 + $0x1c4] sm:$0xf]
    %v3806 = vld [vmem:[%s10 + $0x1c8] sm:$0xf]
    %v3807 = vld [vmem:[%s10 + $0x1cc] sm:$0xf]
    %v3808 = vld [vmem:[%s10 + $0x1d0] sm:$0xf]
    %v3809 = vld [vmem:[%s10 + $0x1d4] sm:$0xf]
    %v3810 = vld [vmem:[%s10 + $0x1d8] sm:$0xf]
    %v3811 = vld [vmem:[%s10 + $0x1dc] sm:$0xf]
    %v3812 = vld [vmem:[%s10 + $0x1e0] sm:$0xf]
    %v3813 = vld [vmem:[%s10 + $0x1e4] sm:$0xf]
    %v3814 = vld [vmem:[%s10 + $0x1e8] sm:$0xf]
    %v3815 = vld [vmem:[%s10 + $0x1ec] sm:$0xf]
    %v3816 = vld [vmem:[%s10 + $0x1f0] sm:$0xf]
    %v3817 = vld [vmem:[%s10 + $0x1f4] sm:$0xf]
    %v3818 = vld [vmem:[%s10 + $0x1f8] sm:$0xf]
    %v3819 = vld [vmem:[%s10 + $0x1fc] sm:$0xf]
    %v3820 = vld [vmem:[%s10 + $0x200] sm:$0xf]
    %v3821 = vld [vmem:[%s10 + $0x204] sm:$0xf]
    %v3822 = vld [vmem:[%s10 + $0x208] sm:$0xf]
    %v3823 = vld [vmem:[%s10 + $0x20c] sm:$0xf]
    %v3824 = vld [vmem:[%s10 + $0x210] sm:$0xf]
    %v3825 = vld [vmem:[%s10 + $0x214] sm:$0xf]
    %v3826 = vld [vmem:[%s10 + $0x218] sm:$0xf]
    %v3827 = vld [vmem:[%s10 + $0x21c] sm:$0xf]
    %v3828 = vld [vmem:[%s10 + $0x220] sm:$0xf]
    %v3829 = vld [vmem:[%s10 + $0x224] sm:$0xf]
    %v3830 = vld [vmem:[%s10 + $0x228] sm:$0xf]
    %v3831 = vld [vmem:[%s10 + $0x22c] sm:$0xf]
    %v3832 = vld [vmem:[%s10 + $0x230] sm:$0xf]
    %v3833 = vld [vmem:[%s10 + $0x234] sm:$0xf]
    %v3834 = vld [vmem:[%s10 + $0x238] sm:$0xf]
    %v3835 = vld [vmem:[%s10 + $0x23c] sm:$0xf]
    %v3836 = vld [vmem:[%s11] sm:$0x1]
    %v3838 = vlaneseq
    %v3839 = vshrl.u32 %v3838, 7
    %v3840 = vsub.s32 0, %v3839
    %v3841 = vrot.slane %v3836, %v3840
    %v3987 = vunpack.c.l.b16 %v3692
    %v3988 = vunpack.c.l.b16 %v3693
    %v3989 = vunpack.c.l.b16 %v3694
    %v3990 = vunpack.c.l.b16 %v3695
    %v3991 = vunpack.c.l.b16 %v3696
    %v3992 = vunpack.c.l.b16 %v3697
    %v3993 = vunpack.c.l.b16 %v3698
    %v3994 = vunpack.c.l.b16 %v3699
    %v3995 = vunpack.c.l.b16 %v3700
    %v3996 = vunpack.c.l.b16 %v3701
    %v3997 = vunpack.c.l.b16 %v3702
    %v3998 = vunpack.c.l.b16 %v3703
    %v3999 = vunpack.c.l.b16 %v3704
    %v4000 = vunpack.c.l.b16 %v3705
    %v4001 = vunpack.c.l.b16 %v3706
    %v4002 = vunpack.c.l.b16 %v3707
    %v4003 = vunpack.c.l.b16 %v3708
    %v4004 = vunpack.c.l.b16 %v3709
    %v4005 = vunpack.c.l.b16 %v3710
    %v4006 = vunpack.c.l.b16 %v3711
    %v4007 = vunpack.c.l.b16 %v3712
    %v4008 = vunpack.c.l.b16 %v3713
    %v4009 = vunpack.c.l.b16 %v3714
    %v4010 = vunpack.c.l.b16 %v3715
    %v4011 = vunpack.c.l.b16 %v3716
    %v4012 = vunpack.c.l.b16 %v3717
    %v4013 = vunpack.c.l.b16 %v3718
    %v4014 = vunpack.c.l.b16 %v3719
    %v4015 = vunpack.c.l.b16 %v3720
    %v4016 = vunpack.c.l.b16 %v3721
    %v4017 = vunpack.c.l.b16 %v3722
    %v4018 = vunpack.c.l.b16 %v3723
    %v4019 = vunpack.c.l.b16 %v3724
    %v4020 = vunpack.c.l.b16 %v3725
    %v4021 = vunpack.c.l.b16 %v3726
    %v4022 = vunpack.c.l.b16 %v3727
    %v4023 = vunpack.c.l.b16 %v3728
    %v4024 = vunpack.c.l.b16 %v3729
    %v4025 = vunpack.c.l.b16 %v3730
    %v4026 = vunpack.c.l.b16 %v3731
    %v4027 = vunpack.c.l.b16 %v3732
    %v4028 = vunpack.c.l.b16 %v3733
    %v4029 = vunpack.c.l.b16 %v3734
    %v4030 = vunpack.c.l.b16 %v3735
    %v4031 = vunpack.c.l.b16 %v3736
    %v4032 = vunpack.c.l.b16 %v3737
    %v4033 = vunpack.c.l.b16 %v3738
    %v4034 = vunpack.c.l.b16 %v3739
    %v4035 = vunpack.c.l.b16 %v3740
    %v4036 = vunpack.c.l.b16 %v3741
    %v4037 = vunpack.c.l.b16 %v3742
    %v4038 = vunpack.c.l.b16 %v3743
    %v4039 = vunpack.c.l.b16 %v3744
    %v4040 = vunpack.c.l.b16 %v3745
    %v4041 = vunpack.c.l.b16 %v3746
    %v4042 = vunpack.c.l.b16 %v3747
    %v4043 = vunpack.c.l.b16 %v3748
    %v4044 = vunpack.c.l.b16 %v3749
    %v4045 = vunpack.c.l.b16 %v3750
    %v4046 = vunpack.c.l.b16 %v3751
    %v4047 = vunpack.c.l.b16 %v3752
    %v4048 = vunpack.c.l.b16 %v3753
    %v4049 = vunpack.c.l.b16 %v3754
    %v4050 = vunpack.c.l.b16 %v3755
    %v4051 = vunpack.c.l.b16 %v3756
    %v4052 = vunpack.c.l.b16 %v3757
    %v4053 = vunpack.c.l.b16 %v3758
    %v4054 = vunpack.c.l.b16 %v3759
    %v4055 = vunpack.c.l.b16 %v3760
    %v4056 = vunpack.c.l.b16 %v3761
    %v4057 = vunpack.c.l.b16 %v3762
    %v4058 = vunpack.c.l.b16 %v3763
    %v4059 = vunpack.c.l.b16 %v3764
    %v4060 = vunpack.c.l.b16 %v3765
    %v4061 = vunpack.c.l.b16 %v3766
    %v4062 = vunpack.c.l.b16 %v3767
    %v4063 = vunpack.c.l.b16 %v3768
    %v4064 = vunpack.c.l.b16 %v3769
    %v4065 = vunpack.c.l.b16 %v3770
    %v4066 = vunpack.c.l.b16 %v3771
    %v4067 = vunpack.c.l.b16 %v3772
    %v4068 = vunpack.c.l.b16 %v3773
    %v4069 = vunpack.c.l.b16 %v3774
    %v4070 = vunpack.c.l.b16 %v3775
    %v4071 = vunpack.c.l.b16 %v3776
    %v4072 = vunpack.c.l.b16 %v3777
    %v4073 = vunpack.c.l.b16 %v3778
    %v4074 = vunpack.c.l.b16 %v3779
    %v4075 = vunpack.c.l.b16 %v3780
    %v4076 = vunpack.c.l.b16 %v3781
    %v4077 = vunpack.c.l.b16 %v3782
    %v4078 = vunpack.c.l.b16 %v3783
    %v4079 = vunpack.c.l.b16 %v3784
    %v4080 = vunpack.c.l.b16 %v3785
    %v4081 = vunpack.c.l.b16 %v3786
    %v4082 = vunpack.c.l.b16 %v3787
    %v4083 = vunpack.c.l.b16 %v3788
    %v4084 = vunpack.c.l.b16 %v3789
    %v4085 = vunpack.c.l.b16 %v3790
    %v4086 = vunpack.c.l.b16 %v3791
    %v4087 = vunpack.c.l.b16 %v3792
    %v4088 = vunpack.c.l.b16 %v3793
    %v4089 = vunpack.c.l.b16 %v3794
    %v4090 = vunpack.c.l.b16 %v3795
    %v4091 = vunpack.c.l.b16 %v3796
    %v4092 = vunpack.c.l.b16 %v3797
    %v4093 = vunpack.c.l.b16 %v3798
    %v4094 = vunpack.c.l.b16 %v3799
    %v4095 = vunpack.c.l.b16 %v3800
    %v4096 = vunpack.c.l.b16 %v3801
    %v4097 = vunpack.c.l.b16 %v3802
    %v4098 = vunpack.c.l.b16 %v3803
    %v4099 = vunpack.c.l.b16 %v3804
    %v4100 = vunpack.c.l.b16 %v3805
    %v4101 = vunpack.c.l.b16 %v3806
    %v4102 = vunpack.c.l.b16 %v3807
    %v4103 = vunpack.c.l.b16 %v3808
    %v4104 = vunpack.c.l.b16 %v3809
    %v4105 = vunpack.c.l.b16 %v3810
    %v4106 = vunpack.c.l.b16 %v3811
    %v4107 = vunpack.c.l.b16 %v3812
    %v4108 = vunpack.c.l.b16 %v3813
    %v4109 = vunpack.c.l.b16 %v3814
    %v4110 = vunpack.c.l.b16 %v3815
    %v4111 = vunpack.c.l.b16 %v3816
    %v4112 = vunpack.c.l.b16 %v3817
    %v4113 = vunpack.c.l.b16 %v3818
    %v4114 = vunpack.c.l.b16 %v3819
    %v4115 = vunpack.c.l.b16 %v3820
    %v4116 = vunpack.c.l.b16 %v3821
    %v4117 = vunpack.c.l.b16 %v3822
    %v4118 = vunpack.c.l.b16 %v3823
    %v4119 = vunpack.c.l.b16 %v3824
    %v4120 = vunpack.c.l.b16 %v3825
    %v4121 = vunpack.c.l.b16 %v3826
    %v4122 = vunpack.c.l.b16 %v3827
    %v4123 = vunpack.c.l.b16 %v3828
    %v4124 = vunpack.c.l.b16 %v3829
    %v4125 = vunpack.c.l.b16 %v3830
    %v4126 = vunpack.c.l.b16 %v3831
    %v4127 = vunpack.c.l.b16 %v3832
    %v4128 = vunpack.c.l.b16 %v3833
    %v4129 = vunpack.c.l.b16 %v3834
    %v4130 = vunpack.c.l.b16 %v3835
    %v4131 = vpack.c.b16 %v3988, %v3987
    %v4132 = vpack.c.b16 %v3990, %v3989
    %v4133 = vpack.c.b16 %v3992, %v3991
    %v4134 = vpack.c.b16 %v3994, %v3993
    %v4135 = vpack.c.b16 %v3996, %v3995
    %v4136 = vpack.c.b16 %v3998, %v3997
    %v4137 = vpack.c.b16 %v4000, %v3999
    %v4138 = vpack.c.b16 %v4002, %v4001
    %v4139 = vpack.c.b16 %v4004, %v4003
    %v4140 = vpack.c.b16 %v4006, %v4005
    %v4141 = vpack.c.b16 %v4008, %v4007
    %v4142 = vpack.c.b16 %v4010, %v4009
    %v4143 = vpack.c.b16 %v4012, %v4011
    %v4144 = vpack.c.b16 %v4014, %v4013
    %v4145 = vpack.c.b16 %v4016, %v4015
    %v4146 = vpack.c.b16 %v4018, %v4017
    %v4147 = vpack.c.b16 %v4020, %v4019
    %v4148 = vpack.c.b16 %v4022, %v4021
    %v4149 = vpack.c.b16 %v4024, %v4023
    %v4150 = vpack.c.b16 %v4026, %v4025
    %v4151 = vpack.c.b16 %v4028, %v4027
    %v4152 = vpack.c.b16 %v4030, %v4029
    %v4153 = vpack.c.b16 %v4032, %v4031
    %v4154 = vpack.c.b16 %v4034, %v4033
    %v4155 = vpack.c.b16 %v4036, %v4035
    %v4156 = vpack.c.b16 %v4038, %v4037
    %v4157 = vpack.c.b16 %v4040, %v4039
    %v4158 = vpack.c.b16 %v4042, %v4041
    %v4159 = vpack.c.b16 %v4044, %v4043
    %v4160 = vpack.c.b16 %v4046, %v4045
    %v4161 = vpack.c.b16 %v4048, %v4047
    %v4162 = vpack.c.b16 %v4050, %v4049
    %v4163 = vpack.c.b16 %v4052, %v4051
    %v4164 = vpack.c.b16 %v4054, %v4053
    %v4165 = vpack.c.b16 %v4056, %v4055
    %v4166 = vpack.c.b16 %v4058, %v4057
    %v4167 = vpack.c.b16 %v4060, %v4059
    %v4168 = vpack.c.b16 %v4062, %v4061
    %v4169 = vpack.c.b16 %v4064, %v4063
    %v4170 = vpack.c.b16 %v4066, %v4065
    %v4171 = vpack.c.b16 %v4068, %v4067
    %v4172 = vpack.c.b16 %v4070, %v4069
    %v4173 = vpack.c.b16 %v4072, %v4071
    %v4174 = vpack.c.b16 %v4074, %v4073
    %v4175 = vpack.c.b16 %v4076, %v4075
    %v4176 = vpack.c.b16 %v4078, %v4077
    %v4177 = vpack.c.b16 %v4080, %v4079
    %v4178 = vpack.c.b16 %v4082, %v4081
    %v4179 = vpack.c.b16 %v4084, %v4083
    %v4180 = vpack.c.b16 %v4086, %v4085
    %v4181 = vpack.c.b16 %v4088, %v4087
    %v4182 = vpack.c.b16 %v4090, %v4089
    %v4183 = vpack.c.b16 %v4092, %v4091
    %v4184 = vpack.c.b16 %v4094, %v4093
    %v4185 = vpack.c.b16 %v4096, %v4095
    %v4186 = vpack.c.b16 %v4098, %v4097
    %v4187 = vpack.c.b16 %v4100, %v4099
    %v4188 = vpack.c.b16 %v4102, %v4101
    %v4189 = vpack.c.b16 %v4104, %v4103
    %v4190 = vpack.c.b16 %v4106, %v4105
    %v4191 = vpack.c.b16 %v4108, %v4107
    %v4192 = vpack.c.b16 %v4110, %v4109
    %v4193 = vpack.c.b16 %v4112, %v4111
    %v4194 = vpack.c.b16 %v4114, %v4113
    %v4195 = vpack.c.b16 %v4116, %v4115
    %v4196 = vpack.c.b16 %v4118, %v4117
    %v4197 = vpack.c.b16 %v4120, %v4119
    %v4198 = vpack.c.b16 %v4122, %v4121
    %v4199 = vpack.c.b16 %v4124, %v4123
    %v4200 = vpack.c.b16 %v4126, %v4125
    %v4201 = vpack.c.b16 %v4128, %v4127
    %v4202 = vpack.c.b16 %v4130, %v4129
    %4275 = vmatprep.subr.bf16.mxu0 0
    %4276 = vmatpush1.bf16.msra.mxu0 %v4131
    %4277 = vmatprep.subr.bf16.mxu0 0
    %4278 = vmatpush1.bf16.msra.mxu0 %v4132
    %4279 = vmatprep.subr.bf16.mxu0 0
    %4280 = vmatpush1.bf16.msra.mxu0 %v4133
    %4281 = vmatprep.subr.bf16.mxu0 0
    %4282 = vmatpush1.bf16.msra.mxu0 %v4134
    %4283 = vmatprep.subr.bf16.mxu0 0
    %4284 = vmatpush1.bf16.msra.mxu0 %v4135
    %4285 = vmatprep.subr.bf16.mxu0 0
    %4286 = vmatpush1.bf16.msra.mxu0 %v4136
    %4287 = vmatprep.subr.bf16.mxu0 0
    %4288 = vmatpush1.bf16.msra.mxu0 %v4137
    %4289 = vmatprep.subr.bf16.mxu0 0
    %4290 = vmatpush1.bf16.msra.mxu0 %v4138
    %4291 = vmatprep.subr.bf16.mxu0 0
    %4292 = vmatpush1.bf16.msra.mxu0 %v4139
    %4293 = vmatprep.subr.bf16.mxu0 0
    %4294 = vmatpush1.bf16.msra.mxu0 %v4140
    %4295 = vmatprep.subr.bf16.mxu0 0
    %4296 = vmatpush1.bf16.msra.mxu0 %v4141
    %4297 = vmatprep.subr.bf16.mxu0 0
    %4298 = vmatpush1.bf16.msra.mxu0 %v4142
    %4299 = vmatprep.subr.bf16.mxu0 0
    %4300 = vmatpush1.bf16.msra.mxu0 %v4143
    %4301 = vmatprep.subr.bf16.mxu0 0
    %4302 = vmatpush1.bf16.msra.mxu0 %v4144
    %4303 = vmatprep.subr.bf16.mxu0 0
    %4304 = vmatpush1.bf16.msra.mxu0 %v4145
    %4305 = vmatprep.subr.bf16.mxu0 0
    %4306 = vmatpush1.bf16.msra.mxu0 %v4146
    %4307 = vmatprep.mubr.bf16.mxu0 %v3582
    %4308 = vmatmul.mubr.bf16.gmra.mrb[0].mxu0 %v3552
    %v4309 = vpop.f32.mrb[0].mxu0
    %v4310 = vadd.f32 %v3841, %v4309
    %v4311 = vpop.f32.mrb[0].mxu0
    %v4312 = vpop.f32.mrb[0].mxu0
    %v4313 = vadd.f32 %v3841, %v4312
    %v4314 = vpop.f32.mrb[0].mxu0
    %4315 = vmatprep.mubr.bf16.mxu0 %v3583
    %4316 = vmatmul.mubr.bf16.gmra.mrb[0].mxu0 %v3553
    %v4317 = vpop.f32.mrb[0].mxu0
    %v4318 = vadd.f32 %v3841, %v4317
    %v4319 = vpop.f32.mrb[0].mxu0
    %v4320 = vpop.f32.mrb[0].mxu0
    %v4321 = vadd.f32 %v3841, %v4320
    %v4322 = vpop.f32.mrb[0].mxu0
    %4323 = vmatprep.mubr.bf16.mxu0 %v3584
    %4324 = vmatmul.mubr.bf16.gmra.mrb[0].mxu0 %v3554
    %v4325 = vpop.f32.mrb[0].mxu0
    %v4326 = vadd.f32 %v3841, %v4325
    %v4327 = vpop.f32.mrb[0].mxu0
    %v4328 = vpop.f32.mrb[0].mxu0
    %v4329 = vadd.f32 %v3841, %v4328
    %v4330 = vpop.f32.mrb[0].mxu0
    %4331 = vmatprep.mubr.bf16.mxu0 %v3585
    %4332 = vmatmul.mubr.bf16.gmra.mrb[0].mxu0 %v3555
    %v4333 = vpop.f32.mrb[0].mxu0
    %v4334 = vadd.f32 %v3841, %v4333
    %v4335 = vpop.f32.mrb[0].mxu0
    %v4336 = vpop.f32.mrb[0].mxu0
    %v4337 = vadd.f32 %v3841, %v4336
    %v4338 = vpop.f32.mrb[0].mxu0
    %4339 = vmatprep.mubr.bf16.mxu0 %v3586
    %4340 = vmatmul.mubr.bf16.gmra.mrb[0].mxu0 %v3556
    %v4341 = vpop.f32.mrb[0].mxu0
    %v4342 = vadd.f32 %v3841, %v4341
    %v4343 = vpop.f32.mrb[0].mxu0
    %v4344 = vpop.f32.mrb[0].mxu0
    %v4345 = vadd.f32 %v3841, %v4344
    %v4346 = vpop.f32.mrb[0].mxu0
    %4347 = vmatprep.mubr.bf16.mxu0 %v3587
    %4348 = vmatmul.mubr.bf16.gmra.mrb[0].mxu0 %v3557
    %v4349 = vpop.f32.mrb[0].mxu0
    %v4350 = vadd.f32 %v3841, %v4349
    %v4351 = vpop.f32.mrb[0].mxu0
    %v4352 = vpop.f32.mrb[0].mxu0
    %v4353 = vadd.f32 %v3841, %v4352
    %v4354 = vpop.f32.mrb[0].mxu0
    %4355 = vmatprep.mubr.bf16.mxu0 %v3588
    %4356 = vmatmul.mubr.bf16.gmra.mrb[0].mxu0 %v3558
    %v4357 = vpop.f32.mrb[0].mxu0
    %v4358 = vadd.f32 %v3841, %v4357
    %v4359 = vpop.f32.mrb[0].mxu0
    %v4360 = vpop.f32.mrb[0].mxu0
    %v4361 = vadd.f32 %v3841, %v4360
    %v4362 = vpop.f32.mrb[0].mxu0
    %4363 = vmatprep.mubr.bf16.mxu0 %v3589
    %4364 = vmatmul.mubr.bf16.gmra.mrb[0].mxu0 %v3559
    %v4365 = vpop.f32.mrb[0].mxu0
    %v4366 = vadd.f32 %v3841, %v4365
    %v4367 = vpop.f32.mrb[0].mxu0
    %v4368 = vpop.f32.mrb[0].mxu0
    %v4369 = vadd.f32 %v3841, %v4368
    %v4370 = vpop.f32.mrb[0].mxu0
    %4371 = vdwg.mxu0
    %4372 = vmatprep.subr.bf16.mxu0 0
    %4373 = vmatpush1.bf16.msra.mxu0 %v4147
    %4374 = vmatprep.subr.bf16.mxu0 0
    %4375 = vmatpush1.bf16.msra.mxu0 %v4148
    %4376 = vmatprep.subr.bf16.mxu0 0
    %4377 = vmatpush1.bf16.msra.mxu0 %v4149
    %4378 = vmatprep.subr.bf16.mxu0 0
    %4379 = vmatpush1.bf16.msra.mxu0 %v4150
    %4380 = vmatprep.subr.bf16.mxu0 0
    %4381 = vmatpush1.bf16.msra.mxu0 %v4151
    %4382 = vmatprep.subr.bf16.mxu0 0
    %4383 = vmatpush1.bf16.msra.mxu0 %v4152
    %4384 = vmatprep.subr.bf16.mxu0 0
    %4385 = vmatpush1.bf16.msra.mxu0 %v4153
    %4386 = vmatprep.subr.bf16.mxu0 0
    %4387 = vmatpush1.bf16.msra.mxu0 %v4154
    %4388 = vmatprep.subr.bf16.mxu0 0
    %4389 = vmatpush1.bf16.msra.mxu0 %v4155
    %4390 = vmatprep.subr.bf16.mxu0 0
    %4391 = vmatpush1.bf16.msra.mxu0 %v4156
    %4392 = vmatprep.subr.bf16.mxu0 0
    %4393 = vmatpush1.bf16.msra.mxu0 %v4157
    %4394 = vmatprep.subr.bf16.mxu0 0
    %4395 = vmatpush1.bf16.msra.mxu0 %v4158
    %4396 = vmatprep.subr.bf16.mxu0 0
    %4397 = vmatpush1.bf16.msra.mxu0 %v4159
    %4398 = vmatprep.subr.bf16.mxu0 0
    %4399 = vmatpush1.bf16.msra.mxu0 %v4160
    %4400 = vmatprep.subr.bf16.mxu0 0
    %4401 = vmatpush1.bf16.msra.mxu0 %v4161
    %4402 = vmatprep.subr.bf16.mxu0 0
    %4403 = vmatpush1.bf16.msra.mxu0 %v4162
    %4404 = vmatprep.mubr.bf16.mxu0 %v3628
    %4405 = vmatmul.mubr.bf16.gmra.mrb[0].mxu0 %v3612
    %v4406 = vpop.f32.mrb[0].mxu0
    %v4407 = vadd.f32 %v4310, %v4406
    %v4408 = vpop.f32.mrb[0].mxu0
    %v4409 = vpop.f32.mrb[0].mxu0
    %v4410 = vadd.f32 %v4313, %v4409
    %v4411 = vpop.f32.mrb[0].mxu0
    %4412 = vmatprep.mubr.bf16.mxu0 %v3629
    %4413 = vmatmul.mubr.bf16.gmra.mrb[0].mxu0 %v3613
    %v4414 = vpop.f32.mrb[0].mxu0
    %v4415 = vadd.f32 %v4318, %v4414
    %v4416 = vpop.f32.mrb[0].mxu0
    %v4417 = vpop.f32.mrb[0].mxu0
    %v4418 = vadd.f32 %v4321, %v4417
    %v4419 = vpop.f32.mrb[0].mxu0
    %4420 = vmatprep.mubr.bf16.mxu0 %v3630
    %4421 = vmatmul.mubr.bf16.gmra.mrb[0].mxu0 %v3614
    %v4422 = vpop.f32.mrb[0].mxu0
    %v4423 = vadd.f32 %v4326, %v4422
    %v4424 = vpop.f32.mrb[0].mxu0
    %v4425 = vpop.f32.mrb[0].mxu0
    %v4426 = vadd.f32 %v4329, %v4425
    %v4427 = vpop.f32.mrb[0].mxu0
    %4428 = vmatprep.mubr.bf16.mxu0 %v3631
    %4429 = vmatmul.mubr.bf16.gmra.mrb[0].mxu0 %v3615
    %v4430 = vpop.f32.mrb[0].mxu0
    %v4431 = vadd.f32 %v4334, %v4430
    %v4432 = vpop.f32.mrb[0].mxu0
    %v4433 = vpop.f32.mrb[0].mxu0
    %v4434 = vadd.f32 %v4337, %v4433
    %v4435 = vpop.f32.mrb[0].mxu0
    %4436 = vmatprep.mubr.bf16.mxu0 %v3632
    %4437 = vmatmul.mubr.bf16.gmra.mrb[0].mxu0 %v3616
    %v4438 = vpop.f32.mrb[0].mxu0
    %v4439 = vadd.f32 %v4342, %v4438
    %v4440 = vpop.f32.mrb[0].mxu0
    %v4441 = vpop.f32.mrb[0].mxu0
    %v4442 = vadd.f32 %v4345, %v4441
    %v4443 = vpop.f32.mrb[0].mxu0
    %4444 = vmatprep.mubr.bf16.mxu0 %v3633
    %4445 = vmatmul.mubr.bf16.gmra.mrb[0].mxu0 %v3617
    %v4446 = vpop.f32.mrb[0].mxu0
    %v4447 = vadd.f32 %v4350, %v4446
    %v4448 = vpop.f32.mrb[0].mxu0
    %v4449 = vpop.f32.mrb[0].mxu0
    %v4450 = vadd.f32 %v4353, %v4449
    %v4451 = vpop.f32.mrb[0].mxu0
    %4452 = vmatprep.mubr.bf16.mxu0 %v3634
    %4453 = vmatmul.mubr.bf16.gmra.mrb[0].mxu0 %v3618
    %v4454 = vpop.f32.mrb[0].mxu0
    %v4455 = vadd.f32 %v4358, %v4454
    %v4456 = vpop.f32.mrb[0].mxu0
    %v4457 = vpop.f32.mrb[0].mxu0
    %v4458 = vadd.f32 %v4361, %v4457
    %v4459 = vpop.f32.mrb[0].mxu0
    %4460 = vmatprep.mubr.bf16.mxu0 %v3635
    %4461 = vmatmul.mubr.bf16.gmra.mrb[0].mxu0 %v3619
    %v4462 = vpop.f32.mrb[0].mxu0
    %v4463 = vadd.f32 %v4366, %v4462
    %v4464 = vpop.f32.mrb[0].mxu0
    %v4465 = vpop.f32.mrb[0].mxu0
    %v4466 = vadd.f32 %v4369, %v4465
    %v4467 = vpop.f32.mrb[0].mxu0
    %4468 = vdwg.mxu0
    %4469 = vmatprep.subr.bf16.mxu0 0
    %4470 = vmatpush1.bf16.msra.mxu0 %v4163
    %4471 = vmatprep.subr.bf16.mxu0 0
    %4472 = vmatpush1.bf16.msra.mxu0 %v4164
    %4473 = vmatprep.subr.bf16.mxu0 0
    %4474 = vmatpush1.bf16.msra.mxu0 %v4165
    %4475 = vmatprep.subr.bf16.mxu0 0
    %4476 = vmatpush1.bf16.msra.mxu0 %v4166
    %4477 = vmatprep.subr.bf16.mxu0 0
    %4478 = vmatpush1.bf16.msra.mxu0 %v4167
    %4479 = vmatprep.subr.bf16.mxu0 0
    %4480 = vmatpush1.bf16.msra.mxu0 %v4168
    %4481 = vmatprep.subr.bf16.mxu0 0
    %4482 = vmatpush1.bf16.msra.mxu0 %v4169
    %4483 = vmatprep.subr.bf16.mxu0 0
    %4484 = vmatpush1.bf16.msra.mxu0 %v4170
    %4485 = vmatprep.subr.bf16.mxu0 0
    %4486 = vmatpush1.bf16.msra.mxu0 %v4171
    %4487 = vmatprep.subr.bf16.mxu0 0
    %4488 = vmatpush1.bf16.msra.mxu0 %v4172
    %4489 = vmatprep.subr.bf16.mxu0 0
    %4490 = vmatpush1.bf16.msra.mxu0 %v4173
    %4491 = vmatprep.subr.bf16.mxu0 0
    %4492 = vmatpush1.bf16.msra.mxu0 %v4174
    %4493 = vmatprep.subr.bf16.mxu0 0
    %4494 = vmatpush1.bf16.msra.mxu0 %v4175
    %4495 = vmatprep.subr.bf16.mxu0 0
    %4496 = vmatpush1.bf16.msra.mxu0 %v4176
    %4497 = vmatprep.subr.bf16.mxu0 0
    %4498 = vmatpush1.bf16.msra.mxu0 %v4177
    %4499 = vmatprep.subr.bf16.mxu0 0
    %4500 = vmatpush1.bf16.msra.mxu0 %v4178
    %4501 = vmatprep.mubr.bf16.mxu0 %v3664
    %4502 = vmatmul.mubr.bf16.gmra.mrb[0].mxu0 %v3646
    %v4503 = vpop.f32.mrb[0].mxu0
    %v4504 = vadd.f32 %v4407, %v4503
    %v4505 = vpop.f32.mrb[0].mxu0
    %v4506 = vpop.f32.mrb[0].mxu0
    %v4507 = vadd.f32 %v4410, %v4506
    %v4508 = vpop.f32.mrb[0].mxu0
    %4509 = vmatprep.mubr.bf16.mxu0 %v3665
    %4510 = vmatmul.mubr.bf16.gmra.mrb[0].mxu0 %v3647
    %v4511 = vpop.f32.mrb[0].mxu0
    %v4512 = vadd.f32 %v4415, %v4511
    %v4513 = vpop.f32.mrb[0].mxu0
    %v4514 = vpop.f32.mrb[0].mxu0
    %v4515 = vadd.f32 %v4418, %v4514
    %v4516 = vpop.f32.mrb[0].mxu0
    %4517 = vmatprep.mubr.bf16.mxu0 %v3666
    %4518 = vmatmul.mubr.bf16.gmra.mrb[0].mxu0 %v3648
    %v4519 = vpop.f32.mrb[0].mxu0
    %v4520 = vadd.f32 %v4423, %v4519
    %v4521 = vpop.f32.mrb[0].mxu0
    %v4522 = vpop.f32.mrb[0].mxu0
    %v4523 = vadd.f32 %v4426, %v4522
    %v4524 = vpop.f32.mrb[0].mxu0
    %4525 = vmatprep.mubr.bf16.mxu0 %v3667
    %4526 = vmatmul.mubr.bf16.gmra.mrb[0].mxu0 %v3649
    %v4527 = vpop.f32.mrb[0].mxu0
    %v4528 = vadd.f32 %v4431, %v4527
    %v4529 = vpop.f32.mrb[0].mxu0
    %v4530 = vpop.f32.mrb[0].mxu0
    %v4531 = vadd.f32 %v4434, %v4530
    %v4532 = vpop.f32.mrb[0].mxu0
    %4533 = vmatprep.mubr.bf16.mxu0 %v3668
    %4534 = vmatmul.mubr.bf16.gmra.mrb[0].mxu0 %v3650
    %v4535 = vpop.f32.mrb[0].mxu0
    %v4536 = vadd.f32 %v4439, %v4535
    %v4537 = vpop.f32.mrb[0].mxu0
    %v4538 = vpop.f32.mrb[0].mxu0
    %v4539 = vadd.f32 %v4442, %v4538
    %v4540 = vpop.f32.mrb[0].mxu0
    %4541 = vmatprep.mubr.bf16.mxu0 %v3669
    %4542 = vmatmul.mubr.bf16.gmra.mrb[0].mxu0 %v3651
    %v4543 = vpop.f32.mrb[0].mxu0
    %v4544 = vadd.f32 %v4447, %v4543
    %v4545 = vpop.f32.mrb[0].mxu0
    %v4546 = vpop.f32.mrb[0].mxu0
    %v4547 = vadd.f32 %v4450, %v4546
    %v4548 = vpop.f32.mrb[0].mxu0
    %4549 = vmatprep.mubr.bf16.mxu0 %v3670
    %4550 = vmatmul.mubr.bf16.gmra.mrb[0].mxu0 %v3652
    %v4551 = vpop.f32.mrb[0].mxu0
    %v4552 = vadd.f32 %v4455, %v4551
    %v4553 = vpop.f32.mrb[0].mxu0
    %v4554 = vpop.f32.mrb[0].mxu0
    %v4555 = vadd.f32 %v4458, %v4554
    %v4556 = vpop.f32.mrb[0].mxu0
    %4557 = vmatprep.mubr.bf16.mxu0 %v3671
    %4558 = vmatmul.mubr.bf16.gmra.mrb[0].mxu0 %v3653
    %v4559 = vpop.f32.mrb[0].mxu0
    %v4560 = vadd.f32 %v4463, %v4559
    %v4561 = vpop.f32.mrb[0].mxu0
    %v4562 = vpop.f32.mrb[0].mxu0
    %v4563 = vadd.f32 %v4466, %v4562
    %v4564 = vpop.f32.mrb[0].mxu0
    %4565 = vdwg.mxu0
    %4566 = vmatprep.subr.bf16.mxu0 0
    %4567 = vmatpush1.bf16.msra.mxu0 %v4179
    %4568 = vmatprep.subr.bf16.mxu0 0
    %4569 = vmatpush1.bf16.msra.mxu0 %v4180
    %4570 = vmatprep.subr.bf16.mxu0 0
    %4571 = vmatpush1.bf16.msra.mxu0 %v4181
    %4572 = vmatprep.subr.bf16.mxu0 0
    %4573 = vmatpush1.bf16.msra.mxu0 %v4182
    %4574 = vmatprep.subr.bf16.mxu0 0
    %4575 = vmatpush1.bf16.msra.mxu0 %v4183
    %4576 = vmatprep.subr.bf16.mxu0 0
    %4577 = vmatpush1.bf16.msra.mxu0 %v4184
    %4578 = vmatprep.subr.bf16.mxu0 0
    %4579 = vmatpush1.bf16.msra.mxu0 %v4185
    %4580 = vmatprep.subr.bf16.mxu0 0
    %4581 = vmatpush1.bf16.msra.mxu0 %v4186
    %4582 = vmatprep.subr.bf16.mxu0 0
    %4583 = vmatpush1.bf16.msra.mxu0 %v4187
    %4584 = vmatprep.subr.bf16.mxu0 0
    %4585 = vmatpush1.bf16.msra.mxu0 %v4188
    %4586 = vmatprep.subr.bf16.mxu0 0
    %4587 = vmatpush1.bf16.msra.mxu0 %v4189
    %4588 = vmatprep.subr.bf16.mxu0 0
    %4589 = vmatpush1.bf16.msra.mxu0 %v4190
    %4590 = vmatprep.subr.bf16.mxu0 0
    %4591 = vmatpush1.bf16.msra.mxu0 %v4191
    %4592 = vmatprep.subr.bf16.mxu0 0
    %4593 = vmatpush1.bf16.msra.mxu0 %v4192
    %4594 = vmatprep.subr.bf16.mxu0 0
    %4595 = vmatpush1.bf16.msra.mxu0 %v4193
    %4596 = vmatprep.subr.bf16.mxu0 0
    %4597 = vmatpush1.bf16.msra.mxu0 %v4194
    %4598 = vmatprep.mubr.bf16.mxu0 %v3583
    %4599 = vmatmul.mubr.bf16.gmra.mrb[0].mxu0 %v3553
    %v4600 = vpop.f32.mrb[0].mxu0
    %v4601 = vadd.f32 %v4504, %v4600
    %v4602 = vpop.f32.mrb[0].mxu0
    %v4603 = vpop.f32.mrb[0].mxu0
    %v4604 = vadd.f32 %v4507, %v4603
    %v4605 = vpop.f32.mrb[0].mxu0
    %4606 = vmatprep.mubr.bf16.mxu0 %v3584
    %4607 = vmatmul.mubr.bf16.gmra.mrb[0].mxu0 %v3554
    %v4608 = vpop.f32.mrb[0].mxu0
    %v4609 = vadd.f32 %v4512, %v4608
    %v4610 = vpop.f32.mrb[0].mxu0
    %v4611 = vpop.f32.mrb[0].mxu0
    %v4612 = vadd.f32 %v4515, %v4611
    %v4613 = vpop.f32.mrb[0].mxu0
    %4614 = vmatprep.mubr.bf16.mxu0 %v3585
    %4615 = vmatmul.mubr.bf16.gmra.mrb[0].mxu0 %v3555
    %v4616 = vpop.f32.mrb[0].mxu0
    %v4617 = vadd.f32 %v4520, %v4616
    %v4618 = vpop.f32.mrb[0].mxu0
    %v4619 = vpop.f32.mrb[0].mxu0
    %v4620 = vadd.f32 %v4523, %v4619
    %v4621 = vpop.f32.mrb[0].mxu0
    %4622 = vmatprep.mubr.bf16.mxu0 %v3684
    %4623 = vmatmul.mubr.bf16.gmra.mrb[0].mxu0 %v3680
    %v4624 = vpop.f32.mrb[0].mxu0
    %v4625 = vadd.f32 %v4528, %v4624
    %v4626 = vpop.f32.mrb[0].mxu0
    %v4627 = vpop.f32.mrb[0].mxu0
    %v4628 = vadd.f32 %v4531, %v4627
    %v4629 = vpop.f32.mrb[0].mxu0
    %4630 = vmatprep.mubr.bf16.mxu0 %v3587
    %4631 = vmatmul.mubr.bf16.gmra.mrb[0].mxu0 %v3557
    %v4632 = vpop.f32.mrb[0].mxu0
    %v4633 = vadd.f32 %v4536, %v4632
    %v4634 = vpop.f32.mrb[0].mxu0
    %v4635 = vpop.f32.mrb[0].mxu0
    %v4636 = vadd.f32 %v4539, %v4635
    %v4637 = vpop.f32.mrb[0].mxu0
    %4638 = vmatprep.mubr.bf16.mxu0 %v3588
    %4639 = vmatmul.mubr.bf16.gmra.mrb[0].mxu0 %v3558
    %v4640 = vpop.f32.mrb[0].mxu0
    %v4641 = vadd.f32 %v4544, %v4640
    %v4642 = vpop.f32.mrb[0].mxu0
    %v4643 = vpop.f32.mrb[0].mxu0
    %v4644 = vadd.f32 %v4547, %v4643
    %v4645 = vpop.f32.mrb[0].mxu0
    %4646 = vmatprep.mubr.bf16.mxu0 %v3589
    %4647 = vmatmul.mubr.bf16.gmra.mrb[0].mxu0 %v3559
    %v4648 = vpop.f32.mrb[0].mxu0
    %v4649 = vadd.f32 %v4552, %v4648
    %v4650 = vpop.f32.mrb[0].mxu0
    %v4651 = vpop.f32.mrb[0].mxu0
    %v4652 = vadd.f32 %v4555, %v4651
    %v4653 = vpop.f32.mrb[0].mxu0
    %4654 = vmatprep.mubr.bf16.mxu0 %v3685
    %4655 = vmatmul.mubr.bf16.gmra.mrb[0].mxu0 %v3681
    %v4656 = vpop.f32.mrb[0].mxu0
    %v4657 = vadd.f32 %v4560, %v4656
    %v4658 = vpop.f32.mrb[0].mxu0
    %v4659 = vpop.f32.mrb[0].mxu0
    %v4660 = vadd.f32 %v4563, %v4659
    %v4661 = vpop.f32.mrb[0].mxu0
    %4662 = vdwg.mxu0
    %4663 = vmatprep.subr.bf16.mxu0 0
    %4664 = vmatpush1.bf16.msra.mxu0 %v4195
    %4665 = vmatprep.subr.bf16.mxu0 0
    %4666 = vmatpush1.bf16.msra.mxu0 %v4196
    %4667 = vmatprep.subr.bf16.mxu0 0
    %4668 = vmatpush1.bf16.msra.mxu0 %v4197
    %4669 = vmatprep.subr.bf16.mxu0 0
    %4670 = vmatpush1.bf16.msra.mxu0 %v4198
    %4671 = vmatprep.subr.bf16.mxu0 0
    %4672 = vmatpush1.bf16.msra.mxu0 %v4199
    %4673 = vmatprep.subr.bf16.mxu0 0
    %4674 = vmatpush1.bf16.msra.mxu0 %v4200
    %4675 = vmatprep.subr.bf16.mxu0 0
    %4676 = vmatpush1.bf16.msra.mxu0 %v4201
    %4677 = vmatprep.subr.bf16.mxu0 0
    %4678 = vmatpush1.bf16.msra.mxu0 %v4202
    %4679 = vmatprep.subr.bf16.mxu0 0
    %4680 = vmatpush1.bf16.msra.mxu0 0
    %4681 = vmatprep.subr.bf16.mxu0 0
    %4682 = vmatpush1.bf16.msra.mxu0 0
    %4683 = vmatprep.subr.bf16.mxu0 0
    %4684 = vmatpush1.bf16.msra.mxu0 0
    %4685 = vmatprep.subr.bf16.mxu0 0
    %4686 = vmatpush1.bf16.msra.mxu0 0
    %4687 = vmatprep.subr.bf16.mxu0 0
    %4688 = vmatpush1.bf16.msra.mxu0 0
    %4689 = vmatprep.subr.bf16.mxu0 0
    %4690 = vmatpush1.bf16.msra.mxu0 0
    %4691 = vmatprep.subr.bf16.mxu0 0
    %4692 = vmatpush1.bf16.msra.mxu0 0
    %4693 = vmatprep.subr.bf16.mxu0 0
    %4694 = vmatpush1.bf16.msra.mxu0 0
    %4695 = vmatprep.mubr.bf16.mxu0 0
    %4696 = vmatmul.mubr.bf16.gmra.mrb[0].mxu0 %v3613
    %v4697 = vpop.f32.mrb[0].mxu0
    %v4698 = vadd.f32 %v4601, %v4697
    %v4699 = vpop.f32.mrb[0].mxu0
    %v4700 = vpop.f32.mrb[0].mxu0
    %v4701 = vadd.f32 %v4604, %v4700
    %v4702 = vpop.f32.mrb[0].mxu0
    %4703 = vmatprep.mubr.bf16.mxu0 0
    %4704 = vmatmul.mubr.bf16.gmra.mrb[0].mxu0 %v3614
    %v4705 = vpop.f32.mrb[0].mxu0
    %v4706 = vadd.f32 %v4609, %v4705
    %v4707 = vpop.f32.mrb[0].mxu0
    %v4708 = vpop.f32.mrb[0].mxu0
    %v4709 = vadd.f32 %v4612, %v4708
    %v4710 = vpop.f32.mrb[0].mxu0
    %4711 = vmatprep.mubr.bf16.mxu0 0
    %4712 = vmatmul.mubr.bf16.gmra.mrb[0].mxu0 %v3615
    %v4713 = vpop.f32.mrb[0].mxu0
    %v4714 = vadd.f32 %v4617, %v4713
    %v4715 = vpop.f32.mrb[0].mxu0
    %v4716 = vpop.f32.mrb[0].mxu0
    %v4717 = vadd.f32 %v4620, %v4716
    %v4718 = vpop.f32.mrb[0].mxu0
    %4719 = vmatprep.mubr.bf16.mxu0 0
    %4720 = vmatmul.mubr.bf16.gmra.mrb[0].mxu0 %v3688
    %v4721 = vpop.f32.mrb[0].mxu0
    %v4722 = vadd.f32 %v4625, %v4721
    %v4723 = vpop.f32.mrb[0].mxu0
    %v4724 = vpop.f32.mrb[0].mxu0
    %v4725 = vadd.f32 %v4628, %v4724
    %v4726 = vpop.f32.mrb[0].mxu0
    %4727 = vmatprep.mubr.bf16.mxu0 0
    %4728 = vmatmul.mubr.bf16.gmra.mrb[0].mxu0 %v3617
    %v4729 = vpop.f32.mrb[0].mxu0
    %v4730 = vadd.f32 %v4633, %v4729
    %v4731 = vpop.f32.mrb[0].mxu0
    %v4732 = vpop.f32.mrb[0].mxu0
    %v4733 = vadd.f32 %v4636, %v4732
    %v4734 = vpop.f32.mrb[0].mxu0
    %4735 = vmatprep.mubr.bf16.mxu0 0
    %4736 = vmatmul.mubr.bf16.gmra.mrb[0].mxu0 %v3618
    %v4737 = vpop.f32.mrb[0].mxu0
    %v4738 = vadd.f32 %v4641, %v4737
    %v4739 = vpop.f32.mrb[0].mxu0
    %v4740 = vpop.f32.mrb[0].mxu0
    %v4741 = vadd.f32 %v4644, %v4740
    %v4742 = vpop.f32.mrb[0].mxu0
    %4743 = vmatprep.mubr.bf16.mxu0 0
    %4744 = vmatmul.mubr.bf16.gmra.mrb[0].mxu0 %v3619
    %v4745 = vpop.f32.mrb[0].mxu0
    %v4746 = vadd.f32 %v4649, %v4745
    %v4747 = vpop.f32.mrb[0].mxu0
    %v4748 = vpop.f32.mrb[0].mxu0
    %v4749 = vadd.f32 %v4652, %v4748
    %v4750 = vpop.f32.mrb[0].mxu0
    %4751 = vmatprep.mubr.bf16.mxu0 0
    %4752 = vmatmul.mubr.bf16.gmra.mrb[0].mxu0 %v3689
    %v4753 = vpop.f32.mrb[0].mxu0
    %v4754 = vadd.f32 %v4657, %v4753
    %v4755 = vpop.f32.mrb[0].mxu0
    %v4756 = vpop.f32.mrb[0].mxu0
    %v4757 = vadd.f32 %v4660, %v4756
    %v4758 = vpop.f32.mrb[0].mxu0
    %4759 = vdwg.mxu0
    %v4760 = vmax.f32 %v4698, 0.0
    %v4761 = vmax.f32 %v4701, 0.0
    %v4762 = vmax.f32 %v4706, 0.0
    %v4763 = vmax.f32 %v4709, 0.0
    %v4764 = vmax.f32 %v4714, 0.0
    %v4765 = vmax.f32 %v4717, 0.0
    %v4766 = vmax.f32 %v4722, 0.0
    %v4767 = vmax.f32 %v4725, 0.0
    %v4768 = vmax.f32 %v4730, 0.0
    %v4769 = vmax.f32 %v4733, 0.0
    %v4770 = vmax.f32 %v4738, 0.0
    %v4771 = vmax.f32 %v4741, 0.0
    %v4772 = vmax.f32 %v4746, 0.0
    %v4773 = vmax.f32 %v4749, 0.0
    %v4774 = vmax.f32 %v4754, 0.0
    %v4775 = vmax.f32 %v4757, 0.0
    %v4776 = vpack.c.bf16 %v4761, %v4760
    %v4777 = vpack.c.bf16 %v4763, %v4762
    %v4778 = vpack.c.bf16 %v4765, %v4764
    %v4779 = vpack.c.bf16 %v4767, %v4766
    %v4780 = vpack.c.bf16 %v4769, %v4768
    %v4781 = vpack.c.bf16 %v4771, %v4770
    %v4782 = vpack.c.bf16 %v4773, %v4772
    %v4783 = vpack.c.bf16 %v4775, %v4774
    %v4784 = vld [vmem:[%s12] sm:$0xff]
    %v4785 = vld [vmem:[%s12 + $0x8] sm:$0xff]
    %v4786 = vld [vmem:[%s12 + $0x10] sm:$0xff]
    %v4787 = vld [vmem:[%s12 + $0x18] sm:$0xff]
    %v4788 = vld [vmem:[%s12 + $0x20] sm:$0xff]
    %v4789 = vld [vmem:[%s12 + $0x28] sm:$0xff]
    %v4790 = vld [vmem:[%s12 + $0x30] sm:$0xff]
    %v4791 = vld [vmem:[%s12 + $0x38] sm:$0xff]
    %v4792 = vld [vmem:[%s12 + $0x40] sm:$0xff]
    %v4793 = vld [vmem:[%s12 + $0x48] sm:$0xff]
    %v4794 = vld [vmem:[%s12 + $0x50] sm:$0xff]
    %v4795 = vld [vmem:[%s12 + $0x58] sm:$0xff]
    %v4796 = vld [vmem:[%s12 + $0x60] sm:$0xff]
    %v4797 = vld [vmem:[%s12 + $0x68] sm:$0xff]
    %v4798 = vld [vmem:[%s12 + $0x70] sm:$0xff]
    %v4799 = vld [vmem:[%s12 + $0x78] sm:$0xff]
    %v4800 = vld [vmem:[%s13] sm:$0x3]
    %v4802 = vlaneseq
    %v4803 = vshrl.u32 %v4802, 7
    %v4804 = vsub.s32 0, %v4803
    %v4805 = vrot.slane %v4800, %v4804
    %v4806 = vlaneseq
    %v4807 = vshrl.u32 %v4806, 7
    %v4808 = vsub.s32 1, %v4807
    %v4809 = vrot.slane %v4800, %v4808
    %v4828 = vunpack.c.l.b16 %v4784
    %v4829 = vunpack.c.h.b16 %v4784
    %v4830 = vunpack.c.l.b16 %v4785
    %v4831 = vunpack.c.h.b16 %v4785
    %v4832 = vunpack.c.l.b16 %v4786
    %v4833 = vunpack.c.h.b16 %v4786
    %v4834 = vunpack.c.l.b16 %v4787
    %v4835 = vunpack.c.h.b16 %v4787
    %v4836 = vunpack.c.l.b16 %v4788
    %v4837 = vunpack.c.h.b16 %v4788
    %v4838 = vunpack.c.l.b16 %v4789
    %v4839 = vunpack.c.h.b16 %v4789
    %v4840 = vunpack.c.l.b16 %v4790
    %v4841 = vunpack.c.h.b16 %v4790
    %v4842 = vunpack.c.l.b16 %v4791
    %v4843 = vunpack.c.h.b16 %v4791
    %v4844 = vunpack.c.l.b16 %v4792
    %v4845 = vunpack.c.h.b16 %v4792
    %v4846 = vunpack.c.l.b16 %v4793
    %v4847 = vunpack.c.h.b16 %v4793
    %v4848 = vunpack.c.l.b16 %v4794
    %v4849 = vunpack.c.h.b16 %v4794
    %v4850 = vunpack.c.l.b16 %v4795
    %v4851 = vunpack.c.h.b16 %v4795
    %v4852 = vunpack.c.l.b16 %v4796
    %v4853 = vunpack.c.h.b16 %v4796
    %v4854 = vunpack.c.l.b16 %v4797
    %v4855 = vunpack.c.h.b16 %v4797
    %v4856 = vunpack.c.l.b16 %v4798
    %v4857 = vunpack.c.h.b16 %v4798
    %v4858 = vunpack.c.l.b16 %v4799
    %v4859 = vunpack.c.h.b16 %v4799
    %v4860 = vpack.c.b16 %v4830, %v4828
    %v4861 = vpack.c.b16 %v4831, %v4829
    %v4862 = vpack.c.b16 %v4834, %v4832
    %v4863 = vpack.c.b16 %v4835, %v4833
    %v4864 = vpack.c.b16 %v4838, %v4836
    %v4865 = vpack.c.b16 %v4839, %v4837
    %v4866 = vpack.c.b16 %v4842, %v4840
    %v4867 = vpack.c.b16 %v4843, %v4841
    %v4868 = vpack.c.b16 %v4846, %v4844
    %v4869 = vpack.c.b16 %v4847, %v4845
    %v4870 = vpack.c.b16 %v4850, %v4848
    %v4871 = vpack.c.b16 %v4851, %v4849
    %v4872 = vpack.c.b16 %v4854, %v4852
    %v4873 = vpack.c.b16 %v4855, %v4853
    %v4874 = vpack.c.b16 %v4858, %v4856
    %v4875 = vpack.c.b16 %v4859, %v4857
    %4892 = vmatprep.subr.bf16.mxu0 %v4861
    %4893 = vmatpush1.bf16.msra.mxu0 %v4860
    %4894 = vmatprep.subr.bf16.mxu0 %v4863
    %4895 = vmatpush1.bf16.msra.mxu0 %v4862
    %4896 = vmatprep.subr.bf16.mxu0 %v4865
    %4897 = vmatpush1.bf16.msra.mxu0 %v4864
    %4898 = vmatprep.subr.bf16.mxu0 %v4867
    %4899 = vmatpush1.bf16.msra.mxu0 %v4866
    %4900 = vmatprep.subr.bf16.mxu0 %v4869
    %4901 = vmatpush1.bf16.msra.mxu0 %v4868
    %4902 = vmatprep.subr.bf16.mxu0 %v4871
    %4903 = vmatpush1.bf16.msra.mxu0 %v4870
    %4904 = vmatprep.subr.bf16.mxu0 %v4873
    %4905 = vmatpush1.bf16.msra.mxu0 %v4872
    %4906 = vmatprep.subr.bf16.mxu0 %v4875
    %4907 = vmatpush1.bf16.msra.mxu0 %v4874
    %4908 = vmatprep.subr.bf16.mxu0 0
    %4909 = vmatpush1.bf16.msra.mxu0 0
    %4910 = vmatprep.subr.bf16.mxu0 0
    %4911 = vmatpush1.bf16.msra.mxu0 0
    %4912 = vmatprep.subr.bf16.mxu0 0
    %4913 = vmatpush1.bf16.msra.mxu0 0
    %4914 = vmatprep.subr.bf16.mxu0 0
    %4915 = vmatpush1.bf16.msra.mxu0 0
    %4916 = vmatprep.subr.bf16.mxu0 0
    %4917 = vmatpush1.bf16.msra.mxu0 0
    %4918 = vmatprep.subr.bf16.mxu0 0
    %4919 = vmatpush1.bf16.msra.mxu0 0
    %4920 = vmatprep.subr.bf16.mxu0 0
    %4921 = vmatpush1.bf16.msra.mxu0 0
    %4922 = vmatprep.subr.bf16.mxu0 0
    %4923 = vmatpush1.bf16.msra.mxu0 0
    %4924 = vmatprep.mubr.bf16.mxu0 0
    %4925 = vmatmul.mubr.bf16.gmra.mrb[0].mxu0 %v4776
    %v4926 = vpop.f32.mrb[0].mxu0
    %v4927 = vadd.f32 %v4805, %v4926
    %v4928 = vpop.f32.mrb[0].mxu0
    %v4929 = vadd.f32 %v4809, %v4928
    %v4930 = vpop.f32.mrb[0].mxu0
    %v4931 = vadd.f32 %v4805, %v4930
    %v4932 = vpop.f32.mrb[0].mxu0
    %v4933 = vadd.f32 %v4809, %v4932
    %4934 = vmatprep.mubr.bf16.mxu0 0
    %4935 = vmatmul.mubr.bf16.gmra.mrb[0].mxu0 %v4777
    %v4936 = vpop.f32.mrb[0].mxu0
    %v4937 = vadd.f32 %v4805, %v4936
    %v4938 = vpop.f32.mrb[0].mxu0
    %v4939 = vadd.f32 %v4809, %v4938
    %v4940 = vpop.f32.mrb[0].mxu0
    %v4941 = vadd.f32 %v4805, %v4940
    %v4942 = vpop.f32.mrb[0].mxu0
    %v4943 = vadd.f32 %v4809, %v4942
    %4944 = vmatprep.mubr.bf16.mxu0 0
    %4945 = vmatmul.mubr.bf16.gmra.mrb[0].mxu0 %v4778
    %v4946 = vpop.f32.mrb[0].mxu0
    %v4947 = vadd.f32 %v4805, %v4946
    %v4948 = vpop.f32.mrb[0].mxu0
    %v4949 = vadd.f32 %v4809, %v4948
    %v4950 = vpop.f32.mrb[0].mxu0
    %v4951 = vadd.f32 %v4805, %v4950
    %v4952 = vpop.f32.mrb[0].mxu0
    %v4953 = vadd.f32 %v4809, %v4952
    %4954 = vmatprep.mubr.bf16.mxu0 0
    %4955 = vmatmul.mubr.bf16.gmra.mrb[0].mxu0 %v4779
    %v4956 = vpop.f32.mrb[0].mxu0
    %v4957 = vadd.f32 %v4805, %v4956
    %v4958 = vpop.f32.mrb[0].mxu0
    %v4959 = vadd.f32 %v4809, %v4958
    %v4960 = vpop.f32.mrb[0].mxu0
    %v4961 = vadd.f32 %v4805, %v4960
    %v4962 = vpop.f32.mrb[0].mxu0
    %v4963 = vadd.f32 %v4809, %v4962
    %4964 = vmatprep.mubr.bf16.mxu0 0
    %4965 = vmatmul.mubr.bf16.gmra.mrb[0].mxu0 %v4780
    %v4966 = vpop.f32.mrb[0].mxu0
    %v4967 = vadd.f32 %v4805, %v4966
    %v4968 = vpop.f32.mrb[0].mxu0
    %v4969 = vadd.f32 %v4809, %v4968
    %v4970 = vpop.f32.mrb[0].mxu0
    %v4971 = vadd.f32 %v4805, %v4970
    %v4972 = vpop.f32.mrb[0].mxu0
    %v4973 = vadd.f32 %v4809, %v4972
    %4974 = vmatprep.mubr.bf16.mxu0 0
    %4975 = vmatmul.mubr.bf16.gmra.mrb[0].mxu0 %v4781
    %v4976 = vpop.f32.mrb[0].mxu0
    %v4977 = vadd.f32 %v4805, %v4976
    %v4978 = vpop.f32.mrb[0].mxu0
    %v4979 = vadd.f32 %v4809, %v4978
    %v4980 = vpop.f32.mrb[0].mxu0
    %v4981 = vadd.f32 %v4805, %v4980
    %v4982 = vpop.f32.mrb[0].mxu0
    %v4983 = vadd.f32 %v4809, %v4982
    %4984 = vmatprep.mubr.bf16.mxu0 0
    %4985 = vmatmul.mubr.bf16.gmra.mrb[0].mxu0 %v4782
    %v4986 = vpop.f32.mrb[0].mxu0
    %v4987 = vadd.f32 %v4805, %v4986
    %v4988 = vpop.f32.mrb[0].mxu0
    %v4989 = vadd.f32 %v4809, %v4988
    %v4990 = vpop.f32.mrb[0].mxu0
    %v4991 = vadd.f32 %v4805, %v4990
    %v4992 = vpop.f32.mrb[0].mxu0
    %v4993 = vadd.f32 %v4809, %v4992
    %4994 = vmatprep.mubr.bf16.mxu0 0
    %4995 = vmatmul.mubr.bf16.gmra.mrb[0].mxu0 %v4783
    %v4996 = vpop.f32.mrb[0].mxu0
    %v4997 = vadd.f32 %v4805, %v4996
    %v4998 = vpop.f32.mrb[0].mxu0
    %v4999 = vadd.f32 %v4809, %v4998
    %v5000 = vpop.f32.mrb[0].mxu0
    %v5001 = vadd.f32 %v4805, %v5000
    %v5002 = vpop.f32.mrb[0].mxu0
    %v5003 = vadd.f32 %v4809, %v5002
    %5004 = vdwg.mxu0
    %v5005 = vadd.f32 %v4927, %v2680
    %v5006 = vadd.f32 %v4929, %v2681
    %v5007 = vadd.f32 %v4931, %v2682
    %v5008 = vadd.f32 %v4933, %v2683
    %v5009 = vadd.f32 %v4937, %v2684
    %v5010 = vadd.f32 %v4939, %v2685
    %v5011 = vadd.f32 %v4941, %v2686
    %v5012 = vadd.f32 %v4943, %v2687
    %v5013 = vadd.f32 %v4947, %v2688
    %v5014 = vadd.f32 %v4949, %v2689
    %v5015 = vadd.f32 %v4951, %v2690
    %v5016 = vadd.f32 %v4953, %v2691
    %v5017 = vadd.f32 %v4957, %v2692
    %v5018 = vadd.f32 %v4959, %v2693
    %v5019 = vadd.f32 %v4961, %v2694
    %v5020 = vadd.f32 %v4963, %v2695
    %v5021 = vadd.f32 %v4967, %v2696
    %v5022 = vadd.f32 %v4969, %v2697
    %v5023 = vadd.f32 %v4971, %v2698
    %v5024 = vadd.f32 %v4973, %v2699
    %v5025 = vadd.f32 %v4977, %v2700
    %v5026 = vadd.f32 %v4979, %v2701
    %v5027 = vadd.f32 %v4981, %v2702
    %v5028 = vadd.f32 %v4983, %v2703
    %v5029 = vadd.f32 %v4987, %v2704
    %v5030 = vadd.f32 %v4989, %v2705
    %v5031 = vadd.f32 %v4991, %v2706
    %v5032 = vadd.f32 %v4993, %v2707
    %v5033 = vadd.f32 %v4997, %v2708
    %v5034 = vadd.f32 %v4999, %v2709
    %v5035 = vadd.f32 %v5001, %v2710
    %v5036 = vadd.f32 %v5003, %v2711
    %v5037 = vmax.f32 %v5005, 0.0
    %v5038 = vmax.f32 %v5006, 0.0
    %v5039 = vmax.f32 %v5007, 0.0
    %v5040 = vmax.f32 %v5008, 0.0
    %v5041 = vmax.f32 %v5009, 0.0
    %v5042 = vmax.f32 %v5010, 0.0
    %v5043 = vmax.f32 %v5011, 0.0
    %v5044 = vmax.f32 %v5012, 0.0
    %v5045 = vmax.f32 %v5013, 0.0
    %v5046 = vmax.f32 %v5014, 0.0
    %v5047 = vmax.f32 %v5015, 0.0
    %v5048 = vmax.f32 %v5016, 0.0
    %v5049 = vmax.f32 %v5017, 0.0
    %v5050 = vmax.f32 %v5018, 0.0
    %v5051 = vmax.f32 %v5019, 0.0
    %v5052 = vmax.f32 %v5020, 0.0
    %v5053 = vmax.f32 %v5021, 0.0
    %v5054 = vmax.f32 %v5022, 0.0
    %v5055 = vmax.f32 %v5023, 0.0
    %v5056 = vmax.f32 %v5024, 0.0
    %v5057 = vmax.f32 %v5025, 0.0
    %v5058 = vmax.f32 %v5026, 0.0
    %v5059 = vmax.f32 %v5027, 0.0
    %v5060 = vmax.f32 %v5028, 0.0
    %v5061 = vmax.f32 %v5029, 0.0
    %v5062 = vmax.f32 %v5030, 0.0
    %v5063 = vmax.f32 %v5031, 0.0
    %v5064 = vmax.f32 %v5032, 0.0
    %v5065 = vmax.f32 %v5033, 0.0
    %v5066 = vmax.f32 %v5034, 0.0
    %v5067 = vmax.f32 %v5035, 0.0
    %v5068 = vmax.f32 %v5036, 0.0
    %v5069 = vadd.f32 %v5037, %v5039
    %v5070 = vadd.f32 %v5069, %v5041
    %v5071 = vadd.f32 %v5070, %v5043
    %v5072 = vadd.f32 %v5071, %v5045
    %v5073 = vadd.f32 %v5072, %v5047
    %v5074 = vadd.f32 %v5073, %v5049
    %v5075 = vadd.f32 %v5074, %v5051
    %v5076 = vrot.slane %v5075, 4
    %v5077 = vadd.f32 %v5075, %v5076
    %v5078 = vrot.slane %v5077, 2
    %v5079 = vadd.f32 %v5077, %v5078
    %v5080 = vrot.slane %v5079, 1
    %v5081 = vadd.f32 %v5079, %v5080
    %v5082 = vadd.f32 %v5038, %v5040
    %v5083 = vadd.f32 %v5082, %v5042
    %v5084 = vadd.f32 %v5083, %v5044
    %v5085 = vadd.f32 %v5084, %v5046
    %v5086 = vadd.f32 %v5085, %v5048
    %v5087 = vadd.f32 %v5086, %v5050
    %v5088 = vadd.f32 %v5087, %v5052
    %v5089 = vrot.slane %v5088, 4
    %v5090 = vadd.f32 %v5088, %v5089
    %v5091 = vrot.slane %v5090, 2
    %v5092 = vadd.f32 %v5090, %v5091
    %v5093 = vrot.slane %v5092, 1
    %v5094 = vadd.f32 %v5092, %v5093
    %v5095 = vadd.f32 %v5053, %v5055
    %v5096 = vadd.f32 %v5095, %v5057
    %v5097 = vadd.f32 %v5096, %v5059
    %v5098 = vadd.f32 %v5097, %v5061
    %v5099 = vadd.f32 %v5098, %v5063
    %v5100 = vadd.f32 %v5099, %v5065
    %v5101 = vadd.f32 %v5100, %v5067
    %v5102 = vrot.slane %v5101, 4
    %v5103 = vadd.f32 %v5101, %v5102
    %v5104 = vrot.slane %v5103, 2
    %v5105 = vadd.f32 %v5103, %v5104
    %v5106 = vrot.slane %v5105, 1
    %v5107 = vadd.f32 %v5105, %v5106
    %v5108 = vadd.f32 %v5054, %v5056
    %v5109 = vadd.f32 %v5108, %v5058
    %v5110 = vadd.f32 %v5109, %v5060
    %v5111 = vadd.f32 %v5110, %v5062
    %v5112 = vadd.f32 %v5111, %v5064
    %v5113 = vadd.f32 %v5112, %v5066
    %v5114 = vadd.f32 %v5113, %v5068
    %v5115 = vrot.slane %v5114, 4
    %v5116 = vadd.f32 %v5114, %v5115
    %v5117 = vrot.slane %v5116, 2
    %v5118 = vadd.f32 %v5116, %v5117
    %v5119 = vrot.slane %v5118, 1
    %v5120 = vadd.f32 %v5118, %v5119
    %v5121 = vrcp.pop 64.0
    %v5122 = vmul.f32 %v5081, %v5121
    %v5123 = vmul.f32 %v5094, %v5121
    %v5124 = vmul.f32 %v5107, %v5121
    %v5125 = vmul.f32 %v5120, %v5121
    %v5126 = vpack.c.bf16 %v5122, %v5122
    %v5127 = vpack.c.bf16 %v5123, %v5123
    %v5128 = vpack.c.bf16 %v5124, %v5124
    %v5129 = vpack.c.bf16 %v5125, %v5125
    %v5130 = vld [vmem:[%s14] sm:$0xf]
    %v5131 = vld [vmem:[%s14 + $0x4] sm:$0xf]
    %v5132 = vld [vmem:[%s14 + $0x8] sm:$0xf]
    %v5133 = vld [vmem:[%s14 + $0xc] sm:$0xf]
    %v5134 = vld [vmem:[%s14 + $0x10] sm:$0xf]
    %v5135 = vld [vmem:[%s14 + $0x14] sm:$0xf]
    %v5136 = vld [vmem:[%s14 + $0x18] sm:$0xf]
    %v5137 = vld [vmem:[%s14 + $0x1c] sm:$0xf]
    %v5138 = vld [vmem:[%s14 + $0x20] sm:$0xf]
    %v5139 = vld [vmem:[%s14 + $0x24] sm:$0xf]
    %v5140 = vld [vmem:[%s14 + $0x28] sm:$0xf]
    %v5141 = vld [vmem:[%s14 + $0x2c] sm:$0xf]
    %v5142 = vld [vmem:[%s14 + $0x30] sm:$0xf]
    %v5143 = vld [vmem:[%s14 + $0x34] sm:$0xf]
    %v5144 = vld [vmem:[%s14 + $0x38] sm:$0xf]
    %v5145 = vld [vmem:[%s14 + $0x3c] sm:$0xf]
    %v5146 = vld [vmem:[%s14 + $0x40] sm:$0xf]
    %v5147 = vld [vmem:[%s14 + $0x44] sm:$0xf]
    %v5148 = vld [vmem:[%s14 + $0x48] sm:$0xf]
    %v5149 = vld [vmem:[%s14 + $0x4c] sm:$0xf]
    %v5150 = vld [vmem:[%s14 + $0x50] sm:$0xf]
    %v5151 = vld [vmem:[%s14 + $0x54] sm:$0xf]
    %v5152 = vld [vmem:[%s14 + $0x58] sm:$0xf]
    %v5153 = vld [vmem:[%s14 + $0x5c] sm:$0xf]
    %v5154 = vld [vmem:[%s14 + $0x60] sm:$0xf]
    %v5155 = vld [vmem:[%s14 + $0x64] sm:$0xf]
    %v5156 = vld [vmem:[%s14 + $0x68] sm:$0xf]
    %v5157 = vld [vmem:[%s14 + $0x6c] sm:$0xf]
    %v5158 = vld [vmem:[%s14 + $0x70] sm:$0xf]
    %v5159 = vld [vmem:[%s14 + $0x74] sm:$0xf]
    %v5160 = vld [vmem:[%s14 + $0x78] sm:$0xf]
    %v5161 = vld [vmem:[%s14 + $0x7c] sm:$0xf]
    %v5162 = vld [vmem:[%s15] sm:$0x1]
    %v5164 = vlaneseq
    %v5165 = vshrl.u32 %v5164, 7
    %v5166 = vsub.s32 0, %v5165
    %v5167 = vrot.slane %v5162, %v5166
    %v5173 = vunpack.c.l.b16 %v5126
    %v5174 = vunpack.c.l.b16 %v5127
    %v5175 = vunpack.c.l.b16 %v5128
    %v5176 = vunpack.c.l.b16 %v5129
    %vm5177 = vcmask 1041409
    %v5178 = vsel %vm5177, %v5175, %v5173
    %v5179 = vsel %vm5177, %v5176, %v5174
    %v5180 = vpack.c.b16 %v5178, %v5178
    %v5181 = vpack.c.b16 %v5179, %v5179
    %v5216 = vunpack.c.l.b16 %v5130
    %v5217 = vunpack.c.l.b16 %v5131
    %v5218 = vunpack.c.l.b16 %v5132
    %v5219 = vunpack.c.l.b16 %v5133
    %v5220 = vunpack.c.l.b16 %v5134
    %v5221 = vunpack.c.l.b16 %v5135
    %v5222 = vunpack.c.l.b16 %v5136
    %v5223 = vunpack.c.l.b16 %v5137
    %v5224 = vunpack.c.l.b16 %v5138
    %v5225 = vunpack.c.l.b16 %v5139
    %v5226 = vunpack.c.l.b16 %v5140
    %v5227 = vunpack.c.l.b16 %v5141
    %v5228 = vunpack.c.l.b16 %v5142
    %v5229 = vunpack.c.l.b16 %v5143
    %v5230 = vunpack.c.l.b16 %v5144
    %v5231 = vunpack.c.l.b16 %v5145
    %v5232 = vunpack.c.l.b16 %v5146
    %v5233 = vunpack.c.l.b16 %v5147
    %v5234 = vunpack.c.l.b16 %v5148
    %v5235 = vunpack.c.l.b16 %v5149
    %v5236 = vunpack.c.l.b16 %v5150
    %v5237 = vunpack.c.l.b16 %v5151
    %v5238 = vunpack.c.l.b16 %v5152
    %v5239 = vunpack.c.l.b16 %v5153
    %v5240 = vunpack.c.l.b16 %v5154
    %v5241 = vunpack.c.l.b16 %v5155
    %v5242 = vunpack.c.l.b16 %v5156
    %v5243 = vunpack.c.l.b16 %v5157
    %v5244 = vunpack.c.l.b16 %v5158
    %v5245 = vunpack.c.l.b16 %v5159
    %v5246 = vunpack.c.l.b16 %v5160
    %v5247 = vunpack.c.l.b16 %v5161
    %v5248 = vpack.c.b16 %v5217, %v5216
    %v5249 = vpack.c.b16 %v5219, %v5218
    %v5250 = vpack.c.b16 %v5221, %v5220
    %v5251 = vpack.c.b16 %v5223, %v5222
    %v5252 = vpack.c.b16 %v5225, %v5224
    %v5253 = vpack.c.b16 %v5227, %v5226
    %v5254 = vpack.c.b16 %v5229, %v5228
    %v5255 = vpack.c.b16 %v5231, %v5230
    %v5256 = vpack.c.b16 %v5233, %v5232
    %v5257 = vpack.c.b16 %v5235, %v5234
    %v5258 = vpack.c.b16 %v5237, %v5236
    %v5259 = vpack.c.b16 %v5239, %v5238
    %v5260 = vpack.c.b16 %v5241, %v5240
    %v5261 = vpack.c.b16 %v5243, %v5242
    %v5262 = vpack.c.b16 %v5245, %v5244
    %v5263 = vpack.c.b16 %v5247, %v5246
    %5280 = vmatprep.subr.bf16.mxu0 0
    %5281 = vmatpush1.bf16.msra.mxu0 %v5248
    %5282 = vmatprep.subr.bf16.mxu0 0
    %5283 = vmatpush1.bf16.msra.mxu0 %v5249
    %5284 = vmatprep.subr.bf16.mxu0 0
    %5285 = vmatpush1.bf16.msra.mxu0 %v5250
    %5286 = vmatprep.subr.bf16.mxu0 0
    %5287 = vmatpush1.bf16.msra.mxu0 %v5251
    %5288 = vmatprep.subr.bf16.mxu0 0
    %5289 = vmatpush1.bf16.msra.mxu0 %v5252
    %5290 = vmatprep.subr.bf16.mxu0 0
    %5291 = vmatpush1.bf16.msra.mxu0 %v5253
    %5292 = vmatprep.subr.bf16.mxu0 0
    %5293 = vmatpush1.bf16.msra.mxu0 %v5254
    %5294 = vmatprep.subr.bf16.mxu0 0
    %5295 = vmatpush1.bf16.msra.mxu0 %v5255
    %5296 = vmatprep.subr.bf16.mxu0 0
    %5297 = vmatpush1.bf16.msra.mxu0 %v5256
    %5298 = vmatprep.subr.bf16.mxu0 0
    %5299 = vmatpush1.bf16.msra.mxu0 %v5257
    %5300 = vmatprep.subr.bf16.mxu0 0
    %5301 = vmatpush1.bf16.msra.mxu0 %v5258
    %5302 = vmatprep.subr.bf16.mxu0 0
    %5303 = vmatpush1.bf16.msra.mxu0 %v5259
    %5304 = vmatprep.subr.bf16.mxu0 0
    %5305 = vmatpush1.bf16.msra.mxu0 %v5260
    %5306 = vmatprep.subr.bf16.mxu0 0
    %5307 = vmatpush1.bf16.msra.mxu0 %v5261
    %5308 = vmatprep.subr.bf16.mxu0 0
    %5309 = vmatpush1.bf16.msra.mxu0 %v5262
    %5310 = vmatprep.subr.bf16.mxu0 0
    %5311 = vmatpush1.bf16.msra.mxu0 %v5263
    %5312 = vmatprep.mubr.bf16.mxu0 %v5181
    %5313 = vmatmul.mubr.bf16.gmra.mrb[0].mxu0 %v5180
    %v5314 = vpop.f32.mrb[0].mxu0
    %v5315 = vadd.f32 %v5167, %v5314
    %v5316 = vpop.f32.mrb[0].mxu0
    %v5317 = vpop.f32.mrb[0].mxu0
    %v5318 = vpop.f32.mrb[0].mxu0
    %5319 = vdwg.mxu0
    %5320 = vst [vmem:[#allocation2] sm:$0x3] %v5315
    // Predicated region
    $region66: #{network_wrn101_forward.3} parent=1 // pred_check
      _
    $region67: #{network_wrn101_forward.3} parent=1 // pred_check_branch
      %5322 = sbr.rel (0) target = $region69
    $region68: #{network_wrn101_forward.3} parent=1 // pred_region
      %s5324 = ssub.s32 32, 32
      %5325 = vsyncadd [#allocation3], %s5324
      %s5327 = sshll.u32 [#allocation2], 4
      %s5328 = int_to_ptr.vmem [resolvable:$true] %s5327
      %5330 = dma.vmem_to_hbm [thread:$0]  %s5328, 32, %s16, [#allocation3]
    $region69: #{network_wrn101_forward.3} parent=1 // pred_fallthru
      _
    // Predicated region
    $region70: #{network_wrn101_forward.3} parent=1 // pred_check
      _
    $region71: #{network_wrn101_forward.3} parent=1 // pred_check_branch
      %5332 = sbr.rel (0) target = $region73
    $region72: #{network_wrn101_forward.3} parent=1 // pred_region
      %5333 = dma.done [#allocation3], 32
    $region73: #{network_wrn101_forward.3} parent=1 // pred_fallthru
      _
    %5334 = vsyncpa [#allocation3], 1

</llo_original>
